<compile_context>
chip_gen: v7x
topology: tpu7x:2x2x1
jax: 0.10.0
libtpu: 0.0.40
codegen_flags: <defaults>
</compile_context>

<pallas_src>
import functools

import jax
import jax.numpy as jnp
from jax import lax
from jax.experimental import pallas as pl
from jax.experimental.pallas import tpu as pltpu

# MXU operand dtype (accumulation stays f32 via preferred_element_type).
_MXU_DTYPE = jnp.bfloat16

_DN_NT = (((1,), (1,)), ((), ()))  # contract over last dims of both (== A @ B.T)


# ---------------------------------------------------------------------------
# In-kernel math helpers (VPU / EUP / MXU primitives only)
# ---------------------------------------------------------------------------
def _gelu_tanh(x):
    # tanh-approx GELU (torch uses exact erf GELU; deviation |err| <~ 1e-3).
    c = 0.7978845608028654  # sqrt(2/pi)
    return 0.5 * x * (1.0 + jnp.tanh(c * (x + 0.044715 * x * x * x)))


def _softmax(x, axis=-1):
    m = jnp.max(x, axis=axis, keepdims=True)
    e = jnp.exp(x - m)
    return e * pl.reciprocal(jnp.sum(e, axis=axis, keepdims=True), approx=True)


def _layernorm(x, g, b, eps=1e-5):
    mean = jnp.mean(x, axis=-1, keepdims=True)
    var = jnp.mean((x - mean) ** 2, axis=-1, keepdims=True)
    return (x - mean) * lax.rsqrt(var + eps) * g + b


def _mm(a, b):
    return jnp.dot(a.astype(_MXU_DTYPE), b.astype(_MXU_DTYPE),
                   preferred_element_type=jnp.float32)


def _mm_nt(a, b):
    return lax.dot_general(a.astype(_MXU_DTYPE), b.astype(_MXU_DTYPE), _DN_NT,
                           preferred_element_type=jnp.float32)


# ---------------------------------------------------------------------------
# Fused whole-transformer kernel.
# grid = (batch_blocks, layer); activations carried across the layer axis.
# ---------------------------------------------------------------------------
def _fused_transformer_kernel(
    # inputs
    x_ref,
    sig_alpha_ref,                      # (L, H) in SMEM, sigmoid(alpha) precomputed
    ln1_g_ref, ln1_b_ref,
    qkv_w_ref, qkv_b_ref,
    gp_w_ref,
    proj_w_ref, proj_b_ref,
    ln2_g_ref, ln2_b_ref,
    ff1_w_ref, ff1_b_ref,
    ff2_w_ref, ff2_b_ref,
    lnf_g_ref, lnf_b_ref,
    # output
    o_ref,
    # scratch
    x_carry, attn_buf,
    *, num_heads, head_dim, scale, bt, seq):

    layer = pl.program_id(1)
    rows = bt * seq
    D = num_heads * head_dim

    # Load the input activations for this batch block once, at layer 0.
    @pl.when(layer == 0)
    def _():
        x_carry[...] = x_ref[...].reshape(rows, D)

    x = x_carry[...]                                   # (rows, D), f32

    # ---------------- attention sub-block ----------------
    n1 = _layernorm(x, ln1_g_ref[0], ln1_b_ref[0])
    qkv = _mm(n1, qkv_w_ref[0]) + qkv_b_ref[0]         # (rows, 3D) dense matmul

    pw = proj_w_ref[0]                                 # (D, D)   bf16
    gp = gp_w_ref[0]                                   # (H, M, Dh) bf16

    for b in range(bt):                                # static; sublane-aligned slices
        r0 = b * seq
        proj_acc = jnp.zeros((seq, D), jnp.float32)
        for h in range(num_heads):                     # static unrolled (H small)
            lo = h * head_dim
            q_h = qkv[r0:r0 + seq, lo:lo + head_dim] * scale        # (N, Dh)
            k_h = qkv[r0:r0 + seq, D + lo:D + lo + head_dim]        # (N, Dh)
            v_h = qkv[r0:r0 + seq, 2 * D + lo:2 * D + lo + head_dim]

            s = _mm_nt(q_h, k_h)                       # (N, N) raw scores (scale folded)

            # group weights: gelu(v @ gp.T) -> softmax -> G = W @ W.T
            gw = _softmax(_gelu_tanh(_mm_nt(v_h, gp[h])), axis=-1)  # (N, M)
            grp = _mm_nt(gw, gw)                       # (N, N)

            attn = _softmax(s * grp, axis=-1)

            a = sig_alpha_ref[layer, h]                # SMEM scalar
            w = (1.0 - a) * attn + a * grp

            # torch: attn_weights / (attn_weights.sum(dim=2, keepdim=True) + 1e-8)
            # dim=2 of (b,h,n,n) is the *query* axis -> axis 0 of this (Nq, Nk) tile.
            w = w * pl.reciprocal(jnp.sum(w, axis=0, keepdims=True) + 1e-8,
                                  approx=True)

            out_h = _mm(w, v_h)                        # (N, Dh)
            # Fold the output projection per head (sublane-aligned Wp slice), so the
            # (N, D) attention output is never assembled from 8-lane pieces.
            proj_acc = proj_acc + _mm(out_h, pw[lo:lo + head_dim, :])

        attn_buf[r0:r0 + seq, :] = proj_acc            # full-width (all D lanes) store

    x = x + attn_buf[...] + proj_b_ref[0]              # residual 1 (+ proj bias)

    # ---------------- feed-forward sub-block ----------------
    n2 = _layernorm(x, ln2_g_ref[0], ln2_b_ref[0])
    h1 = _gelu_tanh(_mm(n2, ff1_w_ref[0]) + ff1_b_ref[0])   # (rows, mlp_dim)
    ff = _mm(h1, ff2_w_ref[0]) + ff2_b_ref[0]                # (rows, D)
    x = x + ff                                         # residual 2

    x_carry[...] = x

    # Final LayerNorm + single HBM store, only after the last layer.
    @pl.when(layer == pl.num_programs(1) - 1)
    def _():
        y = _layernorm(x, lnf_g_ref[...], lnf_b_ref[...])
        o_ref[...] = y.reshape(bt, seq, D)


# ---------------------------------------------------------------------------
# Wrapper: one pallas_call for the whole model.
# ---------------------------------------------------------------------------
def transformer_forward(x, params, num_heads, *, batch_block=None):
    B, N, D = x.shape
    L = params["qkv_w"].shape[0]
    H = num_heads
    Dh = D // H
    scale = float(Dh) ** (-0.5)

    bt = batch_block if batch_block is not None else (2 if B % 2 == 0 else 1)
    assert B % bt == 0, "batch must be divisible by the batch block"
    Bb = B // bt   # keep >= 2 where possible so v7x megacore gets both TCs

    # sigmoid(alpha) computed once (tiny), read as SMEM scalars in the kernel.
    sig_alpha = jax.nn.sigmoid(params["alpha"].astype(jnp.float32)).reshape(L, H)

    kern = functools.partial(
        _fused_transformer_kernel,
        num_heads=H, head_dim=Dh, scale=scale, bt=bt, seq=N)

    per_batch = pl.BlockSpec((bt, N, D), lambda b, l: (b, 0, 0))

    def wspec(arr):
        nd = arr.ndim
        return pl.BlockSpec((1,) + arr.shape[1:],
                            lambda b, l, _n=nd: (l,) + (0,) * (_n - 1))

    smem_spec = pl.BlockSpec(memory_space=pltpu.MemorySpace.SMEM)
    final_ln_spec = pl.BlockSpec((1, D), lambda b, l: (0, 0))

    return pl.pallas_call(
        kern,
        out_shape=jax.ShapeDtypeStruct((B, N, D), jnp.float32),
        grid=(Bb, L),
        in_specs=[
            per_batch,                      # x
            smem_spec,                      # sigmoid(alpha), (L, H) in SMEM
            wspec(params["ln1_g"]), wspec(params["ln1_b"]),
            wspec(params["qkv_w"]), wspec(params["qkv_b"]),
            wspec(params["gp_w"]),
            wspec(params["proj_w"]), wspec(params["proj_b"]),
            wspec(params["ln2_g"]), wspec(params["ln2_b"]),
            wspec(params["ff1_w"]), wspec(params["ff1_b"]),
            wspec(params["ff2_w"]), wspec(params["ff2_b"]),
            final_ln_spec, final_ln_spec,
        ],
        out_specs=per_batch,
        scratch_shapes=[
            pltpu.VMEM((bt * N, D), jnp.float32),   # activations carried across layers
            pltpu.VMEM((bt * N, D), jnp.float32),   # per-layer attention-proj assembly
        ],
        compiler_params=pltpu.CompilerParams(
            dimension_semantics=("parallel", "arbitrary"),
            # Explicit scoped-VMEM budget: safe on v5e/v6e (128 MiB phys) and fits
            # v7x's 64 MiB physical VMEM.
            vmem_limit_bytes=64 * 1024 * 1024,
        ),
    )(
        x,
        sig_alpha,
        params["ln1_g"], params["ln1_b"],
        params["qkv_w"], params["qkv_b"],
        params["gp_w"],
        params["proj_w"], params["proj_b"],
        params["ln2_g"], params["ln2_b"],
        params["ff1_w"], params["ff1_b"],
        params["ff2_w"], params["ff2_b"],
        params["lnf_g"], params["lnf_b"],
    )


# ---------------------------------------------------------------------------
# Deterministic synthetic parameters (shapes follow the PyTorch __init__),
# stacked along a leading `depth` axis.  Matmul weights are stored bf16 in HBM
# (identical numerics to casting f32->bf16 at matmul time); biases/LN stay f32.
# ---------------------------------------------------------------------------
def init_params(key, dim, depth, num_heads, mlp_dim, gp_num):
    Dh = dim // num_heads
    f32, bf16 = jnp.float32, jnp.bfloat16
    ks = jax.random.split(key, 6)
    return dict(
        ln1_g=jnp.ones((depth, 1, dim), f32),
        ln1_b=jnp.zeros((depth, 1, dim), f32),
        qkv_w=(0.02 * jax.random.normal(ks[0], (depth, dim, 3 * dim), f32)).astype(bf16),
        qkv_b=jnp.zeros((depth, 1, 3 * dim), f32),
        # torch: gp.weight is (gp_num, dim); viewed per head as (H, gp_num, Dh)
        # (row-major reinterpretation, same as torch .view).
        gp_w=(0.02 * jax.random.normal(ks[1], (depth, gp_num, dim), f32)
              ).reshape(depth, num_heads, gp_num, Dh).astype(bf16),
        alpha=jax.random.normal(ks[2], (depth, num_heads, 1, 1), f32),
        proj_w=(0.02 * jax.random.normal(ks[3], (depth, dim, dim), f32)).astype(bf16),
        proj_b=jnp.zeros((depth, 1, dim), f32),
        ln2_g=jnp.ones((depth, 1, dim), f32),
        ln2_b=jnp.zeros((depth, 1, dim), f32),
        ff1_w=(0.02 * jax.random.normal(ks[4], (depth, dim, mlp_dim), f32)).astype(bf16),
        ff1_b=jnp.zeros((depth, 1, mlp_dim), f32),
        ff2_w=(0.02 * jax.random.normal(ks[5], (depth, mlp_dim, dim), f32)).astype(bf16),
        ff2_b=jnp.zeros((depth, 1, dim), f32),
        lnf_g=jnp.ones((1, dim), f32),
        lnf_b=jnp.zeros((1, dim), f32),
    )


# ---------------------------------------------------------------------------
# Pure-JAX reference (same math as the PyTorch module, tanh-GELU variant) for a
# sanity check; runs in f32 with the same (bf16-stored) weights.
# ---------------------------------------------------------------------------
def _reference_forward(x, params, num_heads):
    B, N, D = x.shape
    H = num_heads
    Dh = D // H
    L = params["qkv_w"].shape[0]

    def ln(y, g, b):
        m = jnp.mean(y, -1, keepdims=True)
        v = jnp.mean((y - m) ** 2, -1, keepdims=True)
        return (y - m) * lax.rsqrt(v + 1e-5) * g + b

    gelu = lambda t: jax.nn.gelu(t, approximate=True)
    f32 = jnp.float32

    for l in range(L):
        n1 = ln(x, params["ln1_g"][l, 0], params["ln1_b"][l, 0])
        qkv = n1 @ params["qkv_w"][l].astype(f32) + params["qkv_b"][l, 0]
        q, k, v = jnp.split(qkv, 3, axis=-1)

        def heads(t):
            return t.reshape(B, N, H, Dh).transpose(0, 2, 1, 3)

        q, k, v = heads(q), heads(k), heads(v)
        gp = params["gp_w"][l].astype(f32)                       # (H, M, Dh)
        s = jnp.einsum("bhnd,bhkd->bhnk", q, k) * (float(Dh) ** -0.5)
        gw = jnp.einsum("bhnd,hmd->bhnm", v, gp)
        gw = jax.nn.softmax(gelu(gw), axis=-1)
        grp = jnp.einsum("bhnm,bhkm->bhnk", gw, gw)
        attn = jax.nn.softmax(s * grp, axis=-1)
        a = jax.nn.sigmoid(params["alpha"][l]).reshape(1, H, 1, 1)
        w = (1.0 - a) * attn + a * grp
        w = w / (jnp.sum(w, axis=2, keepdims=True) + 1e-8)
        out = jnp.einsum("bhnk,bhkd->bhnd", w, v)
        out = out.transpose(0, 2, 1, 3).reshape(B, N, D)
        out = out @ params["proj_w"][l].astype(f32) + params["proj_b"][l, 0]
        x = out + x

        n2 = ln(x, params["ln2_g"][l, 0], params["ln2_b"][l, 0])
        h1 = gelu(n2 @ params["ff1_w"][l].astype(f32) + params["ff1_b"][l, 0])
        ff = h1 @ params["ff2_w"][l].astype(f32) + params["ff2_b"][l, 0]
        x = ff + x
    return ln(x, params["lnf_g"][0], params["lnf_b"][0])


if __name__ == "__main__":
    # Small but representative shapes: dim=32, depth=2, heads=4 (head_dim=8),
    # mlp_dim=64, gp_num=16, batch=4 (batch_block=2 -> 2 grid blocks), seq=64.
    dim, depth, num_heads, mlp_dim, gp_num = 32, 2, 4, 64, 16
    B, N = 4, 64

    key = jax.random.PRNGKey(0)
    key, pkey, xkey = jax.random.split(key, 3)
    params = init_params(pkey, dim, depth, num_heads, mlp_dim, gp_num)
    x = jax.random.normal(xkey, (B, N, dim), jnp.float32)

    fwd = jax.jit(functools.partial(transformer_forward,
                                    num_heads=num_heads, batch_block=2))
    out = jax.block_until_ready(fwd(x, params))
    assert out.shape == (B, N, dim)

    ref = jax.block_until_ready(_reference_forward(x, params, num_heads))
    max_err = float(jnp.max(jnp.abs(out - ref)))
    # bf16 MXU operands + approx reciprocals -> loosened tolerance vs the f32 reference.
    assert max_err < 2e-2, f"mismatch vs reference: {max_err}"

    print("KERNEL_OK")
</pallas_src>

<mosaic_0001>
module attributes {stable_mosaic.version = 11 : i64} {
  func.func @_fused_transformer_kernel(%arg0: i32, %arg1: i32, %arg2: memref<2x64x32xf32, #tpu.memory_space<vmem>>, %arg3: memref<2x4xf32, #tpu.memory_space<smem>>, %arg4: memref<1x1x32xf32, #tpu.memory_space<vmem>>, %arg5: memref<1x1x32xf32, #tpu.memory_space<vmem>>, %arg6: memref<1x32x96xbf16, #tpu.memory_space<vmem>>, %arg7: memref<1x1x96xf32, #tpu.memory_space<vmem>>, %arg8: memref<1x4x16x8xbf16, #tpu.memory_space<vmem>>, %arg9: memref<1x32x32xbf16, #tpu.memory_space<vmem>>, %arg10: memref<1x1x32xf32, #tpu.memory_space<vmem>>, %arg11: memref<1x1x32xf32, #tpu.memory_space<vmem>>, %arg12: memref<1x1x32xf32, #tpu.memory_space<vmem>>, %arg13: memref<1x32x64xbf16, #tpu.memory_space<vmem>>, %arg14: memref<1x1x64xf32, #tpu.memory_space<vmem>>, %arg15: memref<1x64x32xbf16, #tpu.memory_space<vmem>>, %arg16: memref<1x1x32xf32, #tpu.memory_space<vmem>>, %arg17: memref<1x32xf32, #tpu.memory_space<vmem>>, %arg18: memref<1x32xf32, #tpu.memory_space<vmem>>, %arg19: memref<2x64x32xf32, #tpu.memory_space<vmem>>, %arg20: memref<128x32xf32, #tpu.memory_space<vmem>>, %arg21: memref<128x32xf32, #tpu.memory_space<vmem>>) attributes {dimension_semantics = [#tpu.dimension_semantics<parallel>, #tpu.dimension_semantics<arbitrary>], iteration_bounds = array<i64: 2, 2>, scalar_prefetch = 0 : i64, scratch_operands = 2 : i64, tpu.core_type = #tpu.core_type<tc>, window_params = [{transform_indices = @transform_0, window_bounds = array<i64: 2, 64, 32>}, {transform_indices = @transform_1, window_bounds = array<i64: 2, 4>}, {transform_indices = @transform_2, window_bounds = array<i64: 1, 1, 32>}, {transform_indices = @transform_3, window_bounds = array<i64: 1, 1, 32>}, {transform_indices = @transform_4, window_bounds = array<i64: 1, 32, 96>}, {transform_indices = @transform_5, window_bounds = array<i64: 1, 1, 96>}, {transform_indices = @transform_6, window_bounds = array<i64: 1, 4, 16, 8>}, {transform_indices = @transform_7, window_bounds = array<i64: 1, 32, 32>}, {transform_indices = @transform_8, window_bounds = array<i64: 1, 1, 32>}, {transform_indices = @transform_9, window_bounds = array<i64: 1, 1, 32>}, {transform_indices = @transform_10, window_bounds = array<i64: 1, 1, 32>}, {transform_indices = @transform_11, window_bounds = array<i64: 1, 32, 64>}, {transform_indices = @transform_12, window_bounds = array<i64: 1, 1, 64>}, {transform_indices = @transform_13, window_bounds = array<i64: 1, 64, 32>}, {transform_indices = @transform_14, window_bounds = array<i64: 1, 1, 32>}, {pipeline_mode = #tpu.pipeline_mode<synchronous>, transform_indices = @transform_15, window_bounds = array<i64: 1, 32>}, {pipeline_mode = #tpu.pipeline_mode<synchronous>, transform_indices = @transform_16, window_bounds = array<i64: 1, 32>}, {transform_indices = @transform_17, window_bounds = array<i64: 2, 64, 32>}]} {
    %c0_i32 = arith.constant 0 : i32
    %0 = arith.cmpi eq, %arg1, %c0_i32 : i32
    %1 = arith.extui %0 : i1 to i32
    %c0_i32_0 = arith.constant 0 : i32
    %2 = arith.cmpi ne, %1, %c0_i32_0 : i32
    scf.if %2 {
      %c0_209 = arith.constant 0 : index
      %c0_210 = arith.constant 0 : index
      %c0_211 = arith.constant 0 : index
      %680 = vector.load %arg2[%c0_209, %c0_210, %c0_211] : memref<2x64x32xf32, #tpu.memory_space<vmem>>, vector<2x64x32xf32>
      %681 = vector.shape_cast %680 : vector<2x64x32xf32> to vector<128x32xf32>
      %c0_212 = arith.constant 0 : index
      %c0_213 = arith.constant 0 : index
      %682 = vector.load %arg20[%c0_212, %c0_213] : memref<128x32xf32, #tpu.memory_space<vmem>>, vector<128x32xf32>
      tpu.vector_store %arg20[%c0_212, %c0_213], %681 {strides = array<i32>} : memref<128x32xf32, #tpu.memory_space<vmem>>, vector<128x32xf32>,
    } else {
    }
    %c0 = arith.constant 0 : index
    %c0_1 = arith.constant 0 : index
    %3 = vector.load %arg20[%c0, %c0_1] : memref<128x32xf32, #tpu.memory_space<vmem>>, vector<128x32xf32>
    %c0_2 = arith.constant 0 : index
    %c0_3 = arith.constant 0 : index
    %c0_4 = arith.constant 0 : index
    %4 = vector.load %arg4[%c0_2, %c0_3, %c0_4] : memref<1x1x32xf32, #tpu.memory_space<vmem>>, vector<1x1x32xf32>
    %5 = vector.shape_cast %4 : vector<1x1x32xf32> to vector<1x32xf32>
    %c0_5 = arith.constant 0 : index
    %c0_6 = arith.constant 0 : index
    %c0_7 = arith.constant 0 : index
    %6 = vector.load %arg5[%c0_5, %c0_6, %c0_7] : memref<1x1x32xf32, #tpu.memory_space<vmem>>, vector<1x1x32xf32>
    %7 = vector.shape_cast %6 : vector<1x1x32xf32> to vector<1x32xf32>
    %cst = arith.constant dense<0.000000e+00> : vector<128xf32>
    %8 = vector.multi_reduction <add>, %3, %cst [1] : vector<128x32xf32> to vector<128xf32>
    %9 = vector.shape_cast %8 : vector<128xf32> to vector<128x1xf32>
    %cst_8 = arith.constant 3.200000e+01 : f32
    %10 = vector.broadcast %cst_8 : f32 to vector<128x1xf32>
    %11 = arith.divf %9, %10 : vector<128x1xf32>
    %12 = vector.broadcast %11 : vector<128x1xf32> to vector<128x32xf32>
    %13 = arith.subf %3, %12 : vector<128x32xf32>
    %14 = arith.mulf %13, %13 : vector<128x32xf32>
    %cst_9 = arith.constant dense<0.000000e+00> : vector<128xf32>
    %15 = vector.multi_reduction <add>, %14, %cst_9 [1] : vector<128x32xf32> to vector<128xf32>
    %16 = vector.shape_cast %15 : vector<128xf32> to vector<128x1xf32>
    %cst_10 = arith.constant 3.200000e+01 : f32
    %17 = vector.broadcast %cst_10 : f32 to vector<128x1xf32>
    %18 = arith.divf %16, %17 : vector<128x1xf32>
    %19 = vector.broadcast %11 : vector<128x1xf32> to vector<128x32xf32>
    %20 = arith.subf %3, %19 : vector<128x32xf32>
    %cst_11 = arith.constant 9.99999974E-6 : f32
    %21 = vector.broadcast %cst_11 : f32 to vector<128x1xf32>
    %22 = arith.addf %18, %21 : vector<128x1xf32>
    %23 = math.rsqrt %22 : vector<128x1xf32>
    %24 = vector.broadcast %23 : vector<128x1xf32> to vector<128x32xf32>
    %25 = arith.mulf %20, %24 : vector<128x32xf32>
    %26 = vector.broadcast %5 : vector<1x32xf32> to vector<128x32xf32>
    %27 = arith.mulf %25, %26 : vector<128x32xf32>
    %28 = vector.broadcast %7 : vector<1x32xf32> to vector<128x32xf32>
    %29 = arith.addf %27, %28 : vector<128x32xf32>
    %c0_12 = arith.constant 0 : index
    %c0_13 = arith.constant 0 : index
    %c0_14 = arith.constant 0 : index
    %30 = vector.load %arg6[%c0_12, %c0_13, %c0_14] : memref<1x32x96xbf16, #tpu.memory_space<vmem>>, vector<1x32x96xbf16>
    %31 = vector.shape_cast %30 : vector<1x32x96xbf16> to vector<32x96xbf16>
    %32 = arith.truncf %29 : vector<128x32xf32> to vector<128x32xbf16>
    %cst_15 = arith.constant dense<0.000000e+00> : vector<128x96xf32>
    %33 = tpu.matmul %32, %31, %cst_15 {dimension_numbers = #tpu.dot_dimension_numbers<[1], [0], [0], [1], [0, 0, 1, 1], [], []>} : vector<128x32xbf16>, vector<32x96xbf16>, vector<128x96xf32> -> vector<128x96xf32>
    %c0_16 = arith.constant 0 : index
    %c0_17 = arith.constant 0 : index
    %c0_18 = arith.constant 0 : index
    %34 = vector.load %arg7[%c0_16, %c0_17, %c0_18] : memref<1x1x96xf32, #tpu.memory_space<vmem>>, vector<1x1x96xf32>
    %35 = vector.shape_cast %34 : vector<1x1x96xf32> to vector<1x96xf32>
    %36 = vector.broadcast %35 : vector<1x96xf32> to vector<128x96xf32>
    %37 = arith.addf %33, %36 : vector<128x96xf32>
    %c0_19 = arith.constant 0 : index
    %c0_20 = arith.constant 0 : index
    %c0_21 = arith.constant 0 : index
    %38 = vector.load %arg9[%c0_19, %c0_20, %c0_21] : memref<1x32x32xbf16, #tpu.memory_space<vmem>>, vector<1x32x32xbf16>
    %39 = vector.shape_cast %38 : vector<1x32x32xbf16> to vector<32x32xbf16>
    %c0_22 = arith.constant 0 : index
    %c0_23 = arith.constant 0 : index
    %c0_24 = arith.constant 0 : index
    %c0_25 = arith.constant 0 : index
    %40 = vector.load %arg8[%c0_22, %c0_23, %c0_24, %c0_25] : memref<1x4x16x8xbf16, #tpu.memory_space<vmem>>, vector<1x4x16x8xbf16>
    %41 = vector.shape_cast %40 : vector<1x4x16x8xbf16> to vector<4x16x8xbf16>
    %cst_26 = arith.constant 0.000000e+00 : f32
    %42 = vector.broadcast %cst_26 : f32 to vector<64x32xf32>
    %43 = vector.extract_strided_slice %37 {offsets = [0, 0], sizes = [64, 8], strides = [1, 1]} : vector<128x96xf32> to vector<64x8xf32>
    %cst_27 = arith.constant 0.353553385 : f32
    %44 = vector.broadcast %cst_27 : f32 to vector<64x8xf32>
    %45 = arith.mulf %43, %44 : vector<64x8xf32>
    %46 = vector.extract_strided_slice %37 {offsets = [0, 32], sizes = [64, 8], strides = [1, 1]} : vector<128x96xf32> to vector<64x8xf32>
    %47 = vector.extract_strided_slice %37 {offsets = [0, 64], sizes = [64, 8], strides = [1, 1]} : vector<128x96xf32> to vector<64x8xf32>
    %48 = arith.truncf %45 : vector<64x8xf32> to vector<64x8xbf16>
    %49 = arith.truncf %46 : vector<64x8xf32> to vector<64x8xbf16>
    %cst_28 = arith.constant dense<0.000000e+00> : vector<64x64xf32>
    %50 = tpu.matmul %48, %49, %cst_28 {dimension_numbers = #tpu.dot_dimension_numbers<[1], [1], [0], [0], [0, 0, 1, 0], [], []>} : vector<64x8xbf16>, vector<64x8xbf16>, vector<64x64xf32> -> vector<64x64xf32>
    %51 = vector.extract_strided_slice %41 {offsets = [0, 0, 0], sizes = [1, 16, 8], strides = [1, 1, 1]} : vector<4x16x8xbf16> to vector<1x16x8xbf16>
    %52 = vector.shape_cast %51 : vector<1x16x8xbf16> to vector<16x8xbf16>
    %53 = arith.truncf %47 : vector<64x8xf32> to vector<64x8xbf16>
    %cst_29 = arith.constant dense<0.000000e+00> : vector<64x16xf32>
    %54 = tpu.matmul %53, %52, %cst_29 {dimension_numbers = #tpu.dot_dimension_numbers<[1], [1], [0], [0], [0, 0, 1, 0], [], []>} : vector<64x8xbf16>, vector<16x8xbf16>, vector<64x16xf32> -> vector<64x16xf32>
    %cst_30 = arith.constant 5.000000e-01 : f32
    %55 = vector.broadcast %cst_30 : f32 to vector<64x16xf32>
    %56 = arith.mulf %55, %54 : vector<64x16xf32>
    %cst_31 = arith.constant 4.471500e-02 : f32
    %57 = vector.broadcast %cst_31 : f32 to vector<64x16xf32>
    %58 = arith.mulf %57, %54 : vector<64x16xf32>
    %59 = arith.mulf %58, %54 : vector<64x16xf32>
    %60 = arith.mulf %59, %54 : vector<64x16xf32>
    %61 = arith.addf %54, %60 : vector<64x16xf32>
    %cst_32 = arith.constant 0.797884583 : f32
    %62 = vector.broadcast %cst_32 : f32 to vector<64x16xf32>
    %63 = arith.mulf %62, %61 : vector<64x16xf32>
    %64 = math.tanh %63 : vector<64x16xf32>
    %cst_33 = arith.constant 1.000000e+00 : f32
    %65 = vector.broadcast %cst_33 : f32 to vector<64x16xf32>
    %66 = arith.addf %65, %64 : vector<64x16xf32>
    %67 = arith.mulf %56, %66 : vector<64x16xf32>
    %cst_34 = arith.constant dense<0xFF800000> : vector<64xf32>
    %68 = vector.multi_reduction <maximumf>, %67, %cst_34 [1] : vector<64x16xf32> to vector<64xf32>
    %69 = vector.shape_cast %68 : vector<64xf32> to vector<64x1xf32>
    %70 = vector.broadcast %69 : vector<64x1xf32> to vector<64x16xf32>
    %71 = arith.subf %67, %70 : vector<64x16xf32>
    %72 = math.exp %71 : vector<64x16xf32>
    %cst_35 = arith.constant dense<0.000000e+00> : vector<64xf32>
    %73 = vector.multi_reduction <add>, %72, %cst_35 [1] : vector<64x16xf32> to vector<64xf32>
    %74 = vector.shape_cast %73 : vector<64xf32> to vector<64x1xf32>
    %75 = tpu.reciprocal %74 {approx = true} : vector<64x1xf32> -> vector<64x1xf32>
    %76 = vector.broadcast %75 : vector<64x1xf32> to vector<64x16xf32>
    %77 = arith.mulf %72, %76 : vector<64x16xf32>
    %78 = arith.truncf %77 : vector<64x16xf32> to vector<64x16xbf16>
    %79 = arith.truncf %77 : vector<64x16xf32> to vector<64x16xbf16>
    %cst_36 = arith.constant dense<0.000000e+00> : vector<64x64xf32>
    %80 = tpu.matmul %78, %79, %cst_36 {dimension_numbers = #tpu.dot_dimension_numbers<[1], [1], [0], [0], [0, 0, 1, 0], [], []>} : vector<64x16xbf16>, vector<64x16xbf16>, vector<64x64xf32> -> vector<64x64xf32>
    %81 = arith.mulf %50, %80 : vector<64x64xf32>
    %cst_37 = arith.constant dense<0xFF800000> : vector<64xf32>
    %82 = vector.multi_reduction <maximumf>, %81, %cst_37 [1] : vector<64x64xf32> to vector<64xf32>
    %83 = vector.shape_cast %82 : vector<64xf32> to vector<64x1xf32>
    %84 = vector.broadcast %83 : vector<64x1xf32> to vector<64x64xf32>
    %85 = arith.subf %81, %84 : vector<64x64xf32>
    %86 = math.exp %85 : vector<64x64xf32>
    %cst_38 = arith.constant dense<0.000000e+00> : vector<64xf32>
    %87 = vector.multi_reduction <add>, %86, %cst_38 [1] : vector<64x64xf32> to vector<64xf32>
    %88 = vector.shape_cast %87 : vector<64xf32> to vector<64x1xf32>
    %89 = tpu.reciprocal %88 {approx = true} : vector<64x1xf32> -> vector<64x1xf32>
    %90 = vector.broadcast %89 : vector<64x1xf32> to vector<64x64xf32>
    %91 = arith.mulf %86, %90 : vector<64x64xf32>
    %92 = arith.index_cast %arg1 : i32 to index
    %c0_39 = arith.constant 0 : index
    %93 = memref.load %arg3[%92, %c0_39] : memref<2x4xf32, #tpu.memory_space<smem>>
    %cst_40 = arith.constant 1.000000e+00 : f32
    %94 = arith.subf %cst_40, %93 : f32
    %95 = vector.broadcast %94 : f32 to vector<64x64xf32>
    %96 = arith.mulf %95, %91 : vector<64x64xf32>
    %97 = vector.broadcast %93 : f32 to vector<64x64xf32>
    %98 = arith.mulf %97, %80 : vector<64x64xf32>
    %99 = arith.addf %96, %98 : vector<64x64xf32>
    %cst_41 = arith.constant dense<0.000000e+00> : vector<64xf32>
    %100 = vector.multi_reduction <add>, %99, %cst_41 [0] : vector<64x64xf32> to vector<64xf32>
    %101 = vector.shape_cast %100 : vector<64xf32> to vector<1x64xf32>
    %cst_42 = arith.constant 9.99999993E-9 : f32
    %102 = vector.broadcast %cst_42 : f32 to vector<1x64xf32>
    %103 = arith.addf %101, %102 : vector<1x64xf32>
    %104 = tpu.reciprocal %103 {approx = true} : vector<1x64xf32> -> vector<1x64xf32>
    %105 = vector.broadcast %104 : vector<1x64xf32> to vector<64x64xf32>
    %106 = arith.mulf %99, %105 : vector<64x64xf32>
    %107 = arith.truncf %106 : vector<64x64xf32> to vector<64x64xbf16>
    %108 = arith.truncf %47 : vector<64x8xf32> to vector<64x8xbf16>
    %cst_43 = arith.constant dense<0.000000e+00> : vector<64x8xf32>
    %109 = tpu.matmul %107, %108, %cst_43 {dimension_numbers = #tpu.dot_dimension_numbers<[1], [0], [0], [1], [0, 0, 1, 1], [], []>} : vector<64x64xbf16>, vector<64x8xbf16>, vector<64x8xf32> -> vector<64x8xf32>
    %110 = vector.extract_strided_slice %39 {offsets = [0, 0], sizes = [8, 32], strides = [1, 1]} : vector<32x32xbf16> to vector<8x32xbf16>
    %111 = arith.truncf %109 : vector<64x8xf32> to vector<64x8xbf16>
    %cst_44 = arith.constant dense<0.000000e+00> : vector<64x32xf32>
    %112 = tpu.matmul %111, %110, %cst_44 {dimension_numbers = #tpu.dot_dimension_numbers<[1], [0], [0], [1], [0, 0, 1, 1], [], []>} : vector<64x8xbf16>, vector<8x32xbf16>, vector<64x32xf32> -> vector<64x32xf32>
    %113 = arith.addf %42, %112 : vector<64x32xf32>
    %114 = vector.extract_strided_slice %37 {offsets = [0, 8], sizes = [64, 8], strides = [1, 1]} : vector<128x96xf32> to vector<64x8xf32>
    %cst_45 = arith.constant 0.353553385 : f32
    %115 = vector.broadcast %cst_45 : f32 to vector<64x8xf32>
    %116 = arith.mulf %114, %115 : vector<64x8xf32>
    %117 = vector.extract_strided_slice %37 {offsets = [0, 40], sizes = [64, 8], strides = [1, 1]} : vector<128x96xf32> to vector<64x8xf32>
    %118 = vector.extract_strided_slice %37 {offsets = [0, 72], sizes = [64, 8], strides = [1, 1]} : vector<128x96xf32> to vector<64x8xf32>
    %119 = arith.truncf %116 : vector<64x8xf32> to vector<64x8xbf16>
    %120 = arith.truncf %117 : vector<64x8xf32> to vector<64x8xbf16>
    %cst_46 = arith.constant dense<0.000000e+00> : vector<64x64xf32>
    %121 = tpu.matmul %119, %120, %cst_46 {dimension_numbers = #tpu.dot_dimension_numbers<[1], [1], [0], [0], [0, 0, 1, 0], [], []>} : vector<64x8xbf16>, vector<64x8xbf16>, vector<64x64xf32> -> vector<64x64xf32>
    %122 = vector.extract_strided_slice %41 {offsets = [1, 0, 0], sizes = [1, 16, 8], strides = [1, 1, 1]} : vector<4x16x8xbf16> to vector<1x16x8xbf16>
    %123 = vector.shape_cast %122 : vector<1x16x8xbf16> to vector<16x8xbf16>
    %124 = arith.truncf %118 : vector<64x8xf32> to vector<64x8xbf16>
    %cst_47 = arith.constant dense<0.000000e+00> : vector<64x16xf32>
    %125 = tpu.matmul %124, %123, %cst_47 {dimension_numbers = #tpu.dot_dimension_numbers<[1], [1], [0], [0], [0, 0, 1, 0], [], []>} : vector<64x8xbf16>, vector<16x8xbf16>, vector<64x16xf32> -> vector<64x16xf32>
    %cst_48 = arith.constant 5.000000e-01 : f32
    %126 = vector.broadcast %cst_48 : f32 to vector<64x16xf32>
    %127 = arith.mulf %126, %125 : vector<64x16xf32>
    %cst_49 = arith.constant 4.471500e-02 : f32
    %128 = vector.broadcast %cst_49 : f32 to vector<64x16xf32>
    %129 = arith.mulf %128, %125 : vector<64x16xf32>
    %130 = arith.mulf %129, %125 : vector<64x16xf32>
    %131 = arith.mulf %130, %125 : vector<64x16xf32>
    %132 = arith.addf %125, %131 : vector<64x16xf32>
    %cst_50 = arith.constant 0.797884583 : f32
    %133 = vector.broadcast %cst_50 : f32 to vector<64x16xf32>
    %134 = arith.mulf %133, %132 : vector<64x16xf32>
    %135 = math.tanh %134 : vector<64x16xf32>
    %cst_51 = arith.constant 1.000000e+00 : f32
    %136 = vector.broadcast %cst_51 : f32 to vector<64x16xf32>
    %137 = arith.addf %136, %135 : vector<64x16xf32>
    %138 = arith.mulf %127, %137 : vector<64x16xf32>
    %cst_52 = arith.constant dense<0xFF800000> : vector<64xf32>
    %139 = vector.multi_reduction <maximumf>, %138, %cst_52 [1] : vector<64x16xf32> to vector<64xf32>
    %140 = vector.shape_cast %139 : vector<64xf32> to vector<64x1xf32>
    %141 = vector.broadcast %140 : vector<64x1xf32> to vector<64x16xf32>
    %142 = arith.subf %138, %141 : vector<64x16xf32>
    %143 = math.exp %142 : vector<64x16xf32>
    %cst_53 = arith.constant dense<0.000000e+00> : vector<64xf32>
    %144 = vector.multi_reduction <add>, %143, %cst_53 [1] : vector<64x16xf32> to vector<64xf32>
    %145 = vector.shape_cast %144 : vector<64xf32> to vector<64x1xf32>
    %146 = tpu.reciprocal %145 {approx = true} : vector<64x1xf32> -> vector<64x1xf32>
    %147 = vector.broadcast %146 : vector<64x1xf32> to vector<64x16xf32>
    %148 = arith.mulf %143, %147 : vector<64x16xf32>
    %149 = arith.truncf %148 : vector<64x16xf32> to vector<64x16xbf16>
    %150 = arith.truncf %148 : vector<64x16xf32> to vector<64x16xbf16>
    %cst_54 = arith.constant dense<0.000000e+00> : vector<64x64xf32>
    %151 = tpu.matmul %149, %150, %cst_54 {dimension_numbers = #tpu.dot_dimension_numbers<[1], [1], [0], [0], [0, 0, 1, 0], [], []>} : vector<64x16xbf16>, vector<64x16xbf16>, vector<64x64xf32> -> vector<64x64xf32>
    %152 = arith.mulf %121, %151 : vector<64x64xf32>
    %cst_55 = arith.constant dense<0xFF800000> : vector<64xf32>
    %153 = vector.multi_reduction <maximumf>, %152, %cst_55 [1] : vector<64x64xf32> to vector<64xf32>
    %154 = vector.shape_cast %153 : vector<64xf32> to vector<64x1xf32>
    %155 = vector.broadcast %154 : vector<64x1xf32> to vector<64x64xf32>
    %156 = arith.subf %152, %155 : vector<64x64xf32>
    %157 = math.exp %156 : vector<64x64xf32>
    %cst_56 = arith.constant dense<0.000000e+00> : vector<64xf32>
    %158 = vector.multi_reduction <add>, %157, %cst_56 [1] : vector<64x64xf32> to vector<64xf32>
    %159 = vector.shape_cast %158 : vector<64xf32> to vector<64x1xf32>
    %160 = tpu.reciprocal %159 {approx = true} : vector<64x1xf32> -> vector<64x1xf32>
    %161 = vector.broadcast %160 : vector<64x1xf32> to vector<64x64xf32>
    %162 = arith.mulf %157, %161 : vector<64x64xf32>
    %163 = arith.index_cast %arg1 : i32 to index
    %c1 = arith.constant 1 : index
    %164 = memref.load %arg3[%163, %c1] : memref<2x4xf32, #tpu.memory_space<smem>>
    %cst_57 = arith.constant 1.000000e+00 : f32
    %165 = arith.subf %cst_57, %164 : f32
    %166 = vector.broadcast %165 : f32 to vector<64x64xf32>
    %167 = arith.mulf %166, %162 : vector<64x64xf32>
    %168 = vector.broadcast %164 : f32 to vector<64x64xf32>
    %169 = arith.mulf %168, %151 : vector<64x64xf32>
    %170 = arith.addf %167, %169 : vector<64x64xf32>
    %cst_58 = arith.constant dense<0.000000e+00> : vector<64xf32>
    %171 = vector.multi_reduction <add>, %170, %cst_58 [0] : vector<64x64xf32> to vector<64xf32>
    %172 = vector.shape_cast %171 : vector<64xf32> to vector<1x64xf32>
    %cst_59 = arith.constant 9.99999993E-9 : f32
    %173 = vector.broadcast %cst_59 : f32 to vector<1x64xf32>
    %174 = arith.addf %172, %173 : vector<1x64xf32>
    %175 = tpu.reciprocal %174 {approx = true} : vector<1x64xf32> -> vector<1x64xf32>
    %176 = vector.broadcast %175 : vector<1x64xf32> to vector<64x64xf32>
    %177 = arith.mulf %170, %176 : vector<64x64xf32>
    %178 = arith.truncf %177 : vector<64x64xf32> to vector<64x64xbf16>
    %179 = arith.truncf %118 : vector<64x8xf32> to vector<64x8xbf16>
    %cst_60 = arith.constant dense<0.000000e+00> : vector<64x8xf32>
    %180 = tpu.matmul %178, %179, %cst_60 {dimension_numbers = #tpu.dot_dimension_numbers<[1], [0], [0], [1], [0, 0, 1, 1], [], []>} : vector<64x64xbf16>, vector<64x8xbf16>, vector<64x8xf32> -> vector<64x8xf32>
    %181 = vector.extract_strided_slice %39 {offsets = [8, 0], sizes = [8, 32], strides = [1, 1]} : vector<32x32xbf16> to vector<8x32xbf16>
    %182 = arith.truncf %180 : vector<64x8xf32> to vector<64x8xbf16>
    %cst_61 = arith.constant dense<0.000000e+00> : vector<64x32xf32>
    %183 = tpu.matmul %182, %181, %cst_61 {dimension_numbers = #tpu.dot_dimension_numbers<[1], [0], [0], [1], [0, 0, 1, 1], [], []>} : vector<64x8xbf16>, vector<8x32xbf16>, vector<64x32xf32> -> vector<64x32xf32>
    %184 = arith.addf %113, %183 : vector<64x32xf32>
    %185 = vector.extract_strided_slice %37 {offsets = [0, 16], sizes = [64, 8], strides = [1, 1]} : vector<128x96xf32> to vector<64x8xf32>
    %cst_62 = arith.constant 0.353553385 : f32
    %186 = vector.broadcast %cst_62 : f32 to vector<64x8xf32>
    %187 = arith.mulf %185, %186 : vector<64x8xf32>
    %188 = vector.extract_strided_slice %37 {offsets = [0, 48], sizes = [64, 8], strides = [1, 1]} : vector<128x96xf32> to vector<64x8xf32>
    %189 = vector.extract_strided_slice %37 {offsets = [0, 80], sizes = [64, 8], strides = [1, 1]} : vector<128x96xf32> to vector<64x8xf32>
    %190 = arith.truncf %187 : vector<64x8xf32> to vector<64x8xbf16>
    %191 = arith.truncf %188 : vector<64x8xf32> to vector<64x8xbf16>
    %cst_63 = arith.constant dense<0.000000e+00> : vector<64x64xf32>
    %192 = tpu.matmul %190, %191, %cst_63 {dimension_numbers = #tpu.dot_dimension_numbers<[1], [1], [0], [0], [0, 0, 1, 0], [], []>} : vector<64x8xbf16>, vector<64x8xbf16>, vector<64x64xf32> -> vector<64x64xf32>
    %193 = vector.extract_strided_slice %41 {offsets = [2, 0, 0], sizes = [1, 16, 8], strides = [1, 1, 1]} : vector<4x16x8xbf16> to vector<1x16x8xbf16>
    %194 = vector.shape_cast %193 : vector<1x16x8xbf16> to vector<16x8xbf16>
    %195 = arith.truncf %189 : vector<64x8xf32> to vector<64x8xbf16>
    %cst_64 = arith.constant dense<0.000000e+00> : vector<64x16xf32>
    %196 = tpu.matmul %195, %194, %cst_64 {dimension_numbers = #tpu.dot_dimension_numbers<[1], [1], [0], [0], [0, 0, 1, 0], [], []>} : vector<64x8xbf16>, vector<16x8xbf16>, vector<64x16xf32> -> vector<64x16xf32>
    %cst_65 = arith.constant 5.000000e-01 : f32
    %197 = vector.broadcast %cst_65 : f32 to vector<64x16xf32>
    %198 = arith.mulf %197, %196 : vector<64x16xf32>
    %cst_66 = arith.constant 4.471500e-02 : f32
    %199 = vector.broadcast %cst_66 : f32 to vector<64x16xf32>
    %200 = arith.mulf %199, %196 : vector<64x16xf32>
    %201 = arith.mulf %200, %196 : vector<64x16xf32>
    %202 = arith.mulf %201, %196 : vector<64x16xf32>
    %203 = arith.addf %196, %202 : vector<64x16xf32>
    %cst_67 = arith.constant 0.797884583 : f32
    %204 = vector.broadcast %cst_67 : f32 to vector<64x16xf32>
    %205 = arith.mulf %204, %203 : vector<64x16xf32>
    %206 = math.tanh %205 : vector<64x16xf32>
    %cst_68 = arith.constant 1.000000e+00 : f32
    %207 = vector.broadcast %cst_68 : f32 to vector<64x16xf32>
    %208 = arith.addf %207, %206 : vector<64x16xf32>
    %209 = arith.mulf %198, %208 : vector<64x16xf32>
    %cst_69 = arith.constant dense<0xFF800000> : vector<64xf32>
    %210 = vector.multi_reduction <maximumf>, %209, %cst_69 [1] : vector<64x16xf32> to vector<64xf32>
    %211 = vector.shape_cast %210 : vector<64xf32> to vector<64x1xf32>
    %212 = vector.broadcast %211 : vector<64x1xf32> to vector<64x16xf32>
    %213 = arith.subf %209, %212 : vector<64x16xf32>
    %214 = math.exp %213 : vector<64x16xf32>
    %cst_70 = arith.constant dense<0.000000e+00> : vector<64xf32>
    %215 = vector.multi_reduction <add>, %214, %cst_70 [1] : vector<64x16xf32> to vector<64xf32>
    %216 = vector.shape_cast %215 : vector<64xf32> to vector<64x1xf32>
    %217 = tpu.reciprocal %216 {approx = true} : vector<64x1xf32> -> vector<64x1xf32>
    %218 = vector.broadcast %217 : vector<64x1xf32> to vector<64x16xf32>
    %219 = arith.mulf %214, %218 : vector<64x16xf32>
    %220 = arith.truncf %219 : vector<64x16xf32> to vector<64x16xbf16>
    %221 = arith.truncf %219 : vector<64x16xf32> to vector<64x16xbf16>
    %cst_71 = arith.constant dense<0.000000e+00> : vector<64x64xf32>
    %222 = tpu.matmul %220, %221, %cst_71 {dimension_numbers = #tpu.dot_dimension_numbers<[1], [1], [0], [0], [0, 0, 1, 0], [], []>} : vector<64x16xbf16>, vector<64x16xbf16>, vector<64x64xf32> -> vector<64x64xf32>
    %223 = arith.mulf %192, %222 : vector<64x64xf32>
    %cst_72 = arith.constant dense<0xFF800000> : vector<64xf32>
    %224 = vector.multi_reduction <maximumf>, %223, %cst_72 [1] : vector<64x64xf32> to vector<64xf32>
    %225 = vector.shape_cast %224 : vector<64xf32> to vector<64x1xf32>
    %226 = vector.broadcast %225 : vector<64x1xf32> to vector<64x64xf32>
    %227 = arith.subf %223, %226 : vector<64x64xf32>
    %228 = math.exp %227 : vector<64x64xf32>
    %cst_73 = arith.constant dense<0.000000e+00> : vector<64xf32>
    %229 = vector.multi_reduction <add>, %228, %cst_73 [1] : vector<64x64xf32> to vector<64xf32>
    %230 = vector.shape_cast %229 : vector<64xf32> to vector<64x1xf32>
    %231 = tpu.reciprocal %230 {approx = true} : vector<64x1xf32> -> vector<64x1xf32>
    %232 = vector.broadcast %231 : vector<64x1xf32> to vector<64x64xf32>
    %233 = arith.mulf %228, %232 : vector<64x64xf32>
    %234 = arith.index_cast %arg1 : i32 to index
    %c2 = arith.constant 2 : index
    %235 = memref.load %arg3[%234, %c2] : memref<2x4xf32, #tpu.memory_space<smem>>
    %cst_74 = arith.constant 1.000000e+00 : f32
    %236 = arith.subf %cst_74, %235 : f32
    %237 = vector.broadcast %236 : f32 to vector<64x64xf32>
    %238 = arith.mulf %237, %233 : vector<64x64xf32>
    %239 = vector.broadcast %235 : f32 to vector<64x64xf32>
    %240 = arith.mulf %239, %222 : vector<64x64xf32>
    %241 = arith.addf %238, %240 : vector<64x64xf32>
    %cst_75 = arith.constant dense<0.000000e+00> : vector<64xf32>
    %242 = vector.multi_reduction <add>, %241, %cst_75 [0] : vector<64x64xf32> to vector<64xf32>
    %243 = vector.shape_cast %242 : vector<64xf32> to vector<1x64xf32>
    %cst_76 = arith.constant 9.99999993E-9 : f32
    %244 = vector.broadcast %cst_76 : f32 to vector<1x64xf32>
    %245 = arith.addf %243, %244 : vector<1x64xf32>
    %246 = tpu.reciprocal %245 {approx = true} : vector<1x64xf32> -> vector<1x64xf32>
    %247 = vector.broadcast %246 : vector<1x64xf32> to vector<64x64xf32>
    %248 = arith.mulf %241, %247 : vector<64x64xf32>
    %249 = arith.truncf %248 : vector<64x64xf32> to vector<64x64xbf16>
    %250 = arith.truncf %189 : vector<64x8xf32> to vector<64x8xbf16>
    %cst_77 = arith.constant dense<0.000000e+00> : vector<64x8xf32>
    %251 = tpu.matmul %249, %250, %cst_77 {dimension_numbers = #tpu.dot_dimension_numbers<[1], [0], [0], [1], [0, 0, 1, 1], [], []>} : vector<64x64xbf16>, vector<64x8xbf16>, vector<64x8xf32> -> vector<64x8xf32>
    %252 = vector.extract_strided_slice %39 {offsets = [16, 0], sizes = [8, 32], strides = [1, 1]} : vector<32x32xbf16> to vector<8x32xbf16>
    %253 = arith.truncf %251 : vector<64x8xf32> to vector<64x8xbf16>
    %cst_78 = arith.constant dense<0.000000e+00> : vector<64x32xf32>
    %254 = tpu.matmul %253, %252, %cst_78 {dimension_numbers = #tpu.dot_dimension_numbers<[1], [0], [0], [1], [0, 0, 1, 1], [], []>} : vector<64x8xbf16>, vector<8x32xbf16>, vector<64x32xf32> -> vector<64x32xf32>
    %255 = arith.addf %184, %254 : vector<64x32xf32>
    %256 = vector.extract_strided_slice %37 {offsets = [0, 24], sizes = [64, 8], strides = [1, 1]} : vector<128x96xf32> to vector<64x8xf32>
    %cst_79 = arith.constant 0.353553385 : f32
    %257 = vector.broadcast %cst_79 : f32 to vector<64x8xf32>
    %258 = arith.mulf %256, %257 : vector<64x8xf32>
    %259 = vector.extract_strided_slice %37 {offsets = [0, 56], sizes = [64, 8], strides = [1, 1]} : vector<128x96xf32> to vector<64x8xf32>
    %260 = vector.extract_strided_slice %37 {offsets = [0, 88], sizes = [64, 8], strides = [1, 1]} : vector<128x96xf32> to vector<64x8xf32>
    %261 = arith.truncf %258 : vector<64x8xf32> to vector<64x8xbf16>
    %262 = arith.truncf %259 : vector<64x8xf32> to vector<64x8xbf16>
    %cst_80 = arith.constant dense<0.000000e+00> : vector<64x64xf32>
    %263 = tpu.matmul %261, %262, %cst_80 {dimension_numbers = #tpu.dot_dimension_numbers<[1], [1], [0], [0], [0, 0, 1, 0], [], []>} : vector<64x8xbf16>, vector<64x8xbf16>, vector<64x64xf32> -> vector<64x64xf32>
    %264 = vector.extract_strided_slice %41 {offsets = [3, 0, 0], sizes = [1, 16, 8], strides = [1, 1, 1]} : vector<4x16x8xbf16> to vector<1x16x8xbf16>
    %265 = vector.shape_cast %264 : vector<1x16x8xbf16> to vector<16x8xbf16>
    %266 = arith.truncf %260 : vector<64x8xf32> to vector<64x8xbf16>
    %cst_81 = arith.constant dense<0.000000e+00> : vector<64x16xf32>
    %267 = tpu.matmul %266, %265, %cst_81 {dimension_numbers = #tpu.dot_dimension_numbers<[1], [1], [0], [0], [0, 0, 1, 0], [], []>} : vector<64x8xbf16>, vector<16x8xbf16>, vector<64x16xf32> -> vector<64x16xf32>
    %cst_82 = arith.constant 5.000000e-01 : f32
    %268 = vector.broadcast %cst_82 : f32 to vector<64x16xf32>
    %269 = arith.mulf %268, %267 : vector<64x16xf32>
    %cst_83 = arith.constant 4.471500e-02 : f32
    %270 = vector.broadcast %cst_83 : f32 to vector<64x16xf32>
    %271 = arith.mulf %270, %267 : vector<64x16xf32>
    %272 = arith.mulf %271, %267 : vector<64x16xf32>
    %273 = arith.mulf %272, %267 : vector<64x16xf32>
    %274 = arith.addf %267, %273 : vector<64x16xf32>
    %cst_84 = arith.constant 0.797884583 : f32
    %275 = vector.broadcast %cst_84 : f32 to vector<64x16xf32>
    %276 = arith.mulf %275, %274 : vector<64x16xf32>
    %277 = math.tanh %276 : vector<64x16xf32>
    %cst_85 = arith.constant 1.000000e+00 : f32
    %278 = vector.broadcast %cst_85 : f32 to vector<64x16xf32>
    %279 = arith.addf %278, %277 : vector<64x16xf32>
    %280 = arith.mulf %269, %279 : vector<64x16xf32>
    %cst_86 = arith.constant dense<0xFF800000> : vector<64xf32>
    %281 = vector.multi_reduction <maximumf>, %280, %cst_86 [1] : vector<64x16xf32> to vector<64xf32>
    %282 = vector.shape_cast %281 : vector<64xf32> to vector<64x1xf32>
    %283 = vector.broadcast %282 : vector<64x1xf32> to vector<64x16xf32>
    %284 = arith.subf %280, %283 : vector<64x16xf32>
    %285 = math.exp %284 : vector<64x16xf32>
    %cst_87 = arith.constant dense<0.000000e+00> : vector<64xf32>
    %286 = vector.multi_reduction <add>, %285, %cst_87 [1] : vector<64x16xf32> to vector<64xf32>
    %287 = vector.shape_cast %286 : vector<64xf32> to vector<64x1xf32>
    %288 = tpu.reciprocal %287 {approx = true} : vector<64x1xf32> -> vector<64x1xf32>
    %289 = vector.broadcast %288 : vector<64x1xf32> to vector<64x16xf32>
    %290 = arith.mulf %285, %289 : vector<64x16xf32>
    %291 = arith.truncf %290 : vector<64x16xf32> to vector<64x16xbf16>
    %292 = arith.truncf %290 : vector<64x16xf32> to vector<64x16xbf16>
    %cst_88 = arith.constant dense<0.000000e+00> : vector<64x64xf32>
    %293 = tpu.matmul %291, %292, %cst_88 {dimension_numbers = #tpu.dot_dimension_numbers<[1], [1], [0], [0], [0, 0, 1, 0], [], []>} : vector<64x16xbf16>, vector<64x16xbf16>, vector<64x64xf32> -> vector<64x64xf32>
    %294 = arith.mulf %263, %293 : vector<64x64xf32>
    %cst_89 = arith.constant dense<0xFF800000> : vector<64xf32>
    %295 = vector.multi_reduction <maximumf>, %294, %cst_89 [1] : vector<64x64xf32> to vector<64xf32>
    %296 = vector.shape_cast %295 : vector<64xf32> to vector<64x1xf32>
    %297 = vector.broadcast %296 : vector<64x1xf32> to vector<64x64xf32>
    %298 = arith.subf %294, %297 : vector<64x64xf32>
    %299 = math.exp %298 : vector<64x64xf32>
    %cst_90 = arith.constant dense<0.000000e+00> : vector<64xf32>
    %300 = vector.multi_reduction <add>, %299, %cst_90 [1] : vector<64x64xf32> to vector<64xf32>
    %301 = vector.shape_cast %300 : vector<64xf32> to vector<64x1xf32>
    %302 = tpu.reciprocal %301 {approx = true} : vector<64x1xf32> -> vector<64x1xf32>
    %303 = vector.broadcast %302 : vector<64x1xf32> to vector<64x64xf32>
    %304 = arith.mulf %299, %303 : vector<64x64xf32>
    %305 = arith.index_cast %arg1 : i32 to index
    %c3 = arith.constant 3 : index
    %306 = memref.load %arg3[%305, %c3] : memref<2x4xf32, #tpu.memory_space<smem>>
    %cst_91 = arith.constant 1.000000e+00 : f32
    %307 = arith.subf %cst_91, %306 : f32
    %308 = vector.broadcast %307 : f32 to vector<64x64xf32>
    %309 = arith.mulf %308, %304 : vector<64x64xf32>
    %310 = vector.broadcast %306 : f32 to vector<64x64xf32>
    %311 = arith.mulf %310, %293 : vector<64x64xf32>
    %312 = arith.addf %309, %311 : vector<64x64xf32>
    %cst_92 = arith.constant dense<0.000000e+00> : vector<64xf32>
    %313 = vector.multi_reduction <add>, %312, %cst_92 [0] : vector<64x64xf32> to vector<64xf32>
    %314 = vector.shape_cast %313 : vector<64xf32> to vector<1x64xf32>
    %cst_93 = arith.constant 9.99999993E-9 : f32
    %315 = vector.broadcast %cst_93 : f32 to vector<1x64xf32>
    %316 = arith.addf %314, %315 : vector<1x64xf32>
    %317 = tpu.reciprocal %316 {approx = true} : vector<1x64xf32> -> vector<1x64xf32>
    %318 = vector.broadcast %317 : vector<1x64xf32> to vector<64x64xf32>
    %319 = arith.mulf %312, %318 : vector<64x64xf32>
    %320 = arith.truncf %319 : vector<64x64xf32> to vector<64x64xbf16>
    %321 = arith.truncf %260 : vector<64x8xf32> to vector<64x8xbf16>
    %cst_94 = arith.constant dense<0.000000e+00> : vector<64x8xf32>
    %322 = tpu.matmul %320, %321, %cst_94 {dimension_numbers = #tpu.dot_dimension_numbers<[1], [0], [0], [1], [0, 0, 1, 1], [], []>} : vector<64x64xbf16>, vector<64x8xbf16>, vector<64x8xf32> -> vector<64x8xf32>
    %323 = vector.extract_strided_slice %39 {offsets = [24, 0], sizes = [8, 32], strides = [1, 1]} : vector<32x32xbf16> to vector<8x32xbf16>
    %324 = arith.truncf %322 : vector<64x8xf32> to vector<64x8xbf16>
    %cst_95 = arith.constant dense<0.000000e+00> : vector<64x32xf32>
    %325 = tpu.matmul %324, %323, %cst_95 {dimension_numbers = #tpu.dot_dimension_numbers<[1], [0], [0], [1], [0, 0, 1, 1], [], []>} : vector<64x8xbf16>, vector<8x32xbf16>, vector<64x32xf32> -> vector<64x32xf32>
    %326 = arith.addf %255, %325 : vector<64x32xf32>
    %c0_96 = arith.constant 0 : index
    %c0_97 = arith.constant 0 : index
    %327 = vector.load %arg21[%c0_96, %c0_97] : memref<128x32xf32, #tpu.memory_space<vmem>>, vector<64x32xf32>
    tpu.vector_store %arg21[%c0_96, %c0_97], %326 {strides = array<i32>} : memref<128x32xf32, #tpu.memory_space<vmem>>, vector<64x32xf32>,
    %cst_98 = arith.constant 0.000000e+00 : f32
    %328 = vector.broadcast %cst_98 : f32 to vector<64x32xf32>
    %329 = vector.extract_strided_slice %37 {offsets = [64, 0], sizes = [64, 8], strides = [1, 1]} : vector<128x96xf32> to vector<64x8xf32>
    %cst_99 = arith.constant 0.353553385 : f32
    %330 = vector.broadcast %cst_99 : f32 to vector<64x8xf32>
    %331 = arith.mulf %329, %330 : vector<64x8xf32>
    %332 = vector.extract_strided_slice %37 {offsets = [64, 32], sizes = [64, 8], strides = [1, 1]} : vector<128x96xf32> to vector<64x8xf32>
    %333 = vector.extract_strided_slice %37 {offsets = [64, 64], sizes = [64, 8], strides = [1, 1]} : vector<128x96xf32> to vector<64x8xf32>
    %334 = arith.truncf %331 : vector<64x8xf32> to vector<64x8xbf16>
    %335 = arith.truncf %332 : vector<64x8xf32> to vector<64x8xbf16>
    %cst_100 = arith.constant dense<0.000000e+00> : vector<64x64xf32>
    %336 = tpu.matmul %334, %335, %cst_100 {dimension_numbers = #tpu.dot_dimension_numbers<[1], [1], [0], [0], [0, 0, 1, 0], [], []>} : vector<64x8xbf16>, vector<64x8xbf16>, vector<64x64xf32> -> vector<64x64xf32>
    %337 = vector.extract_strided_slice %41 {offsets = [0, 0, 0], sizes = [1, 16, 8], strides = [1, 1, 1]} : vector<4x16x8xbf16> to vector<1x16x8xbf16>
    %338 = vector.shape_cast %337 : vector<1x16x8xbf16> to vector<16x8xbf16>
    %339 = arith.truncf %333 : vector<64x8xf32> to vector<64x8xbf16>
    %cst_101 = arith.constant dense<0.000000e+00> : vector<64x16xf32>
    %340 = tpu.matmul %339, %338, %cst_101 {dimension_numbers = #tpu.dot_dimension_numbers<[1], [1], [0], [0], [0, 0, 1, 0], [], []>} : vector<64x8xbf16>, vector<16x8xbf16>, vector<64x16xf32> -> vector<64x16xf32>
    %cst_102 = arith.constant 5.000000e-01 : f32
    %341 = vector.broadcast %cst_102 : f32 to vector<64x16xf32>
    %342 = arith.mulf %341, %340 : vector<64x16xf32>
    %cst_103 = arith.constant 4.471500e-02 : f32
    %343 = vector.broadcast %cst_103 : f32 to vector<64x16xf32>
    %344 = arith.mulf %343, %340 : vector<64x16xf32>
    %345 = arith.mulf %344, %340 : vector<64x16xf32>
    %346 = arith.mulf %345, %340 : vector<64x16xf32>
    %347 = arith.addf %340, %346 : vector<64x16xf32>
    %cst_104 = arith.constant 0.797884583 : f32
    %348 = vector.broadcast %cst_104 : f32 to vector<64x16xf32>
    %349 = arith.mulf %348, %347 : vector<64x16xf32>
    %350 = math.tanh %349 : vector<64x16xf32>
    %cst_105 = arith.constant 1.000000e+00 : f32
    %351 = vector.broadcast %cst_105 : f32 to vector<64x16xf32>
    %352 = arith.addf %351, %350 : vector<64x16xf32>
    %353 = arith.mulf %342, %352 : vector<64x16xf32>
    %cst_106 = arith.constant dense<0xFF800000> : vector<64xf32>
    %354 = vector.multi_reduction <maximumf>, %353, %cst_106 [1] : vector<64x16xf32> to vector<64xf32>
    %355 = vector.shape_cast %354 : vector<64xf32> to vector<64x1xf32>
    %356 = vector.broadcast %355 : vector<64x1xf32> to vector<64x16xf32>
    %357 = arith.subf %353, %356 : vector<64x16xf32>
    %358 = math.exp %357 : vector<64x16xf32>
    %cst_107 = arith.constant dense<0.000000e+00> : vector<64xf32>
    %359 = vector.multi_reduction <add>, %358, %cst_107 [1] : vector<64x16xf32> to vector<64xf32>
    %360 = vector.shape_cast %359 : vector<64xf32> to vector<64x1xf32>
    %361 = tpu.reciprocal %360 {approx = true} : vector<64x1xf32> -> vector<64x1xf32>
    %362 = vector.broadcast %361 : vector<64x1xf32> to vector<64x16xf32>
    %363 = arith.mulf %358, %362 : vector<64x16xf32>
    %364 = arith.truncf %363 : vector<64x16xf32> to vector<64x16xbf16>
    %365 = arith.truncf %363 : vector<64x16xf32> to vector<64x16xbf16>
    %cst_108 = arith.constant dense<0.000000e+00> : vector<64x64xf32>
    %366 = tpu.matmul %364, %365, %cst_108 {dimension_numbers = #tpu.dot_dimension_numbers<[1], [1], [0], [0], [0, 0, 1, 0], [], []>} : vector<64x16xbf16>, vector<64x16xbf16>, vector<64x64xf32> -> vector<64x64xf32>
    %367 = arith.mulf %336, %366 : vector<64x64xf32>
    %cst_109 = arith.constant dense<0xFF800000> : vector<64xf32>
    %368 = vector.multi_reduction <maximumf>, %367, %cst_109 [1] : vector<64x64xf32> to vector<64xf32>
    %369 = vector.shape_cast %368 : vector<64xf32> to vector<64x1xf32>
    %370 = vector.broadcast %369 : vector<64x1xf32> to vector<64x64xf32>
    %371 = arith.subf %367, %370 : vector<64x64xf32>
    %372 = math.exp %371 : vector<64x64xf32>
    %cst_110 = arith.constant dense<0.000000e+00> : vector<64xf32>
    %373 = vector.multi_reduction <add>, %372, %cst_110 [1] : vector<64x64xf32> to vector<64xf32>
    %374 = vector.shape_cast %373 : vector<64xf32> to vector<64x1xf32>
    %375 = tpu.reciprocal %374 {approx = true} : vector<64x1xf32> -> vector<64x1xf32>
    %376 = vector.broadcast %375 : vector<64x1xf32> to vector<64x64xf32>
    %377 = arith.mulf %372, %376 : vector<64x64xf32>
    %378 = arith.index_cast %arg1 : i32 to index
    %c0_111 = arith.constant 0 : index
    %379 = memref.load %arg3[%378, %c0_111] : memref<2x4xf32, #tpu.memory_space<smem>>
    %cst_112 = arith.constant 1.000000e+00 : f32
    %380 = arith.subf %cst_112, %379 : f32
    %381 = vector.broadcast %380 : f32 to vector<64x64xf32>
    %382 = arith.mulf %381, %377 : vector<64x64xf32>
    %383 = vector.broadcast %379 : f32 to vector<64x64xf32>
    %384 = arith.mulf %383, %366 : vector<64x64xf32>
    %385 = arith.addf %382, %384 : vector<64x64xf32>
    %cst_113 = arith.constant dense<0.000000e+00> : vector<64xf32>
    %386 = vector.multi_reduction <add>, %385, %cst_113 [0] : vector<64x64xf32> to vector<64xf32>
    %387 = vector.shape_cast %386 : vector<64xf32> to vector<1x64xf32>
    %cst_114 = arith.constant 9.99999993E-9 : f32
    %388 = vector.broadcast %cst_114 : f32 to vector<1x64xf32>
    %389 = arith.addf %387, %388 : vector<1x64xf32>
    %390 = tpu.reciprocal %389 {approx = true} : vector<1x64xf32> -> vector<1x64xf32>
    %391 = vector.broadcast %390 : vector<1x64xf32> to vector<64x64xf32>
    %392 = arith.mulf %385, %391 : vector<64x64xf32>
    %393 = arith.truncf %392 : vector<64x64xf32> to vector<64x64xbf16>
    %394 = arith.truncf %333 : vector<64x8xf32> to vector<64x8xbf16>
    %cst_115 = arith.constant dense<0.000000e+00> : vector<64x8xf32>
    %395 = tpu.matmul %393, %394, %cst_115 {dimension_numbers = #tpu.dot_dimension_numbers<[1], [0], [0], [1], [0, 0, 1, 1], [], []>} : vector<64x64xbf16>, vector<64x8xbf16>, vector<64x8xf32> -> vector<64x8xf32>
    %396 = vector.extract_strided_slice %39 {offsets = [0, 0], sizes = [8, 32], strides = [1, 1]} : vector<32x32xbf16> to vector<8x32xbf16>
    %397 = arith.truncf %395 : vector<64x8xf32> to vector<64x8xbf16>
    %cst_116 = arith.constant dense<0.000000e+00> : vector<64x32xf32>
    %398 = tpu.matmul %397, %396, %cst_116 {dimension_numbers = #tpu.dot_dimension_numbers<[1], [0], [0], [1], [0, 0, 1, 1], [], []>} : vector<64x8xbf16>, vector<8x32xbf16>, vector<64x32xf32> -> vector<64x32xf32>
    %399 = arith.addf %328, %398 : vector<64x32xf32>
    %400 = vector.extract_strided_slice %37 {offsets = [64, 8], sizes = [64, 8], strides = [1, 1]} : vector<128x96xf32> to vector<64x8xf32>
    %cst_117 = arith.constant 0.353553385 : f32
    %401 = vector.broadcast %cst_117 : f32 to vector<64x8xf32>
    %402 = arith.mulf %400, %401 : vector<64x8xf32>
    %403 = vector.extract_strided_slice %37 {offsets = [64, 40], sizes = [64, 8], strides = [1, 1]} : vector<128x96xf32> to vector<64x8xf32>
    %404 = vector.extract_strided_slice %37 {offsets = [64, 72], sizes = [64, 8], strides = [1, 1]} : vector<128x96xf32> to vector<64x8xf32>
    %405 = arith.truncf %402 : vector<64x8xf32> to vector<64x8xbf16>
    %406 = arith.truncf %403 : vector<64x8xf32> to vector<64x8xbf16>
    %cst_118 = arith.constant dense<0.000000e+00> : vector<64x64xf32>
    %407 = tpu.matmul %405, %406, %cst_118 {dimension_numbers = #tpu.dot_dimension_numbers<[1], [1], [0], [0], [0, 0, 1, 0], [], []>} : vector<64x8xbf16>, vector<64x8xbf16>, vector<64x64xf32> -> vector<64x64xf32>
    %408 = vector.extract_strided_slice %41 {offsets = [1, 0, 0], sizes = [1, 16, 8], strides = [1, 1, 1]} : vector<4x16x8xbf16> to vector<1x16x8xbf16>
    %409 = vector.shape_cast %408 : vector<1x16x8xbf16> to vector<16x8xbf16>
    %410 = arith.truncf %404 : vector<64x8xf32> to vector<64x8xbf16>
    %cst_119 = arith.constant dense<0.000000e+00> : vector<64x16xf32>
    %411 = tpu.matmul %410, %409, %cst_119 {dimension_numbers = #tpu.dot_dimension_numbers<[1], [1], [0], [0], [0, 0, 1, 0], [], []>} : vector<64x8xbf16>, vector<16x8xbf16>, vector<64x16xf32> -> vector<64x16xf32>
    %cst_120 = arith.constant 5.000000e-01 : f32
    %412 = vector.broadcast %cst_120 : f32 to vector<64x16xf32>
    %413 = arith.mulf %412, %411 : vector<64x16xf32>
    %cst_121 = arith.constant 4.471500e-02 : f32
    %414 = vector.broadcast %cst_121 : f32 to vector<64x16xf32>
    %415 = arith.mulf %414, %411 : vector<64x16xf32>
    %416 = arith.mulf %415, %411 : vector<64x16xf32>
    %417 = arith.mulf %416, %411 : vector<64x16xf32>
    %418 = arith.addf %411, %417 : vector<64x16xf32>
    %cst_122 = arith.constant 0.797884583 : f32
    %419 = vector.broadcast %cst_122 : f32 to vector<64x16xf32>
    %420 = arith.mulf %419, %418 : vector<64x16xf32>
    %421 = math.tanh %420 : vector<64x16xf32>
    %cst_123 = arith.constant 1.000000e+00 : f32
    %422 = vector.broadcast %cst_123 : f32 to vector<64x16xf32>
    %423 = arith.addf %422, %421 : vector<64x16xf32>
    %424 = arith.mulf %413, %423 : vector<64x16xf32>
    %cst_124 = arith.constant dense<0xFF800000> : vector<64xf32>
    %425 = vector.multi_reduction <maximumf>, %424, %cst_124 [1] : vector<64x16xf32> to vector<64xf32>
    %426 = vector.shape_cast %425 : vector<64xf32> to vector<64x1xf32>
    %427 = vector.broadcast %426 : vector<64x1xf32> to vector<64x16xf32>
    %428 = arith.subf %424, %427 : vector<64x16xf32>
    %429 = math.exp %428 : vector<64x16xf32>
    %cst_125 = arith.constant dense<0.000000e+00> : vector<64xf32>
    %430 = vector.multi_reduction <add>, %429, %cst_125 [1] : vector<64x16xf32> to vector<64xf32>
    %431 = vector.shape_cast %430 : vector<64xf32> to vector<64x1xf32>
    %432 = tpu.reciprocal %431 {approx = true} : vector<64x1xf32> -> vector<64x1xf32>
    %433 = vector.broadcast %432 : vector<64x1xf32> to vector<64x16xf32>
    %434 = arith.mulf %429, %433 : vector<64x16xf32>
    %435 = arith.truncf %434 : vector<64x16xf32> to vector<64x16xbf16>
    %436 = arith.truncf %434 : vector<64x16xf32> to vector<64x16xbf16>
    %cst_126 = arith.constant dense<0.000000e+00> : vector<64x64xf32>
    %437 = tpu.matmul %435, %436, %cst_126 {dimension_numbers = #tpu.dot_dimension_numbers<[1], [1], [0], [0], [0, 0, 1, 0], [], []>} : vector<64x16xbf16>, vector<64x16xbf16>, vector<64x64xf32> -> vector<64x64xf32>
    %438 = arith.mulf %407, %437 : vector<64x64xf32>
    %cst_127 = arith.constant dense<0xFF800000> : vector<64xf32>
    %439 = vector.multi_reduction <maximumf>, %438, %cst_127 [1] : vector<64x64xf32> to vector<64xf32>
    %440 = vector.shape_cast %439 : vector<64xf32> to vector<64x1xf32>
    %441 = vector.broadcast %440 : vector<64x1xf32> to vector<64x64xf32>
    %442 = arith.subf %438, %441 : vector<64x64xf32>
    %443 = math.exp %442 : vector<64x64xf32>
    %cst_128 = arith.constant dense<0.000000e+00> : vector<64xf32>
    %444 = vector.multi_reduction <add>, %443, %cst_128 [1] : vector<64x64xf32> to vector<64xf32>
    %445 = vector.shape_cast %444 : vector<64xf32> to vector<64x1xf32>
    %446 = tpu.reciprocal %445 {approx = true} : vector<64x1xf32> -> vector<64x1xf32>
    %447 = vector.broadcast %446 : vector<64x1xf32> to vector<64x64xf32>
    %448 = arith.mulf %443, %447 : vector<64x64xf32>
    %449 = arith.index_cast %arg1 : i32 to index
    %c1_129 = arith.constant 1 : index
    %450 = memref.load %arg3[%449, %c1_129] : memref<2x4xf32, #tpu.memory_space<smem>>
    %cst_130 = arith.constant 1.000000e+00 : f32
    %451 = arith.subf %cst_130, %450 : f32
    %452 = vector.broadcast %451 : f32 to vector<64x64xf32>
    %453 = arith.mulf %452, %448 : vector<64x64xf32>
    %454 = vector.broadcast %450 : f32 to vector<64x64xf32>
    %455 = arith.mulf %454, %437 : vector<64x64xf32>
    %456 = arith.addf %453, %455 : vector<64x64xf32>
    %cst_131 = arith.constant dense<0.000000e+00> : vector<64xf32>
    %457 = vector.multi_reduction <add>, %456, %cst_131 [0] : vector<64x64xf32> to vector<64xf32>
    %458 = vector.shape_cast %457 : vector<64xf32> to vector<1x64xf32>
    %cst_132 = arith.constant 9.99999993E-9 : f32
    %459 = vector.broadcast %cst_132 : f32 to vector<1x64xf32>
    %460 = arith.addf %458, %459 : vector<1x64xf32>
    %461 = tpu.reciprocal %460 {approx = true} : vector<1x64xf32> -> vector<1x64xf32>
    %462 = vector.broadcast %461 : vector<1x64xf32> to vector<64x64xf32>
    %463 = arith.mulf %456, %462 : vector<64x64xf32>
    %464 = arith.truncf %463 : vector<64x64xf32> to vector<64x64xbf16>
    %465 = arith.truncf %404 : vector<64x8xf32> to vector<64x8xbf16>
    %cst_133 = arith.constant dense<0.000000e+00> : vector<64x8xf32>
    %466 = tpu.matmul %464, %465, %cst_133 {dimension_numbers = #tpu.dot_dimension_numbers<[1], [0], [0], [1], [0, 0, 1, 1], [], []>} : vector<64x64xbf16>, vector<64x8xbf16>, vector<64x8xf32> -> vector<64x8xf32>
    %467 = vector.extract_strided_slice %39 {offsets = [8, 0], sizes = [8, 32], strides = [1, 1]} : vector<32x32xbf16> to vector<8x32xbf16>
    %468 = arith.truncf %466 : vector<64x8xf32> to vector<64x8xbf16>
    %cst_134 = arith.constant dense<0.000000e+00> : vector<64x32xf32>
    %469 = tpu.matmul %468, %467, %cst_134 {dimension_numbers = #tpu.dot_dimension_numbers<[1], [0], [0], [1], [0, 0, 1, 1], [], []>} : vector<64x8xbf16>, vector<8x32xbf16>, vector<64x32xf32> -> vector<64x32xf32>
    %470 = arith.addf %399, %469 : vector<64x32xf32>
    %471 = vector.extract_strided_slice %37 {offsets = [64, 16], sizes = [64, 8], strides = [1, 1]} : vector<128x96xf32> to vector<64x8xf32>
    %cst_135 = arith.constant 0.353553385 : f32
    %472 = vector.broadcast %cst_135 : f32 to vector<64x8xf32>
    %473 = arith.mulf %471, %472 : vector<64x8xf32>
    %474 = vector.extract_strided_slice %37 {offsets = [64, 48], sizes = [64, 8], strides = [1, 1]} : vector<128x96xf32> to vector<64x8xf32>
    %475 = vector.extract_strided_slice %37 {offsets = [64, 80], sizes = [64, 8], strides = [1, 1]} : vector<128x96xf32> to vector<64x8xf32>
    %476 = arith.truncf %473 : vector<64x8xf32> to vector<64x8xbf16>
    %477 = arith.truncf %474 : vector<64x8xf32> to vector<64x8xbf16>
    %cst_136 = arith.constant dense<0.000000e+00> : vector<64x64xf32>
    %478 = tpu.matmul %476, %477, %cst_136 {dimension_numbers = #tpu.dot_dimension_numbers<[1], [1], [0], [0], [0, 0, 1, 0], [], []>} : vector<64x8xbf16>, vector<64x8xbf16>, vector<64x64xf32> -> vector<64x64xf32>
    %479 = vector.extract_strided_slice %41 {offsets = [2, 0, 0], sizes = [1, 16, 8], strides = [1, 1, 1]} : vector<4x16x8xbf16> to vector<1x16x8xbf16>
    %480 = vector.shape_cast %479 : vector<1x16x8xbf16> to vector<16x8xbf16>
    %481 = arith.truncf %475 : vector<64x8xf32> to vector<64x8xbf16>
    %cst_137 = arith.constant dense<0.000000e+00> : vector<64x16xf32>
    %482 = tpu.matmul %481, %480, %cst_137 {dimension_numbers = #tpu.dot_dimension_numbers<[1], [1], [0], [0], [0, 0, 1, 0], [], []>} : vector<64x8xbf16>, vector<16x8xbf16>, vector<64x16xf32> -> vector<64x16xf32>
    %cst_138 = arith.constant 5.000000e-01 : f32
    %483 = vector.broadcast %cst_138 : f32 to vector<64x16xf32>
    %484 = arith.mulf %483, %482 : vector<64x16xf32>
    %cst_139 = arith.constant 4.471500e-02 : f32
    %485 = vector.broadcast %cst_139 : f32 to vector<64x16xf32>
    %486 = arith.mulf %485, %482 : vector<64x16xf32>
    %487 = arith.mulf %486, %482 : vector<64x16xf32>
    %488 = arith.mulf %487, %482 : vector<64x16xf32>
    %489 = arith.addf %482, %488 : vector<64x16xf32>
    %cst_140 = arith.constant 0.797884583 : f32
    %490 = vector.broadcast %cst_140 : f32 to vector<64x16xf32>
    %491 = arith.mulf %490, %489 : vector<64x16xf32>
    %492 = math.tanh %491 : vector<64x16xf32>
    %cst_141 = arith.constant 1.000000e+00 : f32
    %493 = vector.broadcast %cst_141 : f32 to vector<64x16xf32>
    %494 = arith.addf %493, %492 : vector<64x16xf32>
    %495 = arith.mulf %484, %494 : vector<64x16xf32>
    %cst_142 = arith.constant dense<0xFF800000> : vector<64xf32>
    %496 = vector.multi_reduction <maximumf>, %495, %cst_142 [1] : vector<64x16xf32> to vector<64xf32>
    %497 = vector.shape_cast %496 : vector<64xf32> to vector<64x1xf32>
    %498 = vector.broadcast %497 : vector<64x1xf32> to vector<64x16xf32>
    %499 = arith.subf %495, %498 : vector<64x16xf32>
    %500 = math.exp %499 : vector<64x16xf32>
    %cst_143 = arith.constant dense<0.000000e+00> : vector<64xf32>
    %501 = vector.multi_reduction <add>, %500, %cst_143 [1] : vector<64x16xf32> to vector<64xf32>
    %502 = vector.shape_cast %501 : vector<64xf32> to vector<64x1xf32>
    %503 = tpu.reciprocal %502 {approx = true} : vector<64x1xf32> -> vector<64x1xf32>
    %504 = vector.broadcast %503 : vector<64x1xf32> to vector<64x16xf32>
    %505 = arith.mulf %500, %504 : vector<64x16xf32>
    %506 = arith.truncf %505 : vector<64x16xf32> to vector<64x16xbf16>
    %507 = arith.truncf %505 : vector<64x16xf32> to vector<64x16xbf16>
    %cst_144 = arith.constant dense<0.000000e+00> : vector<64x64xf32>
    %508 = tpu.matmul %506, %507, %cst_144 {dimension_numbers = #tpu.dot_dimension_numbers<[1], [1], [0], [0], [0, 0, 1, 0], [], []>} : vector<64x16xbf16>, vector<64x16xbf16>, vector<64x64xf32> -> vector<64x64xf32>
    %509 = arith.mulf %478, %508 : vector<64x64xf32>
    %cst_145 = arith.constant dense<0xFF800000> : vector<64xf32>
    %510 = vector.multi_reduction <maximumf>, %509, %cst_145 [1] : vector<64x64xf32> to vector<64xf32>
    %511 = vector.shape_cast %510 : vector<64xf32> to vector<64x1xf32>
    %512 = vector.broadcast %511 : vector<64x1xf32> to vector<64x64xf32>
    %513 = arith.subf %509, %512 : vector<64x64xf32>
    %514 = math.exp %513 : vector<64x64xf32>
    %cst_146 = arith.constant dense<0.000000e+00> : vector<64xf32>
    %515 = vector.multi_reduction <add>, %514, %cst_146 [1] : vector<64x64xf32> to vector<64xf32>
    %516 = vector.shape_cast %515 : vector<64xf32> to vector<64x1xf32>
    %517 = tpu.reciprocal %516 {approx = true} : vector<64x1xf32> -> vector<64x1xf32>
    %518 = vector.broadcast %517 : vector<64x1xf32> to vector<64x64xf32>
    %519 = arith.mulf %514, %518 : vector<64x64xf32>
    %520 = arith.index_cast %arg1 : i32 to index
    %c2_147 = arith.constant 2 : index
    %521 = memref.load %arg3[%520, %c2_147] : memref<2x4xf32, #tpu.memory_space<smem>>
    %cst_148 = arith.constant 1.000000e+00 : f32
    %522 = arith.subf %cst_148, %521 : f32
    %523 = vector.broadcast %522 : f32 to vector<64x64xf32>
    %524 = arith.mulf %523, %519 : vector<64x64xf32>
    %525 = vector.broadcast %521 : f32 to vector<64x64xf32>
    %526 = arith.mulf %525, %508 : vector<64x64xf32>
    %527 = arith.addf %524, %526 : vector<64x64xf32>
    %cst_149 = arith.constant dense<0.000000e+00> : vector<64xf32>
    %528 = vector.multi_reduction <add>, %527, %cst_149 [0] : vector<64x64xf32> to vector<64xf32>
    %529 = vector.shape_cast %528 : vector<64xf32> to vector<1x64xf32>
    %cst_150 = arith.constant 9.99999993E-9 : f32
    %530 = vector.broadcast %cst_150 : f32 to vector<1x64xf32>
    %531 = arith.addf %529, %530 : vector<1x64xf32>
    %532 = tpu.reciprocal %531 {approx = true} : vector<1x64xf32> -> vector<1x64xf32>
    %533 = vector.broadcast %532 : vector<1x64xf32> to vector<64x64xf32>
    %534 = arith.mulf %527, %533 : vector<64x64xf32>
    %535 = arith.truncf %534 : vector<64x64xf32> to vector<64x64xbf16>
    %536 = arith.truncf %475 : vector<64x8xf32> to vector<64x8xbf16>
    %cst_151 = arith.constant dense<0.000000e+00> : vector<64x8xf32>
    %537 = tpu.matmul %535, %536, %cst_151 {dimension_numbers = #tpu.dot_dimension_numbers<[1], [0], [0], [1], [0, 0, 1, 1], [], []>} : vector<64x64xbf16>, vector<64x8xbf16>, vector<64x8xf32> -> vector<64x8xf32>
    %538 = vector.extract_strided_slice %39 {offsets = [16, 0], sizes = [8, 32], strides = [1, 1]} : vector<32x32xbf16> to vector<8x32xbf16>
    %539 = arith.truncf %537 : vector<64x8xf32> to vector<64x8xbf16>
    %cst_152 = arith.constant dense<0.000000e+00> : vector<64x32xf32>
    %540 = tpu.matmul %539, %538, %cst_152 {dimension_numbers = #tpu.dot_dimension_numbers<[1], [0], [0], [1], [0, 0, 1, 1], [], []>} : vector<64x8xbf16>, vector<8x32xbf16>, vector<64x32xf32> -> vector<64x32xf32>
    %541 = arith.addf %470, %540 : vector<64x32xf32>
    %542 = vector.extract_strided_slice %37 {offsets = [64, 24], sizes = [64, 8], strides = [1, 1]} : vector<128x96xf32> to vector<64x8xf32>
    %cst_153 = arith.constant 0.353553385 : f32
    %543 = vector.broadcast %cst_153 : f32 to vector<64x8xf32>
    %544 = arith.mulf %542, %543 : vector<64x8xf32>
    %545 = vector.extract_strided_slice %37 {offsets = [64, 56], sizes = [64, 8], strides = [1, 1]} : vector<128x96xf32> to vector<64x8xf32>
    %546 = vector.extract_strided_slice %37 {offsets = [64, 88], sizes = [64, 8], strides = [1, 1]} : vector<128x96xf32> to vector<64x8xf32>
    %547 = arith.truncf %544 : vector<64x8xf32> to vector<64x8xbf16>
    %548 = arith.truncf %545 : vector<64x8xf32> to vector<64x8xbf16>
    %cst_154 = arith.constant dense<0.000000e+00> : vector<64x64xf32>
    %549 = tpu.matmul %547, %548, %cst_154 {dimension_numbers = #tpu.dot_dimension_numbers<[1], [1], [0], [0], [0, 0, 1, 0], [], []>} : vector<64x8xbf16>, vector<64x8xbf16>, vector<64x64xf32> -> vector<64x64xf32>
    %550 = vector.extract_strided_slice %41 {offsets = [3, 0, 0], sizes = [1, 16, 8], strides = [1, 1, 1]} : vector<4x16x8xbf16> to vector<1x16x8xbf16>
    %551 = vector.shape_cast %550 : vector<1x16x8xbf16> to vector<16x8xbf16>
    %552 = arith.truncf %546 : vector<64x8xf32> to vector<64x8xbf16>
    %cst_155 = arith.constant dense<0.000000e+00> : vector<64x16xf32>
    %553 = tpu.matmul %552, %551, %cst_155 {dimension_numbers = #tpu.dot_dimension_numbers<[1], [1], [0], [0], [0, 0, 1, 0], [], []>} : vector<64x8xbf16>, vector<16x8xbf16>, vector<64x16xf32> -> vector<64x16xf32>
    %cst_156 = arith.constant 5.000000e-01 : f32
    %554 = vector.broadcast %cst_156 : f32 to vector<64x16xf32>
    %555 = arith.mulf %554, %553 : vector<64x16xf32>
    %cst_157 = arith.constant 4.471500e-02 : f32
    %556 = vector.broadcast %cst_157 : f32 to vector<64x16xf32>
    %557 = arith.mulf %556, %553 : vector<64x16xf32>
    %558 = arith.mulf %557, %553 : vector<64x16xf32>
    %559 = arith.mulf %558, %553 : vector<64x16xf32>
    %560 = arith.addf %553, %559 : vector<64x16xf32>
    %cst_158 = arith.constant 0.797884583 : f32
    %561 = vector.broadcast %cst_158 : f32 to vector<64x16xf32>
    %562 = arith.mulf %561, %560 : vector<64x16xf32>
    %563 = math.tanh %562 : vector<64x16xf32>
    %cst_159 = arith.constant 1.000000e+00 : f32
    %564 = vector.broadcast %cst_159 : f32 to vector<64x16xf32>
    %565 = arith.addf %564, %563 : vector<64x16xf32>
    %566 = arith.mulf %555, %565 : vector<64x16xf32>
    %cst_160 = arith.constant dense<0xFF800000> : vector<64xf32>
    %567 = vector.multi_reduction <maximumf>, %566, %cst_160 [1] : vector<64x16xf32> to vector<64xf32>
    %568 = vector.shape_cast %567 : vector<64xf32> to vector<64x1xf32>
    %569 = vector.broadcast %568 : vector<64x1xf32> to vector<64x16xf32>
    %570 = arith.subf %566, %569 : vector<64x16xf32>
    %571 = math.exp %570 : vector<64x16xf32>
    %cst_161 = arith.constant dense<0.000000e+00> : vector<64xf32>
    %572 = vector.multi_reduction <add>, %571, %cst_161 [1] : vector<64x16xf32> to vector<64xf32>
    %573 = vector.shape_cast %572 : vector<64xf32> to vector<64x1xf32>
    %574 = tpu.reciprocal %573 {approx = true} : vector<64x1xf32> -> vector<64x1xf32>
    %575 = vector.broadcast %574 : vector<64x1xf32> to vector<64x16xf32>
    %576 = arith.mulf %571, %575 : vector<64x16xf32>
    %577 = arith.truncf %576 : vector<64x16xf32> to vector<64x16xbf16>
    %578 = arith.truncf %576 : vector<64x16xf32> to vector<64x16xbf16>
    %cst_162 = arith.constant dense<0.000000e+00> : vector<64x64xf32>
    %579 = tpu.matmul %577, %578, %cst_162 {dimension_numbers = #tpu.dot_dimension_numbers<[1], [1], [0], [0], [0, 0, 1, 0], [], []>} : vector<64x16xbf16>, vector<64x16xbf16>, vector<64x64xf32> -> vector<64x64xf32>
    %580 = arith.mulf %549, %579 : vector<64x64xf32>
    %cst_163 = arith.constant dense<0xFF800000> : vector<64xf32>
    %581 = vector.multi_reduction <maximumf>, %580, %cst_163 [1] : vector<64x64xf32> to vector<64xf32>
    %582 = vector.shape_cast %581 : vector<64xf32> to vector<64x1xf32>
    %583 = vector.broadcast %582 : vector<64x1xf32> to vector<64x64xf32>
    %584 = arith.subf %580, %583 : vector<64x64xf32>
    %585 = math.exp %584 : vector<64x64xf32>
    %cst_164 = arith.constant dense<0.000000e+00> : vector<64xf32>
    %586 = vector.multi_reduction <add>, %585, %cst_164 [1] : vector<64x64xf32> to vector<64xf32>
    %587 = vector.shape_cast %586 : vector<64xf32> to vector<64x1xf32>
    %588 = tpu.reciprocal %587 {approx = true} : vector<64x1xf32> -> vector<64x1xf32>
    %589 = vector.broadcast %588 : vector<64x1xf32> to vector<64x64xf32>
    %590 = arith.mulf %585, %589 : vector<64x64xf32>
    %591 = arith.index_cast %arg1 : i32 to index
    %c3_165 = arith.constant 3 : index
    %592 = memref.load %arg3[%591, %c3_165] : memref<2x4xf32, #tpu.memory_space<smem>>
    %cst_166 = arith.constant 1.000000e+00 : f32
    %593 = arith.subf %cst_166, %592 : f32
    %594 = vector.broadcast %593 : f32 to vector<64x64xf32>
    %595 = arith.mulf %594, %590 : vector<64x64xf32>
    %596 = vector.broadcast %592 : f32 to vector<64x64xf32>
    %597 = arith.mulf %596, %579 : vector<64x64xf32>
    %598 = arith.addf %595, %597 : vector<64x64xf32>
    %cst_167 = arith.constant dense<0.000000e+00> : vector<64xf32>
    %599 = vector.multi_reduction <add>, %598, %cst_167 [0] : vector<64x64xf32> to vector<64xf32>
    %600 = vector.shape_cast %599 : vector<64xf32> to vector<1x64xf32>
    %cst_168 = arith.constant 9.99999993E-9 : f32
    %601 = vector.broadcast %cst_168 : f32 to vector<1x64xf32>
    %602 = arith.addf %600, %601 : vector<1x64xf32>
    %603 = tpu.reciprocal %602 {approx = true} : vector<1x64xf32> -> vector<1x64xf32>
    %604 = vector.broadcast %603 : vector<1x64xf32> to vector<64x64xf32>
    %605 = arith.mulf %598, %604 : vector<64x64xf32>
    %606 = arith.truncf %605 : vector<64x64xf32> to vector<64x64xbf16>
    %607 = arith.truncf %546 : vector<64x8xf32> to vector<64x8xbf16>
    %cst_169 = arith.constant dense<0.000000e+00> : vector<64x8xf32>
    %608 = tpu.matmul %606, %607, %cst_169 {dimension_numbers = #tpu.dot_dimension_numbers<[1], [0], [0], [1], [0, 0, 1, 1], [], []>} : vector<64x64xbf16>, vector<64x8xbf16>, vector<64x8xf32> -> vector<64x8xf32>
    %609 = vector.extract_strided_slice %39 {offsets = [24, 0], sizes = [8, 32], strides = [1, 1]} : vector<32x32xbf16> to vector<8x32xbf16>
    %610 = arith.truncf %608 : vector<64x8xf32> to vector<64x8xbf16>
    %cst_170 = arith.constant dense<0.000000e+00> : vector<64x32xf32>
    %611 = tpu.matmul %610, %609, %cst_170 {dimension_numbers = #tpu.dot_dimension_numbers<[1], [0], [0], [1], [0, 0, 1, 1], [], []>} : vector<64x8xbf16>, vector<8x32xbf16>, vector<64x32xf32> -> vector<64x32xf32>
    %612 = arith.addf %541, %611 : vector<64x32xf32>
    %c64 = arith.constant 64 : index
    %c0_171 = arith.constant 0 : index
    %613 = vector.load %arg21[%c64, %c0_171] : memref<128x32xf32, #tpu.memory_space<vmem>>, vector<64x32xf32>
    tpu.vector_store %arg21[%c64, %c0_171], %612 {strides = array<i32>} : memref<128x32xf32, #tpu.memory_space<vmem>>, vector<64x32xf32>,
    %c0_172 = arith.constant 0 : index
    %c0_173 = arith.constant 0 : index
    %614 = vector.load %arg21[%c0_172, %c0_173] : memref<128x32xf32, #tpu.memory_space<vmem>>, vector<128x32xf32>
    %615 = arith.addf %3, %614 : vector<128x32xf32>
    %c0_174 = arith.constant 0 : index
    %c0_175 = arith.constant 0 : index
    %c0_176 = arith.constant 0 : index
    %616 = vector.load %arg10[%c0_174, %c0_175, %c0_176] : memref<1x1x32xf32, #tpu.memory_space<vmem>>, vector<1x1x32xf32>
    %617 = vector.shape_cast %616 : vector<1x1x32xf32> to vector<1x32xf32>
    %618 = vector.broadcast %617 : vector<1x32xf32> to vector<128x32xf32>
    %619 = arith.addf %615, %618 : vector<128x32xf32>
    %c0_177 = arith.constant 0 : index
    %c0_178 = arith.constant 0 : index
    %c0_179 = arith.constant 0 : index
    %620 = vector.load %arg11[%c0_177, %c0_178, %c0_179] : memref<1x1x32xf32, #tpu.memory_space<vmem>>, vector<1x1x32xf32>
    %621 = vector.shape_cast %620 : vector<1x1x32xf32> to vector<1x32xf32>
    %c0_180 = arith.constant 0 : index
    %c0_181 = arith.constant 0 : index
    %c0_182 = arith.constant 0 : index
    %622 = vector.load %arg12[%c0_180, %c0_181, %c0_182] : memref<1x1x32xf32, #tpu.memory_space<vmem>>, vector<1x1x32xf32>
    %623 = vector.shape_cast %622 : vector<1x1x32xf32> to vector<1x32xf32>
    %cst_183 = arith.constant dense<0.000000e+00> : vector<128xf32>
    %624 = vector.multi_reduction <add>, %619, %cst_183 [1] : vector<128x32xf32> to vector<128xf32>
    %625 = vector.shape_cast %624 : vector<128xf32> to vector<128x1xf32>
    %cst_184 = arith.constant 3.200000e+01 : f32
    %626 = vector.broadcast %cst_184 : f32 to vector<128x1xf32>
    %627 = arith.divf %625, %626 : vector<128x1xf32>
    %628 = vector.broadcast %627 : vector<128x1xf32> to vector<128x32xf32>
    %629 = arith.subf %619, %628 : vector<128x32xf32>
    %630 = arith.mulf %629, %629 : vector<128x32xf32>
    %cst_185 = arith.constant dense<0.000000e+00> : vector<128xf32>
    %631 = vector.multi_reduction <add>, %630, %cst_185 [1] : vector<128x32xf32> to vector<128xf32>
    %632 = vector.shape_cast %631 : vector<128xf32> to vector<128x1xf32>
    %cst_186 = arith.constant 3.200000e+01 : f32
    %633 = vector.broadcast %cst_186 : f32 to vector<128x1xf32>
    %634 = arith.divf %632, %633 : vector<128x1xf32>
    %635 = vector.broadcast %627 : vector<128x1xf32> to vector<128x32xf32>
    %636 = arith.subf %619, %635 : vector<128x32xf32>
    %cst_187 = arith.constant 9.99999974E-6 : f32
    %637 = vector.broadcast %cst_187 : f32 to vector<128x1xf32>
    %638 = arith.addf %634, %637 : vector<128x1xf32>
    %639 = math.rsqrt %638 : vector<128x1xf32>
    %640 = vector.broadcast %639 : vector<128x1xf32> to vector<128x32xf32>
    %641 = arith.mulf %636, %640 : vector<128x32xf32>
    %642 = vector.broadcast %621 : vector<1x32xf32> to vector<128x32xf32>
    %643 = arith.mulf %641, %642 : vector<128x32xf32>
    %644 = vector.broadcast %623 : vector<1x32xf32> to vector<128x32xf32>
    %645 = arith.addf %643, %644 : vector<128x32xf32>
    %c0_188 = arith.constant 0 : index
    %c0_189 = arith.constant 0 : index
    %c0_190 = arith.constant 0 : index
    %646 = vector.load %arg13[%c0_188, %c0_189, %c0_190] : memref<1x32x64xbf16, #tpu.memory_space<vmem>>, vector<1x32x64xbf16>
    %647 = vector.shape_cast %646 : vector<1x32x64xbf16> to vector<32x64xbf16>
    %648 = arith.truncf %645 : vector<128x32xf32> to vector<128x32xbf16>
    %cst_191 = arith.constant dense<0.000000e+00> : vector<128x64xf32>
    %649 = tpu.matmul %648, %647, %cst_191 {dimension_numbers = #tpu.dot_dimension_numbers<[1], [0], [0], [1], [0, 0, 1, 1], [], []>} : vector<128x32xbf16>, vector<32x64xbf16>, vector<128x64xf32> -> vector<128x64xf32>
    %c0_192 = arith.constant 0 : index
    %c0_193 = arith.constant 0 : index
    %c0_194 = arith.constant 0 : index
    %650 = vector.load %arg14[%c0_192, %c0_193, %c0_194] : memref<1x1x64xf32, #tpu.memory_space<vmem>>, vector<1x1x64xf32>
    %651 = vector.shape_cast %650 : vector<1x1x64xf32> to vector<1x64xf32>
    %652 = vector.broadcast %651 : vector<1x64xf32> to vector<128x64xf32>
    %653 = arith.addf %649, %652 : vector<128x64xf32>
    %cst_195 = arith.constant 5.000000e-01 : f32
    %654 = vector.broadcast %cst_195 : f32 to vector<128x64xf32>
    %655 = arith.mulf %654, %653 : vector<128x64xf32>
    %cst_196 = arith.constant 4.471500e-02 : f32
    %656 = vector.broadcast %cst_196 : f32 to vector<128x64xf32>
    %657 = arith.mulf %656, %653 : vector<128x64xf32>
    %658 = arith.mulf %657, %653 : vector<128x64xf32>
    %659 = arith.mulf %658, %653 : vector<128x64xf32>
    %660 = arith.addf %653, %659 : vector<128x64xf32>
    %cst_197 = arith.constant 0.797884583 : f32
    %661 = vector.broadcast %cst_197 : f32 to vector<128x64xf32>
    %662 = arith.mulf %661, %660 : vector<128x64xf32>
    %663 = math.tanh %662 : vector<128x64xf32>
    %cst_198 = arith.constant 1.000000e+00 : f32
    %664 = vector.broadcast %cst_198 : f32 to vector<128x64xf32>
    %665 = arith.addf %664, %663 : vector<128x64xf32>
    %666 = arith.mulf %655, %665 : vector<128x64xf32>
    %c0_199 = arith.constant 0 : index
    %c0_200 = arith.constant 0 : index
    %c0_201 = arith.constant 0 : index
    %667 = vector.load %arg15[%c0_199, %c0_200, %c0_201] : memref<1x64x32xbf16, #tpu.memory_space<vmem>>, vector<1x64x32xbf16>
    %668 = vector.shape_cast %667 : vector<1x64x32xbf16> to vector<64x32xbf16>
    %669 = arith.truncf %666 : vector<128x64xf32> to vector<128x64xbf16>
    %cst_202 = arith.constant dense<0.000000e+00> : vector<128x32xf32>
    %670 = tpu.matmul %669, %668, %cst_202 {dimension_numbers = #tpu.dot_dimension_numbers<[1], [0], [0], [1], [0, 0, 1, 1], [], []>} : vector<128x64xbf16>, vector<64x32xbf16>, vector<128x32xf32> -> vector<128x32xf32>
    %c0_203 = arith.constant 0 : index
    %c0_204 = arith.constant 0 : index
    %c0_205 = arith.constant 0 : index
    %671 = vector.load %arg16[%c0_203, %c0_204, %c0_205] : memref<1x1x32xf32, #tpu.memory_space<vmem>>, vector<1x1x32xf32>
    %672 = vector.shape_cast %671 : vector<1x1x32xf32> to vector<1x32xf32>
    %673 = vector.broadcast %672 : vector<1x32xf32> to vector<128x32xf32>
    %674 = arith.addf %670, %673 : vector<128x32xf32>
    %675 = arith.addf %619, %674 : vector<128x32xf32>
    %c0_206 = arith.constant 0 : index
    %c0_207 = arith.constant 0 : index
    %676 = vector.load %arg20[%c0_206, %c0_207] : memref<128x32xf32, #tpu.memory_space<vmem>>, vector<128x32xf32>
    tpu.vector_store %arg20[%c0_206, %c0_207], %675 {strides = array<i32>} : memref<128x32xf32, #tpu.memory_space<vmem>>, vector<128x32xf32>,
    %c1_i32 = arith.constant 1 : i32
    %677 = arith.cmpi eq, %arg1, %c1_i32 : i32
    %678 = arith.extui %677 : i1 to i32
    %c0_i32_208 = arith.constant 0 : i32
    %679 = arith.cmpi ne, %678, %c0_i32_208 : i32
    scf.if %679 {
      %c0_209 = arith.constant 0 : index
      %c0_210 = arith.constant 0 : index
      %680 = vector.load %arg17[%c0_209, %c0_210] : memref<1x32xf32, #tpu.memory_space<vmem>>, vector<1x32xf32>
      %c0_211 = arith.constant 0 : index
      %c0_212 = arith.constant 0 : index
      %681 = vector.load %arg18[%c0_211, %c0_212] : memref<1x32xf32, #tpu.memory_space<vmem>>, vector<1x32xf32>
      %cst_213 = arith.constant dense<0.000000e+00> : vector<128xf32>
      %682 = vector.multi_reduction <add>, %675, %cst_213 [1] : vector<128x32xf32> to vector<128xf32>
      %683 = vector.shape_cast %682 : vector<128xf32> to vector<128x1xf32>
      %cst_214 = arith.constant 3.200000e+01 : f32
      %684 = vector.broadcast %cst_214 : f32 to vector<128x1xf32>
      %685 = arith.divf %683, %684 : vector<128x1xf32>
      %686 = vector.broadcast %685 : vector<128x1xf32> to vector<128x32xf32>
      %687 = arith.subf %675, %686 : vector<128x32xf32>
      %688 = arith.mulf %687, %687 : vector<128x32xf32>
      %cst_215 = arith.constant dense<0.000000e+00> : vector<128xf32>
      %689 = vector.multi_reduction <add>, %688, %cst_215 [1] : vector<128x32xf32> to vector<128xf32>
      %690 = vector.shape_cast %689 : vector<128xf32> to vector<128x1xf32>
      %cst_216 = arith.constant 3.200000e+01 : f32
      %691 = vector.broadcast %cst_216 : f32 to vector<128x1xf32>
      %692 = arith.divf %690, %691 : vector<128x1xf32>
      %693 = vector.broadcast %685 : vector<128x1xf32> to vector<128x32xf32>
      %694 = arith.subf %675, %693 : vector<128x32xf32>
      %cst_217 = arith.constant 9.99999974E-6 : f32
      %695 = vector.broadcast %cst_217 : f32 to vector<128x1xf32>
      %696 = arith.addf %692, %695 : vector<128x1xf32>
      %697 = math.rsqrt %696 : vector<128x1xf32>
      %698 = vector.broadcast %697 : vector<128x1xf32> to vector<128x32xf32>
      %699 = arith.mulf %694, %698 : vector<128x32xf32>
      %700 = vector.broadcast %680 : vector<1x32xf32> to vector<128x32xf32>
      %701 = arith.mulf %699, %700 : vector<128x32xf32>
      %702 = vector.broadcast %681 : vector<1x32xf32> to vector<128x32xf32>
      %703 = arith.addf %701, %702 : vector<128x32xf32>
      %704 = vector.shape_cast %703 : vector<128x32xf32> to vector<2x64x32xf32>
      %c0_218 = arith.constant 0 : index
      %c0_219 = arith.constant 0 : index
      %c0_220 = arith.constant 0 : index
      %705 = vector.load %arg19[%c0_218, %c0_219, %c0_220] : memref<2x64x32xf32, #tpu.memory_space<vmem>>, vector<2x64x32xf32>
      tpu.vector_store %arg19[%c0_218, %c0_219, %c0_220], %704 {strides = array<i32>} : memref<2x64x32xf32, #tpu.memory_space<vmem>>, vector<2x64x32xf32>,
    } else {
    }
    return
  }
  func.func @transform_0(%arg0: i32, %arg1: i32) -> (i32, i32, i32) {
    %c0_i32 = arith.constant 0 : i32
    %c0_i32_0 = arith.constant 0 : i32
    %c0_i32_1 = arith.constant 0 : i32
    return %arg0, %c0_i32, %c0_i32_0 : i32, i32, i32
  }
  func.func @transform_1(%arg0: i32, %arg1: i32) -> (i32, i32) {
    %c0_i32 = arith.constant 0 : i32
    %c0_i32_0 = arith.constant 0 : i32
    %c0_i32_1 = arith.constant 0 : i32
    return %c0_i32, %c0_i32_0 : i32, i32
  }
  func.func @transform_2(%arg0: i32, %arg1: i32) -> (i32, i32, i32) {
    %c0_i32 = arith.constant 0 : i32
    %c0_i32_0 = arith.constant 0 : i32
    %c0_i32_1 = arith.constant 0 : i32
    return %arg1, %c0_i32, %c0_i32_0 : i32, i32, i32
  }
  func.func @transform_3(%arg0: i32, %arg1: i32) -> (i32, i32, i32) {
    %c0_i32 = arith.constant 0 : i32
    %c0_i32_0 = arith.constant 0 : i32
    %c0_i32_1 = arith.constant 0 : i32
    return %arg1, %c0_i32, %c0_i32_0 : i32, i32, i32
  }
  func.func @transform_4(%arg0: i32, %arg1: i32) -> (i32, i32, i32) {
    %c0_i32 = arith.constant 0 : i32
    %c0_i32_0 = arith.constant 0 : i32
    %c0_i32_1 = arith.constant 0 : i32
    return %arg1, %c0_i32, %c0_i32_0 : i32, i32, i32
  }
  func.func @transform_5(%arg0: i32, %arg1: i32) -> (i32, i32, i32) {
    %c0_i32 = arith.constant 0 : i32
    %c0_i32_0 = arith.constant 0 : i32
    %c0_i32_1 = arith.constant 0 : i32
    return %arg1, %c0_i32, %c0_i32_0 : i32, i32, i32
  }
  func.func @transform_6(%arg0: i32, %arg1: i32) -> (i32, i32, i32, i32) {
    %c0_i32 = arith.constant 0 : i32
    %c0_i32_0 = arith.constant 0 : i32
    %c0_i32_1 = arith.constant 0 : i32
    %c0_i32_2 = arith.constant 0 : i32
    return %arg1, %c0_i32, %c0_i32_0, %c0_i32_1 : i32, i32, i32, i32
  }
  func.func @transform_7(%arg0: i32, %arg1: i32) -> (i32, i32, i32) {
    %c0_i32 = arith.constant 0 : i32
    %c0_i32_0 = arith.constant 0 : i32
    %c0_i32_1 = arith.constant 0 : i32
    return %arg1, %c0_i32, %c0_i32_0 : i32, i32, i32
  }
  func.func @transform_8(%arg0: i32, %arg1: i32) -> (i32, i32, i32) {
    %c0_i32 = arith.constant 0 : i32
    %c0_i32_0 = arith.constant 0 : i32
    %c0_i32_1 = arith.constant 0 : i32
    return %arg1, %c0_i32, %c0_i32_0 : i32, i32, i32
  }
  func.func @transform_9(%arg0: i32, %arg1: i32) -> (i32, i32, i32) {
    %c0_i32 = arith.constant 0 : i32
    %c0_i32_0 = arith.constant 0 : i32
    %c0_i32_1 = arith.constant 0 : i32
    return %arg1, %c0_i32, %c0_i32_0 : i32, i32, i32
  }
  func.func @transform_10(%arg0: i32, %arg1: i32) -> (i32, i32, i32) {
    %c0_i32 = arith.constant 0 : i32
    %c0_i32_0 = arith.constant 0 : i32
    %c0_i32_1 = arith.constant 0 : i32
    return %arg1, %c0_i32, %c0_i32_0 : i32, i32, i32
  }
  func.func @transform_11(%arg0: i32, %arg1: i32) -> (i32, i32, i32) {
    %c0_i32 = arith.constant 0 : i32
    %c0_i32_0 = arith.constant 0 : i32
    %c0_i32_1 = arith.constant 0 : i32
    return %arg1, %c0_i32, %c0_i32_0 : i32, i32, i32
  }
  func.func @transform_12(%arg0: i32, %arg1: i32) -> (i32, i32, i32) {
    %c0_i32 = arith.constant 0 : i32
    %c0_i32_0 = arith.constant 0 : i32
    %c0_i32_1 = arith.constant 0 : i32
    return %arg1, %c0_i32, %c0_i32_0 : i32, i32, i32
  }
  func.func @transform_13(%arg0: i32, %arg1: i32) -> (i32, i32, i32) {
    %c0_i32 = arith.constant 0 : i32
    %c0_i32_0 = arith.constant 0 : i32
    %c0_i32_1 = arith.constant 0 : i32
    return %arg1, %c0_i32, %c0_i32_0 : i32, i32, i32
  }
  func.func @transform_14(%arg0: i32, %arg1: i32) -> (i32, i32, i32) {
    %c0_i32 = arith.constant 0 : i32
    %c0_i32_0 = arith.constant 0 : i32
    %c0_i32_1 = arith.constant 0 : i32
    return %arg1, %c0_i32, %c0_i32_0 : i32, i32, i32
  }
  func.func @transform_15(%arg0: i32, %arg1: i32) -> (i32, i32) {
    %c0_i32 = arith.constant 0 : i32
    %c0_i32_0 = arith.constant 0 : i32
    %c0_i32_1 = arith.constant 0 : i32
    return %c0_i32, %c0_i32_0 : i32, i32
  }
  func.func @transform_16(%arg0: i32, %arg1: i32) -> (i32, i32) {
    %c0_i32 = arith.constant 0 : i32
    %c0_i32_0 = arith.constant 0 : i32
    %c0_i32_1 = arith.constant 0 : i32
    return %c0_i32, %c0_i32_0 : i32, i32
  }
  func.func @transform_17(%arg0: i32, %arg1: i32) -> (i32, i32, i32) {
    %c0_i32 = arith.constant 0 : i32
    %c0_i32_0 = arith.constant 0 : i32
    %c0_i32_1 = arith.constant 0 : i32
    return %arg0, %c0_i32, %c0_i32_0 : i32, i32, i32
  }
}

</mosaic_0001>

<llo_original>
// kernel: transformer_forward.1
$region0: #{transformer_forward.1}
  #allocation0 [shape = 'u32[]', space=smem, size = 0x4, offset = 0x4, fixed_abs, tag = 'smem constant byte address 0x4 - core index']
  #allocation1 [shape = 'u32[144,128]{1,0:T(1,128)}', space=vmem, size = 0x12000, scoped, tag = 'internal scratch']
  #allocation2 [shape = 'f32[128,32]{1,0:T(8,128)}', space=vmem, size = 0x10000, scoped, tag = 'scratch operand']
  #allocation3 [shape = 'f32[128,32]{1,0:T(8,128)}', space=vmem, size = 0x10000, scoped, tag = 'scratch operand']
  %s0 = inlined_call_operand.hbm [shape: f32[4,64,32], index: 0, kind: input, shape index: {}]
  %s1 = inlined_call_operand.hbm [shape: f32[2,4], index: 1, kind: input, shape index: {}]
  %s2 = inlined_call_operand.hbm [shape: f32[2,1,32], index: 2, kind: input, shape index: {}]
  %s3 = inlined_call_operand.hbm [shape: f32[2,1,32], index: 3, kind: input, shape index: {}]
  %s4 = inlined_call_operand.hbm [shape: bf16[2,32,96], index: 4, kind: input, shape index: {}]
  %s5 = inlined_call_operand.hbm [shape: f32[2,1,96], index: 5, kind: input, shape index: {}]
  %s6 = inlined_call_operand.hbm [shape: bf16[2,4,16,8], index: 6, kind: input, shape index: {}]
  %s7 = inlined_call_operand.hbm [shape: bf16[2,32,32], index: 7, kind: input, shape index: {}]
  %s8 = inlined_call_operand.hbm [shape: f32[2,1,32], index: 8, kind: input, shape index: {}]
  %s9 = inlined_call_operand.hbm [shape: f32[2,1,32], index: 9, kind: input, shape index: {}]
  %s10 = inlined_call_operand.hbm [shape: f32[2,1,32], index: 10, kind: input, shape index: {}]
  %s11 = inlined_call_operand.hbm [shape: bf16[2,32,64], index: 11, kind: input, shape index: {}]
  %s12 = inlined_call_operand.hbm [shape: f32[2,1,64], index: 12, kind: input, shape index: {}]
  %s13 = inlined_call_operand.hbm [shape: bf16[2,64,32], index: 13, kind: input, shape index: {}]
  %s14 = inlined_call_operand.hbm [shape: f32[2,1,32], index: 14, kind: input, shape index: {}]
  %s15 = inlined_call_operand.hbm [shape: f32[1,32], index: 15, kind: input, shape index: {}]
  %s16 = inlined_call_operand.hbm [shape: f32[1,32], index: 16, kind: input, shape index: {}]
  %s17 = inlined_call_operand.hbm [shape: f32[4,64,32], index: 17, kind: output, shape index: {}]
  %s18 = sld [smem:[#allocation0]]
  $region177: #{transformer_forward.1} parent=0
    _
  %s20 = ssub.s32 1, %s18
  %s21 = scalar_select 0, %s20, %s18
  $region1: #{transformer_forward.1} parent=0
    #allocation4 [shape = 'u8[131072]{0}', space=vmem, size = 0x20000, scoped, tag = 'input window, operand 0']
    #allocation5 [shape = 's32[2]{0}', space=sflag, size = 0x8, scoped, tag = 'scoped memory for transformer_forward.1']
    #allocation6 [shape = 's32[2]{0}', space=sflag, size = 0x8, scoped, tag = 'scoped memory for transformer_forward.1']
    #allocation7 [shape = 's32[2]{0}', space=sflag, size = 0x8, scoped, tag = 'scoped memory for transformer_forward.1']
    #allocation8 [shape = 'u8[1024]{0}', space=smem, size = 0x400, scoped, tag = 'input window, operand 1, single buffered']
    #allocation9 [shape = 'u8[1024]{0}', space=vmem, size = 0x400, scoped, tag = 'input window, operand 2']
    #allocation10 [shape = 's32[2]{0}', space=sflag, size = 0x8, scoped, tag = 'scoped memory for transformer_forward.1']
    #allocation11 [shape = 'u8[1024]{0}', space=vmem, size = 0x400, scoped, tag = 'input window, operand 3']
    #allocation12 [shape = 'u8[16384]{0}', space=vmem, size = 0x4000, scoped, tag = 'input window, operand 4']
    #allocation13 [shape = 's32[2]{0}', space=sflag, size = 0x8, scoped, tag = 'scoped memory for transformer_forward.1']
    #allocation14 [shape = 'u8[1024]{0}', space=vmem, size = 0x400, scoped, tag = 'input window, operand 5']
    #allocation15 [shape = 'u8[32768]{0}', space=vmem, size = 0x8000, scoped, tag = 'input window, operand 6']
    #allocation16 [shape = 's32[2]{0}', space=sflag, size = 0x8, scoped, tag = 'scoped memory for transformer_forward.1']
    #allocation17 [shape = 'u8[16384]{0}', space=vmem, size = 0x4000, scoped, tag = 'input window, operand 7']
    #allocation18 [shape = 'u8[1024]{0}', space=vmem, size = 0x400, scoped, tag = 'input window, operand 8']
    #allocation19 [shape = 's32[2]{0}', space=sflag, size = 0x8, scoped, tag = 'scoped memory for transformer_forward.1']
    #allocation20 [shape = 'u8[1024]{0}', space=vmem, size = 0x400, scoped, tag = 'input window, operand 9']
    #allocation21 [shape = 'u8[1024]{0}', space=vmem, size = 0x400, scoped, tag = 'input window, operand 10']
    #allocation22 [shape = 's32[2]{0}', space=sflag, size = 0x8, scoped, tag = 'scoped memory for transformer_forward.1']
    #allocation23 [shape = 'u8[16384]{0}', space=vmem, size = 0x4000, scoped, tag = 'input window, operand 11']
    #allocation24 [shape = 'u8[1024]{0}', space=vmem, size = 0x400, scoped, tag = 'input window, operand 12']
    #allocation25 [shape = 's32[2]{0}', space=sflag, size = 0x8, scoped, tag = 'scoped memory for transformer_forward.1']
    #allocation26 [shape = 'u8[32768]{0}', space=vmem, size = 0x8000, scoped, tag = 'input window, operand 13']
    #allocation27 [shape = 'u8[1024]{0}', space=vmem, size = 0x400, scoped, tag = 'input window, operand 14']
    #allocation28 [shape = 's32[2]{0}', space=sflag, size = 0x8, scoped, tag = 'scoped memory for transformer_forward.1']
    #allocation29 [shape = 'u8[512]{0}', space=vmem, size = 0x400, scoped, tag = 'input window, operand 15, single buffered']
    #allocation30 [shape = 'u8[512]{0}', space=vmem, size = 0x400, scoped, tag = 'input window, operand 16, single buffered']
    #allocation31 [shape = 's32[1]{0}', space=sflag, size = 0x4, scoped, tag = 'scoped memory for transformer_forward.1']
    #allocation32 [shape = 'u8[131072]{0}', space=vmem, size = 0x20000, scoped, tag = 'output window, operand 0']
    %22 = vsyncpa [#allocation5], 0
    %s23 = scalar_lea.sflag [#allocation5], 1
    %24 = vsyncpa %s23, 0
    %25 = vsyncpa [#allocation7], 0
    %26 = vsyncpa [#allocation10], 0
    %s27 = scalar_lea.sflag [#allocation10], 1
    %28 = vsyncpa %s27, 0
    %29 = vsyncpa [#allocation13], 0
    %s30 = scalar_lea.sflag [#allocation13], 1
    %31 = vsyncpa %s30, 0
    %32 = vsyncpa [#allocation16], 0
    %s33 = scalar_lea.sflag [#allocation16], 1
    %34 = vsyncpa %s33, 0
    %35 = vsyncpa [#allocation19], 0
    %s36 = scalar_lea.sflag [#allocation19], 1
    %37 = vsyncpa %s36, 0
    %38 = vsyncpa [#allocation22], 0
    %s39 = scalar_lea.sflag [#allocation22], 1
    %40 = vsyncpa %s39, 0
    %41 = vsyncpa [#allocation25], 0
    %s42 = scalar_lea.sflag [#allocation25], 1
    %43 = vsyncpa %s42, 0
    %44 = vsyncpa [#allocation28], 0
    %s45 = scalar_lea.sflag [#allocation28], 1
    %46 = vsyncpa %s45, 0
    %47 = vsyncpa [#allocation31], 0
    %48 = vsyncpa [#allocation6], 0
    %s49 = scalar_lea.sflag [#allocation6], 1
    %50 = vsyncpa %s49, 0
    loop: start=0, step=1, limit=6
    $region2: #{transformer_forward.1} parent=1 // loop_pre_header
      _
    $region3: #{transformer_forward.1} parent=1 // loop_header
      %s52 = sphi 0, %s56
      %p53 = scmp.ge.s32.totalorder %s52, 6
      %s59 = sphi 0, %s71
      %s60 = sphi 0, %s67
      %s61 = sphi 0, %s59
      %s62 = sphi 0, %s60
      %s63 = sphi 0, %s61
      %s64 = sphi 0, %s62
      %s74 = sphi 0, %s76
      %s77 = sphi 0, %s74
      %s78 = sphi 0, %s77
      %s94 = sphi 0, %s78
      %s98 = sphi 0, %s98
      %s100 = sphi 0, %s98
      %s101 = sphi 0, %s100
      %s115 = sphi 0, %s101
      %s121 = sphi 0, %s123
      %s124 = sphi 0, %s121
      %s125 = sphi 0, %s124
      %s141 = sphi 0, %s125
      %s147 = sphi 0, %s149
      %s150 = sphi 0, %s147
      %s151 = sphi 0, %s150
      %s167 = sphi 0, %s151
      %s173 = sphi 0, %s175
      %s176 = sphi 0, %s173
      %s177 = sphi 0, %s176
      %s193 = sphi 0, %s177
      %s199 = sphi 0, %s201
      %s202 = sphi 0, %s199
      %s203 = sphi 0, %s202
      %s219 = sphi 0, %s203
      %s225 = sphi 0, %s227
      %s228 = sphi 0, %s225
      %s229 = sphi 0, %s228
      %s245 = sphi 0, %s229
      %s251 = sphi 0, %s253
      %s254 = sphi 0, %s251
      %s255 = sphi 0, %s254
      %s271 = sphi 0, %s255
      %s277 = sphi 0, %s279
      %s280 = sphi 0, %s277
      %s281 = sphi 0, %s280
      %s297 = sphi 0, %s281
      %s303 = sphi 0, %s305
      %s306 = sphi 0, %s303
      %s307 = sphi 0, %s306
      %s323 = sphi 0, %s307
      %s329 = sphi 0, %s331
      %s332 = sphi 0, %s329
      %s333 = sphi 0, %s332
      %s349 = sphi 0, %s333
      %s355 = sphi 0, %s357
      %s358 = sphi 0, %s355
      %s359 = sphi 0, %s358
      %s375 = sphi 0, %s359
      %s381 = sphi 0, %s383
      %s384 = sphi 0, %s381
      %s385 = sphi 0, %s384
      %s401 = sphi 0, %s385
      %s407 = sphi 0, %s409
      %s410 = sphi 0, %s407
      %s411 = sphi 0, %s410
      %s427 = sphi 0, %s411
      %s433 = sphi 0, %s435
      %s436 = sphi 0, %s433
      %s437 = sphi 0, %s436
      %s453 = sphi 0, %s437
      %s457 = sphi 0, %s457
      %s459 = sphi 0, %s457
      %s460 = sphi 0, %s459
      %s474 = sphi 0, %s460
      %s478 = sphi 0, %s478
      %s480 = sphi 0, %s478
      %s481 = sphi 0, %s480
      %s495 = sphi 0, %s481
      %s501 = sphi 0, %s503
      %s504 = sphi 0, %s501
      %s505 = sphi 0, %s504
      %s521 = sphi 0, %s505
    $region4: #{transformer_forward.1} parent=1 // loop_header_branch
      %55 = sbr.rel (%p53) target = $region8
    $region5: #{transformer_forward.1} parent=1 // loop_body
      %s57 = ssub.s32 %s52, 1
      %s58 = ssub.s32 %s52, 2
      %s65 = sadd.s32 1, %s60
      %p66 = scmp.ge.s32.totalorder %s65, 2
      %s67 = scalar_select %p66, 0, %s65
      %s68 = sadd.s32 1, %s59
      %s69 = scalar_select %p66, %s68, %s59
      %p70 = scmp.ge.s32.totalorder %s69, 2
      %s71 = scalar_select %p70, 0, %s69
      %s72 = ssub.s32 %s59, %s71
      %p73 = scmp.eq.s32.totalorder %s72, 0
      %s75 = sadd.s32 %s74, 1
      %s76 = scalar_select %p73, %s74, %s75
      %p79 = pneg %p73
      %p80 = scmp.eq.s32.totalorder %s52, 3
      %p81 = por %p79, %p80
      %p82 = scmp.ne.s32.totalorder %s74, %s77
      %p83 = scmp.eq.s32.totalorder %s52, 0
      %p84 = por %p82, %p83
      %p85 = scmp.ne.s32.totalorder %s74, %s77
      %p86 = scmp.eq.s32.totalorder %s57, 3
      %p87 = por %p85, %p86
      %p88 = scmp.ne.s32.totalorder %s77, %s78
      %p89 = scmp.eq.s32.totalorder %s57, 0
      %p90 = por %p88, %p89
      %p91 = scmp.ne.s32.totalorder %s77, %s78
      %p92 = scmp.eq.s32.totalorder %s58, 3
      %p93 = por %p91, %p92
      %p95 = scmp.ne.s32.totalorder %s78, %s94
      %p96 = scmp.eq.s32.totalorder %s58, 0
      %p97 = por %p95, %p96
      %s99 = sadd.s32 %s98, 1
      %p102 = scmp.eq.s32.totalorder %s52, 3
      %p103 = scmp.ne.s32.totalorder %s98, %s100
      %p104 = scmp.eq.s32.totalorder %s52, 0
      %p105 = por %p103, %p104
      %p106 = scmp.ne.s32.totalorder %s98, %s100
      %p107 = scmp.eq.s32.totalorder %s57, 3
      %p108 = por %p106, %p107
      %p109 = scmp.ne.s32.totalorder %s100, %s101
      %p110 = scmp.eq.s32.totalorder %s57, 0
      %p111 = por %p109, %p110
      %p112 = scmp.ne.s32.totalorder %s100, %s101
      %p113 = scmp.eq.s32.totalorder %s58, 3
      %p114 = por %p112, %p113
      %p116 = scmp.ne.s32.totalorder %s101, %s115
      %p117 = scmp.eq.s32.totalorder %s58, 0
      %p118 = por %p116, %p117
      %s119 = ssub.s32 %s60, %s67
      %p120 = scmp.eq.s32.totalorder %s119, 0
      %s122 = sadd.s32 %s121, 1
      %s123 = scalar_select %p120, %s121, %s122
      %p126 = pneg %p120
      %p127 = scmp.eq.s32.totalorder %s52, 3
      %p128 = por %p126, %p127
      %p129 = scmp.ne.s32.totalorder %s121, %s124
      %p130 = scmp.eq.s32.totalorder %s52, 0
      %p131 = por %p129, %p130
      %p132 = scmp.ne.s32.totalorder %s121, %s124
      %p133 = scmp.eq.s32.totalorder %s57, 3
      %p134 = por %p132, %p133
      %p135 = scmp.ne.s32.totalorder %s124, %s125
      %p136 = scmp.eq.s32.totalorder %s57, 0
      %p137 = por %p135, %p136
      %p138 = scmp.ne.s32.totalorder %s124, %s125
      %p139 = scmp.eq.s32.totalorder %s58, 3
      %p140 = por %p138, %p139
      %p142 = scmp.ne.s32.totalorder %s125, %s141
      %p143 = scmp.eq.s32.totalorder %s58, 0
      %p144 = por %p142, %p143
      %s145 = ssub.s32 %s60, %s67
      %p146 = scmp.eq.s32.totalorder %s145, 0
      %s148 = sadd.s32 %s147, 1
      %s149 = scalar_select %p146, %s147, %s148
      %p152 = pneg %p146
      %p153 = scmp.eq.s32.totalorder %s52, 3
      %p154 = por %p152, %p153
      %p155 = scmp.ne.s32.totalorder %s147, %s150
      %p156 = scmp.eq.s32.totalorder %s52, 0
      %p157 = por %p155, %p156
      %p158 = scmp.ne.s32.totalorder %s147, %s150
      %p159 = scmp.eq.s32.totalorder %s57, 3
      %p160 = por %p158, %p159
      %p161 = scmp.ne.s32.totalorder %s150, %s151
      %p162 = scmp.eq.s32.totalorder %s57, 0
      %p163 = por %p161, %p162
      %p164 = scmp.ne.s32.totalorder %s150, %s151
      %p165 = scmp.eq.s32.totalorder %s58, 3
      %p166 = por %p164, %p165
      %p168 = scmp.ne.s32.totalorder %s151, %s167
      %p169 = scmp.eq.s32.totalorder %s58, 0
      %p170 = por %p168, %p169
      %s171 = ssub.s32 %s60, %s67
      %p172 = scmp.eq.s32.totalorder %s171, 0
      %s174 = sadd.s32 %s173, 1
      %s175 = scalar_select %p172, %s173, %s174
      %p178 = pneg %p172
      %p179 = scmp.eq.s32.totalorder %s52, 3
      %p180 = por %p178, %p179
      %p181 = scmp.ne.s32.totalorder %s173, %s176
      %p182 = scmp.eq.s32.totalorder %s52, 0
      %p183 = por %p181, %p182
      %p184 = scmp.ne.s32.totalorder %s173, %s176
      %p185 = scmp.eq.s32.totalorder %s57, 3
      %p186 = por %p184, %p185
      %p187 = scmp.ne.s32.totalorder %s176, %s177
      %p188 = scmp.eq.s32.totalorder %s57, 0
      %p189 = por %p187, %p188
      %p190 = scmp.ne.s32.totalorder %s176, %s177
      %p191 = scmp.eq.s32.totalorder %s58, 3
      %p192 = por %p190, %p191
      %p194 = scmp.ne.s32.totalorder %s177, %s193
      %p195 = scmp.eq.s32.totalorder %s58, 0
      %p196 = por %p194, %p195
      %s197 = ssub.s32 %s60, %s67
      %p198 = scmp.eq.s32.totalorder %s197, 0
      %s200 = sadd.s32 %s199, 1
      %s201 = scalar_select %p198, %s199, %s200
      %p204 = pneg %p198
      %p205 = scmp.eq.s32.totalorder %s52, 3
      %p206 = por %p204, %p205
      %p207 = scmp.ne.s32.totalorder %s199, %s202
      %p208 = scmp.eq.s32.totalorder %s52, 0
      %p209 = por %p207, %p208
      %p210 = scmp.ne.s32.totalorder %s199, %s202
      %p211 = scmp.eq.s32.totalorder %s57, 3
      %p212 = por %p210, %p211
      %p213 = scmp.ne.s32.totalorder %s202, %s203
      %p214 = scmp.eq.s32.totalorder %s57, 0
      %p215 = por %p213, %p214
      %p216 = scmp.ne.s32.totalorder %s202, %s203
      %p217 = scmp.eq.s32.totalorder %s58, 3
      %p218 = por %p216, %p217
      %p220 = scmp.ne.s32.totalorder %s203, %s219
      %p221 = scmp.eq.s32.totalorder %s58, 0
      %p222 = por %p220, %p221
      %s223 = ssub.s32 %s60, %s67
      %p224 = scmp.eq.s32.totalorder %s223, 0
      %s226 = sadd.s32 %s225, 1
      %s227 = scalar_select %p224, %s225, %s226
      %p230 = pneg %p224
      %p231 = scmp.eq.s32.totalorder %s52, 3
      %p232 = por %p230, %p231
      %p233 = scmp.ne.s32.totalorder %s225, %s228
      %p234 = scmp.eq.s32.totalorder %s52, 0
      %p235 = por %p233, %p234
      %p236 = scmp.ne.s32.totalorder %s225, %s228
      %p237 = scmp.eq.s32.totalorder %s57, 3
      %p238 = por %p236, %p237
      %p239 = scmp.ne.s32.totalorder %s228, %s229
      %p240 = scmp.eq.s32.totalorder %s57, 0
      %p241 = por %p239, %p240
      %p242 = scmp.ne.s32.totalorder %s228, %s229
      %p243 = scmp.eq.s32.totalorder %s58, 3
      %p244 = por %p242, %p243
      %p246 = scmp.ne.s32.totalorder %s229, %s245
      %p247 = scmp.eq.s32.totalorder %s58, 0
      %p248 = por %p246, %p247
      %s249 = ssub.s32 %s60, %s67
      %p250 = scmp.eq.s32.totalorder %s249, 0
      %s252 = sadd.s32 %s251, 1
      %s253 = scalar_select %p250, %s251, %s252
      %p256 = pneg %p250
      %p257 = scmp.eq.s32.totalorder %s52, 3
      %p258 = por %p256, %p257
      %p259 = scmp.ne.s32.totalorder %s251, %s254
      %p260 = scmp.eq.s32.totalorder %s52, 0
      %p261 = por %p259, %p260
      %p262 = scmp.ne.s32.totalorder %s251, %s254
      %p263 = scmp.eq.s32.totalorder %s57, 3
      %p264 = por %p262, %p263
      %p265 = scmp.ne.s32.totalorder %s254, %s255
      %p266 = scmp.eq.s32.totalorder %s57, 0
      %p267 = por %p265, %p266
      %p268 = scmp.ne.s32.totalorder %s254, %s255
      %p269 = scmp.eq.s32.totalorder %s58, 3
      %p270 = por %p268, %p269
      %p272 = scmp.ne.s32.totalorder %s255, %s271
      %p273 = scmp.eq.s32.totalorder %s58, 0
      %p274 = por %p272, %p273
      %s275 = ssub.s32 %s60, %s67
      %p276 = scmp.eq.s32.totalorder %s275, 0
      %s278 = sadd.s32 %s277, 1
      %s279 = scalar_select %p276, %s277, %s278
      %p282 = pneg %p276
      %p283 = scmp.eq.s32.totalorder %s52, 3
      %p284 = por %p282, %p283
      %p285 = scmp.ne.s32.totalorder %s277, %s280
      %p286 = scmp.eq.s32.totalorder %s52, 0
      %p287 = por %p285, %p286
      %p288 = scmp.ne.s32.totalorder %s277, %s280
      %p289 = scmp.eq.s32.totalorder %s57, 3
      %p290 = por %p288, %p289
      %p291 = scmp.ne.s32.totalorder %s280, %s281
      %p292 = scmp.eq.s32.totalorder %s57, 0
      %p293 = por %p291, %p292
      %p294 = scmp.ne.s32.totalorder %s280, %s281
      %p295 = scmp.eq.s32.totalorder %s58, 3
      %p296 = por %p294, %p295
      %p298 = scmp.ne.s32.totalorder %s281, %s297
      %p299 = scmp.eq.s32.totalorder %s58, 0
      %p300 = por %p298, %p299
      %s301 = ssub.s32 %s60, %s67
      %p302 = scmp.eq.s32.totalorder %s301, 0
      %s304 = sadd.s32 %s303, 1
      %s305 = scalar_select %p302, %s303, %s304
      %p308 = pneg %p302
      %p309 = scmp.eq.s32.totalorder %s52, 3
      %p310 = por %p308, %p309
      %p311 = scmp.ne.s32.totalorder %s303, %s306
      %p312 = scmp.eq.s32.totalorder %s52, 0
      %p313 = por %p311, %p312
      %p314 = scmp.ne.s32.totalorder %s303, %s306
      %p315 = scmp.eq.s32.totalorder %s57, 3
      %p316 = por %p314, %p315
      %p317 = scmp.ne.s32.totalorder %s306, %s307
      %p318 = scmp.eq.s32.totalorder %s57, 0
      %p319 = por %p317, %p318
      %p320 = scmp.ne.s32.totalorder %s306, %s307
      %p321 = scmp.eq.s32.totalorder %s58, 3
      %p322 = por %p320, %p321
      %p324 = scmp.ne.s32.totalorder %s307, %s323
      %p325 = scmp.eq.s32.totalorder %s58, 0
      %p326 = por %p324, %p325
      %s327 = ssub.s32 %s60, %s67
      %p328 = scmp.eq.s32.totalorder %s327, 0
      %s330 = sadd.s32 %s329, 1
      %s331 = scalar_select %p328, %s329, %s330
      %p334 = pneg %p328
      %p335 = scmp.eq.s32.totalorder %s52, 3
      %p336 = por %p334, %p335
      %p337 = scmp.ne.s32.totalorder %s329, %s332
      %p338 = scmp.eq.s32.totalorder %s52, 0
      %p339 = por %p337, %p338
      %p340 = scmp.ne.s32.totalorder %s329, %s332
      %p341 = scmp.eq.s32.totalorder %s57, 3
      %p342 = por %p340, %p341
      %p343 = scmp.ne.s32.totalorder %s332, %s333
      %p344 = scmp.eq.s32.totalorder %s57, 0
      %p345 = por %p343, %p344
      %p346 = scmp.ne.s32.totalorder %s332, %s333
      %p347 = scmp.eq.s32.totalorder %s58, 3
      %p348 = por %p346, %p347
      %p350 = scmp.ne.s32.totalorder %s333, %s349
      %p351 = scmp.eq.s32.totalorder %s58, 0
      %p352 = por %p350, %p351
      %s353 = ssub.s32 %s60, %s67
      %p354 = scmp.eq.s32.totalorder %s353, 0
      %s356 = sadd.s32 %s355, 1
      %s357 = scalar_select %p354, %s355, %s356
      %p360 = pneg %p354
      %p361 = scmp.eq.s32.totalorder %s52, 3
      %p362 = por %p360, %p361
      %p363 = scmp.ne.s32.totalorder %s355, %s358
      %p364 = scmp.eq.s32.totalorder %s52, 0
      %p365 = por %p363, %p364
      %p366 = scmp.ne.s32.totalorder %s355, %s358
      %p367 = scmp.eq.s32.totalorder %s57, 3
      %p368 = por %p366, %p367
      %p369 = scmp.ne.s32.totalorder %s358, %s359
      %p370 = scmp.eq.s32.totalorder %s57, 0
      %p371 = por %p369, %p370
      %p372 = scmp.ne.s32.totalorder %s358, %s359
      %p373 = scmp.eq.s32.totalorder %s58, 3
      %p374 = por %p372, %p373
      %p376 = scmp.ne.s32.totalorder %s359, %s375
      %p377 = scmp.eq.s32.totalorder %s58, 0
      %p378 = por %p376, %p377
      %s379 = ssub.s32 %s60, %s67
      %p380 = scmp.eq.s32.totalorder %s379, 0
      %s382 = sadd.s32 %s381, 1
      %s383 = scalar_select %p380, %s381, %s382
      %p386 = pneg %p380
      %p387 = scmp.eq.s32.totalorder %s52, 3
      %p388 = por %p386, %p387
      %p389 = scmp.ne.s32.totalorder %s381, %s384
      %p390 = scmp.eq.s32.totalorder %s52, 0
      %p391 = por %p389, %p390
      %p392 = scmp.ne.s32.totalorder %s381, %s384
      %p393 = scmp.eq.s32.totalorder %s57, 3
      %p394 = por %p392, %p393
      %p395 = scmp.ne.s32.totalorder %s384, %s385
      %p396 = scmp.eq.s32.totalorder %s57, 0
      %p397 = por %p395, %p396
      %p398 = scmp.ne.s32.totalorder %s384, %s385
      %p399 = scmp.eq.s32.totalorder %s58, 3
      %p400 = por %p398, %p399
      %p402 = scmp.ne.s32.totalorder %s385, %s401
      %p403 = scmp.eq.s32.totalorder %s58, 0
      %p404 = por %p402, %p403
      %s405 = ssub.s32 %s60, %s67
      %p406 = scmp.eq.s32.totalorder %s405, 0
      %s408 = sadd.s32 %s407, 1
      %s409 = scalar_select %p406, %s407, %s408
      %p412 = pneg %p406
      %p413 = scmp.eq.s32.totalorder %s52, 3
      %p414 = por %p412, %p413
      %p415 = scmp.ne.s32.totalorder %s407, %s410
      %p416 = scmp.eq.s32.totalorder %s52, 0
      %p417 = por %p415, %p416
      %p418 = scmp.ne.s32.totalorder %s407, %s410
      %p419 = scmp.eq.s32.totalorder %s57, 3
      %p420 = por %p418, %p419
      %p421 = scmp.ne.s32.totalorder %s410, %s411
      %p422 = scmp.eq.s32.totalorder %s57, 0
      %p423 = por %p421, %p422
      %p424 = scmp.ne.s32.totalorder %s410, %s411
      %p425 = scmp.eq.s32.totalorder %s58, 3
      %p426 = por %p424, %p425
      %p428 = scmp.ne.s32.totalorder %s411, %s427
      %p429 = scmp.eq.s32.totalorder %s58, 0
      %p430 = por %p428, %p429
      %s431 = ssub.s32 %s60, %s67
      %p432 = scmp.eq.s32.totalorder %s431, 0
      %s434 = sadd.s32 %s433, 1
      %s435 = scalar_select %p432, %s433, %s434
      %p438 = pneg %p432
      %p439 = scmp.eq.s32.totalorder %s52, 3
      %p440 = por %p438, %p439
      %p441 = scmp.ne.s32.totalorder %s433, %s436
      %p442 = scmp.eq.s32.totalorder %s52, 0
      %p443 = por %p441, %p442
      %p444 = scmp.ne.s32.totalorder %s433, %s436
      %p445 = scmp.eq.s32.totalorder %s57, 3
      %p446 = por %p444, %p445
      %p447 = scmp.ne.s32.totalorder %s436, %s437
      %p448 = scmp.eq.s32.totalorder %s57, 0
      %p449 = por %p447, %p448
      %p450 = scmp.ne.s32.totalorder %s436, %s437
      %p451 = scmp.eq.s32.totalorder %s58, 3
      %p452 = por %p450, %p451
      %p454 = scmp.ne.s32.totalorder %s437, %s453
      %p455 = scmp.eq.s32.totalorder %s58, 0
      %p456 = por %p454, %p455
      %s458 = sadd.s32 %s457, 1
      %p461 = scmp.eq.s32.totalorder %s52, 3
      %p462 = scmp.ne.s32.totalorder %s457, %s459
      %p463 = scmp.eq.s32.totalorder %s52, 0
      %p464 = por %p462, %p463
      %p465 = scmp.ne.s32.totalorder %s457, %s459
      %p466 = scmp.eq.s32.totalorder %s57, 3
      %p467 = por %p465, %p466
      %p468 = scmp.ne.s32.totalorder %s459, %s460
      %p469 = scmp.eq.s32.totalorder %s57, 0
      %p470 = por %p468, %p469
      %p471 = scmp.ne.s32.totalorder %s459, %s460
      %p472 = scmp.eq.s32.totalorder %s58, 3
      %p473 = por %p471, %p472
      %p475 = scmp.ne.s32.totalorder %s460, %s474
      %p476 = scmp.eq.s32.totalorder %s58, 0
      %p477 = por %p475, %p476
      %s479 = sadd.s32 %s478, 1
      %p482 = scmp.eq.s32.totalorder %s52, 3
      %p483 = scmp.ne.s32.totalorder %s478, %s480
      %p484 = scmp.eq.s32.totalorder %s52, 0
      %p485 = por %p483, %p484
      %p486 = scmp.ne.s32.totalorder %s478, %s480
      %p487 = scmp.eq.s32.totalorder %s57, 3
      %p488 = por %p486, %p487
      %p489 = scmp.ne.s32.totalorder %s480, %s481
      %p490 = scmp.eq.s32.totalorder %s57, 0
      %p491 = por %p489, %p490
      %p492 = scmp.ne.s32.totalorder %s480, %s481
      %p493 = scmp.eq.s32.totalorder %s58, 3
      %p494 = por %p492, %p493
      %p496 = scmp.ne.s32.totalorder %s481, %s495
      %p497 = scmp.eq.s32.totalorder %s58, 0
      %p498 = por %p496, %p497
      %s499 = ssub.s32 %s59, %s71
      %p500 = scmp.eq.s32.totalorder %s499, 0
      %s502 = sadd.s32 %s501, 1
      %s503 = scalar_select %p500, %s501, %s502
      %p506 = pneg %p500
      %p507 = scmp.eq.s32.totalorder %s52, 3
      %p508 = por %p506, %p507
      %p509 = scmp.ne.s32.totalorder %s501, %s504
      %p510 = scmp.eq.s32.totalorder %s52, 0
      %p511 = por %p509, %p510
      %p512 = scmp.ne.s32.totalorder %s501, %s504
      %p513 = scmp.eq.s32.totalorder %s57, 3
      %p514 = por %p512, %p513
      %p515 = scmp.ne.s32.totalorder %s504, %s505
      %p516 = scmp.eq.s32.totalorder %s57, 0
      %p517 = por %p515, %p516
      %p518 = scmp.ne.s32.totalorder %s504, %s505
      %p519 = scmp.eq.s32.totalorder %s58, 3
      %p520 = por %p518, %p519
      %p522 = scmp.ne.s32.totalorder %s505, %s521
      %p523 = scmp.eq.s32.totalorder %s58, 0
      %p524 = por %p522, %p523
      %p525 = scmp.le.s32.totalorder 1, %s52
      %p526 = scmp.lt.s32.totalorder %s52, 5
      %p527 = pnand %p525, %p526
      %p528 = pneg %p527
      // Predicated region
      $region9: #{transformer_forward.1} parent=5 // pred_check
        _
      $region10: #{transformer_forward.1} parent=5 // pred_check_branch
        %530 = sbr.rel (%p527) target = $region12
      $region11: #{transformer_forward.1} parent=5 // pred_region
        %s531 = ssub.s32 %s52, 1
        // Predicated region
        $region13: #{transformer_forward.1} parent=11 // pred_check
          %p532 = pneg %p111
        $region14: #{transformer_forward.1} parent=11 // pred_check_branch
          %534 = sbr.rel (%p532) target = $region16
        $region15: #{transformer_forward.1} parent=11 // pred_region
          %s536 = ssub.s32 32, 32
          %537 = vsyncadd [#allocation7], %s536
          %540 = dma.hbm_to_smem %s1, 32, [#allocation8], [#allocation7]
        $region16: #{transformer_forward.1} parent=11 // pred_fallthru
          _
        // Predicated region
        $region17: #{transformer_forward.1} parent=11 // pred_check
          %p541 = pneg %p470
        $region18: #{transformer_forward.1} parent=11 // pred_check_branch
          %543 = sbr.rel (%p541) target = $region20
        $region19: #{transformer_forward.1} parent=11 // pred_region
          %s545 = ssub.s32 16, 16
          %546 = vsyncadd [#allocation28], %s545
          %s548 = sshll.u32 [#allocation29], 4
          %s549 = int_to_ptr.vmem [resolvable:$true] %s548
          %551 = dma.hbm_to_vmem [thread:$0]  %s15, 16, %s549, [#allocation28]
        $region20: #{transformer_forward.1} parent=11 // pred_fallthru
          _
        // Predicated region
        $region21: #{transformer_forward.1} parent=11 // pred_check
          %p552 = pneg %p491
        $region22: #{transformer_forward.1} parent=11 // pred_check_branch
          %554 = sbr.rel (%p552) target = $region24
        $region23: #{transformer_forward.1} parent=11 // pred_region
          %s556 = ssub.s32 16, 16
          %557 = vsyncadd [#allocation31], %s556
          %s559 = sshll.u32 [#allocation30], 4
          %s560 = int_to_ptr.vmem [resolvable:$true] %s559
          %562 = dma.hbm_to_vmem [thread:$0]  %s16, 16, %s560, [#allocation31]
        $region24: #{transformer_forward.1} parent=11 // pred_fallthru
          _
      $region12: #{transformer_forward.1} parent=5 // pred_fallthru
        _
      %p563 = scmp.lt.s32.totalorder %s52, 4
      // Predicated region
      $region25: #{transformer_forward.1} parent=5 // pred_check
        %p564 = pneg %p563
      $region26: #{transformer_forward.1} parent=5 // pred_check_branch
        %566 = sbr.rel (%p564) target = $region28
      $region27: #{transformer_forward.1} parent=5 // pred_region
        // Predicated region
        $region29: #{transformer_forward.1} parent=27 // pred_check
          %p567 = pneg %p84
        $region30: #{transformer_forward.1} parent=27 // pred_check_branch
          %569 = sbr.rel (%p567) target = $region32
        $region31: #{transformer_forward.1} parent=27 // pred_region
          %s570 = sand.u32 %s74, 1
          %s571 = scalar_lea.sflag [#allocation5], %s570
          %s572 = sand.u32 %s74, 1
          %s573 = smul.addr %s572, 128
          %s574 = scalar_lea.vmem [#allocation4], %s573
          %s575 = smul.u32 2, %s59
          %s577 = ssub.s32 2048, 2048
          %578 = vsyncadd %s571, %s577
          %s579 = smul.addr %s575, 8
          %s580 = smul.addr %s579, 128
          %s581 = scalar_lea.hbm %s0, %s580
          %s582 = sshll.u32 %s574, 4
          %s583 = int_to_ptr.vmem [resolvable:$true] %s582
          %588 = dma.hbm_to_vmem [thread:$0]  %s581, 2048, %s583, %s571, 128, 128, 8
        $region32: #{transformer_forward.1} parent=27 // pred_fallthru
          _
        // Predicated region
        $region33: #{transformer_forward.1} parent=27 // pred_check
          %p589 = pneg %p131
        $region34: #{transformer_forward.1} parent=27 // pred_check_branch
          %591 = sbr.rel (%p589) target = $region36
        $region35: #{transformer_forward.1} parent=27 // pred_region
          %s592 = sand.u32 %s52, 1
          %s593 = scalar_lea.sflag [#allocation10], %s592
          %s594 = sand.u32 %s121, 1
          %s595 = scalar_lea.vmem [#allocation9], %s594
          %s597 = ssub.s32 16, 16
          %598 = vsyncadd %s593, %s597
          %s599 = smul.addr %s60, 16
          %s600 = scalar_lea.hbm %s2, %s599
          %s602 = sshll.u32 %s595, 4
          %s603 = int_to_ptr.vmem [resolvable:$true] %s602
          %605 = dma.hbm_to_vmem [thread:$0]  %s600, 16, %s603, %s593
        $region36: #{transformer_forward.1} parent=27 // pred_fallthru
          _
        // Predicated region
        $region37: #{transformer_forward.1} parent=27 // pred_check
          %p606 = pneg %p157
        $region38: #{transformer_forward.1} parent=27 // pred_check_branch
          %608 = sbr.rel (%p606) target = $region40
        $region39: #{transformer_forward.1} parent=27 // pred_region
          %s609 = sand.u32 %s52, 1
          %s610 = scalar_lea.sflag [#allocation10], %s609
          %s611 = sand.u32 %s147, 1
          %s612 = scalar_lea.vmem [#allocation11], %s611
          %s614 = ssub.s32 16, 16
          %615 = vsyncadd %s610, %s614
          %s616 = smul.addr %s60, 16
          %s617 = scalar_lea.hbm %s3, %s616
          %s619 = sshll.u32 %s612, 4
          %s620 = int_to_ptr.vmem [resolvable:$true] %s619
          %622 = dma.hbm_to_vmem [thread:$0]  %s617, 16, %s620, %s610
        $region40: #{transformer_forward.1} parent=27 // pred_fallthru
          _
        // Predicated region
        $region41: #{transformer_forward.1} parent=27 // pred_check
          %p623 = pneg %p183
        $region42: #{transformer_forward.1} parent=27 // pred_check_branch
          %625 = sbr.rel (%p623) target = $region44
        $region43: #{transformer_forward.1} parent=27 // pred_region
          %s626 = sand.u32 %s52, 1
          %s627 = scalar_lea.sflag [#allocation13], %s626
          %s628 = sand.u32 %s173, 1
          %s629 = smul.addr %s628, 16
          %s630 = scalar_lea.vmem [#allocation12], %s629
          %s632 = ssub.s32 256, 256
          %633 = vsyncadd %s627, %s632
          %s634 = smul.addr %s60, 4
          %s635 = smul.addr %s634, 64
          %s636 = scalar_lea.hbm %s4, %s635
          %s637 = sshll.u32 %s630, 4
          %s638 = int_to_ptr.vmem [resolvable:$true] %s637
          %643 = dma.hbm_to_vmem [thread:$0]  %s636, 256, %s638, %s627, 64, 64, 4
        $region44: #{transformer_forward.1} parent=27 // pred_fallthru
          _
        // Predicated region
        $region45: #{transformer_forward.1} parent=27 // pred_check
          %p644 = pneg %p209
        $region46: #{transformer_forward.1} parent=27 // pred_check_branch
          %646 = sbr.rel (%p644) target = $region48
        $region47: #{transformer_forward.1} parent=27 // pred_region
          %s647 = sand.u32 %s52, 1
          %s648 = scalar_lea.sflag [#allocation13], %s647
          %s649 = sand.u32 %s199, 1
          %s650 = scalar_lea.vmem [#allocation14], %s649
          %s652 = ssub.s32 16, 16
          %653 = vsyncadd %s648, %s652
          %s654 = smul.addr %s60, 16
          %s655 = scalar_lea.hbm %s5, %s654
          %s657 = sshll.u32 %s650, 4
          %s658 = int_to_ptr.vmem [resolvable:$true] %s657
          %660 = dma.hbm_to_vmem [thread:$0]  %s655, 16, %s658, %s648
        $region48: #{transformer_forward.1} parent=27 // pred_fallthru
          _
        // Predicated region
        $region49: #{transformer_forward.1} parent=27 // pred_check
          %p661 = pneg %p235
        $region50: #{transformer_forward.1} parent=27 // pred_check_branch
          %663 = sbr.rel (%p661) target = $region52
        $region51: #{transformer_forward.1} parent=27 // pred_region
          %s664 = sand.u32 %s52, 1
          %s665 = scalar_lea.sflag [#allocation16], %s664
          %s666 = sand.u32 %s225, 1
          %s667 = smul.addr %s666, 32
          %s668 = scalar_lea.vmem [#allocation15], %s667
          %s670 = ssub.s32 512, 512
          %671 = vsyncadd %s665, %s670
          %s672 = smul.addr %s60, 8
          %s673 = smul.addr %s672, 64
          %s674 = scalar_lea.hbm %s6, %s673
          %s675 = sshll.u32 %s668, 4
          %s676 = int_to_ptr.vmem [resolvable:$true] %s675
          %681 = dma.hbm_to_vmem [thread:$0]  %s674, 512, %s676, %s665, 64, 64, 4
        $region52: #{transformer_forward.1} parent=27 // pred_fallthru
          _
        // Predicated region
        $region53: #{transformer_forward.1} parent=27 // pred_check
          %p682 = pneg %p261
        $region54: #{transformer_forward.1} parent=27 // pred_check_branch
          %684 = sbr.rel (%p682) target = $region56
        $region55: #{transformer_forward.1} parent=27 // pred_region
          %s685 = sand.u32 %s52, 1
          %s686 = scalar_lea.sflag [#allocation16], %s685
          %s687 = sand.u32 %s251, 1
          %s688 = smul.addr %s687, 16
          %s689 = scalar_lea.vmem [#allocation17], %s688
          %s691 = ssub.s32 256, 256
          %692 = vsyncadd %s686, %s691
          %s693 = smul.addr %s60, 4
          %s694 = smul.addr %s693, 64
          %s695 = scalar_lea.hbm %s7, %s694
          %s696 = sshll.u32 %s689, 4
          %s697 = int_to_ptr.vmem [resolvable:$true] %s696
          %702 = dma.hbm_to_vmem [thread:$0]  %s695, 256, %s697, %s686, 64, 64, 4
        $region56: #{transformer_forward.1} parent=27 // pred_fallthru
          _
        // Predicated region
        $region57: #{transformer_forward.1} parent=27 // pred_check
          %p703 = pneg %p287
        $region58: #{transformer_forward.1} parent=27 // pred_check_branch
          %705 = sbr.rel (%p703) target = $region60
        $region59: #{transformer_forward.1} parent=27 // pred_region
          %s706 = sand.u32 %s52, 1
          %s707 = scalar_lea.sflag [#allocation19], %s706
          %s708 = sand.u32 %s277, 1
          %s709 = scalar_lea.vmem [#allocation18], %s708
          %s711 = ssub.s32 16, 16
          %712 = vsyncadd %s707, %s711
          %s713 = smul.addr %s60, 16
          %s714 = scalar_lea.hbm %s8, %s713
          %s716 = sshll.u32 %s709, 4
          %s717 = int_to_ptr.vmem [resolvable:$true] %s716
          %719 = dma.hbm_to_vmem [thread:$0]  %s714, 16, %s717, %s707
        $region60: #{transformer_forward.1} parent=27 // pred_fallthru
          _
        // Predicated region
        $region61: #{transformer_forward.1} parent=27 // pred_check
          %p720 = pneg %p313
        $region62: #{transformer_forward.1} parent=27 // pred_check_branch
          %722 = sbr.rel (%p720) target = $region64
        $region63: #{transformer_forward.1} parent=27 // pred_region
          %s723 = sand.u32 %s52, 1
          %s724 = scalar_lea.sflag [#allocation19], %s723
          %s725 = sand.u32 %s303, 1
          %s726 = scalar_lea.vmem [#allocation20], %s725
          %s728 = ssub.s32 16, 16
          %729 = vsyncadd %s724, %s728
          %s730 = smul.addr %s60, 16
          %s731 = scalar_lea.hbm %s9, %s730
          %s733 = sshll.u32 %s726, 4
          %s734 = int_to_ptr.vmem [resolvable:$true] %s733
          %736 = dma.hbm_to_vmem [thread:$0]  %s731, 16, %s734, %s724
        $region64: #{transformer_forward.1} parent=27 // pred_fallthru
          _
        // Predicated region
        $region65: #{transformer_forward.1} parent=27 // pred_check
          %p737 = pneg %p339
        $region66: #{transformer_forward.1} parent=27 // pred_check_branch
          %739 = sbr.rel (%p737) target = $region68
        $region67: #{transformer_forward.1} parent=27 // pred_region
          %s740 = sand.u32 %s52, 1
          %s741 = scalar_lea.sflag [#allocation22], %s740
          %s742 = sand.u32 %s329, 1
          %s743 = scalar_lea.vmem [#allocation21], %s742
          %s745 = ssub.s32 16, 16
          %746 = vsyncadd %s741, %s745
          %s747 = smul.addr %s60, 16
          %s748 = scalar_lea.hbm %s10, %s747
          %s750 = sshll.u32 %s743, 4
          %s751 = int_to_ptr.vmem [resolvable:$true] %s750
          %753 = dma.hbm_to_vmem [thread:$0]  %s748, 16, %s751, %s741
        $region68: #{transformer_forward.1} parent=27 // pred_fallthru
          _
        // Predicated region
        $region69: #{transformer_forward.1} parent=27 // pred_check
          %p754 = pneg %p365
        $region70: #{transformer_forward.1} parent=27 // pred_check_branch
          %756 = sbr.rel (%p754) target = $region72
        $region71: #{transformer_forward.1} parent=27 // pred_region
          %s757 = sand.u32 %s52, 1
          %s758 = scalar_lea.sflag [#allocation22], %s757
          %s759 = sand.u32 %s355, 1
          %s760 = smul.addr %s759, 16
          %s761 = scalar_lea.vmem [#allocation23], %s760
          %s763 = ssub.s32 256, 256
          %764 = vsyncadd %s758, %s763
          %s765 = smul.addr %s60, 4
          %s766 = smul.addr %s765, 64
          %s767 = scalar_lea.hbm %s11, %s766
          %s768 = sshll.u32 %s761, 4
          %s769 = int_to_ptr.vmem [resolvable:$true] %s768
          %774 = dma.hbm_to_vmem [thread:$0]  %s767, 256, %s769, %s758, 64, 64, 4
        $region72: #{transformer_forward.1} parent=27 // pred_fallthru
          _
        // Predicated region
        $region73: #{transformer_forward.1} parent=27 // pred_check
          %p775 = pneg %p391
        $region74: #{transformer_forward.1} parent=27 // pred_check_branch
          %777 = sbr.rel (%p775) target = $region76
        $region75: #{transformer_forward.1} parent=27 // pred_region
          %s778 = sand.u32 %s52, 1
          %s779 = scalar_lea.sflag [#allocation25], %s778
          %s780 = sand.u32 %s381, 1
          %s781 = scalar_lea.vmem [#allocation24], %s780
          %s783 = ssub.s32 16, 16
          %784 = vsyncadd %s779, %s783
          %s785 = smul.addr %s60, 16
          %s786 = scalar_lea.hbm %s12, %s785
          %s788 = sshll.u32 %s781, 4
          %s789 = int_to_ptr.vmem [resolvable:$true] %s788
          %791 = dma.hbm_to_vmem [thread:$0]  %s786, 16, %s789, %s779
        $region76: #{transformer_forward.1} parent=27 // pred_fallthru
          _
        // Predicated region
        $region77: #{transformer_forward.1} parent=27 // pred_check
          %p792 = pneg %p417
        $region78: #{transformer_forward.1} parent=27 // pred_check_branch
          %794 = sbr.rel (%p792) target = $region80
        $region79: #{transformer_forward.1} parent=27 // pred_region
          %s795 = sand.u32 %s52, 1
          %s796 = scalar_lea.sflag [#allocation25], %s795
          %s797 = sand.u32 %s407, 1
          %s798 = smul.addr %s797, 32
          %s799 = scalar_lea.vmem [#allocation26], %s798
          %s801 = ssub.s32 512, 512
          %802 = vsyncadd %s796, %s801
          %s803 = smul.addr %s60, 8
          %s804 = smul.addr %s803, 64
          %s805 = scalar_lea.hbm %s13, %s804
          %s806 = sshll.u32 %s799, 4
          %s807 = int_to_ptr.vmem [resolvable:$true] %s806
          %812 = dma.hbm_to_vmem [thread:$0]  %s805, 512, %s807, %s796, 64, 64, 4
        $region80: #{transformer_forward.1} parent=27 // pred_fallthru
          _
        // Predicated region
        $region81: #{transformer_forward.1} parent=27 // pred_check
          %p813 = pneg %p443
        $region82: #{transformer_forward.1} parent=27 // pred_check_branch
          %815 = sbr.rel (%p813) target = $region84
        $region83: #{transformer_forward.1} parent=27 // pred_region
          %s816 = sand.u32 %s52, 1
          %s817 = scalar_lea.sflag [#allocation28], %s816
          %s818 = sand.u32 %s433, 1
          %s819 = scalar_lea.vmem [#allocation27], %s818
          %s821 = ssub.s32 16, 16
          %822 = vsyncadd %s817, %s821
          %s823 = smul.addr %s60, 16
          %s824 = scalar_lea.hbm %s14, %s823
          %s826 = sshll.u32 %s819, 4
          %s827 = int_to_ptr.vmem [resolvable:$true] %s826
          %829 = dma.hbm_to_vmem [thread:$0]  %s824, 16, %s827, %s817
        $region84: #{transformer_forward.1} parent=27 // pred_fallthru
          _
      $region28: #{transformer_forward.1} parent=5 // pred_fallthru
        _
      %p830 = scmp.le.s32.totalorder 1, %s52
      %p831 = scmp.lt.s32.totalorder %s52, 5
      %p832 = pnand %p830, %p831
      %p833 = pneg %p832
      // Predicated region
      $region85: #{transformer_forward.1} parent=5 // pred_check
        _
      $region86: #{transformer_forward.1} parent=5 // pred_check_branch
        %835 = sbr.rel (%p832) target = $region88
      $region87: #{transformer_forward.1} parent=5 // pred_region
        %s836 = ssub.s32 %s52, 1
        %s837 = sand.u32 %s77, 1
        %s838 = scalar_lea.sflag [#allocation5], %s837
        %s839 = sand.u32 %s77, 1
        %s840 = smul.addr %s839, 128
        %s841 = scalar_lea.vmem [#allocation4], %s840
        // Predicated region
        $region89: #{transformer_forward.1} parent=87 // pred_check
          %p842 = pneg %p90
        $region90: #{transformer_forward.1} parent=87 // pred_check_branch
          %844 = sbr.rel (%p842) target = $region92
        $region91: #{transformer_forward.1} parent=87 // pred_region
          %845 = dma.done %s838, 2048
        $region92: #{transformer_forward.1} parent=87 // pred_fallthru
          _
        // Predicated region
        $region93: #{transformer_forward.1} parent=87 // pred_check
          %p846 = pneg %p111
        $region94: #{transformer_forward.1} parent=87 // pred_check_branch
          %848 = sbr.rel (%p846) target = $region96
        $region95: #{transformer_forward.1} parent=87 // pred_region
          %849 = dma.done [#allocation7], 32
        $region96: #{transformer_forward.1} parent=87 // pred_fallthru
          _
        %s850 = sand.u32 %s57, 1
        %s851 = scalar_lea.sflag [#allocation10], %s850
        %s852 = sand.u32 %s124, 1
        %s853 = scalar_lea.vmem [#allocation9], %s852
        // Predicated region
        $region97: #{transformer_forward.1} parent=87 // pred_check
          %p854 = pneg %p137
        $region98: #{transformer_forward.1} parent=87 // pred_check_branch
          %856 = sbr.rel (%p854) target = $region100
        $region99: #{transformer_forward.1} parent=87 // pred_region
          %857 = dma.done %s851, 16
        $region100: #{transformer_forward.1} parent=87 // pred_fallthru
          _
        %s858 = sand.u32 %s57, 1
        %s859 = scalar_lea.sflag [#allocation10], %s858
        %s860 = sand.u32 %s150, 1
        %s861 = scalar_lea.vmem [#allocation11], %s860
        // Predicated region
        $region101: #{transformer_forward.1} parent=87 // pred_check
          %p862 = pneg %p163
        $region102: #{transformer_forward.1} parent=87 // pred_check_branch
          %864 = sbr.rel (%p862) target = $region104
        $region103: #{transformer_forward.1} parent=87 // pred_region
          %865 = dma.done %s859, 16
        $region104: #{transformer_forward.1} parent=87 // pred_fallthru
          _
        %s866 = sand.u32 %s57, 1
        %s867 = scalar_lea.sflag [#allocation13], %s866
        %s868 = sand.u32 %s176, 1
        %s869 = smul.addr %s868, 16
        %s870 = scalar_lea.vmem [#allocation12], %s869
        // Predicated region
        $region105: #{transformer_forward.1} parent=87 // pred_check
          %p871 = pneg %p189
        $region106: #{transformer_forward.1} parent=87 // pred_check_branch
          %873 = sbr.rel (%p871) target = $region108
        $region107: #{transformer_forward.1} parent=87 // pred_region
          %874 = dma.done %s867, 256
        $region108: #{transformer_forward.1} parent=87 // pred_fallthru
          _
        %s875 = sand.u32 %s57, 1
        %s876 = scalar_lea.sflag [#allocation13], %s875
        %s877 = sand.u32 %s202, 1
        %s878 = scalar_lea.vmem [#allocation14], %s877
        // Predicated region
        $region109: #{transformer_forward.1} parent=87 // pred_check
          %p879 = pneg %p215
        $region110: #{transformer_forward.1} parent=87 // pred_check_branch
          %881 = sbr.rel (%p879) target = $region112
        $region111: #{transformer_forward.1} parent=87 // pred_region
          %882 = dma.done %s876, 16
        $region112: #{transformer_forward.1} parent=87 // pred_fallthru
          _
        %s883 = sand.u32 %s57, 1
        %s884 = scalar_lea.sflag [#allocation16], %s883
        %s885 = sand.u32 %s228, 1
        %s886 = smul.addr %s885, 32
        %s887 = scalar_lea.vmem [#allocation15], %s886
        // Predicated region
        $region113: #{transformer_forward.1} parent=87 // pred_check
          %p888 = pneg %p241
        $region114: #{transformer_forward.1} parent=87 // pred_check_branch
          %890 = sbr.rel (%p888) target = $region116
        $region115: #{transformer_forward.1} parent=87 // pred_region
          %891 = dma.done %s884, 512
        $region116: #{transformer_forward.1} parent=87 // pred_fallthru
          _
        %s892 = sand.u32 %s57, 1
        %s893 = scalar_lea.sflag [#allocation16], %s892
        %s894 = sand.u32 %s254, 1
        %s895 = smul.addr %s894, 16
        %s896 = scalar_lea.vmem [#allocation17], %s895
        // Predicated region
        $region117: #{transformer_forward.1} parent=87 // pred_check
          %p897 = pneg %p267
        $region118: #{transformer_forward.1} parent=87 // pred_check_branch
          %899 = sbr.rel (%p897) target = $region120
        $region119: #{transformer_forward.1} parent=87 // pred_region
          %900 = dma.done %s893, 256
        $region120: #{transformer_forward.1} parent=87 // pred_fallthru
          _
        %s901 = sand.u32 %s57, 1
        %s902 = scalar_lea.sflag [#allocation19], %s901
        %s903 = sand.u32 %s280, 1
        %s904 = scalar_lea.vmem [#allocation18], %s903
        // Predicated region
        $region121: #{transformer_forward.1} parent=87 // pred_check
          %p905 = pneg %p293
        $region122: #{transformer_forward.1} parent=87 // pred_check_branch
          %907 = sbr.rel (%p905) target = $region124
        $region123: #{transformer_forward.1} parent=87 // pred_region
          %908 = dma.done %s902, 16
        $region124: #{transformer_forward.1} parent=87 // pred_fallthru
          _
        %s909 = sand.u32 %s57, 1
        %s910 = scalar_lea.sflag [#allocation19], %s909
        %s911 = sand.u32 %s306, 1
        %s912 = scalar_lea.vmem [#allocation20], %s911
        // Predicated region
        $region125: #{transformer_forward.1} parent=87 // pred_check
          %p913 = pneg %p319
        $region126: #{transformer_forward.1} parent=87 // pred_check_branch
          %915 = sbr.rel (%p913) target = $region128
        $region127: #{transformer_forward.1} parent=87 // pred_region
          %916 = dma.done %s910, 16
        $region128: #{transformer_forward.1} parent=87 // pred_fallthru
          _
        %s917 = sand.u32 %s57, 1
        %s918 = scalar_lea.sflag [#allocation22], %s917
        %s919 = sand.u32 %s332, 1
        %s920 = scalar_lea.vmem [#allocation21], %s919
        // Predicated region
        $region129: #{transformer_forward.1} parent=87 // pred_check
          %p921 = pneg %p345
        $region130: #{transformer_forward.1} parent=87 // pred_check_branch
          %923 = sbr.rel (%p921) target = $region132
        $region131: #{transformer_forward.1} parent=87 // pred_region
          %924 = dma.done %s918, 16
        $region132: #{transformer_forward.1} parent=87 // pred_fallthru
          _
        %s925 = sand.u32 %s57, 1
        %s926 = scalar_lea.sflag [#allocation22], %s925
        %s927 = sand.u32 %s358, 1
        %s928 = smul.addr %s927, 16
        %s929 = scalar_lea.vmem [#allocation23], %s928
        // Predicated region
        $region133: #{transformer_forward.1} parent=87 // pred_check
          %p930 = pneg %p371
        $region134: #{transformer_forward.1} parent=87 // pred_check_branch
          %932 = sbr.rel (%p930) target = $region136
        $region135: #{transformer_forward.1} parent=87 // pred_region
          %933 = dma.done %s926, 256
        $region136: #{transformer_forward.1} parent=87 // pred_fallthru
          _
        %s934 = sand.u32 %s57, 1
        %s935 = scalar_lea.sflag [#allocation25], %s934
        %s936 = sand.u32 %s384, 1
        %s937 = scalar_lea.vmem [#allocation24], %s936
        // Predicated region
        $region137: #{transformer_forward.1} parent=87 // pred_check
          %p938 = pneg %p397
        $region138: #{transformer_forward.1} parent=87 // pred_check_branch
          %940 = sbr.rel (%p938) target = $region140
        $region139: #{transformer_forward.1} parent=87 // pred_region
          %941 = dma.done %s935, 16
        $region140: #{transformer_forward.1} parent=87 // pred_fallthru
          _
        %s942 = sand.u32 %s57, 1
        %s943 = scalar_lea.sflag [#allocation25], %s942
        %s944 = sand.u32 %s410, 1
        %s945 = smul.addr %s944, 32
        %s946 = scalar_lea.vmem [#allocation26], %s945
        // Predicated region
        $region141: #{transformer_forward.1} parent=87 // pred_check
          %p947 = pneg %p423
        $region142: #{transformer_forward.1} parent=87 // pred_check_branch
          %949 = sbr.rel (%p947) target = $region144
        $region143: #{transformer_forward.1} parent=87 // pred_region
          %950 = dma.done %s943, 512
        $region144: #{transformer_forward.1} parent=87 // pred_fallthru
          _
        %s951 = sand.u32 %s57, 1
        %s952 = scalar_lea.sflag [#allocation28], %s951
        %s953 = sand.u32 %s436, 1
        %s954 = scalar_lea.vmem [#allocation27], %s953
        // Predicated region
        $region145: #{transformer_forward.1} parent=87 // pred_check
          %p955 = pneg %p449
        $region146: #{transformer_forward.1} parent=87 // pred_check_branch
          %957 = sbr.rel (%p955) target = $region148
        $region147: #{transformer_forward.1} parent=87 // pred_region
          %958 = dma.done %s952, 16
        $region148: #{transformer_forward.1} parent=87 // pred_fallthru
          _
        // Predicated region
        $region149: #{transformer_forward.1} parent=87 // pred_check
          %p959 = pneg %p470
        $region150: #{transformer_forward.1} parent=87 // pred_check_branch
          %961 = sbr.rel (%p959) target = $region152
        $region151: #{transformer_forward.1} parent=87 // pred_region
          %962 = dma.done [#allocation28], 16
        $region152: #{transformer_forward.1} parent=87 // pred_fallthru
          _
        // Predicated region
        $region153: #{transformer_forward.1} parent=87 // pred_check
          %p963 = pneg %p491
        $region154: #{transformer_forward.1} parent=87 // pred_check_branch
          %965 = sbr.rel (%p963) target = $region156
        $region155: #{transformer_forward.1} parent=87 // pred_region
          %966 = dma.done [#allocation31], 16
        $region156: #{transformer_forward.1} parent=87 // pred_fallthru
          _
        %967 = sfence
        %s968 = sand.u32 %s77, 1
        %s969 = scalar_lea.sflag [#allocation5], %s968
        %s970 = sand.u32 %s77, 1
        %s971 = smul.addr %s970, 128
        %s972 = scalar_lea.vmem [#allocation4], %s971
        %p973 = pneg %p90
        %p974 = pneg %p87
        %p975 = pneg %p111
        %p976 = pneg %p108
        %s977 = sand.u32 %s57, 1
        %s978 = scalar_lea.sflag [#allocation10], %s977
        %s979 = sand.u32 %s124, 1
        %s980 = scalar_lea.vmem [#allocation9], %s979
        %p981 = pneg %p137
        %p982 = pneg %p134
        %s983 = sand.u32 %s57, 1
        %s984 = scalar_lea.sflag [#allocation10], %s983
        %s985 = sand.u32 %s150, 1
        %s986 = scalar_lea.vmem [#allocation11], %s985
        %p987 = pneg %p163
        %p988 = pneg %p160
        %s989 = sand.u32 %s57, 1
        %s990 = scalar_lea.sflag [#allocation13], %s989
        %s991 = sand.u32 %s176, 1
        %s992 = smul.addr %s991, 16
        %s993 = scalar_lea.vmem [#allocation12], %s992
        %p994 = pneg %p189
        %p995 = pneg %p186
        %s996 = sand.u32 %s57, 1
        %s997 = scalar_lea.sflag [#allocation13], %s996
        %s998 = sand.u32 %s202, 1
        %s999 = scalar_lea.vmem [#allocation14], %s998
        %p1000 = pneg %p215
        %p1001 = pneg %p212
        %s1002 = sand.u32 %s57, 1
        %s1003 = scalar_lea.sflag [#allocation16], %s1002
        %s1004 = sand.u32 %s228, 1
        %s1005 = smul.addr %s1004, 32
        %s1006 = scalar_lea.vmem [#allocation15], %s1005
        %p1007 = pneg %p241
        %p1008 = pneg %p238
        %s1009 = sand.u32 %s57, 1
        %s1010 = scalar_lea.sflag [#allocation16], %s1009
        %s1011 = sand.u32 %s254, 1
        %s1012 = smul.addr %s1011, 16
        %s1013 = scalar_lea.vmem [#allocation17], %s1012
        %p1014 = pneg %p267
        %p1015 = pneg %p264
        %s1016 = sand.u32 %s57, 1
        %s1017 = scalar_lea.sflag [#allocation19], %s1016
        %s1018 = sand.u32 %s280, 1
        %s1019 = scalar_lea.vmem [#allocation18], %s1018
        %p1020 = pneg %p293
        %p1021 = pneg %p290
        %s1022 = sand.u32 %s57, 1
        %s1023 = scalar_lea.sflag [#allocation19], %s1022
        %s1024 = sand.u32 %s306, 1
        %s1025 = scalar_lea.vmem [#allocation20], %s1024
        %p1026 = pneg %p319
        %p1027 = pneg %p316
        %s1028 = sand.u32 %s57, 1
        %s1029 = scalar_lea.sflag [#allocation22], %s1028
        %s1030 = sand.u32 %s332, 1
        %s1031 = scalar_lea.vmem [#allocation21], %s1030
        %p1032 = pneg %p345
        %p1033 = pneg %p342
        %s1034 = sand.u32 %s57, 1
        %s1035 = scalar_lea.sflag [#allocation22], %s1034
        %s1036 = sand.u32 %s358, 1
        %s1037 = smul.addr %s1036, 16
        %s1038 = scalar_lea.vmem [#allocation23], %s1037
        %p1039 = pneg %p371
        %p1040 = pneg %p368
        %s1041 = sand.u32 %s57, 1
        %s1042 = scalar_lea.sflag [#allocation25], %s1041
        %s1043 = sand.u32 %s384, 1
        %s1044 = scalar_lea.vmem [#allocation24], %s1043
        %p1045 = pneg %p397
        %p1046 = pneg %p394
        %s1047 = sand.u32 %s57, 1
        %s1048 = scalar_lea.sflag [#allocation25], %s1047
        %s1049 = sand.u32 %s410, 1
        %s1050 = smul.addr %s1049, 32
        %s1051 = scalar_lea.vmem [#allocation26], %s1050
        %p1052 = pneg %p423
        %p1053 = pneg %p420
        %s1054 = sand.u32 %s57, 1
        %s1055 = scalar_lea.sflag [#allocation28], %s1054
        %s1056 = sand.u32 %s436, 1
        %s1057 = scalar_lea.vmem [#allocation27], %s1056
        %p1058 = pneg %p449
        %p1059 = pneg %p446
        %p1060 = pneg %p470
        %p1061 = pneg %p467
        %p1062 = pneg %p491
        %p1063 = pneg %p488
        %p1064 = pneg %p517
        %p1065 = pneg %p514
        %s1066 = sand.u32 %s504, 1
        %s1067 = scalar_lea.sflag [#allocation6], %s1066
        %s1068 = sand.u32 %s504, 1
        %s1069 = smul.addr %s1068, 128
        %s1070 = scalar_lea.vmem [#allocation32], %s1069
        %s1071 = smul.u32 2, %s61
        %s1072 = smul.u32 2, %s61
        %p1074 = scmp.eq.s32.totalorder %s62, 0
        // Predicated region
        $region157: #{transformer_forward.1} parent=87 // pred_check
          %p1075 = pneg %p1074
        $region158: #{transformer_forward.1} parent=87 // pred_check_branch
          %1077 = sbr.rel (%p1075) target = $region160
        $region159: #{transformer_forward.1} parent=87 // pred_region
          %v1078 = vld [vmem:[%s841] sm:$0xff]
          %v1079 = vld [vmem:[%s841 + $0x8] sm:$0xff]
          %v1080 = vld [vmem:[%s841 + $0x10] sm:$0xff]
          %v1081 = vld [vmem:[%s841 + $0x18] sm:$0xff]
          %v1082 = vld [vmem:[%s841 + $0x20] sm:$0xff]
          %v1083 = vld [vmem:[%s841 + $0x28] sm:$0xff]
          %v1084 = vld [vmem:[%s841 + $0x30] sm:$0xff]
          %v1085 = vld [vmem:[%s841 + $0x38] sm:$0xff]
          %v1086 = vld [vmem:[%s841 + $0x40] sm:$0xff]
          %v1087 = vld [vmem:[%s841 + $0x48] sm:$0xff]
          %v1088 = vld [vmem:[%s841 + $0x50] sm:$0xff]
          %v1089 = vld [vmem:[%s841 + $0x58] sm:$0xff]
          %v1090 = vld [vmem:[%s841 + $0x60] sm:$0xff]
          %v1091 = vld [vmem:[%s841 + $0x68] sm:$0xff]
          %v1092 = vld [vmem:[%s841 + $0x70] sm:$0xff]
          %v1093 = vld [vmem:[%s841 + $0x78] sm:$0xff]
          %vm1094 = vcmask 261120
          %1095 = vst.msk [vmem:[#allocation2] sm:$0xff] %vm1094, %v1078
          %1096 = vst.msk [vmem:[#allocation2 + $0x8] sm:$0xff] %vm1094, %v1079
          %1097 = vst.msk [vmem:[#allocation2 + $0x10] sm:$0xff] %vm1094, %v1080
          %1098 = vst.msk [vmem:[#allocation2 + $0x18] sm:$0xff] %vm1094, %v1081
          %1099 = vst.msk [vmem:[#allocation2 + $0x20] sm:$0xff] %vm1094, %v1082
          %1100 = vst.msk [vmem:[#allocation2 + $0x28] sm:$0xff] %vm1094, %v1083
          %1101 = vst.msk [vmem:[#allocation2 + $0x30] sm:$0xff] %vm1094, %v1084
          %1102 = vst.msk [vmem:[#allocation2 + $0x38] sm:$0xff] %vm1094, %v1085
          %1103 = vst.msk [vmem:[#allocation2 + $0x40] sm:$0xff] %vm1094, %v1086
          %1104 = vst.msk [vmem:[#allocation2 + $0x48] sm:$0xff] %vm1094, %v1087
          %1105 = vst.msk [vmem:[#allocation2 + $0x50] sm:$0xff] %vm1094, %v1088
          %1106 = vst.msk [vmem:[#allocation2 + $0x58] sm:$0xff] %vm1094, %v1089
          %1107 = vst.msk [vmem:[#allocation2 + $0x60] sm:$0xff] %vm1094, %v1090
          %1108 = vst.msk [vmem:[#allocation2 + $0x68] sm:$0xff] %vm1094, %v1091
          %1109 = vst.msk [vmem:[#allocation2 + $0x70] sm:$0xff] %vm1094, %v1092
          %1110 = vst.msk [vmem:[#allocation2 + $0x78] sm:$0xff] %vm1094, %v1093
        $region160: #{transformer_forward.1} parent=87 // pred_fallthru
          _
        %v1111 = vld [vmem:[#allocation2] sm:$0xff]
        %v1112 = vld [vmem:[#allocation2 + $0x8] sm:$0xff]
        %v1113 = vld [vmem:[#allocation2 + $0x10] sm:$0xff]
        %v1114 = vld [vmem:[#allocation2 + $0x18] sm:$0xff]
        %v1115 = vld [vmem:[#allocation2 + $0x20] sm:$0xff]
        %v1116 = vld [vmem:[#allocation2 + $0x28] sm:$0xff]
        %v1117 = vld [vmem:[#allocation2 + $0x30] sm:$0xff]
        %v1118 = vld [vmem:[#allocation2 + $0x38] sm:$0xff]
        %v1119 = vld [vmem:[#allocation2 + $0x40] sm:$0xff]
        %v1120 = vld [vmem:[#allocation2 + $0x48] sm:$0xff]
        %v1121 = vld [vmem:[#allocation2 + $0x50] sm:$0xff]
        %v1122 = vld [vmem:[#allocation2 + $0x58] sm:$0xff]
        %v1123 = vld [vmem:[#allocation2 + $0x60] sm:$0xff]
        %v1124 = vld [vmem:[#allocation2 + $0x68] sm:$0xff]
        %v1125 = vld [vmem:[#allocation2 + $0x70] sm:$0xff]
        %v1126 = vld [vmem:[#allocation2 + $0x78] sm:$0xff]
        %v1127 = vld [vmem:[%s853] sm:$0x1]
        %v1128 = vld [vmem:[%s861] sm:$0x1]
        %vm1129 = vcmask 261120
        %v1130 = vsel %vm1129, %v1111, 0.0
        %1131 = vadd.xlane.f32.xlu0 %v1130
        %v1132 = vpop.xlane.xlu0 %1131
        %v1133 = vsel %vm1129, %v1112, 0.0
        %1134 = vadd.xlane.f32.xlu0 %v1133
        %v1135 = vpop.xlane.xlu0 %1134
        %v1136 = vsel %vm1129, %v1113, 0.0
        %1137 = vadd.xlane.f32.xlu0 %v1136
        %v1138 = vpop.xlane.xlu0 %1137
        %v1139 = vsel %vm1129, %v1114, 0.0
        %1140 = vadd.xlane.f32.xlu0 %v1139
        %v1141 = vpop.xlane.xlu0 %1140
        %v1142 = vsel %vm1129, %v1115, 0.0
        %1143 = vadd.xlane.f32.xlu0 %v1142
        %v1144 = vpop.xlane.xlu0 %1143
        %v1145 = vsel %vm1129, %v1116, 0.0
        %1146 = vadd.xlane.f32.xlu0 %v1145
        %v1147 = vpop.xlane.xlu0 %1146
        %v1148 = vsel %vm1129, %v1117, 0.0
        %1149 = vadd.xlane.f32.xlu0 %v1148
        %v1150 = vpop.xlane.xlu0 %1149
        %v1151 = vsel %vm1129, %v1118, 0.0
        %1152 = vadd.xlane.f32.xlu0 %v1151
        %v1153 = vpop.xlane.xlu0 %1152
        %v1154 = vsel %vm1129, %v1119, 0.0
        %1155 = vadd.xlane.f32.xlu0 %v1154
        %v1156 = vpop.xlane.xlu0 %1155
        %v1157 = vsel %vm1129, %v1120, 0.0
        %1158 = vadd.xlane.f32.xlu0 %v1157
        %v1159 = vpop.xlane.xlu0 %1158
        %v1160 = vsel %vm1129, %v1121, 0.0
        %1161 = vadd.xlane.f32.xlu0 %v1160
        %v1162 = vpop.xlane.xlu0 %1161
        %v1163 = vsel %vm1129, %v1122, 0.0
        %1164 = vadd.xlane.f32.xlu0 %v1163
        %v1165 = vpop.xlane.xlu0 %1164
        %v1166 = vsel %vm1129, %v1123, 0.0
        %1167 = vadd.xlane.f32.xlu0 %v1166
        %v1168 = vpop.xlane.xlu0 %1167
        %v1169 = vsel %vm1129, %v1124, 0.0
        %1170 = vadd.xlane.f32.xlu0 %v1169
        %v1171 = vpop.xlane.xlu0 %1170
        %v1172 = vsel %vm1129, %v1125, 0.0
        %1173 = vadd.xlane.f32.xlu0 %v1172
        %v1174 = vpop.xlane.xlu0 %1173
        %v1175 = vsel %vm1129, %v1126, 0.0
        %1176 = vadd.xlane.f32.xlu0 %v1175
        %v1177 = vpop.xlane.xlu0 %1176
        %v1178 = vrcp.pop 32.0
        %v1179 = vmul.f32 %v1132, %v1178
        %v1180 = vmul.f32 %v1135, %v1178
        %v1181 = vmul.f32 %v1138, %v1178
        %v1182 = vmul.f32 %v1141, %v1178
        %v1183 = vmul.f32 %v1144, %v1178
        %v1184 = vmul.f32 %v1147, %v1178
        %v1185 = vmul.f32 %v1150, %v1178
        %v1186 = vmul.f32 %v1153, %v1178
        %v1187 = vmul.f32 %v1156, %v1178
        %v1188 = vmul.f32 %v1159, %v1178
        %v1189 = vmul.f32 %v1162, %v1178
        %v1190 = vmul.f32 %v1165, %v1178
        %v1191 = vmul.f32 %v1168, %v1178
        %v1192 = vmul.f32 %v1171, %v1178
        %v1193 = vmul.f32 %v1174, %v1178
        %v1194 = vmul.f32 %v1177, %v1178
        %v1195 = vsub.f32 %v1111, %v1179
        %v1196 = vsub.f32 %v1112, %v1180
        %v1197 = vsub.f32 %v1113, %v1181
        %v1198 = vsub.f32 %v1114, %v1182
        %v1199 = vsub.f32 %v1115, %v1183
        %v1200 = vsub.f32 %v1116, %v1184
        %v1201 = vsub.f32 %v1117, %v1185
        %v1202 = vsub.f32 %v1118, %v1186
        %v1203 = vsub.f32 %v1119, %v1187
        %v1204 = vsub.f32 %v1120, %v1188
        %v1205 = vsub.f32 %v1121, %v1189
        %v1206 = vsub.f32 %v1122, %v1190
        %v1207 = vsub.f32 %v1123, %v1191
        %v1208 = vsub.f32 %v1124, %v1192
        %v1209 = vsub.f32 %v1125, %v1193
        %v1210 = vsub.f32 %v1126, %v1194
        %v1211 = vmul.f32 %v1195, %v1195
        %v1212 = vmul.f32 %v1196, %v1196
        %v1213 = vmul.f32 %v1197, %v1197
        %v1214 = vmul.f32 %v1198, %v1198
        %v1215 = vmul.f32 %v1199, %v1199
        %v1216 = vmul.f32 %v1200, %v1200
        %v1217 = vmul.f32 %v1201, %v1201
        %v1218 = vmul.f32 %v1202, %v1202
        %v1219 = vmul.f32 %v1203, %v1203
        %v1220 = vmul.f32 %v1204, %v1204
        %v1221 = vmul.f32 %v1205, %v1205
        %v1222 = vmul.f32 %v1206, %v1206
        %v1223 = vmul.f32 %v1207, %v1207
        %v1224 = vmul.f32 %v1208, %v1208
        %v1225 = vmul.f32 %v1209, %v1209
        %v1226 = vmul.f32 %v1210, %v1210
        %v1227 = vsel %vm1129, %v1211, 0.0
        %1228 = vadd.xlane.f32.xlu0 %v1227
        %v1229 = vpop.xlane.xlu0 %1228
        %v1230 = vsel %vm1129, %v1212, 0.0
        %1231 = vadd.xlane.f32.xlu0 %v1230
        %v1232 = vpop.xlane.xlu0 %1231
        %v1233 = vsel %vm1129, %v1213, 0.0
        %1234 = vadd.xlane.f32.xlu0 %v1233
        %v1235 = vpop.xlane.xlu0 %1234
        %v1236 = vsel %vm1129, %v1214, 0.0
        %1237 = vadd.xlane.f32.xlu0 %v1236
        %v1238 = vpop.xlane.xlu0 %1237
        %v1239 = vsel %vm1129, %v1215, 0.0
        %1240 = vadd.xlane.f32.xlu0 %v1239
        %v1241 = vpop.xlane.xlu0 %1240
        %v1242 = vsel %vm1129, %v1216, 0.0
        %1243 = vadd.xlane.f32.xlu0 %v1242
        %v1244 = vpop.xlane.xlu0 %1243
        %v1245 = vsel %vm1129, %v1217, 0.0
        %1246 = vadd.xlane.f32.xlu0 %v1245
        %v1247 = vpop.xlane.xlu0 %1246
        %v1248 = vsel %vm1129, %v1218, 0.0
        %1249 = vadd.xlane.f32.xlu0 %v1248
        %v1250 = vpop.xlane.xlu0 %1249
        %v1251 = vsel %vm1129, %v1219, 0.0
        %1252 = vadd.xlane.f32.xlu0 %v1251
        %v1253 = vpop.xlane.xlu0 %1252
        %v1254 = vsel %vm1129, %v1220, 0.0
        %1255 = vadd.xlane.f32.xlu0 %v1254
        %v1256 = vpop.xlane.xlu0 %1255
        %v1257 = vsel %vm1129, %v1221, 0.0
        %1258 = vadd.xlane.f32.xlu0 %v1257
        %v1259 = vpop.xlane.xlu0 %1258
        %v1260 = vsel %vm1129, %v1222, 0.0
        %1261 = vadd.xlane.f32.xlu0 %v1260
        %v1262 = vpop.xlane.xlu0 %1261
        %v1263 = vsel %vm1129, %v1223, 0.0
        %1264 = vadd.xlane.f32.xlu0 %v1263
        %v1265 = vpop.xlane.xlu0 %1264
        %v1266 = vsel %vm1129, %v1224, 0.0
        %1267 = vadd.xlane.f32.xlu0 %v1266
        %v1268 = vpop.xlane.xlu0 %1267
        %v1269 = vsel %vm1129, %v1225, 0.0
        %1270 = vadd.xlane.f32.xlu0 %v1269
        %v1271 = vpop.xlane.xlu0 %1270
        %v1272 = vsel %vm1129, %v1226, 0.0
        %1273 = vadd.xlane.f32.xlu0 %v1272
        %v1274 = vpop.xlane.xlu0 %1273
        %v1275 = vmul.f32 %v1229, %v1178
        %v1276 = vmul.f32 %v1232, %v1178
        %v1277 = vmul.f32 %v1235, %v1178
        %v1278 = vmul.f32 %v1238, %v1178
        %v1279 = vmul.f32 %v1241, %v1178
        %v1280 = vmul.f32 %v1244, %v1178
        %v1281 = vmul.f32 %v1247, %v1178
        %v1282 = vmul.f32 %v1250, %v1178
        %v1283 = vmul.f32 %v1253, %v1178
        %v1284 = vmul.f32 %v1256, %v1178
        %v1285 = vmul.f32 %v1259, %v1178
        %v1286 = vmul.f32 %v1262, %v1178
        %v1287 = vmul.f32 %v1265, %v1178
        %v1288 = vmul.f32 %v1268, %v1178
        %v1289 = vmul.f32 %v1271, %v1178
        %v1290 = vmul.f32 %v1274, %v1178
        %v1291 = vadd.f32 %v1275, 1e-05
        %v1292 = vadd.f32 %v1276, 1e-05
        %v1293 = vadd.f32 %v1277, 1e-05
        %v1294 = vadd.f32 %v1278, 1e-05
        %v1295 = vadd.f32 %v1279, 1e-05
        %v1296 = vadd.f32 %v1280, 1e-05
        %v1297 = vadd.f32 %v1281, 1e-05
        %v1298 = vadd.f32 %v1282, 1e-05
        %v1299 = vadd.f32 %v1283, 1e-05
        %v1300 = vadd.f32 %v1284, 1e-05
        %v1301 = vadd.f32 %v1285, 1e-05
        %v1302 = vadd.f32 %v1286, 1e-05
        %v1303 = vadd.f32 %v1287, 1e-05
        %v1304 = vadd.f32 %v1288, 1e-05
        %v1305 = vadd.f32 %v1289, 1e-05
        %v1306 = vadd.f32 %v1290, 1e-05
        %v1307 = vrsqrt.pop %v1291
        %v1308 = vrsqrt.pop %v1292
        %v1309 = vrsqrt.pop %v1293
        %v1310 = vrsqrt.pop %v1294
        %v1311 = vrsqrt.pop %v1295
        %v1312 = vrsqrt.pop %v1296
        %v1313 = vrsqrt.pop %v1297
        %v1314 = vrsqrt.pop %v1298
        %v1315 = vrsqrt.pop %v1299
        %v1316 = vrsqrt.pop %v1300
        %v1317 = vrsqrt.pop %v1301
        %v1318 = vrsqrt.pop %v1302
        %v1319 = vrsqrt.pop %v1303
        %v1320 = vrsqrt.pop %v1304
        %v1321 = vrsqrt.pop %v1305
        %v1322 = vrsqrt.pop %v1306
        %v1323 = vmul.f32 %v1195, %v1307
        %v1324 = vmul.f32 %v1196, %v1308
        %v1325 = vmul.f32 %v1197, %v1309
        %v1326 = vmul.f32 %v1198, %v1310
        %v1327 = vmul.f32 %v1199, %v1311
        %v1328 = vmul.f32 %v1200, %v1312
        %v1329 = vmul.f32 %v1201, %v1313
        %v1330 = vmul.f32 %v1202, %v1314
        %v1331 = vmul.f32 %v1203, %v1315
        %v1332 = vmul.f32 %v1204, %v1316
        %v1333 = vmul.f32 %v1205, %v1317
        %v1334 = vmul.f32 %v1206, %v1318
        %v1335 = vmul.f32 %v1207, %v1319
        %v1336 = vmul.f32 %v1208, %v1320
        %v1337 = vmul.f32 %v1209, %v1321
        %v1338 = vmul.f32 %v1210, %v1322
        %v1340 = vlaneseq
        %v1341 = vshrl.u32 %v1340, 7
        %v1342 = vsub.s32 0, %v1341
        %v1343 = vrot.slane %v1127, %v1342
        %v1345 = vmul.f32 %v1323, %v1343
        %v1346 = vmul.f32 %v1324, %v1343
        %v1347 = vmul.f32 %v1325, %v1343
        %v1348 = vmul.f32 %v1326, %v1343
        %v1349 = vmul.f32 %v1327, %v1343
        %v1350 = vmul.f32 %v1328, %v1343
        %v1351 = vmul.f32 %v1329, %v1343
        %v1352 = vmul.f32 %v1330, %v1343
        %v1353 = vmul.f32 %v1331, %v1343
        %v1354 = vmul.f32 %v1332, %v1343
        %v1355 = vmul.f32 %v1333, %v1343
        %v1356 = vmul.f32 %v1334, %v1343
        %v1357 = vmul.f32 %v1335, %v1343
        %v1358 = vmul.f32 %v1336, %v1343
        %v1359 = vmul.f32 %v1337, %v1343
        %v1360 = vmul.f32 %v1338, %v1343
        %v1362 = vlaneseq
        %v1363 = vshrl.u32 %v1362, 7
        %v1364 = vsub.s32 0, %v1363
        %v1365 = vrot.slane %v1128, %v1364
        %v1367 = vadd.f32 %v1345, %v1365
        %v1368 = vadd.f32 %v1346, %v1365
        %v1369 = vadd.f32 %v1347, %v1365
        %v1370 = vadd.f32 %v1348, %v1365
        %v1371 = vadd.f32 %v1349, %v1365
        %v1372 = vadd.f32 %v1350, %v1365
        %v1373 = vadd.f32 %v1351, %v1365
        %v1374 = vadd.f32 %v1352, %v1365
        %v1375 = vadd.f32 %v1353, %v1365
        %v1376 = vadd.f32 %v1354, %v1365
        %v1377 = vadd.f32 %v1355, %v1365
        %v1378 = vadd.f32 %v1356, %v1365
        %v1379 = vadd.f32 %v1357, %v1365
        %v1380 = vadd.f32 %v1358, %v1365
        %v1381 = vadd.f32 %v1359, %v1365
        %v1382 = vadd.f32 %v1360, %v1365
        %v1383 = vld [vmem:[%s870] sm:$0xf]
        %v1384 = vld [vmem:[%s870 + $0x4] sm:$0xf]
        %v1385 = vld [vmem:[%s870 + $0x8] sm:$0xf]
        %v1386 = vld [vmem:[%s870 + $0xc] sm:$0xf]
        %v1387 = vpack.c.bf16 %v1368, %v1367
        %v1388 = vpack.c.bf16 %v1370, %v1369
        %v1389 = vpack.c.bf16 %v1372, %v1371
        %v1390 = vpack.c.bf16 %v1374, %v1373
        %v1391 = vpack.c.bf16 %v1376, %v1375
        %v1392 = vpack.c.bf16 %v1378, %v1377
        %v1393 = vpack.c.bf16 %v1380, %v1379
        %v1394 = vpack.c.bf16 %v1382, %v1381
        %v1395 = vld [vmem:[%s878] sm:$0x1]
        %v1397 = vlaneseq
        %v1398 = vshrl.u32 %v1397, 7
        %v1399 = vsub.s32 0, %v1398
        %v1400 = vrot.slane %v1395, %v1399
        %v1406 = vunpack.c.l.b16 %v1383
        %v1407 = vunpack.c.l.b16 %v1384
        %v1408 = vunpack.c.l.b16 %v1385
        %v1409 = vunpack.c.l.b16 %v1386
        %v1410 = vpack.c.b16 %v1407, %v1406
        %v1411 = vpack.c.b16 %v1409, %v1408
        %v1415 = vsel %vm1129, %v1387, 0
        %v1418 = vsel %vm1129, %v1388, 0
        %v1421 = vsel %vm1129, %v1389, 0
        %v1424 = vsel %vm1129, %v1390, 0
        %v1427 = vsel %vm1129, %v1391, 0
        %v1430 = vsel %vm1129, %v1392, 0
        %v1433 = vsel %vm1129, %v1393, 0
        %v1436 = vsel %vm1129, %v1394, 0
        %1438 = vmatprep.subr.bf16.mxu0 0
        %1439 = vmatpush1.bf16.msra.mxu0 %v1410
        %1440 = vmatprep.subr.bf16.mxu0 0
        %1441 = vmatpush1.bf16.msra.mxu0 %v1411
        %1442 = vmatprep.subr.bf16.mxu0 0
        %1443 = vmatpush1.bf16.msra.mxu0 0
        %1444 = vmatprep.subr.bf16.mxu0 0
        %1445 = vmatpush1.bf16.msra.mxu0 0
        %1446 = vmatprep.subr.bf16.mxu0 0
        %1447 = vmatpush1.bf16.msra.mxu0 0
        %1448 = vmatprep.subr.bf16.mxu0 0
        %1449 = vmatpush1.bf16.msra.mxu0 0
        %1450 = vmatprep.subr.bf16.mxu0 0
        %1451 = vmatpush1.bf16.msra.mxu0 0
        %1452 = vmatprep.subr.bf16.mxu0 0
        %1453 = vmatpush1.bf16.msra.mxu0 0
        %1454 = vmatprep.subr.bf16.mxu0 0
        %1455 = vmatpush1.bf16.msra.mxu0 0
        %1456 = vmatprep.subr.bf16.mxu0 0
        %1457 = vmatpush1.bf16.msra.mxu0 0
        %1458 = vmatprep.subr.bf16.mxu0 0
        %1459 = vmatpush1.bf16.msra.mxu0 0
        %1460 = vmatprep.subr.bf16.mxu0 0
        %1461 = vmatpush1.bf16.msra.mxu0 0
        %1462 = vmatprep.subr.bf16.mxu0 0
        %1463 = vmatpush1.bf16.msra.mxu0 0
        %1464 = vmatprep.subr.bf16.mxu0 0
        %1465 = vmatpush1.bf16.msra.mxu0 0
        %1466 = vmatprep.subr.bf16.mxu0 0
        %1467 = vmatpush1.bf16.msra.mxu0 0
        %1468 = vmatprep.subr.bf16.mxu0 0
        %1469 = vmatpush1.bf16.msra.mxu0 0
        %1470 = vmatprep.mubr.bf16.mxu0 0
        %1471 = vmatmul.mubr.bf16.gmra.mrb[0].mxu0 %v1415
        %v1472 = vpop.f32.mrb[0].mxu0
        %v1473 = vadd.f32 %v1400, %v1472
        %v1474 = vpop.f32.mrb[0].mxu0
        %v1475 = vpop.f32.mrb[0].mxu0
        %v1476 = vadd.f32 %v1400, %v1475
        %v1477 = vpop.f32.mrb[0].mxu0
        %1478 = vmatprep.mubr.bf16.mxu0 0
        %1479 = vmatmul.mubr.bf16.gmra.mrb[0].mxu0 %v1418
        %v1480 = vpop.f32.mrb[0].mxu0
        %v1481 = vadd.f32 %v1400, %v1480
        %v1482 = vpop.f32.mrb[0].mxu0
        %v1483 = vpop.f32.mrb[0].mxu0
        %v1484 = vadd.f32 %v1400, %v1483
        %v1485 = vpop.f32.mrb[0].mxu0
        %1486 = vmatprep.mubr.bf16.mxu0 0
        %1487 = vmatmul.mubr.bf16.gmra.mrb[0].mxu0 %v1421
        %v1488 = vpop.f32.mrb[0].mxu0
        %v1489 = vadd.f32 %v1400, %v1488
        %v1490 = vpop.f32.mrb[0].mxu0
        %v1491 = vpop.f32.mrb[0].mxu0
        %v1492 = vadd.f32 %v1400, %v1491
        %v1493 = vpop.f32.mrb[0].mxu0
        %1494 = vmatprep.mubr.bf16.mxu0 0
        %1495 = vmatmul.mubr.bf16.gmra.mrb[0].mxu0 %v1424
        %v1496 = vpop.f32.mrb[0].mxu0
        %v1497 = vadd.f32 %v1400, %v1496
        %v1498 = vpop.f32.mrb[0].mxu0
        %v1499 = vpop.f32.mrb[0].mxu0
        %v1500 = vadd.f32 %v1400, %v1499
        %v1501 = vpop.f32.mrb[0].mxu0
        %1502 = vmatprep.mubr.bf16.mxu0 0
        %1503 = vmatmul.mubr.bf16.gmra.mrb[0].mxu0 %v1427
        %v1504 = vpop.f32.mrb[0].mxu0
        %v1505 = vadd.f32 %v1400, %v1504
        %v1506 = vpop.f32.mrb[0].mxu0
        %v1507 = vpop.f32.mrb[0].mxu0
        %v1508 = vadd.f32 %v1400, %v1507
        %v1509 = vpop.f32.mrb[0].mxu0
        %1510 = vmatprep.mubr.bf16.mxu0 0
        %1511 = vmatmul.mubr.bf16.gmra.mrb[0].mxu0 %v1430
        %v1512 = vpop.f32.mrb[0].mxu0
        %v1513 = vadd.f32 %v1400, %v1512
        %v1514 = vpop.f32.mrb[0].mxu0
        %v1515 = vpop.f32.mrb[0].mxu0
        %v1516 = vadd.f32 %v1400, %v1515
        %v1517 = vpop.f32.mrb[0].mxu0
        %1518 = vmatprep.mubr.bf16.mxu0 0
        %1519 = vmatmul.mubr.bf16.gmra.mrb[0].mxu0 %v1433
        %v1520 = vpop.f32.mrb[0].mxu0
        %v1521 = vadd.f32 %v1400, %v1520
        %v1522 = vpop.f32.mrb[0].mxu0
        %v1523 = vpop.f32.mrb[0].mxu0
        %v1524 = vadd.f32 %v1400, %v1523
        %v1525 = vpop.f32.mrb[0].mxu0
        %1526 = vmatprep.mubr.bf16.mxu0 0
        %1527 = vmatmul.mubr.bf16.gmra.mrb[0].mxu0 %v1436
        %v1528 = vpop.f32.mrb[0].mxu0
        %v1529 = vadd.f32 %v1400, %v1528
        %v1530 = vpop.f32.mrb[0].mxu0
        %v1531 = vpop.f32.mrb[0].mxu0
        %v1532 = vadd.f32 %v1400, %v1531
        %v1533 = vpop.f32.mrb[0].mxu0
        %1534 = vdwg.mxu0
        %v1535 = vld [vmem:[%s896] sm:$0xf]
        %v1536 = vld [vmem:[%s896 + $0x4] sm:$0xf]
        %v1537 = vld [vmem:[%s896 + $0x8] sm:$0xf]
        %v1538 = vld [vmem:[%s896 + $0xc] sm:$0xf]
        %v1539 = vld [vmem:[%s887] sm:$0xf]
        %v1540 = vld [vmem:[%s887 + $0x4] sm:$0xf]
        %v1541 = vld [vmem:[%s887 + $0x8] sm:$0xf]
        %v1542 = vld [vmem:[%s887 + $0xc] sm:$0xf]
        %v1543 = vld [vmem:[%s887 + $0x10] sm:$0xf]
        %v1544 = vld [vmem:[%s887 + $0x14] sm:$0xf]
        %v1545 = vld [vmem:[%s887 + $0x18] sm:$0xf]
        %v1546 = vld [vmem:[%s887 + $0x1c] sm:$0xf]
        %v1547 = vmul.f32 %v1473, 0.35355338
        %v1548 = vmul.f32 %v1476, 0.35355338
        %v1549 = vmul.f32 %v1481, 0.35355338
        %v1550 = vmul.f32 %v1484, 0.35355338
        %v1551 = vmul.f32 %v1489, 0.35355338
        %v1552 = vmul.f32 %v1492, 0.35355338
        %v1553 = vmul.f32 %v1497, 0.35355338
        %v1554 = vmul.f32 %v1500, 0.35355338
        %v1555 = vpack.c.bf16 %v1548, %v1547
        %v1556 = vpack.c.bf16 %v1550, %v1549
        %v1557 = vpack.c.bf16 %v1552, %v1551
        %v1558 = vpack.c.bf16 %v1554, %v1553
        %v1559 = vpack.c.bf16 %v1476, %v1473
        %v1560 = vpack.c.bf16 %v1484, %v1481
        %v1561 = vpack.c.bf16 %v1492, %v1489
        %v1562 = vpack.c.bf16 %v1500, %v1497
        %1567 = vrot.lane.b32.xlu0 %v1559, 96
        %v1568 = vpop.permute.xlu0 %1567
        %1569 = vrot.lane.b32.xlu0 %v1560, 96
        %v1570 = vpop.permute.xlu0 %1569
        %1571 = vrot.lane.b32.xlu0 %v1561, 96
        %v1572 = vpop.permute.xlu0 %1571
        %1573 = vrot.lane.b32.xlu0 %v1562, 96
        %v1574 = vpop.permute.xlu0 %1573
        %vm1575 = vcmask 64512
        %v1577 = vsel %vm1575, %v1555, 0
        %v1580 = vsel %vm1575, %v1556, 0
        %v1583 = vsel %vm1575, %v1557, 0
        %v1586 = vsel %vm1575, %v1558, 0
        %v1589 = vsel %vm1575, %v1568, 0
        %v1592 = vsel %vm1575, %v1570, 0
        %v1595 = vsel %vm1575, %v1572, 0
        %v1598 = vsel %vm1575, %v1574, 0
        %1600 = vmatprep.subr.bf16.mxu0 0
        %1601 = vmatpush1.bf16.xpose.msra.mxu0 %v1589
        %1602 = vmatprep.subr.bf16.mxu0 0
        %1603 = vmatpush1.bf16.xpose.msra.mxu0 %v1592
        %1604 = vmatprep.subr.bf16.mxu0 0
        %1605 = vmatpush1.bf16.xpose.msra.mxu0 %v1595
        %1606 = vmatprep.subr.bf16.mxu0 0
        %1607 = vmatpush1.bf16.xpose.msra.mxu0 %v1598
        %1608 = vmatprep.subr.bf16.mxu0 0
        %1609 = vmatpush1.bf16.xpose.msra.mxu0 0
        %1610 = vmatprep.subr.bf16.mxu0 0
        %1611 = vmatpush1.bf16.xpose.msra.mxu0 0
        %1612 = vmatprep.subr.bf16.mxu0 0
        %1613 = vmatpush1.bf16.xpose.msra.mxu0 0
        %1614 = vmatprep.subr.bf16.mxu0 0
        %1615 = vmatpush1.bf16.xpose.msra.mxu0 0
        %1616 = vmatprep.subr.bf16.mxu0 0
        %1617 = vmatpush1.bf16.xpose.msra.mxu0 0
        %1618 = vmatprep.subr.bf16.mxu0 0
        %1619 = vmatpush1.bf16.xpose.msra.mxu0 0
        %1620 = vmatprep.subr.bf16.mxu0 0
        %1621 = vmatpush1.bf16.xpose.msra.mxu0 0
        %1622 = vmatprep.subr.bf16.mxu0 0
        %1623 = vmatpush1.bf16.xpose.msra.mxu0 0
        %1624 = vmatprep.subr.bf16.mxu0 0
        %1625 = vmatpush1.bf16.xpose.msra.mxu0 0
        %1626 = vmatprep.subr.bf16.mxu0 0
        %1627 = vmatpush1.bf16.xpose.msra.mxu0 0
        %1628 = vmatprep.subr.bf16.mxu0 0
        %1629 = vmatpush1.bf16.xpose.msra.mxu0 0
        %1630 = vmatprep.subr.bf16.mxu0 0
        %1631 = vmatpush1.bf16.xpose.msra.mxu0 0
        %1632 = vmatprep.mubr.bf16.mxu0 0
        %1633 = vmatmul.mubr.bf16.gmra.mrb[0].mxu0 %v1577
        %v1634 = vpop.f32.mrb[0].mxu0
        %v1635 = vadd.f32 0.0, %v1634
        %v1636 = vpop.f32.mrb[0].mxu0
        %v1637 = vpop.f32.mrb[0].mxu0
        %v1638 = vadd.f32 0.0, %v1637
        %v1639 = vpop.f32.mrb[0].mxu0
        %1640 = vmatprep.mubr.bf16.mxu0 0
        %1641 = vmatmul.mubr.bf16.gmra.mrb[0].mxu0 %v1580
        %v1642 = vpop.f32.mrb[0].mxu0
        %v1643 = vadd.f32 0.0, %v1642
        %v1644 = vpop.f32.mrb[0].mxu0
        %v1645 = vpop.f32.mrb[0].mxu0
        %v1646 = vadd.f32 0.0, %v1645
        %v1647 = vpop.f32.mrb[0].mxu0
        %1648 = vmatprep.mubr.bf16.mxu0 0
        %1649 = vmatmul.mubr.bf16.gmra.mrb[0].mxu0 %v1583
        %v1650 = vpop.f32.mrb[0].mxu0
        %v1651 = vadd.f32 0.0, %v1650
        %v1652 = vpop.f32.mrb[0].mxu0
        %v1653 = vpop.f32.mrb[0].mxu0
        %v1654 = vadd.f32 0.0, %v1653
        %v1655 = vpop.f32.mrb[0].mxu0
        %1656 = vmatprep.mubr.bf16.mxu0 0
        %1657 = vmatmul.mubr.bf16.gmra.mrb[0].mxu0 %v1586
        %v1658 = vpop.f32.mrb[0].mxu0
        %v1659 = vadd.f32 0.0, %v1658
        %v1660 = vpop.f32.mrb[0].mxu0
        %v1661 = vpop.f32.mrb[0].mxu0
        %v1662 = vadd.f32 0.0, %v1661
        %v1663 = vpop.f32.mrb[0].mxu0
        %1664 = vdwg.mxu0
        %1665 = vrot.lane.b32.xlu0 %v1559, 64
        %v1666 = vpop.permute.xlu0 %1665
        %1667 = vrot.lane.b32.xlu0 %v1560, 64
        %v1668 = vpop.permute.xlu0 %1667
        %1669 = vrot.lane.b32.xlu0 %v1561, 64
        %v1670 = vpop.permute.xlu0 %1669
        %1671 = vrot.lane.b32.xlu0 %v1562, 64
        %v1672 = vpop.permute.xlu0 %1671
        %v1675 = vunpack.c.l.b16 %v1539
        %v1676 = vunpack.c.l.b16 %v1540
        %v1677 = vpack.c.b16 %v1676, %v1675
        %v1679 = vsel %vm1575, %v1666, 0
        %v1682 = vsel %vm1575, %v1668, 0
        %v1685 = vsel %vm1575, %v1670, 0
        %v1688 = vsel %vm1575, %v1672, 0
        %v1691 = vsel %vm1575, %v1677, 0
        %1693 = vmatprep.subr.bf16.mxu0 0
        %1694 = vmatpush1.bf16.xpose.msra.mxu0 %v1691
        %1695 = vmatprep.subr.bf16.mxu0 0
        %1696 = vmatpush1.bf16.xpose.msra.mxu0 0
        %1697 = vmatprep.subr.bf16.mxu0 0
        %1698 = vmatpush1.bf16.xpose.msra.mxu0 0
        %1699 = vmatprep.subr.bf16.mxu0 0
        %1700 = vmatpush1.bf16.xpose.msra.mxu0 0
        %1701 = vmatprep.subr.bf16.mxu0 0
        %1702 = vmatpush1.bf16.xpose.msra.mxu0 0
        %1703 = vmatprep.subr.bf16.mxu0 0
        %1704 = vmatpush1.bf16.xpose.msra.mxu0 0
        %1705 = vmatprep.subr.bf16.mxu0 0
        %1706 = vmatpush1.bf16.xpose.msra.mxu0 0
        %1707 = vmatprep.subr.bf16.mxu0 0
        %1708 = vmatpush1.bf16.xpose.msra.mxu0 0
        %1709 = vmatprep.subr.bf16.mxu0 0
        %1710 = vmatpush1.bf16.xpose.msra.mxu0 0
        %1711 = vmatprep.subr.bf16.mxu0 0
        %1712 = vmatpush1.bf16.xpose.msra.mxu0 0
        %1713 = vmatprep.subr.bf16.mxu0 0
        %1714 = vmatpush1.bf16.xpose.msra.mxu0 0
        %1715 = vmatprep.subr.bf16.mxu0 0
        %1716 = vmatpush1.bf16.xpose.msra.mxu0 0
        %1717 = vmatprep.subr.bf16.mxu0 0
        %1718 = vmatpush1.bf16.xpose.msra.mxu0 0
        %1719 = vmatprep.subr.bf16.mxu0 0
        %1720 = vmatpush1.bf16.xpose.msra.mxu0 0
        %1721 = vmatprep.subr.bf16.mxu0 0
        %1722 = vmatpush1.bf16.xpose.msra.mxu0 0
        %1723 = vmatprep.subr.bf16.mxu0 0
        %1724 = vmatpush1.bf16.xpose.msra.mxu0 0
        %1725 = vmatprep.mubr.bf16.mxu0 0
        %1726 = vmatmul.mubr.bf16.gmra.mrb[0].mxu0 %v1679
        %v1727 = vpop.f32.mrb[0].mxu0
        %v1728 = vadd.f32 0.0, %v1727
        %v1729 = vpop.f32.mrb[0].mxu0
        %v1730 = vpop.f32.mrb[0].mxu0
        %v1731 = vadd.f32 0.0, %v1730
        %v1732 = vpop.f32.mrb[0].mxu0
        %1733 = vmatprep.mubr.bf16.mxu0 0
        %1734 = vmatmul.mubr.bf16.gmra.mrb[0].mxu0 %v1682
        %v1735 = vpop.f32.mrb[0].mxu0
        %v1736 = vadd.f32 0.0, %v1735
        %v1737 = vpop.f32.mrb[0].mxu0
        %v1738 = vpop.f32.mrb[0].mxu0
        %v1739 = vadd.f32 0.0, %v1738
        %v1740 = vpop.f32.mrb[0].mxu0
        %1741 = vmatprep.mubr.bf16.mxu0 0
        %1742 = vmatmul.mubr.bf16.gmra.mrb[0].mxu0 %v1685
        %v1743 = vpop.f32.mrb[0].mxu0
        %v1744 = vadd.f32 0.0, %v1743
        %v1745 = vpop.f32.mrb[0].mxu0
        %v1746 = vpop.f32.mrb[0].mxu0
        %v1747 = vadd.f32 0.0, %v1746
        %v1748 = vpop.f32.mrb[0].mxu0
        %1749 = vmatprep.mubr.bf16.mxu0 0
        %1750 = vmatmul.mubr.bf16.gmra.mrb[0].mxu0 %v1688
        %v1751 = vpop.f32.mrb[0].mxu0
        %v1752 = vadd.f32 0.0, %v1751
        %v1753 = vpop.f32.mrb[0].mxu0
        %v1754 = vpop.f32.mrb[0].mxu0
        %v1755 = vadd.f32 0.0, %v1754
        %v1756 = vpop.f32.mrb[0].mxu0
        %1757 = vdwg.mxu0
        %v1758 = vmul.f32 %v1728, 0.5
        %v1759 = vmul.f32 %v1731, 0.5
        %v1760 = vmul.f32 %v1736, 0.5
        %v1761 = vmul.f32 %v1739, 0.5
        %v1762 = vmul.f32 %v1744, 0.5
        %v1763 = vmul.f32 %v1747, 0.5
        %v1764 = vmul.f32 %v1752, 0.5
        %v1765 = vmul.f32 %v1755, 0.5
        %v1766 = vmul.f32 %v1728, 0.044715
        %v1767 = vmul.f32 %v1731, 0.044715
        %v1768 = vmul.f32 %v1736, 0.044715
        %v1769 = vmul.f32 %v1739, 0.044715
        %v1770 = vmul.f32 %v1744, 0.044715
        %v1771 = vmul.f32 %v1747, 0.044715
        %v1772 = vmul.f32 %v1752, 0.044715
        %v1773 = vmul.f32 %v1755, 0.044715
        %v1774 = vmul.f32 %v1766, %v1728
        %v1775 = vmul.f32 %v1767, %v1731
        %v1776 = vmul.f32 %v1768, %v1736
        %v1777 = vmul.f32 %v1769, %v1739
        %v1778 = vmul.f32 %v1770, %v1744
        %v1779 = vmul.f32 %v1771, %v1747
        %v1780 = vmul.f32 %v1772, %v1752
        %v1781 = vmul.f32 %v1773, %v1755
        %v1782 = vmul.f32 %v1774, %v1728
        %v1783 = vmul.f32 %v1775, %v1731
        %v1784 = vmul.f32 %v1776, %v1736
        %v1785 = vmul.f32 %v1777, %v1739
        %v1786 = vmul.f32 %v1778, %v1744
        %v1787 = vmul.f32 %v1779, %v1747
        %v1788 = vmul.f32 %v1780, %v1752
        %v1789 = vmul.f32 %v1781, %v1755
        %v1790 = vadd.f32 %v1728, %v1782
        %v1791 = vadd.f32 %v1731, %v1783
        %v1792 = vadd.f32 %v1736, %v1784
        %v1793 = vadd.f32 %v1739, %v1785
        %v1794 = vadd.f32 %v1744, %v1786
        %v1795 = vadd.f32 %v1747, %v1787
        %v1796 = vadd.f32 %v1752, %v1788
        %v1797 = vadd.f32 %v1755, %v1789
        %v1798 = vmul.f32 %v1790, 0.7978846
        %v1799 = vmul.f32 %v1791, 0.7978846
        %v1800 = vmul.f32 %v1792, 0.7978846
        %v1801 = vmul.f32 %v1793, 0.7978846
        %v1802 = vmul.f32 %v1794, 0.7978846
        %v1803 = vmul.f32 %v1795, 0.7978846
        %v1804 = vmul.f32 %v1796, 0.7978846
        %v1805 = vmul.f32 %v1797, 0.7978846
        %v1806 = vtanh.pop %v1798
        %v1807 = vtanh.pop %v1799
        %v1808 = vtanh.pop %v1800
        %v1809 = vtanh.pop %v1801
        %v1810 = vtanh.pop %v1802
        %v1811 = vtanh.pop %v1803
        %v1812 = vtanh.pop %v1804
        %v1813 = vtanh.pop %v1805
        %v1814 = vadd.f32 %v1806, 1.0
        %v1815 = vadd.f32 %v1807, 1.0
        %v1816 = vadd.f32 %v1808, 1.0
        %v1817 = vadd.f32 %v1809, 1.0
        %v1818 = vadd.f32 %v1810, 1.0
        %v1819 = vadd.f32 %v1811, 1.0
        %v1820 = vadd.f32 %v1812, 1.0
        %v1821 = vadd.f32 %v1813, 1.0
        %v1822 = vmul.f32 %v1758, %v1814
        %v1823 = vmul.f32 %v1759, %v1815
        %v1824 = vmul.f32 %v1760, %v1816
        %v1825 = vmul.f32 %v1761, %v1817
        %v1826 = vmul.f32 %v1762, %v1818
        %v1827 = vmul.f32 %v1763, %v1819
        %v1828 = vmul.f32 %v1764, %v1820
        %v1829 = vmul.f32 %v1765, %v1821
        %vm1830 = vcmask 130048
        %v1831 = vsel %vm1830, %v1822, -inf
        %1832 = vmax.xlane.f32.xlu0 %v1831
        %v1833 = vpop.xlane.xlu0 %1832
        %v1834 = vsel %vm1830, %v1823, -inf
        %1835 = vmax.xlane.f32.xlu0 %v1834
        %v1836 = vpop.xlane.xlu0 %1835
        %v1837 = vsel %vm1830, %v1824, -inf
        %1838 = vmax.xlane.f32.xlu0 %v1837
        %v1839 = vpop.xlane.xlu0 %1838
        %v1840 = vsel %vm1830, %v1825, -inf
        %1841 = vmax.xlane.f32.xlu0 %v1840
        %v1842 = vpop.xlane.xlu0 %1841
        %v1843 = vsel %vm1830, %v1826, -inf
        %1844 = vmax.xlane.f32.xlu0 %v1843
        %v1845 = vpop.xlane.xlu0 %1844
        %v1846 = vsel %vm1830, %v1827, -inf
        %1847 = vmax.xlane.f32.xlu0 %v1846
        %v1848 = vpop.xlane.xlu0 %1847
        %v1849 = vsel %vm1830, %v1828, -inf
        %1850 = vmax.xlane.f32.xlu0 %v1849
        %v1851 = vpop.xlane.xlu0 %1850
        %v1852 = vsel %vm1830, %v1829, -inf
        %1853 = vmax.xlane.f32.xlu0 %v1852
        %v1854 = vpop.xlane.xlu0 %1853
        %v1855 = vsub.f32 %v1822, %v1833
        %v1856 = vsub.f32 %v1823, %v1836
        %v1857 = vsub.f32 %v1824, %v1839
        %v1858 = vsub.f32 %v1825, %v1842
        %v1859 = vsub.f32 %v1826, %v1845
        %v1860 = vsub.f32 %v1827, %v1848
        %v1861 = vsub.f32 %v1828, %v1851
        %v1862 = vsub.f32 %v1829, %v1854
        %v1863 = vmul.f32 %v1855, 1.442695
        %v1864 = vpow.pop %v1863
        %v1865 = vmul.f32 %v1856, 1.442695
        %v1866 = vpow.pop %v1865
        %v1867 = vmul.f32 %v1857, 1.442695
        %v1868 = vpow.pop %v1867
        %v1869 = vmul.f32 %v1858, 1.442695
        %v1870 = vpow.pop %v1869
        %v1871 = vmul.f32 %v1859, 1.442695
        %v1872 = vpow.pop %v1871
        %v1873 = vmul.f32 %v1860, 1.442695
        %v1874 = vpow.pop %v1873
        %v1875 = vmul.f32 %v1861, 1.442695
        %v1876 = vpow.pop %v1875
        %v1877 = vmul.f32 %v1862, 1.442695
        %v1878 = vpow.pop %v1877
        %v1879 = vsel %vm1830, %v1864, 0.0
        %1880 = vadd.xlane.f32.xlu0 %v1879
        %v1881 = vpop.xlane.xlu0 %1880
        %v1882 = vsel %vm1830, %v1866, 0.0
        %1883 = vadd.xlane.f32.xlu0 %v1882
        %v1884 = vpop.xlane.xlu0 %1883
        %v1885 = vsel %vm1830, %v1868, 0.0
        %1886 = vadd.xlane.f32.xlu0 %v1885
        %v1887 = vpop.xlane.xlu0 %1886
        %v1888 = vsel %vm1830, %v1870, 0.0
        %1889 = vadd.xlane.f32.xlu0 %v1888
        %v1890 = vpop.xlane.xlu0 %1889
        %v1891 = vsel %vm1830, %v1872, 0.0
        %1892 = vadd.xlane.f32.xlu0 %v1891
        %v1893 = vpop.xlane.xlu0 %1892
        %v1894 = vsel %vm1830, %v1874, 0.0
        %1895 = vadd.xlane.f32.xlu0 %v1894
        %v1896 = vpop.xlane.xlu0 %1895
        %v1897 = vsel %vm1830, %v1876, 0.0
        %1898 = vadd.xlane.f32.xlu0 %v1897
        %v1899 = vpop.xlane.xlu0 %1898
        %v1900 = vsel %vm1830, %v1878, 0.0
        %1901 = vadd.xlane.f32.xlu0 %v1900
        %v1902 = vpop.xlane.xlu0 %1901
        %v1903 = vrcp.pop %v1881
        %v1904 = vrcp.pop %v1884
        %v1905 = vrcp.pop %v1887
        %v1906 = vrcp.pop %v1890
        %v1907 = vrcp.pop %v1893
        %v1908 = vrcp.pop %v1896
        %v1909 = vrcp.pop %v1899
        %v1910 = vrcp.pop %v1902
        %v1911 = vmul.f32 %v1864, %v1903
        %v1912 = vmul.f32 %v1866, %v1904
        %v1913 = vmul.f32 %v1868, %v1905
        %v1914 = vmul.f32 %v1870, %v1906
        %v1915 = vmul.f32 %v1872, %v1907
        %v1916 = vmul.f32 %v1874, %v1908
        %v1917 = vmul.f32 %v1876, %v1909
        %v1918 = vmul.f32 %v1878, %v1910
        %v1919 = vpack.c.bf16 %v1912, %v1911
        %v1920 = vpack.c.bf16 %v1914, %v1913
        %v1921 = vpack.c.bf16 %v1916, %v1915
        %v1922 = vpack.c.bf16 %v1918, %v1917
        %v1924 = vsel %vm1830, %v1919, 0
        %v1927 = vsel %vm1830, %v1920, 0
        %v1930 = vsel %vm1830, %v1921, 0
        %v1933 = vsel %vm1830, %v1922, 0
        %1935 = vmatprep.subr.bf16.mxu0 0
        %1936 = vmatpush1.bf16.xpose.msra.mxu0 %v1924
        %1937 = vmatprep.subr.bf16.mxu0 0
        %1938 = vmatpush1.bf16.xpose.msra.mxu0 %v1927
        %1939 = vmatprep.subr.bf16.mxu0 0
        %1940 = vmatpush1.bf16.xpose.msra.mxu0 %v1930
        %1941 = vmatprep.subr.bf16.mxu0 0
        %1942 = vmatpush1.bf16.xpose.msra.mxu0 %v1933
        %1943 = vmatprep.subr.bf16.mxu0 0
        %1944 = vmatpush1.bf16.xpose.msra.mxu0 0
        %1945 = vmatprep.subr.bf16.mxu0 0
        %1946 = vmatpush1.bf16.xpose.msra.mxu0 0
        %1947 = vmatprep.subr.bf16.mxu0 0
        %1948 = vmatpush1.bf16.xpose.msra.mxu0 0
        %1949 = vmatprep.subr.bf16.mxu0 0
        %1950 = vmatpush1.bf16.xpose.msra.mxu0 0
        %1951 = vmatprep.subr.bf16.mxu0 0
        %1952 = vmatpush1.bf16.xpose.msra.mxu0 0
        %1953 = vmatprep.subr.bf16.mxu0 0
        %1954 = vmatpush1.bf16.xpose.msra.mxu0 0
        %1955 = vmatprep.subr.bf16.mxu0 0
        %1956 = vmatpush1.bf16.xpose.msra.mxu0 0
        %1957 = vmatprep.subr.bf16.mxu0 0
        %1958 = vmatpush1.bf16.xpose.msra.mxu0 0
        %1959 = vmatprep.subr.bf16.mxu0 0
        %1960 = vmatpush1.bf16.xpose.msra.mxu0 0
        %1961 = vmatprep.subr.bf16.mxu0 0
        %1962 = vmatpush1.bf16.xpose.msra.mxu0 0
        %1963 = vmatprep.subr.bf16.mxu0 0
        %1964 = vmatpush1.bf16.xpose.msra.mxu0 0
        %1965 = vmatprep.subr.bf16.mxu0 0
        %1966 = vmatpush1.bf16.xpose.msra.mxu0 0
        %1967 = vmatprep.mubr.bf16.mxu0 0
        %1968 = vmatmul.mubr.bf16.gmra.mrb[0].mxu0 %v1924
        %v1969 = vpop.f32.mrb[0].mxu0
        %v1970 = vadd.f32 0.0, %v1969
        %v1971 = vpop.f32.mrb[0].mxu0
        %v1972 = vpop.f32.mrb[0].mxu0
        %v1973 = vadd.f32 0.0, %v1972
        %v1974 = vpop.f32.mrb[0].mxu0
        %1975 = vmatprep.mubr.bf16.mxu0 0
        %1976 = vmatmul.mubr.bf16.gmra.mrb[0].mxu0 %v1927
        %v1977 = vpop.f32.mrb[0].mxu0
        %v1978 = vadd.f32 0.0, %v1977
        %v1979 = vpop.f32.mrb[0].mxu0
        %v1980 = vpop.f32.mrb[0].mxu0
        %v1981 = vadd.f32 0.0, %v1980
        %v1982 = vpop.f32.mrb[0].mxu0
        %1983 = vmatprep.mubr.bf16.mxu0 0
        %1984 = vmatmul.mubr.bf16.gmra.mrb[0].mxu0 %v1930
        %v1985 = vpop.f32.mrb[0].mxu0
        %v1986 = vadd.f32 0.0, %v1985
        %v1987 = vpop.f32.mrb[0].mxu0
        %v1988 = vpop.f32.mrb[0].mxu0
        %v1989 = vadd.f32 0.0, %v1988
        %v1990 = vpop.f32.mrb[0].mxu0
        %1991 = vmatprep.mubr.bf16.mxu0 0
        %1992 = vmatmul.mubr.bf16.gmra.mrb[0].mxu0 %v1933
        %v1993 = vpop.f32.mrb[0].mxu0
        %v1994 = vadd.f32 0.0, %v1993
        %v1995 = vpop.f32.mrb[0].mxu0
        %v1996 = vpop.f32.mrb[0].mxu0
        %v1997 = vadd.f32 0.0, %v1996
        %v1998 = vpop.f32.mrb[0].mxu0
        %1999 = vdwg.mxu0
        %v2000 = vmul.f32 %v1635, %v1970
        %v2001 = vmul.f32 %v1638, %v1973
        %v2002 = vmul.f32 %v1643, %v1978
        %v2003 = vmul.f32 %v1646, %v1981
        %v2004 = vmul.f32 %v1651, %v1986
        %v2005 = vmul.f32 %v1654, %v1989
        %v2006 = vmul.f32 %v1659, %v1994
        %v2007 = vmul.f32 %v1662, %v1997
        %vm2008 = vcmask 523264
        %v2009 = vsel %vm2008, %v2000, -inf
        %2010 = vmax.xlane.f32.xlu0 %v2009
        %v2011 = vpop.xlane.xlu0 %2010
        %v2012 = vsel %vm2008, %v2001, -inf
        %2013 = vmax.xlane.f32.xlu0 %v2012
        %v2014 = vpop.xlane.xlu0 %2013
        %v2015 = vsel %vm2008, %v2002, -inf
        %2016 = vmax.xlane.f32.xlu0 %v2015
        %v2017 = vpop.xlane.xlu0 %2016
        %v2018 = vsel %vm2008, %v2003, -inf
        %2019 = vmax.xlane.f32.xlu0 %v2018
        %v2020 = vpop.xlane.xlu0 %2019
        %v2021 = vsel %vm2008, %v2004, -inf
        %2022 = vmax.xlane.f32.xlu0 %v2021
        %v2023 = vpop.xlane.xlu0 %2022
        %v2024 = vsel %vm2008, %v2005, -inf
        %2025 = vmax.xlane.f32.xlu0 %v2024
        %v2026 = vpop.xlane.xlu0 %2025
        %v2027 = vsel %vm2008, %v2006, -inf
        %2028 = vmax.xlane.f32.xlu0 %v2027
        %v2029 = vpop.xlane.xlu0 %2028
        %v2030 = vsel %vm2008, %v2007, -inf
        %2031 = vmax.xlane.f32.xlu0 %v2030
        %v2032 = vpop.xlane.xlu0 %2031
        %v2033 = vsub.f32 %v2000, %v2011
        %v2034 = vsub.f32 %v2001, %v2014
        %v2035 = vsub.f32 %v2002, %v2017
        %v2036 = vsub.f32 %v2003, %v2020
        %v2037 = vsub.f32 %v2004, %v2023
        %v2038 = vsub.f32 %v2005, %v2026
        %v2039 = vsub.f32 %v2006, %v2029
        %v2040 = vsub.f32 %v2007, %v2032
        %v2041 = vmul.f32 %v2033, 1.442695
        %v2042 = vpow.pop %v2041
        %v2043 = vmul.f32 %v2034, 1.442695
        %v2044 = vpow.pop %v2043
        %v2045 = vmul.f32 %v2035, 1.442695
        %v2046 = vpow.pop %v2045
        %v2047 = vmul.f32 %v2036, 1.442695
        %v2048 = vpow.pop %v2047
        %v2049 = vmul.f32 %v2037, 1.442695
        %v2050 = vpow.pop %v2049
        %v2051 = vmul.f32 %v2038, 1.442695
        %v2052 = vpow.pop %v2051
        %v2053 = vmul.f32 %v2039, 1.442695
        %v2054 = vpow.pop %v2053
        %v2055 = vmul.f32 %v2040, 1.442695
        %v2056 = vpow.pop %v2055
        %v2057 = vsel %vm2008, %v2042, 0.0
        %2058 = vadd.xlane.f32.xlu0 %v2057
        %v2059 = vpop.xlane.xlu0 %2058
        %v2060 = vsel %vm2008, %v2044, 0.0
        %2061 = vadd.xlane.f32.xlu0 %v2060
        %v2062 = vpop.xlane.xlu0 %2061
        %v2063 = vsel %vm2008, %v2046, 0.0
        %2064 = vadd.xlane.f32.xlu0 %v2063
        %v2065 = vpop.xlane.xlu0 %2064
        %v2066 = vsel %vm2008, %v2048, 0.0
        %2067 = vadd.xlane.f32.xlu0 %v2066
        %v2068 = vpop.xlane.xlu0 %2067
        %v2069 = vsel %vm2008, %v2050, 0.0
        %2070 = vadd.xlane.f32.xlu0 %v2069
        %v2071 = vpop.xlane.xlu0 %2070
        %v2072 = vsel %vm2008, %v2052, 0.0
        %2073 = vadd.xlane.f32.xlu0 %v2072
        %v2074 = vpop.xlane.xlu0 %2073
        %v2075 = vsel %vm2008, %v2054, 0.0
        %2076 = vadd.xlane.f32.xlu0 %v2075
        %v2077 = vpop.xlane.xlu0 %2076
        %v2078 = vsel %vm2008, %v2056, 0.0
        %2079 = vadd.xlane.f32.xlu0 %v2078
        %v2080 = vpop.xlane.xlu0 %2079
        %v2081 = vrcp.pop %v2059
        %v2082 = vrcp.pop %v2062
        %v2083 = vrcp.pop %v2065
        %v2084 = vrcp.pop %v2068
        %v2085 = vrcp.pop %v2071
        %v2086 = vrcp.pop %v2074
        %v2087 = vrcp.pop %v2077
        %v2088 = vrcp.pop %v2080
        %v2089 = vmul.f32 %v2042, %v2081
        %v2090 = vmul.f32 %v2044, %v2082
        %v2091 = vmul.f32 %v2046, %v2083
        %v2092 = vmul.f32 %v2048, %v2084
        %v2093 = vmul.f32 %v2050, %v2085
        %v2094 = vmul.f32 %v2052, %v2086
        %v2095 = vmul.f32 %v2054, %v2087
        %v2096 = vmul.f32 %v2056, %v2088
        %s2097 = smul.u32 %s62, 128
        %s2098 = sld [smem:[#allocation8 + %s2097]]
        %s2099 = ssub.f32 1.0, %s2098
        %v2100 = vstv %s2099
        %v2101 = vmul.f32 %v2100, %v2089
        %v2102 = vmul.f32 %v2100, %v2090
        %v2103 = vmul.f32 %v2100, %v2091
        %v2104 = vmul.f32 %v2100, %v2092
        %v2105 = vmul.f32 %v2100, %v2093
        %v2106 = vmul.f32 %v2100, %v2094
        %v2107 = vmul.f32 %v2100, %v2095
        %v2108 = vmul.f32 %v2100, %v2096
        %v2109 = vstv %s2098
        %v2110 = vmul.f32 %v2109, %v1970
        %v2111 = vmul.f32 %v2109, %v1973
        %v2112 = vmul.f32 %v2109, %v1978
        %v2113 = vmul.f32 %v2109, %v1981
        %v2114 = vmul.f32 %v2109, %v1986
        %v2115 = vmul.f32 %v2109, %v1989
        %v2116 = vmul.f32 %v2109, %v1994
        %v2117 = vmul.f32 %v2109, %v1997
        %v2118 = vadd.f32 %v2101, %v2110
        %v2119 = vadd.f32 %v2102, %v2111
        %v2120 = vadd.f32 %v2103, %v2112
        %v2121 = vadd.f32 %v2104, %v2113
        %v2122 = vadd.f32 %v2105, %v2114
        %v2123 = vadd.f32 %v2106, %v2115
        %v2124 = vadd.f32 %v2107, %v2116
        %v2125 = vadd.f32 %v2108, %v2117
        %v2126 = vsel %vm2008, %v2118, 0.0
        %v2127 = vsel %vm2008, %v2119, 0.0
        %v2128 = vadd.f32 %v2126, %v2127
        %v2129 = vsel %vm2008, %v2120, 0.0
        %v2130 = vadd.f32 %v2128, %v2129
        %v2131 = vsel %vm2008, %v2121, 0.0
        %v2132 = vadd.f32 %v2130, %v2131
        %v2133 = vsel %vm2008, %v2122, 0.0
        %v2134 = vadd.f32 %v2132, %v2133
        %v2135 = vsel %vm2008, %v2123, 0.0
        %v2136 = vadd.f32 %v2134, %v2135
        %v2137 = vsel %vm2008, %v2124, 0.0
        %v2138 = vadd.f32 %v2136, %v2137
        %v2139 = vsel %vm2008, %v2125, 0.0
        %v2140 = vadd.f32 %v2138, %v2139
        %v2141 = vrot.slane %v2140, 4
        %v2142 = vadd.f32 %v2140, %v2141
        %v2143 = vrot.slane %v2142, 2
        %v2144 = vadd.f32 %v2142, %v2143
        %v2145 = vrot.slane %v2144, 1
        %v2146 = vadd.f32 %v2144, %v2145
        %v2147 = vadd.f32 %v2146, 1e-08
        %v2148 = vrcp.pop %v2147
        %v2149 = vmul.f32 %v2118, %v2148
        %v2150 = vmul.f32 %v2119, %v2148
        %v2151 = vmul.f32 %v2120, %v2148
        %v2152 = vmul.f32 %v2121, %v2148
        %v2153 = vmul.f32 %v2122, %v2148
        %v2154 = vmul.f32 %v2123, %v2148
        %v2155 = vmul.f32 %v2124, %v2148
        %v2156 = vmul.f32 %v2125, %v2148
        %v2157 = vpack.c.bf16 %v2150, %v2149
        %v2158 = vpack.c.bf16 %v2152, %v2151
        %v2159 = vpack.c.bf16 %v2154, %v2153
        %v2160 = vpack.c.bf16 %v2156, %v2155
        %v2166 = vsel %vm2008, %v2157, 0
        %v2169 = vsel %vm2008, %v2158, 0
        %v2172 = vsel %vm2008, %v2159, 0
        %v2175 = vsel %vm2008, %v2160, 0
        %2177 = vmatprep.subr.bf16.mxu0 0
        %2178 = vmatpush1.bf16.msra.mxu0 %v1666
        %2179 = vmatprep.subr.bf16.mxu0 0
        %2180 = vmatpush1.bf16.msra.mxu0 %v1668
        %2181 = vmatprep.subr.bf16.mxu0 0
        %2182 = vmatpush1.bf16.msra.mxu0 %v1670
        %2183 = vmatprep.subr.bf16.mxu0 0
        %2184 = vmatpush1.bf16.msra.mxu0 %v1672
        %2185 = vmatprep.subr.bf16.mxu0 0
        %2186 = vmatpush1.bf16.msra.mxu0 0
        %2187 = vmatprep.subr.bf16.mxu0 0
        %2188 = vmatpush1.bf16.msra.mxu0 0
        %2189 = vmatprep.subr.bf16.mxu0 0
        %2190 = vmatpush1.bf16.msra.mxu0 0
        %2191 = vmatprep.subr.bf16.mxu0 0
        %2192 = vmatpush1.bf16.msra.mxu0 0
        %2193 = vmatprep.subr.bf16.mxu0 0
        %2194 = vmatpush1.bf16.msra.mxu0 0
        %2195 = vmatprep.subr.bf16.mxu0 0
        %2196 = vmatpush1.bf16.msra.mxu0 0
        %2197 = vmatprep.subr.bf16.mxu0 0
        %2198 = vmatpush1.bf16.msra.mxu0 0
        %2199 = vmatprep.subr.bf16.mxu0 0
        %2200 = vmatpush1.bf16.msra.mxu0 0
        %2201 = vmatprep.subr.bf16.mxu0 0
        %2202 = vmatpush1.bf16.msra.mxu0 0
        %2203 = vmatprep.subr.bf16.mxu0 0
        %2204 = vmatpush1.bf16.msra.mxu0 0
        %2205 = vmatprep.subr.bf16.mxu0 0
        %2206 = vmatpush1.bf16.msra.mxu0 0
        %2207 = vmatprep.subr.bf16.mxu0 0
        %2208 = vmatpush1.bf16.msra.mxu0 0
        %2209 = vmatprep.mubr.bf16.mxu0 0
        %2210 = vmatmul.mubr.bf16.gmra.mrb[0].mxu0 %v2166
        %v2211 = vpop.f32.mrb[0].mxu0
        %v2212 = vadd.f32 0.0, %v2211
        %v2213 = vpop.f32.mrb[0].mxu0
        %v2214 = vpop.f32.mrb[0].mxu0
        %v2215 = vadd.f32 0.0, %v2214
        %v2216 = vpop.f32.mrb[0].mxu0
        %2217 = vmatprep.mubr.bf16.mxu0 0
        %2218 = vmatmul.mubr.bf16.gmra.mrb[0].mxu0 %v2169
        %v2219 = vpop.f32.mrb[0].mxu0
        %v2220 = vadd.f32 0.0, %v2219
        %v2221 = vpop.f32.mrb[0].mxu0
        %v2222 = vpop.f32.mrb[0].mxu0
        %v2223 = vadd.f32 0.0, %v2222
        %v2224 = vpop.f32.mrb[0].mxu0
        %2225 = vmatprep.mubr.bf16.mxu0 0
        %2226 = vmatmul.mubr.bf16.gmra.mrb[0].mxu0 %v2172
        %v2227 = vpop.f32.mrb[0].mxu0
        %v2228 = vadd.f32 0.0, %v2227
        %v2229 = vpop.f32.mrb[0].mxu0
        %v2230 = vpop.f32.mrb[0].mxu0
        %v2231 = vadd.f32 0.0, %v2230
        %v2232 = vpop.f32.mrb[0].mxu0
        %2233 = vmatprep.mubr.bf16.mxu0 0
        %2234 = vmatmul.mubr.bf16.gmra.mrb[0].mxu0 %v2175
        %v2235 = vpop.f32.mrb[0].mxu0
        %v2236 = vadd.f32 0.0, %v2235
        %v2237 = vpop.f32.mrb[0].mxu0
        %v2238 = vpop.f32.mrb[0].mxu0
        %v2239 = vadd.f32 0.0, %v2238
        %v2240 = vpop.f32.mrb[0].mxu0
        %2241 = vdwg.mxu0
        %v2242 = vpack.c.bf16 %v2215, %v2212
        %v2243 = vpack.c.bf16 %v2223, %v2220
        %v2244 = vpack.c.bf16 %v2231, %v2228
        %v2245 = vpack.c.bf16 %v2239, %v2236
        %2250 = vrot.lane.b32.xlu0 %v1555, 120
        %v2251 = vpop.permute.xlu0 %2250
        %2252 = vrot.lane.b32.xlu0 %v1556, 120
        %v2253 = vpop.permute.xlu0 %2252
        %2254 = vrot.lane.b32.xlu0 %v1557, 120
        %v2255 = vpop.permute.xlu0 %2254
        %2256 = vrot.lane.b32.xlu0 %v1558, 120
        %v2257 = vpop.permute.xlu0 %2256
        %2258 = vrot.lane.b32.xlu0 %v1559, 88
        %v2259 = vpop.permute.xlu0 %2258
        %2260 = vrot.lane.b32.xlu0 %v1560, 88
        %v2261 = vpop.permute.xlu0 %2260
        %2262 = vrot.lane.b32.xlu0 %v1561, 88
        %v2263 = vpop.permute.xlu0 %2262
        %2264 = vrot.lane.b32.xlu0 %v1562, 88
        %v2265 = vpop.permute.xlu0 %2264
        %v2267 = vsel %vm1575, %v2251, 0
        %v2270 = vsel %vm1575, %v2253, 0
        %v2273 = vsel %vm1575, %v2255, 0
        %v2276 = vsel %vm1575, %v2257, 0
        %v2279 = vsel %vm1575, %v2259, 0
        %v2282 = vsel %vm1575, %v2261, 0
        %v2285 = vsel %vm1575, %v2263, 0
        %v2288 = vsel %vm1575, %v2265, 0
        %2290 = vmatprep.subr.bf16.mxu0 0
        %2291 = vmatpush1.bf16.xpose.msra.mxu0 %v2279
        %2292 = vmatprep.subr.bf16.mxu0 0
        %2293 = vmatpush1.bf16.xpose.msra.mxu0 %v2282
        %2294 = vmatprep.subr.bf16.mxu0 0
        %2295 = vmatpush1.bf16.xpose.msra.mxu0 %v2285
        %2296 = vmatprep.subr.bf16.mxu0 0
        %2297 = vmatpush1.bf16.xpose.msra.mxu0 %v2288
        %2298 = vmatprep.subr.bf16.mxu0 0
        %2299 = vmatpush1.bf16.xpose.msra.mxu0 0
        %2300 = vmatprep.subr.bf16.mxu0 0
        %2301 = vmatpush1.bf16.xpose.msra.mxu0 0
        %2302 = vmatprep.subr.bf16.mxu0 0
        %2303 = vmatpush1.bf16.xpose.msra.mxu0 0
        %2304 = vmatprep.subr.bf16.mxu0 0
        %2305 = vmatpush1.bf16.xpose.msra.mxu0 0
        %2306 = vmatprep.subr.bf16.mxu0 0
        %2307 = vmatpush1.bf16.xpose.msra.mxu0 0
        %2308 = vmatprep.subr.bf16.mxu0 0
        %2309 = vmatpush1.bf16.xpose.msra.mxu0 0
        %2310 = vmatprep.subr.bf16.mxu0 0
        %2311 = vmatpush1.bf16.xpose.msra.mxu0 0
        %2312 = vmatprep.subr.bf16.mxu0 0
        %2313 = vmatpush1.bf16.xpose.msra.mxu0 0
        %2314 = vmatprep.subr.bf16.mxu0 0
        %2315 = vmatpush1.bf16.xpose.msra.mxu0 0
        %2316 = vmatprep.subr.bf16.mxu0 0
        %2317 = vmatpush1.bf16.xpose.msra.mxu0 0
        %2318 = vmatprep.subr.bf16.mxu0 0
        %2319 = vmatpush1.bf16.xpose.msra.mxu0 0
        %2320 = vmatprep.subr.bf16.mxu0 0
        %2321 = vmatpush1.bf16.xpose.msra.mxu0 0
        %2322 = vmatprep.mubr.bf16.mxu0 0
        %2323 = vmatmul.mubr.bf16.gmra.mrb[0].mxu0 %v2267
        %v2324 = vpop.f32.mrb[0].mxu0
        %v2325 = vadd.f32 0.0, %v2324
        %v2326 = vpop.f32.mrb[0].mxu0
        %v2327 = vpop.f32.mrb[0].mxu0
        %v2328 = vadd.f32 0.0, %v2327
        %v2329 = vpop.f32.mrb[0].mxu0
        %2330 = vmatprep.mubr.bf16.mxu0 0
        %2331 = vmatmul.mubr.bf16.gmra.mrb[0].mxu0 %v2270
        %v2332 = vpop.f32.mrb[0].mxu0
        %v2333 = vadd.f32 0.0, %v2332
        %v2334 = vpop.f32.mrb[0].mxu0
        %v2335 = vpop.f32.mrb[0].mxu0
        %v2336 = vadd.f32 0.0, %v2335
        %v2337 = vpop.f32.mrb[0].mxu0
        %2338 = vmatprep.mubr.bf16.mxu0 0
        %2339 = vmatmul.mubr.bf16.gmra.mrb[0].mxu0 %v2273
        %v2340 = vpop.f32.mrb[0].mxu0
        %v2341 = vadd.f32 0.0, %v2340
        %v2342 = vpop.f32.mrb[0].mxu0
        %v2343 = vpop.f32.mrb[0].mxu0
        %v2344 = vadd.f32 0.0, %v2343
        %v2345 = vpop.f32.mrb[0].mxu0
        %2346 = vmatprep.mubr.bf16.mxu0 0
        %2347 = vmatmul.mubr.bf16.gmra.mrb[0].mxu0 %v2276
        %v2348 = vpop.f32.mrb[0].mxu0
        %v2349 = vadd.f32 0.0, %v2348
        %v2350 = vpop.f32.mrb[0].mxu0
        %v2351 = vpop.f32.mrb[0].mxu0
        %v2352 = vadd.f32 0.0, %v2351
        %v2353 = vpop.f32.mrb[0].mxu0
        %2354 = vdwg.mxu0
        %2355 = vrot.lane.b32.xlu0 %v1559, 56
        %v2356 = vpop.permute.xlu0 %2355
        %2357 = vrot.lane.b32.xlu0 %v1560, 56
        %v2358 = vpop.permute.xlu0 %2357
        %2359 = vrot.lane.b32.xlu0 %v1561, 56
        %v2360 = vpop.permute.xlu0 %2359
        %2361 = vrot.lane.b32.xlu0 %v1562, 56
        %v2362 = vpop.permute.xlu0 %2361
        %v2365 = vunpack.c.l.b16 %v1541
        %v2366 = vunpack.c.l.b16 %v1542
        %v2367 = vpack.c.b16 %v2366, %v2365
        %v2369 = vsel %vm1575, %v2356, 0
        %v2372 = vsel %vm1575, %v2358, 0
        %v2375 = vsel %vm1575, %v2360, 0
        %v2378 = vsel %vm1575, %v2362, 0
        %v2381 = vsel %vm1575, %v2367, 0
        %2383 = vmatprep.subr.bf16.mxu0 0
        %2384 = vmatpush1.bf16.xpose.msra.mxu0 %v2381
        %2385 = vmatprep.subr.bf16.mxu0 0
        %2386 = vmatpush1.bf16.xpose.msra.mxu0 0
        %2387 = vmatprep.subr.bf16.mxu0 0
        %2388 = vmatpush1.bf16.xpose.msra.mxu0 0
        %2389 = vmatprep.subr.bf16.mxu0 0
        %2390 = vmatpush1.bf16.xpose.msra.mxu0 0
        %2391 = vmatprep.subr.bf16.mxu0 0
        %2392 = vmatpush1.bf16.xpose.msra.mxu0 0
        %2393 = vmatprep.subr.bf16.mxu0 0
        %2394 = vmatpush1.bf16.xpose.msra.mxu0 0
        %2395 = vmatprep.subr.bf16.mxu0 0
        %2396 = vmatpush1.bf16.xpose.msra.mxu0 0
        %2397 = vmatprep.subr.bf16.mxu0 0
        %2398 = vmatpush1.bf16.xpose.msra.mxu0 0
        %2399 = vmatprep.subr.bf16.mxu0 0
        %2400 = vmatpush1.bf16.xpose.msra.mxu0 0
        %2401 = vmatprep.subr.bf16.mxu0 0
        %2402 = vmatpush1.bf16.xpose.msra.mxu0 0
        %2403 = vmatprep.subr.bf16.mxu0 0
        %2404 = vmatpush1.bf16.xpose.msra.mxu0 0
        %2405 = vmatprep.subr.bf16.mxu0 0
        %2406 = vmatpush1.bf16.xpose.msra.mxu0 0
        %2407 = vmatprep.subr.bf16.mxu0 0
        %2408 = vmatpush1.bf16.xpose.msra.mxu0 0
        %2409 = vmatprep.subr.bf16.mxu0 0
        %2410 = vmatpush1.bf16.xpose.msra.mxu0 0
        %2411 = vmatprep.subr.bf16.mxu0 0
        %2412 = vmatpush1.bf16.xpose.msra.mxu0 0
        %2413 = vmatprep.subr.bf16.mxu0 0
        %2414 = vmatpush1.bf16.xpose.msra.mxu0 0
        %2415 = vmatprep.mubr.bf16.mxu0 0
        %2416 = vmatmul.mubr.bf16.gmra.mrb[0].mxu0 %v2369
        %v2417 = vpop.f32.mrb[0].mxu0
        %v2418 = vadd.f32 0.0, %v2417
        %v2419 = vpop.f32.mrb[0].mxu0
        %v2420 = vpop.f32.mrb[0].mxu0
        %v2421 = vadd.f32 0.0, %v2420
        %v2422 = vpop.f32.mrb[0].mxu0
        %2423 = vmatprep.mubr.bf16.mxu0 0
        %2424 = vmatmul.mubr.bf16.gmra.mrb[0].mxu0 %v2372
        %v2425 = vpop.f32.mrb[0].mxu0
        %v2426 = vadd.f32 0.0, %v2425
        %v2427 = vpop.f32.mrb[0].mxu0
        %v2428 = vpop.f32.mrb[0].mxu0
        %v2429 = vadd.f32 0.0, %v2428
        %v2430 = vpop.f32.mrb[0].mxu0
        %2431 = vmatprep.mubr.bf16.mxu0 0
        %2432 = vmatmul.mubr.bf16.gmra.mrb[0].mxu0 %v2375
        %v2433 = vpop.f32.mrb[0].mxu0
        %v2434 = vadd.f32 0.0, %v2433
        %v2435 = vpop.f32.mrb[0].mxu0
        %v2436 = vpop.f32.mrb[0].mxu0
        %v2437 = vadd.f32 0.0, %v2436
        %v2438 = vpop.f32.mrb[0].mxu0
        %2439 = vmatprep.mubr.bf16.mxu0 0
        %2440 = vmatmul.mubr.bf16.gmra.mrb[0].mxu0 %v2378
        %v2441 = vpop.f32.mrb[0].mxu0
        %v2442 = vadd.f32 0.0, %v2441
        %v2443 = vpop.f32.mrb[0].mxu0
        %v2444 = vpop.f32.mrb[0].mxu0
        %v2445 = vadd.f32 0.0, %v2444
        %v2446 = vpop.f32.mrb[0].mxu0
        %2447 = vdwg.mxu0
        %v2448 = vmul.f32 %v2418, 0.5
        %v2449 = vmul.f32 %v2421, 0.5
        %v2450 = vmul.f32 %v2426, 0.5
        %v2451 = vmul.f32 %v2429, 0.5
        %v2452 = vmul.f32 %v2434, 0.5
        %v2453 = vmul.f32 %v2437, 0.5
        %v2454 = vmul.f32 %v2442, 0.5
        %v2455 = vmul.f32 %v2445, 0.5
        %v2456 = vmul.f32 %v2418, 0.044715
        %v2457 = vmul.f32 %v2421, 0.044715
        %v2458 = vmul.f32 %v2426, 0.044715
        %v2459 = vmul.f32 %v2429, 0.044715
        %v2460 = vmul.f32 %v2434, 0.044715
        %v2461 = vmul.f32 %v2437, 0.044715
        %v2462 = vmul.f32 %v2442, 0.044715
        %v2463 = vmul.f32 %v2445, 0.044715
        %v2464 = vmul.f32 %v2456, %v2418
        %v2465 = vmul.f32 %v2457, %v2421
        %v2466 = vmul.f32 %v2458, %v2426
        %v2467 = vmul.f32 %v2459, %v2429
        %v2468 = vmul.f32 %v2460, %v2434
        %v2469 = vmul.f32 %v2461, %v2437
        %v2470 = vmul.f32 %v2462, %v2442
        %v2471 = vmul.f32 %v2463, %v2445
        %v2472 = vmul.f32 %v2464, %v2418
        %v2473 = vmul.f32 %v2465, %v2421
        %v2474 = vmul.f32 %v2466, %v2426
        %v2475 = vmul.f32 %v2467, %v2429
        %v2476 = vmul.f32 %v2468, %v2434
        %v2477 = vmul.f32 %v2469, %v2437
        %v2478 = vmul.f32 %v2470, %v2442
        %v2479 = vmul.f32 %v2471, %v2445
        %v2480 = vadd.f32 %v2418, %v2472
        %v2481 = vadd.f32 %v2421, %v2473
        %v2482 = vadd.f32 %v2426, %v2474
        %v2483 = vadd.f32 %v2429, %v2475
        %v2484 = vadd.f32 %v2434, %v2476
        %v2485 = vadd.f32 %v2437, %v2477
        %v2486 = vadd.f32 %v2442, %v2478
        %v2487 = vadd.f32 %v2445, %v2479
        %v2488 = vmul.f32 %v2480, 0.7978846
        %v2489 = vmul.f32 %v2481, 0.7978846
        %v2490 = vmul.f32 %v2482, 0.7978846
        %v2491 = vmul.f32 %v2483, 0.7978846
        %v2492 = vmul.f32 %v2484, 0.7978846
        %v2493 = vmul.f32 %v2485, 0.7978846
        %v2494 = vmul.f32 %v2486, 0.7978846
        %v2495 = vmul.f32 %v2487, 0.7978846
        %v2496 = vtanh.pop %v2488
        %v2497 = vtanh.pop %v2489
        %v2498 = vtanh.pop %v2490
        %v2499 = vtanh.pop %v2491
        %v2500 = vtanh.pop %v2492
        %v2501 = vtanh.pop %v2493
        %v2502 = vtanh.pop %v2494
        %v2503 = vtanh.pop %v2495
        %v2504 = vadd.f32 %v2496, 1.0
        %v2505 = vadd.f32 %v2497, 1.0
        %v2506 = vadd.f32 %v2498, 1.0
        %v2507 = vadd.f32 %v2499, 1.0
        %v2508 = vadd.f32 %v2500, 1.0
        %v2509 = vadd.f32 %v2501, 1.0
        %v2510 = vadd.f32 %v2502, 1.0
        %v2511 = vadd.f32 %v2503, 1.0
        %v2512 = vmul.f32 %v2448, %v2504
        %v2513 = vmul.f32 %v2449, %v2505
        %v2514 = vmul.f32 %v2450, %v2506
        %v2515 = vmul.f32 %v2451, %v2507
        %v2516 = vmul.f32 %v2452, %v2508
        %v2517 = vmul.f32 %v2453, %v2509
        %v2518 = vmul.f32 %v2454, %v2510
        %v2519 = vmul.f32 %v2455, %v2511
        %v2520 = vsel %vm1830, %v2512, -inf
        %2521 = vmax.xlane.f32.xlu0 %v2520
        %v2522 = vpop.xlane.xlu0 %2521
        %v2523 = vsel %vm1830, %v2513, -inf
        %2524 = vmax.xlane.f32.xlu0 %v2523
        %v2525 = vpop.xlane.xlu0 %2524
        %v2526 = vsel %vm1830, %v2514, -inf
        %2527 = vmax.xlane.f32.xlu0 %v2526
        %v2528 = vpop.xlane.xlu0 %2527
        %v2529 = vsel %vm1830, %v2515, -inf
        %2530 = vmax.xlane.f32.xlu0 %v2529
        %v2531 = vpop.xlane.xlu0 %2530
        %v2532 = vsel %vm1830, %v2516, -inf
        %2533 = vmax.xlane.f32.xlu0 %v2532
        %v2534 = vpop.xlane.xlu0 %2533
        %v2535 = vsel %vm1830, %v2517, -inf
        %2536 = vmax.xlane.f32.xlu0 %v2535
        %v2537 = vpop.xlane.xlu0 %2536
        %v2538 = vsel %vm1830, %v2518, -inf
        %2539 = vmax.xlane.f32.xlu0 %v2538
        %v2540 = vpop.xlane.xlu0 %2539
        %v2541 = vsel %vm1830, %v2519, -inf
        %2542 = vmax.xlane.f32.xlu0 %v2541
        %v2543 = vpop.xlane.xlu0 %2542
        %v2544 = vsub.f32 %v2512, %v2522
        %v2545 = vsub.f32 %v2513, %v2525
        %v2546 = vsub.f32 %v2514, %v2528
        %v2547 = vsub.f32 %v2515, %v2531
        %v2548 = vsub.f32 %v2516, %v2534
        %v2549 = vsub.f32 %v2517, %v2537
        %v2550 = vsub.f32 %v2518, %v2540
        %v2551 = vsub.f32 %v2519, %v2543
        %v2552 = vmul.f32 %v2544, 1.442695
        %v2553 = vpow.pop %v2552
        %v2554 = vmul.f32 %v2545, 1.442695
        %v2555 = vpow.pop %v2554
        %v2556 = vmul.f32 %v2546, 1.442695
        %v2557 = vpow.pop %v2556
        %v2558 = vmul.f32 %v2547, 1.442695
        %v2559 = vpow.pop %v2558
        %v2560 = vmul.f32 %v2548, 1.442695
        %v2561 = vpow.pop %v2560
        %v2562 = vmul.f32 %v2549, 1.442695
        %v2563 = vpow.pop %v2562
        %v2564 = vmul.f32 %v2550, 1.442695
        %v2565 = vpow.pop %v2564
        %v2566 = vmul.f32 %v2551, 1.442695
        %v2567 = vpow.pop %v2566
        %v2568 = vsel %vm1830, %v2553, 0.0
        %2569 = vadd.xlane.f32.xlu0 %v2568
        %v2570 = vpop.xlane.xlu0 %2569
        %v2571 = vsel %vm1830, %v2555, 0.0
        %2572 = vadd.xlane.f32.xlu0 %v2571
        %v2573 = vpop.xlane.xlu0 %2572
        %v2574 = vsel %vm1830, %v2557, 0.0
        %2575 = vadd.xlane.f32.xlu0 %v2574
        %v2576 = vpop.xlane.xlu0 %2575
        %v2577 = vsel %vm1830, %v2559, 0.0
        %2578 = vadd.xlane.f32.xlu0 %v2577
        %v2579 = vpop.xlane.xlu0 %2578
        %v2580 = vsel %vm1830, %v2561, 0.0
        %2581 = vadd.xlane.f32.xlu0 %v2580
        %v2582 = vpop.xlane.xlu0 %2581
        %v2583 = vsel %vm1830, %v2563, 0.0
        %2584 = vadd.xlane.f32.xlu0 %v2583
        %v2585 = vpop.xlane.xlu0 %2584
        %v2586 = vsel %vm1830, %v2565, 0.0
        %2587 = vadd.xlane.f32.xlu0 %v2586
        %v2588 = vpop.xlane.xlu0 %2587
        %v2589 = vsel %vm1830, %v2567, 0.0
        %2590 = vadd.xlane.f32.xlu0 %v2589
        %v2591 = vpop.xlane.xlu0 %2590
        %v2592 = vrcp.pop %v2570
        %v2593 = vrcp.pop %v2573
        %v2594 = vrcp.pop %v2576
        %v2595 = vrcp.pop %v2579
        %v2596 = vrcp.pop %v2582
        %v2597 = vrcp.pop %v2585
        %v2598 = vrcp.pop %v2588
        %v2599 = vrcp.pop %v2591
        %v2600 = vmul.f32 %v2553, %v2592
        %v2601 = vmul.f32 %v2555, %v2593
        %v2602 = vmul.f32 %v2557, %v2594
        %v2603 = vmul.f32 %v2559, %v2595
        %v2604 = vmul.f32 %v2561, %v2596
        %v2605 = vmul.f32 %v2563, %v2597
        %v2606 = vmul.f32 %v2565, %v2598
        %v2607 = vmul.f32 %v2567, %v2599
        %v2608 = vpack.c.bf16 %v2601, %v2600
        %v2609 = vpack.c.bf16 %v2603, %v2602
        %v2610 = vpack.c.bf16 %v2605, %v2604
        %v2611 = vpack.c.bf16 %v2607, %v2606
        %v2613 = vsel %vm1830, %v2608, 0
        %v2616 = vsel %vm1830, %v2609, 0
        %v2619 = vsel %vm1830, %v2610, 0
        %v2622 = vsel %vm1830, %v2611, 0
        %2624 = vmatprep.subr.bf16.mxu0 0
        %2625 = vmatpush1.bf16.xpose.msra.mxu0 %v2613
        %2626 = vmatprep.subr.bf16.mxu0 0
        %2627 = vmatpush1.bf16.xpose.msra.mxu0 %v2616
        %2628 = vmatprep.subr.bf16.mxu0 0
        %2629 = vmatpush1.bf16.xpose.msra.mxu0 %v2619
        %2630 = vmatprep.subr.bf16.mxu0 0
        %2631 = vmatpush1.bf16.xpose.msra.mxu0 %v2622
        %2632 = vmatprep.subr.bf16.mxu0 0
        %2633 = vmatpush1.bf16.xpose.msra.mxu0 0
        %2634 = vmatprep.subr.bf16.mxu0 0
        %2635 = vmatpush1.bf16.xpose.msra.mxu0 0
        %2636 = vmatprep.subr.bf16.mxu0 0
        %2637 = vmatpush1.bf16.xpose.msra.mxu0 0
        %2638 = vmatprep.subr.bf16.mxu0 0
        %2639 = vmatpush1.bf16.xpose.msra.mxu0 0
        %2640 = vmatprep.subr.bf16.mxu0 0
        %2641 = vmatpush1.bf16.xpose.msra.mxu0 0
        %2642 = vmatprep.subr.bf16.mxu0 0
        %2643 = vmatpush1.bf16.xpose.msra.mxu0 0
        %2644 = vmatprep.subr.bf16.mxu0 0
        %2645 = vmatpush1.bf16.xpose.msra.mxu0 0
        %2646 = vmatprep.subr.bf16.mxu0 0
        %2647 = vmatpush1.bf16.xpose.msra.mxu0 0
        %2648 = vmatprep.subr.bf16.mxu0 0
        %2649 = vmatpush1.bf16.xpose.msra.mxu0 0
        %2650 = vmatprep.subr.bf16.mxu0 0
        %2651 = vmatpush1.bf16.xpose.msra.mxu0 0
        %2652 = vmatprep.subr.bf16.mxu0 0
        %2653 = vmatpush1.bf16.xpose.msra.mxu0 0
        %2654 = vmatprep.subr.bf16.mxu0 0
        %2655 = vmatpush1.bf16.xpose.msra.mxu0 0
        %2656 = vmatprep.mubr.bf16.mxu0 0
        %2657 = vmatmul.mubr.bf16.gmra.mrb[0].mxu0 %v2613
        %v2658 = vpop.f32.mrb[0].mxu0
        %v2659 = vadd.f32 0.0, %v2658
        %v2660 = vpop.f32.mrb[0].mxu0
        %v2661 = vpop.f32.mrb[0].mxu0
        %v2662 = vadd.f32 0.0, %v2661
        %v2663 = vpop.f32.mrb[0].mxu0
        %2664 = vmatprep.mubr.bf16.mxu0 0
        %2665 = vmatmul.mubr.bf16.gmra.mrb[0].mxu0 %v2616
        %v2666 = vpop.f32.mrb[0].mxu0
        %v2667 = vadd.f32 0.0, %v2666
        %v2668 = vpop.f32.mrb[0].mxu0
        %v2669 = vpop.f32.mrb[0].mxu0
        %v2670 = vadd.f32 0.0, %v2669
        %v2671 = vpop.f32.mrb[0].mxu0
        %2672 = vmatprep.mubr.bf16.mxu0 0
        %2673 = vmatmul.mubr.bf16.gmra.mrb[0].mxu0 %v2619
        %v2674 = vpop.f32.mrb[0].mxu0
        %v2675 = vadd.f32 0.0, %v2674
        %v2676 = vpop.f32.mrb[0].mxu0
        %v2677 = vpop.f32.mrb[0].mxu0
        %v2678 = vadd.f32 0.0, %v2677
        %v2679 = vpop.f32.mrb[0].mxu0
        %2680 = vmatprep.mubr.bf16.mxu0 0
        %2681 = vmatmul.mubr.bf16.gmra.mrb[0].mxu0 %v2622
        %v2682 = vpop.f32.mrb[0].mxu0
        %v2683 = vadd.f32 0.0, %v2682
        %v2684 = vpop.f32.mrb[0].mxu0
        %v2685 = vpop.f32.mrb[0].mxu0
        %v2686 = vadd.f32 0.0, %v2685
        %v2687 = vpop.f32.mrb[0].mxu0
        %2688 = vdwg.mxu0
        %v2689 = vmul.f32 %v2325, %v2659
        %v2690 = vmul.f32 %v2328, %v2662
        %v2691 = vmul.f32 %v2333, %v2667
        %v2692 = vmul.f32 %v2336, %v2670
        %v2693 = vmul.f32 %v2341, %v2675
        %v2694 = vmul.f32 %v2344, %v2678
        %v2695 = vmul.f32 %v2349, %v2683
        %v2696 = vmul.f32 %v2352, %v2686
        %v2697 = vsel %vm2008, %v2689, -inf
        %2698 = vmax.xlane.f32.xlu0 %v2697
        %v2699 = vpop.xlane.xlu0 %2698
        %v2700 = vsel %vm2008, %v2690, -inf
        %2701 = vmax.xlane.f32.xlu0 %v2700
        %v2702 = vpop.xlane.xlu0 %2701
        %v2703 = vsel %vm2008, %v2691, -inf
        %2704 = vmax.xlane.f32.xlu0 %v2703
        %v2705 = vpop.xlane.xlu0 %2704
        %v2706 = vsel %vm2008, %v2692, -inf
        %2707 = vmax.xlane.f32.xlu0 %v2706
        %v2708 = vpop.xlane.xlu0 %2707
        %v2709 = vsel %vm2008, %v2693, -inf
        %2710 = vmax.xlane.f32.xlu0 %v2709
        %v2711 = vpop.xlane.xlu0 %2710
        %v2712 = vsel %vm2008, %v2694, -inf
        %2713 = vmax.xlane.f32.xlu0 %v2712
        %v2714 = vpop.xlane.xlu0 %2713
        %v2715 = vsel %vm2008, %v2695, -inf
        %2716 = vmax.xlane.f32.xlu0 %v2715
        %v2717 = vpop.xlane.xlu0 %2716
        %v2718 = vsel %vm2008, %v2696, -inf
        %2719 = vmax.xlane.f32.xlu0 %v2718
        %v2720 = vpop.xlane.xlu0 %2719
        %v2721 = vsub.f32 %v2689, %v2699
        %v2722 = vsub.f32 %v2690, %v2702
        %v2723 = vsub.f32 %v2691, %v2705
        %v2724 = vsub.f32 %v2692, %v2708
        %v2725 = vsub.f32 %v2693, %v2711
        %v2726 = vsub.f32 %v2694, %v2714
        %v2727 = vsub.f32 %v2695, %v2717
        %v2728 = vsub.f32 %v2696, %v2720
        %v2729 = vmul.f32 %v2721, 1.442695
        %v2730 = vpow.pop %v2729
        %v2731 = vmul.f32 %v2722, 1.442695
        %v2732 = vpow.pop %v2731
        %v2733 = vmul.f32 %v2723, 1.442695
        %v2734 = vpow.pop %v2733
        %v2735 = vmul.f32 %v2724, 1.442695
        %v2736 = vpow.pop %v2735
        %v2737 = vmul.f32 %v2725, 1.442695
        %v2738 = vpow.pop %v2737
        %v2739 = vmul.f32 %v2726, 1.442695
        %v2740 = vpow.pop %v2739
        %v2741 = vmul.f32 %v2727, 1.442695
        %v2742 = vpow.pop %v2741
        %v2743 = vmul.f32 %v2728, 1.442695
        %v2744 = vpow.pop %v2743
        %v2745 = vsel %vm2008, %v2730, 0.0
        %2746 = vadd.xlane.f32.xlu0 %v2745
        %v2747 = vpop.xlane.xlu0 %2746
        %v2748 = vsel %vm2008, %v2732, 0.0
        %2749 = vadd.xlane.f32.xlu0 %v2748
        %v2750 = vpop.xlane.xlu0 %2749
        %v2751 = vsel %vm2008, %v2734, 0.0
        %2752 = vadd.xlane.f32.xlu0 %v2751
        %v2753 = vpop.xlane.xlu0 %2752
        %v2754 = vsel %vm2008, %v2736, 0.0
        %2755 = vadd.xlane.f32.xlu0 %v2754
        %v2756 = vpop.xlane.xlu0 %2755
        %v2757 = vsel %vm2008, %v2738, 0.0
        %2758 = vadd.xlane.f32.xlu0 %v2757
        %v2759 = vpop.xlane.xlu0 %2758
        %v2760 = vsel %vm2008, %v2740, 0.0
        %2761 = vadd.xlane.f32.xlu0 %v2760
        %v2762 = vpop.xlane.xlu0 %2761
        %v2763 = vsel %vm2008, %v2742, 0.0
        %2764 = vadd.xlane.f32.xlu0 %v2763
        %v2765 = vpop.xlane.xlu0 %2764
        %v2766 = vsel %vm2008, %v2744, 0.0
        %2767 = vadd.xlane.f32.xlu0 %v2766
        %v2768 = vpop.xlane.xlu0 %2767
        %v2769 = vrcp.pop %v2747
        %v2770 = vrcp.pop %v2750
        %v2771 = vrcp.pop %v2753
        %v2772 = vrcp.pop %v2756
        %v2773 = vrcp.pop %v2759
        %v2774 = vrcp.pop %v2762
        %v2775 = vrcp.pop %v2765
        %v2776 = vrcp.pop %v2768
        %v2777 = vmul.f32 %v2730, %v2769
        %v2778 = vmul.f32 %v2732, %v2770
        %v2779 = vmul.f32 %v2734, %v2771
        %v2780 = vmul.f32 %v2736, %v2772
        %v2781 = vmul.f32 %v2738, %v2773
        %v2782 = vmul.f32 %v2740, %v2774
        %v2783 = vmul.f32 %v2742, %v2775
        %v2784 = vmul.f32 %v2744, %v2776
        %s2785 = sadd.s32 %s2097, 1
        %s2786 = sld [smem:[#allocation8 + %s2785]]
        %s2787 = ssub.f32 1.0, %s2786
        %v2788 = vstv %s2787
        %v2789 = vmul.f32 %v2788, %v2777
        %v2790 = vmul.f32 %v2788, %v2778
        %v2791 = vmul.f32 %v2788, %v2779
        %v2792 = vmul.f32 %v2788, %v2780
        %v2793 = vmul.f32 %v2788, %v2781
        %v2794 = vmul.f32 %v2788, %v2782
        %v2795 = vmul.f32 %v2788, %v2783
        %v2796 = vmul.f32 %v2788, %v2784
        %v2797 = vstv %s2786
        %v2798 = vmul.f32 %v2797, %v2659
        %v2799 = vmul.f32 %v2797, %v2662
        %v2800 = vmul.f32 %v2797, %v2667
        %v2801 = vmul.f32 %v2797, %v2670
        %v2802 = vmul.f32 %v2797, %v2675
        %v2803 = vmul.f32 %v2797, %v2678
        %v2804 = vmul.f32 %v2797, %v2683
        %v2805 = vmul.f32 %v2797, %v2686
        %v2806 = vadd.f32 %v2789, %v2798
        %v2807 = vadd.f32 %v2790, %v2799
        %v2808 = vadd.f32 %v2791, %v2800
        %v2809 = vadd.f32 %v2792, %v2801
        %v2810 = vadd.f32 %v2793, %v2802
        %v2811 = vadd.f32 %v2794, %v2803
        %v2812 = vadd.f32 %v2795, %v2804
        %v2813 = vadd.f32 %v2796, %v2805
        %v2814 = vsel %vm2008, %v2806, 0.0
        %v2815 = vsel %vm2008, %v2807, 0.0
        %v2816 = vadd.f32 %v2814, %v2815
        %v2817 = vsel %vm2008, %v2808, 0.0
        %v2818 = vadd.f32 %v2816, %v2817
        %v2819 = vsel %vm2008, %v2809, 0.0
        %v2820 = vadd.f32 %v2818, %v2819
        %v2821 = vsel %vm2008, %v2810, 0.0
        %v2822 = vadd.f32 %v2820, %v2821
        %v2823 = vsel %vm2008, %v2811, 0.0
        %v2824 = vadd.f32 %v2822, %v2823
        %v2825 = vsel %vm2008, %v2812, 0.0
        %v2826 = vadd.f32 %v2824, %v2825
        %v2827 = vsel %vm2008, %v2813, 0.0
        %v2828 = vadd.f32 %v2826, %v2827
        %v2829 = vrot.slane %v2828, 4
        %v2830 = vadd.f32 %v2828, %v2829
        %v2831 = vrot.slane %v2830, 2
        %v2832 = vadd.f32 %v2830, %v2831
        %v2833 = vrot.slane %v2832, 1
        %v2834 = vadd.f32 %v2832, %v2833
        %v2835 = vadd.f32 %v2834, 1e-08
        %v2836 = vrcp.pop %v2835
        %v2837 = vmul.f32 %v2806, %v2836
        %v2838 = vmul.f32 %v2807, %v2836
        %v2839 = vmul.f32 %v2808, %v2836
        %v2840 = vmul.f32 %v2809, %v2836
        %v2841 = vmul.f32 %v2810, %v2836
        %v2842 = vmul.f32 %v2811, %v2836
        %v2843 = vmul.f32 %v2812, %v2836
        %v2844 = vmul.f32 %v2813, %v2836
        %v2845 = vpack.c.bf16 %v2838, %v2837
        %v2846 = vpack.c.bf16 %v2840, %v2839
        %v2847 = vpack.c.bf16 %v2842, %v2841
        %v2848 = vpack.c.bf16 %v2844, %v2843
        %v2854 = vsel %vm2008, %v2845, 0
        %v2857 = vsel %vm2008, %v2846, 0
        %v2860 = vsel %vm2008, %v2847, 0
        %v2863 = vsel %vm2008, %v2848, 0
        %2865 = vmatprep.subr.bf16.mxu0 0
        %2866 = vmatpush1.bf16.msra.mxu0 %v2356
        %2867 = vmatprep.subr.bf16.mxu0 0
        %2868 = vmatpush1.bf16.msra.mxu0 %v2358
        %2869 = vmatprep.subr.bf16.mxu0 0
        %2870 = vmatpush1.bf16.msra.mxu0 %v2360
        %2871 = vmatprep.subr.bf16.mxu0 0
        %2872 = vmatpush1.bf16.msra.mxu0 %v2362
        %2873 = vmatprep.subr.bf16.mxu0 0
        %2874 = vmatpush1.bf16.msra.mxu0 0
        %2875 = vmatprep.subr.bf16.mxu0 0
        %2876 = vmatpush1.bf16.msra.mxu0 0
        %2877 = vmatprep.subr.bf16.mxu0 0
        %2878 = vmatpush1.bf16.msra.mxu0 0
        %2879 = vmatprep.subr.bf16.mxu0 0
        %2880 = vmatpush1.bf16.msra.mxu0 0
        %2881 = vmatprep.subr.bf16.mxu0 0
        %2882 = vmatpush1.bf16.msra.mxu0 0
        %2883 = vmatprep.subr.bf16.mxu0 0
        %2884 = vmatpush1.bf16.msra.mxu0 0
        %2885 = vmatprep.subr.bf16.mxu0 0
        %2886 = vmatpush1.bf16.msra.mxu0 0
        %2887 = vmatprep.subr.bf16.mxu0 0
        %2888 = vmatpush1.bf16.msra.mxu0 0
        %2889 = vmatprep.subr.bf16.mxu0 0
        %2890 = vmatpush1.bf16.msra.mxu0 0
        %2891 = vmatprep.subr.bf16.mxu0 0
        %2892 = vmatpush1.bf16.msra.mxu0 0
        %2893 = vmatprep.subr.bf16.mxu0 0
        %2894 = vmatpush1.bf16.msra.mxu0 0
        %2895 = vmatprep.subr.bf16.mxu0 0
        %2896 = vmatpush1.bf16.msra.mxu0 0
        %2897 = vmatprep.mubr.bf16.mxu0 0
        %2898 = vmatmul.mubr.bf16.gmra.mrb[0].mxu0 %v2854
        %v2899 = vpop.f32.mrb[0].mxu0
        %v2900 = vadd.f32 0.0, %v2899
        %v2901 = vpop.f32.mrb[0].mxu0
        %v2902 = vpop.f32.mrb[0].mxu0
        %v2903 = vadd.f32 0.0, %v2902
        %v2904 = vpop.f32.mrb[0].mxu0
        %2905 = vmatprep.mubr.bf16.mxu0 0
        %2906 = vmatmul.mubr.bf16.gmra.mrb[0].mxu0 %v2857
        %v2907 = vpop.f32.mrb[0].mxu0
        %v2908 = vadd.f32 0.0, %v2907
        %v2909 = vpop.f32.mrb[0].mxu0
        %v2910 = vpop.f32.mrb[0].mxu0
        %v2911 = vadd.f32 0.0, %v2910
        %v2912 = vpop.f32.mrb[0].mxu0
        %2913 = vmatprep.mubr.bf16.mxu0 0
        %2914 = vmatmul.mubr.bf16.gmra.mrb[0].mxu0 %v2860
        %v2915 = vpop.f32.mrb[0].mxu0
        %v2916 = vadd.f32 0.0, %v2915
        %v2917 = vpop.f32.mrb[0].mxu0
        %v2918 = vpop.f32.mrb[0].mxu0
        %v2919 = vadd.f32 0.0, %v2918
        %v2920 = vpop.f32.mrb[0].mxu0
        %2921 = vmatprep.mubr.bf16.mxu0 0
        %2922 = vmatmul.mubr.bf16.gmra.mrb[0].mxu0 %v2863
        %v2923 = vpop.f32.mrb[0].mxu0
        %v2924 = vadd.f32 0.0, %v2923
        %v2925 = vpop.f32.mrb[0].mxu0
        %v2926 = vpop.f32.mrb[0].mxu0
        %v2927 = vadd.f32 0.0, %v2926
        %v2928 = vpop.f32.mrb[0].mxu0
        %2929 = vdwg.mxu0
        %v2930 = vpack.c.bf16 %v2903, %v2900
        %v2931 = vpack.c.bf16 %v2911, %v2908
        %v2932 = vpack.c.bf16 %v2919, %v2916
        %v2933 = vpack.c.bf16 %v2927, %v2924
        %v2935 = vsel %vm1575, %v2930, 0
        %v2938 = vsel %vm1575, %v2931, 0
        %v2941 = vsel %vm1575, %v2932, 0
        %v2944 = vsel %vm1575, %v2933, 0
        %vm2946 = vcmask 1043456
        %v2948 = vsel %vm2946, %v1536, 0
        %2950 = vmatprep.subr.bf16.mxu0 0
        %2951 = vmatpush1.bf16.msra.mxu0 %v2948
        %2952 = vmatprep.subr.bf16.mxu0 0
        %2953 = vmatpush1.bf16.msra.mxu0 0
        %2954 = vmatprep.subr.bf16.mxu0 0
        %2955 = vmatpush1.bf16.msra.mxu0 0
        %2956 = vmatprep.subr.bf16.mxu0 0
        %2957 = vmatpush1.bf16.msra.mxu0 0
        %2958 = vmatprep.subr.bf16.mxu0 0
        %2959 = vmatpush1.bf16.msra.mxu0 0
        %2960 = vmatprep.subr.bf16.mxu0 0
        %2961 = vmatpush1.bf16.msra.mxu0 0
        %2962 = vmatprep.subr.bf16.mxu0 0
        %2963 = vmatpush1.bf16.msra.mxu0 0
        %2964 = vmatprep.subr.bf16.mxu0 0
        %2965 = vmatpush1.bf16.msra.mxu0 0
        %2966 = vmatprep.subr.bf16.mxu0 0
        %2967 = vmatpush1.bf16.msra.mxu0 0
        %2968 = vmatprep.subr.bf16.mxu0 0
        %2969 = vmatpush1.bf16.msra.mxu0 0
        %2970 = vmatprep.subr.bf16.mxu0 0
        %2971 = vmatpush1.bf16.msra.mxu0 0
        %2972 = vmatprep.subr.bf16.mxu0 0
        %2973 = vmatpush1.bf16.msra.mxu0 0
        %2974 = vmatprep.subr.bf16.mxu0 0
        %2975 = vmatpush1.bf16.msra.mxu0 0
        %2976 = vmatprep.subr.bf16.mxu0 0
        %2977 = vmatpush1.bf16.msra.mxu0 0
        %2978 = vmatprep.subr.bf16.mxu0 0
        %2979 = vmatpush1.bf16.msra.mxu0 0
        %2980 = vmatprep.subr.bf16.mxu0 0
        %2981 = vmatpush1.bf16.msra.mxu0 0
        %2982 = vmatprep.mubr.bf16.mxu0 0
        %2983 = vmatmul.mubr.bf16.gmra.mrb[0].mxu0 %v2935
        %v2984 = vpop.f32.mrb[0].mxu0
        %v2985 = vadd.f32 0.0, %v2984
        %v2986 = vpop.f32.mrb[0].mxu0
        %v2987 = vpop.f32.mrb[0].mxu0
        %v2988 = vadd.f32 0.0, %v2987
        %v2989 = vpop.f32.mrb[0].mxu0
        %2990 = vmatprep.mubr.bf16.mxu0 0
        %2991 = vmatmul.mubr.bf16.gmra.mrb[0].mxu0 %v2938
        %v2992 = vpop.f32.mrb[0].mxu0
        %v2993 = vadd.f32 0.0, %v2992
        %v2994 = vpop.f32.mrb[0].mxu0
        %v2995 = vpop.f32.mrb[0].mxu0
        %v2996 = vadd.f32 0.0, %v2995
        %v2997 = vpop.f32.mrb[0].mxu0
        %2998 = vmatprep.mubr.bf16.mxu0 0
        %2999 = vmatmul.mubr.bf16.gmra.mrb[0].mxu0 %v2941
        %v3000 = vpop.f32.mrb[0].mxu0
        %v3001 = vadd.f32 0.0, %v3000
        %v3002 = vpop.f32.mrb[0].mxu0
        %v3003 = vpop.f32.mrb[0].mxu0
        %v3004 = vadd.f32 0.0, %v3003
        %v3005 = vpop.f32.mrb[0].mxu0
        %3006 = vmatprep.mubr.bf16.mxu0 0
        %3007 = vmatmul.mubr.bf16.gmra.mrb[0].mxu0 %v2944
        %v3008 = vpop.f32.mrb[0].mxu0
        %v3009 = vadd.f32 0.0, %v3008
        %v3010 = vpop.f32.mrb[0].mxu0
        %v3011 = vpop.f32.mrb[0].mxu0
        %v3012 = vadd.f32 0.0, %v3011
        %v3013 = vpop.f32.mrb[0].mxu0
        %3014 = vdwg.mxu0
        %v3016 = vsel %vm1575, %v2242, 0
        %v3019 = vsel %vm1575, %v2243, 0
        %v3022 = vsel %vm1575, %v2244, 0
        %v3025 = vsel %vm1575, %v2245, 0
        %v3028 = vsel %vm2946, %v1535, 0
        %3030 = vmatprep.subr.bf16.mxu0 0
        %3031 = vmatpush1.bf16.msra.mxu0 %v3028
        %3032 = vmatprep.subr.bf16.mxu0 0
        %3033 = vmatpush1.bf16.msra.mxu0 0
        %3034 = vmatprep.subr.bf16.mxu0 0
        %3035 = vmatpush1.bf16.msra.mxu0 0
        %3036 = vmatprep.subr.bf16.mxu0 0
        %3037 = vmatpush1.bf16.msra.mxu0 0
        %3038 = vmatprep.subr.bf16.mxu0 0
        %3039 = vmatpush1.bf16.msra.mxu0 0
        %3040 = vmatprep.subr.bf16.mxu0 0
        %3041 = vmatpush1.bf16.msra.mxu0 0
        %3042 = vmatprep.subr.bf16.mxu0 0
        %3043 = vmatpush1.bf16.msra.mxu0 0
        %3044 = vmatprep.subr.bf16.mxu0 0
        %3045 = vmatpush1.bf16.msra.mxu0 0
        %3046 = vmatprep.subr.bf16.mxu0 0
        %3047 = vmatpush1.bf16.msra.mxu0 0
        %3048 = vmatprep.subr.bf16.mxu0 0
        %3049 = vmatpush1.bf16.msra.mxu0 0
        %3050 = vmatprep.subr.bf16.mxu0 0
        %3051 = vmatpush1.bf16.msra.mxu0 0
        %3052 = vmatprep.subr.bf16.mxu0 0
        %3053 = vmatpush1.bf16.msra.mxu0 0
        %3054 = vmatprep.subr.bf16.mxu0 0
        %3055 = vmatpush1.bf16.msra.mxu0 0
        %3056 = vmatprep.subr.bf16.mxu0 0
        %3057 = vmatpush1.bf16.msra.mxu0 0
        %3058 = vmatprep.subr.bf16.mxu0 0
        %3059 = vmatpush1.bf16.msra.mxu0 0
        %3060 = vmatprep.subr.bf16.mxu0 0
        %3061 = vmatpush1.bf16.msra.mxu0 0
        %3062 = vmatprep.mubr.bf16.mxu0 0
        %3063 = vmatmul.mubr.bf16.gmra.mrb[0].mxu0 %v3016
        %v3064 = vpop.f32.mrb[0].mxu0
        %v3065 = vadd.f32 %v2985, %v3064
        %v3066 = vpop.f32.mrb[0].mxu0
        %v3067 = vpop.f32.mrb[0].mxu0
        %v3068 = vadd.f32 %v2988, %v3067
        %v3069 = vpop.f32.mrb[0].mxu0
        %3070 = vmatprep.mubr.bf16.mxu0 0
        %3071 = vmatmul.mubr.bf16.gmra.mrb[0].mxu0 %v3019
        %v3072 = vpop.f32.mrb[0].mxu0
        %v3073 = vadd.f32 %v2993, %v3072
        %v3074 = vpop.f32.mrb[0].mxu0
        %v3075 = vpop.f32.mrb[0].mxu0
        %v3076 = vadd.f32 %v2996, %v3075
        %v3077 = vpop.f32.mrb[0].mxu0
        %3078 = vmatprep.mubr.bf16.mxu0 0
        %3079 = vmatmul.mubr.bf16.gmra.mrb[0].mxu0 %v3022
        %v3080 = vpop.f32.mrb[0].mxu0
        %v3081 = vadd.f32 %v3001, %v3080
        %v3082 = vpop.f32.mrb[0].mxu0
        %v3083 = vpop.f32.mrb[0].mxu0
        %v3084 = vadd.f32 %v3004, %v3083
        %v3085 = vpop.f32.mrb[0].mxu0
        %3086 = vmatprep.mubr.bf16.mxu0 0
        %3087 = vmatmul.mubr.bf16.gmra.mrb[0].mxu0 %v3025
        %v3088 = vpop.f32.mrb[0].mxu0
        %v3089 = vadd.f32 %v3009, %v3088
        %v3090 = vpop.f32.mrb[0].mxu0
        %v3091 = vpop.f32.mrb[0].mxu0
        %v3092 = vadd.f32 %v3012, %v3091
        %v3093 = vpop.f32.mrb[0].mxu0
        %3094 = vdwg.mxu0
        %3095 = vrot.lane.b32.xlu0 %v1555, 112
        %v3096 = vpop.permute.xlu0 %3095
        %3097 = vrot.lane.b32.xlu0 %v1556, 112
        %v3098 = vpop.permute.xlu0 %3097
        %3099 = vrot.lane.b32.xlu0 %v1557, 112
        %v3100 = vpop.permute.xlu0 %3099
        %3101 = vrot.lane.b32.xlu0 %v1558, 112
        %v3102 = vpop.permute.xlu0 %3101
        %3103 = vrot.lane.b32.xlu0 %v1559, 80
        %v3104 = vpop.permute.xlu0 %3103
        %3105 = vrot.lane.b32.xlu0 %v1560, 80
        %v3106 = vpop.permute.xlu0 %3105
        %3107 = vrot.lane.b32.xlu0 %v1561, 80
        %v3108 = vpop.permute.xlu0 %3107
        %3109 = vrot.lane.b32.xlu0 %v1562, 80
        %v3110 = vpop.permute.xlu0 %3109
        %v3112 = vsel %vm1575, %v3096, 0
        %v3115 = vsel %vm1575, %v3098, 0
        %v3118 = vsel %vm1575, %v3100, 0
        %v3121 = vsel %vm1575, %v3102, 0
        %v3124 = vsel %vm1575, %v3104, 0
        %v3127 = vsel %vm1575, %v3106, 0
        %v3130 = vsel %vm1575, %v3108, 0
        %v3133 = vsel %vm1575, %v3110, 0
        %3135 = vmatprep.subr.bf16.mxu0 0
        %3136 = vmatpush1.bf16.xpose.msra.mxu0 %v3124
        %3137 = vmatprep.subr.bf16.mxu0 0
        %3138 = vmatpush1.bf16.xpose.msra.mxu0 %v3127
        %3139 = vmatprep.subr.bf16.mxu0 0
        %3140 = vmatpush1.bf16.xpose.msra.mxu0 %v3130
        %3141 = vmatprep.subr.bf16.mxu0 0
        %3142 = vmatpush1.bf16.xpose.msra.mxu0 %v3133
        %3143 = vmatprep.subr.bf16.mxu0 0
        %3144 = vmatpush1.bf16.xpose.msra.mxu0 0
        %3145 = vmatprep.subr.bf16.mxu0 0
        %3146 = vmatpush1.bf16.xpose.msra.mxu0 0
        %3147 = vmatprep.subr.bf16.mxu0 0
        %3148 = vmatpush1.bf16.xpose.msra.mxu0 0
        %3149 = vmatprep.subr.bf16.mxu0 0
        %3150 = vmatpush1.bf16.xpose.msra.mxu0 0
        %3151 = vmatprep.subr.bf16.mxu0 0
        %3152 = vmatpush1.bf16.xpose.msra.mxu0 0
        %3153 = vmatprep.subr.bf16.mxu0 0
        %3154 = vmatpush1.bf16.xpose.msra.mxu0 0
        %3155 = vmatprep.subr.bf16.mxu0 0
        %3156 = vmatpush1.bf16.xpose.msra.mxu0 0
        %3157 = vmatprep.subr.bf16.mxu0 0
        %3158 = vmatpush1.bf16.xpose.msra.mxu0 0
        %3159 = vmatprep.subr.bf16.mxu0 0
        %3160 = vmatpush1.bf16.xpose.msra.mxu0 0
        %3161 = vmatprep.subr.bf16.mxu0 0
        %3162 = vmatpush1.bf16.xpose.msra.mxu0 0
        %3163 = vmatprep.subr.bf16.mxu0 0
        %3164 = vmatpush1.bf16.xpose.msra.mxu0 0
        %3165 = vmatprep.subr.bf16.mxu0 0
        %3166 = vmatpush1.bf16.xpose.msra.mxu0 0
        %3167 = vmatprep.mubr.bf16.mxu0 0
        %3168 = vmatmul.mubr.bf16.gmra.mrb[0].mxu0 %v3112
        %v3169 = vpop.f32.mrb[0].mxu0
        %v3170 = vadd.f32 0.0, %v3169
        %v3171 = vpop.f32.mrb[0].mxu0
        %v3172 = vpop.f32.mrb[0].mxu0
        %v3173 = vadd.f32 0.0, %v3172
        %v3174 = vpop.f32.mrb[0].mxu0
        %3175 = vmatprep.mubr.bf16.mxu0 0
        %3176 = vmatmul.mubr.bf16.gmra.mrb[0].mxu0 %v3115
        %v3177 = vpop.f32.mrb[0].mxu0
        %v3178 = vadd.f32 0.0, %v3177
        %v3179 = vpop.f32.mrb[0].mxu0
        %v3180 = vpop.f32.mrb[0].mxu0
        %v3181 = vadd.f32 0.0, %v3180
        %v3182 = vpop.f32.mrb[0].mxu0
        %3183 = vmatprep.mubr.bf16.mxu0 0
        %3184 = vmatmul.mubr.bf16.gmra.mrb[0].mxu0 %v3118
        %v3185 = vpop.f32.mrb[0].mxu0
        %v3186 = vadd.f32 0.0, %v3185
        %v3187 = vpop.f32.mrb[0].mxu0
        %v3188 = vpop.f32.mrb[0].mxu0
        %v3189 = vadd.f32 0.0, %v3188
        %v3190 = vpop.f32.mrb[0].mxu0
        %3191 = vmatprep.mubr.bf16.mxu0 0
        %3192 = vmatmul.mubr.bf16.gmra.mrb[0].mxu0 %v3121
        %v3193 = vpop.f32.mrb[0].mxu0
        %v3194 = vadd.f32 0.0, %v3193
        %v3195 = vpop.f32.mrb[0].mxu0
        %v3196 = vpop.f32.mrb[0].mxu0
        %v3197 = vadd.f32 0.0, %v3196
        %v3198 = vpop.f32.mrb[0].mxu0
        %3199 = vdwg.mxu0
        %3200 = vrot.lane.b32.xlu0 %v1559, 48
        %v3201 = vpop.permute.xlu0 %3200
        %3202 = vrot.lane.b32.xlu0 %v1560, 48
        %v3203 = vpop.permute.xlu0 %3202
        %3204 = vrot.lane.b32.xlu0 %v1561, 48
        %v3205 = vpop.permute.xlu0 %3204
        %3206 = vrot.lane.b32.xlu0 %v1562, 48
        %v3207 = vpop.permute.xlu0 %3206
        %v3210 = vunpack.c.l.b16 %v1543
        %v3211 = vunpack.c.l.b16 %v1544
        %v3212 = vpack.c.b16 %v3211, %v3210
        %v3214 = vsel %vm1575, %v3201, 0
        %v3217 = vsel %vm1575, %v3203, 0
        %v3220 = vsel %vm1575, %v3205, 0
        %v3223 = vsel %vm1575, %v3207, 0
        %v3226 = vsel %vm1575, %v3212, 0
        %3228 = vmatprep.subr.bf16.mxu0 0
        %3229 = vmatpush1.bf16.xpose.msra.mxu0 %v3226
        %3230 = vmatprep.subr.bf16.mxu0 0
        %3231 = vmatpush1.bf16.xpose.msra.mxu0 0
        %3232 = vmatprep.subr.bf16.mxu0 0
        %3233 = vmatpush1.bf16.xpose.msra.mxu0 0
        %3234 = vmatprep.subr.bf16.mxu0 0
        %3235 = vmatpush1.bf16.xpose.msra.mxu0 0
        %3236 = vmatprep.subr.bf16.mxu0 0
        %3237 = vmatpush1.bf16.xpose.msra.mxu0 0
        %3238 = vmatprep.subr.bf16.mxu0 0
        %3239 = vmatpush1.bf16.xpose.msra.mxu0 0
        %3240 = vmatprep.subr.bf16.mxu0 0
        %3241 = vmatpush1.bf16.xpose.msra.mxu0 0
        %3242 = vmatprep.subr.bf16.mxu0 0
        %3243 = vmatpush1.bf16.xpose.msra.mxu0 0
        %3244 = vmatprep.subr.bf16.mxu0 0
        %3245 = vmatpush1.bf16.xpose.msra.mxu0 0
        %3246 = vmatprep.subr.bf16.mxu0 0
        %3247 = vmatpush1.bf16.xpose.msra.mxu0 0
        %3248 = vmatprep.subr.bf16.mxu0 0
        %3249 = vmatpush1.bf16.xpose.msra.mxu0 0
        %3250 = vmatprep.subr.bf16.mxu0 0
        %3251 = vmatpush1.bf16.xpose.msra.mxu0 0
        %3252 = vmatprep.subr.bf16.mxu0 0
        %3253 = vmatpush1.bf16.xpose.msra.mxu0 0
        %3254 = vmatprep.subr.bf16.mxu0 0
        %3255 = vmatpush1.bf16.xpose.msra.mxu0 0
        %3256 = vmatprep.subr.bf16.mxu0 0
        %3257 = vmatpush1.bf16.xpose.msra.mxu0 0
        %3258 = vmatprep.subr.bf16.mxu0 0
        %3259 = vmatpush1.bf16.xpose.msra.mxu0 0
        %3260 = vmatprep.mubr.bf16.mxu0 0
        %3261 = vmatmul.mubr.bf16.gmra.mrb[0].mxu0 %v3214
        %v3262 = vpop.f32.mrb[0].mxu0
        %v3263 = vadd.f32 0.0, %v3262
        %v3264 = vpop.f32.mrb[0].mxu0
        %v3265 = vpop.f32.mrb[0].mxu0
        %v3266 = vadd.f32 0.0, %v3265
        %v3267 = vpop.f32.mrb[0].mxu0
        %3268 = vmatprep.mubr.bf16.mxu0 0
        %3269 = vmatmul.mubr.bf16.gmra.mrb[0].mxu0 %v3217
        %v3270 = vpop.f32.mrb[0].mxu0
        %v3271 = vadd.f32 0.0, %v3270
        %v3272 = vpop.f32.mrb[0].mxu0
        %v3273 = vpop.f32.mrb[0].mxu0
        %v3274 = vadd.f32 0.0, %v3273
        %v3275 = vpop.f32.mrb[0].mxu0
        %3276 = vmatprep.mubr.bf16.mxu0 0
        %3277 = vmatmul.mubr.bf16.gmra.mrb[0].mxu0 %v3220
        %v3278 = vpop.f32.mrb[0].mxu0
        %v3279 = vadd.f32 0.0, %v3278
        %v3280 = vpop.f32.mrb[0].mxu0
        %v3281 = vpop.f32.mrb[0].mxu0
        %v3282 = vadd.f32 0.0, %v3281
        %v3283 = vpop.f32.mrb[0].mxu0
        %3284 = vmatprep.mubr.bf16.mxu0 0
        %3285 = vmatmul.mubr.bf16.gmra.mrb[0].mxu0 %v3223
        %v3286 = vpop.f32.mrb[0].mxu0
        %v3287 = vadd.f32 0.0, %v3286
        %v3288 = vpop.f32.mrb[0].mxu0
        %v3289 = vpop.f32.mrb[0].mxu0
        %v3290 = vadd.f32 0.0, %v3289
        %v3291 = vpop.f32.mrb[0].mxu0
        %3292 = vdwg.mxu0
        %v3293 = vmul.f32 %v3263, 0.5
        %v3294 = vmul.f32 %v3266, 0.5
        %v3295 = vmul.f32 %v3271, 0.5
        %v3296 = vmul.f32 %v3274, 0.5
        %v3297 = vmul.f32 %v3279, 0.5
        %v3298 = vmul.f32 %v3282, 0.5
        %v3299 = vmul.f32 %v3287, 0.5
        %v3300 = vmul.f32 %v3290, 0.5
        %v3301 = vmul.f32 %v3263, 0.044715
        %v3302 = vmul.f32 %v3266, 0.044715
        %v3303 = vmul.f32 %v3271, 0.044715
        %v3304 = vmul.f32 %v3274, 0.044715
        %v3305 = vmul.f32 %v3279, 0.044715
        %v3306 = vmul.f32 %v3282, 0.044715
        %v3307 = vmul.f32 %v3287, 0.044715
        %v3308 = vmul.f32 %v3290, 0.044715
        %v3309 = vmul.f32 %v3301, %v3263
        %v3310 = vmul.f32 %v3302, %v3266
        %v3311 = vmul.f32 %v3303, %v3271
        %v3312 = vmul.f32 %v3304, %v3274
        %v3313 = vmul.f32 %v3305, %v3279
        %v3314 = vmul.f32 %v3306, %v3282
        %v3315 = vmul.f32 %v3307, %v3287
        %v3316 = vmul.f32 %v3308, %v3290
        %v3317 = vmul.f32 %v3309, %v3263
        %v3318 = vmul.f32 %v3310, %v3266
        %v3319 = vmul.f32 %v3311, %v3271
        %v3320 = vmul.f32 %v3312, %v3274
        %v3321 = vmul.f32 %v3313, %v3279
        %v3322 = vmul.f32 %v3314, %v3282
        %v3323 = vmul.f32 %v3315, %v3287
        %v3324 = vmul.f32 %v3316, %v3290
        %v3325 = vadd.f32 %v3263, %v3317
        %v3326 = vadd.f32 %v3266, %v3318
        %v3327 = vadd.f32 %v3271, %v3319
        %v3328 = vadd.f32 %v3274, %v3320
        %v3329 = vadd.f32 %v3279, %v3321
        %v3330 = vadd.f32 %v3282, %v3322
        %v3331 = vadd.f32 %v3287, %v3323
        %v3332 = vadd.f32 %v3290, %v3324
        %v3333 = vmul.f32 %v3325, 0.7978846
        %v3334 = vmul.f32 %v3326, 0.7978846
        %v3335 = vmul.f32 %v3327, 0.7978846
        %v3336 = vmul.f32 %v3328, 0.7978846
        %v3337 = vmul.f32 %v3329, 0.7978846
        %v3338 = vmul.f32 %v3330, 0.7978846
        %v3339 = vmul.f32 %v3331, 0.7978846
        %v3340 = vmul.f32 %v3332, 0.7978846
        %v3341 = vtanh.pop %v3333
        %v3342 = vtanh.pop %v3334
        %v3343 = vtanh.pop %v3335
        %v3344 = vtanh.pop %v3336
        %v3345 = vtanh.pop %v3337
        %v3346 = vtanh.pop %v3338
        %v3347 = vtanh.pop %v3339
        %v3348 = vtanh.pop %v3340
        %v3349 = vadd.f32 %v3341, 1.0
        %v3350 = vadd.f32 %v3342, 1.0
        %v3351 = vadd.f32 %v3343, 1.0
        %v3352 = vadd.f32 %v3344, 1.0
        %v3353 = vadd.f32 %v3345, 1.0
        %v3354 = vadd.f32 %v3346, 1.0
        %v3355 = vadd.f32 %v3347, 1.0
        %v3356 = vadd.f32 %v3348, 1.0
        %v3357 = vmul.f32 %v3293, %v3349
        %v3358 = vmul.f32 %v3294, %v3350
        %v3359 = vmul.f32 %v3295, %v3351
        %v3360 = vmul.f32 %v3296, %v3352
        %v3361 = vmul.f32 %v3297, %v3353
        %v3362 = vmul.f32 %v3298, %v3354
        %v3363 = vmul.f32 %v3299, %v3355
        %v3364 = vmul.f32 %v3300, %v3356
        %v3365 = vsel %vm1830, %v3357, -inf
        %3366 = vmax.xlane.f32.xlu0 %v3365
        %v3367 = vpop.xlane.xlu0 %3366
        %v3368 = vsel %vm1830, %v3358, -inf
        %3369 = vmax.xlane.f32.xlu0 %v3368
        %v3370 = vpop.xlane.xlu0 %3369
        %v3371 = vsel %vm1830, %v3359, -inf
        %3372 = vmax.xlane.f32.xlu0 %v3371
        %v3373 = vpop.xlane.xlu0 %3372
        %v3374 = vsel %vm1830, %v3360, -inf
        %3375 = vmax.xlane.f32.xlu0 %v3374
        %v3376 = vpop.xlane.xlu0 %3375
        %v3377 = vsel %vm1830, %v3361, -inf
        %3378 = vmax.xlane.f32.xlu0 %v3377
        %v3379 = vpop.xlane.xlu0 %3378
        %v3380 = vsel %vm1830, %v3362, -inf
        %3381 = vmax.xlane.f32.xlu0 %v3380
        %v3382 = vpop.xlane.xlu0 %3381
        %v3383 = vsel %vm1830, %v3363, -inf
        %3384 = vmax.xlane.f32.xlu0 %v3383
        %v3385 = vpop.xlane.xlu0 %3384
        %v3386 = vsel %vm1830, %v3364, -inf
        %3387 = vmax.xlane.f32.xlu0 %v3386
        %v3388 = vpop.xlane.xlu0 %3387
        %v3389 = vsub.f32 %v3357, %v3367
        %v3390 = vsub.f32 %v3358, %v3370
        %v3391 = vsub.f32 %v3359, %v3373
        %v3392 = vsub.f32 %v3360, %v3376
        %v3393 = vsub.f32 %v3361, %v3379
        %v3394 = vsub.f32 %v3362, %v3382
        %v3395 = vsub.f32 %v3363, %v3385
        %v3396 = vsub.f32 %v3364, %v3388
        %v3397 = vmul.f32 %v3389, 1.442695
        %v3398 = vpow.pop %v3397
        %v3399 = vmul.f32 %v3390, 1.442695
        %v3400 = vpow.pop %v3399
        %v3401 = vmul.f32 %v3391, 1.442695
        %v3402 = vpow.pop %v3401
        %v3403 = vmul.f32 %v3392, 1.442695
        %v3404 = vpow.pop %v3403
        %v3405 = vmul.f32 %v3393, 1.442695
        %v3406 = vpow.pop %v3405
        %v3407 = vmul.f32 %v3394, 1.442695
        %v3408 = vpow.pop %v3407
        %v3409 = vmul.f32 %v3395, 1.442695
        %v3410 = vpow.pop %v3409
        %v3411 = vmul.f32 %v3396, 1.442695
        %v3412 = vpow.pop %v3411
        %v3413 = vsel %vm1830, %v3398, 0.0
        %3414 = vadd.xlane.f32.xlu0 %v3413
        %v3415 = vpop.xlane.xlu0 %3414
        %v3416 = vsel %vm1830, %v3400, 0.0
        %3417 = vadd.xlane.f32.xlu0 %v3416
        %v3418 = vpop.xlane.xlu0 %3417
        %v3419 = vsel %vm1830, %v3402, 0.0
        %3420 = vadd.xlane.f32.xlu0 %v3419
        %v3421 = vpop.xlane.xlu0 %3420
        %v3422 = vsel %vm1830, %v3404, 0.0
        %3423 = vadd.xlane.f32.xlu0 %v3422
        %v3424 = vpop.xlane.xlu0 %3423
        %v3425 = vsel %vm1830, %v3406, 0.0
        %3426 = vadd.xlane.f32.xlu0 %v3425
        %v3427 = vpop.xlane.xlu0 %3426
        %v3428 = vsel %vm1830, %v3408, 0.0
        %3429 = vadd.xlane.f32.xlu0 %v3428
        %v3430 = vpop.xlane.xlu0 %3429
        %v3431 = vsel %vm1830, %v3410, 0.0
        %3432 = vadd.xlane.f32.xlu0 %v3431
        %v3433 = vpop.xlane.xlu0 %3432
        %v3434 = vsel %vm1830, %v3412, 0.0
        %3435 = vadd.xlane.f32.xlu0 %v3434
        %v3436 = vpop.xlane.xlu0 %3435
        %v3437 = vrcp.pop %v3415
        %v3438 = vrcp.pop %v3418
        %v3439 = vrcp.pop %v3421
        %v3440 = vrcp.pop %v3424
        %v3441 = vrcp.pop %v3427
        %v3442 = vrcp.pop %v3430
        %v3443 = vrcp.pop %v3433
        %v3444 = vrcp.pop %v3436
        %v3445 = vmul.f32 %v3398, %v3437
        %v3446 = vmul.f32 %v3400, %v3438
        %v3447 = vmul.f32 %v3402, %v3439
        %v3448 = vmul.f32 %v3404, %v3440
        %v3449 = vmul.f32 %v3406, %v3441
        %v3450 = vmul.f32 %v3408, %v3442
        %v3451 = vmul.f32 %v3410, %v3443
        %v3452 = vmul.f32 %v3412, %v3444
        %v3453 = vpack.c.bf16 %v3446, %v3445
        %v3454 = vpack.c.bf16 %v3448, %v3447
        %v3455 = vpack.c.bf16 %v3450, %v3449
        %v3456 = vpack.c.bf16 %v3452, %v3451
        %v3458 = vsel %vm1830, %v3453, 0
        %v3461 = vsel %vm1830, %v3454, 0
        %v3464 = vsel %vm1830, %v3455, 0
        %v3467 = vsel %vm1830, %v3456, 0
        %3469 = vmatprep.subr.bf16.mxu0 0
        %3470 = vmatpush1.bf16.xpose.msra.mxu0 %v3458
        %3471 = vmatprep.subr.bf16.mxu0 0
        %3472 = vmatpush1.bf16.xpose.msra.mxu0 %v3461
        %3473 = vmatprep.subr.bf16.mxu0 0
        %3474 = vmatpush1.bf16.xpose.msra.mxu0 %v3464
        %3475 = vmatprep.subr.bf16.mxu0 0
        %3476 = vmatpush1.bf16.xpose.msra.mxu0 %v3467
        %3477 = vmatprep.subr.bf16.mxu0 0
        %3478 = vmatpush1.bf16.xpose.msra.mxu0 0
        %3479 = vmatprep.subr.bf16.mxu0 0
        %3480 = vmatpush1.bf16.xpose.msra.mxu0 0
        %3481 = vmatprep.subr.bf16.mxu0 0
        %3482 = vmatpush1.bf16.xpose.msra.mxu0 0
        %3483 = vmatprep.subr.bf16.mxu0 0
        %3484 = vmatpush1.bf16.xpose.msra.mxu0 0
        %3485 = vmatprep.subr.bf16.mxu0 0
        %3486 = vmatpush1.bf16.xpose.msra.mxu0 0
        %3487 = vmatprep.subr.bf16.mxu0 0
        %3488 = vmatpush1.bf16.xpose.msra.mxu0 0
        %3489 = vmatprep.subr.bf16.mxu0 0
        %3490 = vmatpush1.bf16.xpose.msra.mxu0 0
        %3491 = vmatprep.subr.bf16.mxu0 0
        %3492 = vmatpush1.bf16.xpose.msra.mxu0 0
        %3493 = vmatprep.subr.bf16.mxu0 0
        %3494 = vmatpush1.bf16.xpose.msra.mxu0 0
        %3495 = vmatprep.subr.bf16.mxu0 0
        %3496 = vmatpush1.bf16.xpose.msra.mxu0 0
        %3497 = vmatprep.subr.bf16.mxu0 0
        %3498 = vmatpush1.bf16.xpose.msra.mxu0 0
        %3499 = vmatprep.subr.bf16.mxu0 0
        %3500 = vmatpush1.bf16.xpose.msra.mxu0 0
        %3501 = vmatprep.mubr.bf16.mxu0 0
        %3502 = vmatmul.mubr.bf16.gmra.mrb[0].mxu0 %v3458
        %v3503 = vpop.f32.mrb[0].mxu0
        %v3504 = vadd.f32 0.0, %v3503
        %v3505 = vpop.f32.mrb[0].mxu0
        %v3506 = vpop.f32.mrb[0].mxu0
        %v3507 = vadd.f32 0.0, %v3506
        %v3508 = vpop.f32.mrb[0].mxu0
        %3509 = vmatprep.mubr.bf16.mxu0 0
        %3510 = vmatmul.mubr.bf16.gmra.mrb[0].mxu0 %v3461
        %v3511 = vpop.f32.mrb[0].mxu0
        %v3512 = vadd.f32 0.0, %v3511
        %v3513 = vpop.f32.mrb[0].mxu0
        %v3514 = vpop.f32.mrb[0].mxu0
        %v3515 = vadd.f32 0.0, %v3514
        %v3516 = vpop.f32.mrb[0].mxu0
        %3517 = vmatprep.mubr.bf16.mxu0 0
        %3518 = vmatmul.mubr.bf16.gmra.mrb[0].mxu0 %v3464
        %v3519 = vpop.f32.mrb[0].mxu0
        %v3520 = vadd.f32 0.0, %v3519
        %v3521 = vpop.f32.mrb[0].mxu0
        %v3522 = vpop.f32.mrb[0].mxu0
        %v3523 = vadd.f32 0.0, %v3522
        %v3524 = vpop.f32.mrb[0].mxu0
        %3525 = vmatprep.mubr.bf16.mxu0 0
        %3526 = vmatmul.mubr.bf16.gmra.mrb[0].mxu0 %v3467
        %v3527 = vpop.f32.mrb[0].mxu0
        %v3528 = vadd.f32 0.0, %v3527
        %v3529 = vpop.f32.mrb[0].mxu0
        %v3530 = vpop.f32.mrb[0].mxu0
        %v3531 = vadd.f32 0.0, %v3530
        %v3532 = vpop.f32.mrb[0].mxu0
        %3533 = vdwg.mxu0
        %v3534 = vmul.f32 %v3170, %v3504
        %v3535 = vmul.f32 %v3173, %v3507
        %v3536 = vmul.f32 %v3178, %v3512
        %v3537 = vmul.f32 %v3181, %v3515
        %v3538 = vmul.f32 %v3186, %v3520
        %v3539 = vmul.f32 %v3189, %v3523
        %v3540 = vmul.f32 %v3194, %v3528
        %v3541 = vmul.f32 %v3197, %v3531
        %v3542 = vsel %vm2008, %v3534, -inf
        %3543 = vmax.xlane.f32.xlu0 %v3542
        %v3544 = vpop.xlane.xlu0 %3543
        %v3545 = vsel %vm2008, %v3535, -inf
        %3546 = vmax.xlane.f32.xlu0 %v3545
        %v3547 = vpop.xlane.xlu0 %3546
        %v3548 = vsel %vm2008, %v3536, -inf
        %3549 = vmax.xlane.f32.xlu0 %v3548
        %v3550 = vpop.xlane.xlu0 %3549
        %v3551 = vsel %vm2008, %v3537, -inf
        %3552 = vmax.xlane.f32.xlu0 %v3551
        %v3553 = vpop.xlane.xlu0 %3552
        %v3554 = vsel %vm2008, %v3538, -inf
        %3555 = vmax.xlane.f32.xlu0 %v3554
        %v3556 = vpop.xlane.xlu0 %3555
        %v3557 = vsel %vm2008, %v3539, -inf
        %3558 = vmax.xlane.f32.xlu0 %v3557
        %v3559 = vpop.xlane.xlu0 %3558
        %v3560 = vsel %vm2008, %v3540, -inf
        %3561 = vmax.xlane.f32.xlu0 %v3560
        %v3562 = vpop.xlane.xlu0 %3561
        %v3563 = vsel %vm2008, %v3541, -inf
        %3564 = vmax.xlane.f32.xlu0 %v3563
        %v3565 = vpop.xlane.xlu0 %3564
        %v3566 = vsub.f32 %v3534, %v3544
        %v3567 = vsub.f32 %v3535, %v3547
        %v3568 = vsub.f32 %v3536, %v3550
        %v3569 = vsub.f32 %v3537, %v3553
        %v3570 = vsub.f32 %v3538, %v3556
        %v3571 = vsub.f32 %v3539, %v3559
        %v3572 = vsub.f32 %v3540, %v3562
        %v3573 = vsub.f32 %v3541, %v3565
        %v3574 = vmul.f32 %v3566, 1.442695
        %v3575 = vpow.pop %v3574
        %v3576 = vmul.f32 %v3567, 1.442695
        %v3577 = vpow.pop %v3576
        %v3578 = vmul.f32 %v3568, 1.442695
        %v3579 = vpow.pop %v3578
        %v3580 = vmul.f32 %v3569, 1.442695
        %v3581 = vpow.pop %v3580
        %v3582 = vmul.f32 %v3570, 1.442695
        %v3583 = vpow.pop %v3582
        %v3584 = vmul.f32 %v3571, 1.442695
        %v3585 = vpow.pop %v3584
        %v3586 = vmul.f32 %v3572, 1.442695
        %v3587 = vpow.pop %v3586
        %v3588 = vmul.f32 %v3573, 1.442695
        %v3589 = vpow.pop %v3588
        %v3590 = vsel %vm2008, %v3575, 0.0
        %3591 = vadd.xlane.f32.xlu0 %v3590
        %v3592 = vpop.xlane.xlu0 %3591
        %v3593 = vsel %vm2008, %v3577, 0.0
        %3594 = vadd.xlane.f32.xlu0 %v3593
        %v3595 = vpop.xlane.xlu0 %3594
        %v3596 = vsel %vm2008, %v3579, 0.0
        %3597 = vadd.xlane.f32.xlu0 %v3596
        %v3598 = vpop.xlane.xlu0 %3597
        %v3599 = vsel %vm2008, %v3581, 0.0
        %3600 = vadd.xlane.f32.xlu0 %v3599
        %v3601 = vpop.xlane.xlu0 %3600
        %v3602 = vsel %vm2008, %v3583, 0.0
        %3603 = vadd.xlane.f32.xlu0 %v3602
        %v3604 = vpop.xlane.xlu0 %3603
        %v3605 = vsel %vm2008, %v3585, 0.0
        %3606 = vadd.xlane.f32.xlu0 %v3605
        %v3607 = vpop.xlane.xlu0 %3606
        %v3608 = vsel %vm2008, %v3587, 0.0
        %3609 = vadd.xlane.f32.xlu0 %v3608
        %v3610 = vpop.xlane.xlu0 %3609
        %v3611 = vsel %vm2008, %v3589, 0.0
        %3612 = vadd.xlane.f32.xlu0 %v3611
        %v3613 = vpop.xlane.xlu0 %3612
        %v3614 = vrcp.pop %v3592
        %v3615 = vrcp.pop %v3595
        %v3616 = vrcp.pop %v3598
        %v3617 = vrcp.pop %v3601
        %v3618 = vrcp.pop %v3604
        %v3619 = vrcp.pop %v3607
        %v3620 = vrcp.pop %v3610
        %v3621 = vrcp.pop %v3613
        %v3622 = vmul.f32 %v3575, %v3614
        %v3623 = vmul.f32 %v3577, %v3615
        %v3624 = vmul.f32 %v3579, %v3616
        %v3625 = vmul.f32 %v3581, %v3617
        %v3626 = vmul.f32 %v3583, %v3618
        %v3627 = vmul.f32 %v3585, %v3619
        %v3628 = vmul.f32 %v3587, %v3620
        %v3629 = vmul.f32 %v3589, %v3621
        %s3630 = sadd.s32 %s2097, 2
        %s3631 = sld [smem:[#allocation8 + %s3630]]
        %s3632 = ssub.f32 1.0, %s3631
        %v3633 = vstv %s3632
        %v3634 = vmul.f32 %v3633, %v3622
        %v3635 = vmul.f32 %v3633, %v3623
        %v3636 = vmul.f32 %v3633, %v3624
        %v3637 = vmul.f32 %v3633, %v3625
        %v3638 = vmul.f32 %v3633, %v3626
        %v3639 = vmul.f32 %v3633, %v3627
        %v3640 = vmul.f32 %v3633, %v3628
        %v3641 = vmul.f32 %v3633, %v3629
        %v3642 = vstv %s3631
        %v3643 = vmul.f32 %v3642, %v3504
        %v3644 = vmul.f32 %v3642, %v3507
        %v3645 = vmul.f32 %v3642, %v3512
        %v3646 = vmul.f32 %v3642, %v3515
        %v3647 = vmul.f32 %v3642, %v3520
        %v3648 = vmul.f32 %v3642, %v3523
        %v3649 = vmul.f32 %v3642, %v3528
        %v3650 = vmul.f32 %v3642, %v3531
        %v3651 = vadd.f32 %v3634, %v3643
        %v3652 = vadd.f32 %v3635, %v3644
        %v3653 = vadd.f32 %v3636, %v3645
        %v3654 = vadd.f32 %v3637, %v3646
        %v3655 = vadd.f32 %v3638, %v3647
        %v3656 = vadd.f32 %v3639, %v3648
        %v3657 = vadd.f32 %v3640, %v3649
        %v3658 = vadd.f32 %v3641, %v3650
        %v3659 = vsel %vm2008, %v3651, 0.0
        %v3660 = vsel %vm2008, %v3652, 0.0
        %v3661 = vadd.f32 %v3659, %v3660
        %v3662 = vsel %vm2008, %v3653, 0.0
        %v3663 = vadd.f32 %v3661, %v3662
        %v3664 = vsel %vm2008, %v3654, 0.0
        %v3665 = vadd.f32 %v3663, %v3664
        %v3666 = vsel %vm2008, %v3655, 0.0
        %v3667 = vadd.f32 %v3665, %v3666
        %v3668 = vsel %vm2008, %v3656, 0.0
        %v3669 = vadd.f32 %v3667, %v3668
        %v3670 = vsel %vm2008, %v3657, 0.0
        %v3671 = vadd.f32 %v3669, %v3670
        %v3672 = vsel %vm2008, %v3658, 0.0
        %v3673 = vadd.f32 %v3671, %v3672
        %v3674 = vrot.slane %v3673, 4
        %v3675 = vadd.f32 %v3673, %v3674
        %v3676 = vrot.slane %v3675, 2
        %v3677 = vadd.f32 %v3675, %v3676
        %v3678 = vrot.slane %v3677, 1
        %v3679 = vadd.f32 %v3677, %v3678
        %v3680 = vadd.f32 %v3679, 1e-08
        %v3681 = vrcp.pop %v3680
        %v3682 = vmul.f32 %v3651, %v3681
        %v3683 = vmul.f32 %v3652, %v3681
        %v3684 = vmul.f32 %v3653, %v3681
        %v3685 = vmul.f32 %v3654, %v3681
        %v3686 = vmul.f32 %v3655, %v3681
        %v3687 = vmul.f32 %v3656, %v3681
        %v3688 = vmul.f32 %v3657, %v3681
        %v3689 = vmul.f32 %v3658, %v3681
        %v3690 = vpack.c.bf16 %v3683, %v3682
        %v3691 = vpack.c.bf16 %v3685, %v3684
        %v3692 = vpack.c.bf16 %v3687, %v3686
        %v3693 = vpack.c.bf16 %v3689, %v3688
        %v3699 = vsel %vm2008, %v3690, 0
        %v3702 = vsel %vm2008, %v3691, 0
        %v3705 = vsel %vm2008, %v3692, 0
        %v3708 = vsel %vm2008, %v3693, 0
        %3710 = vmatprep.subr.bf16.mxu0 0
        %3711 = vmatpush1.bf16.msra.mxu0 %v3201
        %3712 = vmatprep.subr.bf16.mxu0 0
        %3713 = vmatpush1.bf16.msra.mxu0 %v3203
        %3714 = vmatprep.subr.bf16.mxu0 0
        %3715 = vmatpush1.bf16.msra.mxu0 %v3205
        %3716 = vmatprep.subr.bf16.mxu0 0
        %3717 = vmatpush1.bf16.msra.mxu0 %v3207
        %3718 = vmatprep.subr.bf16.mxu0 0
        %3719 = vmatpush1.bf16.msra.mxu0 0
        %3720 = vmatprep.subr.bf16.mxu0 0
        %3721 = vmatpush1.bf16.msra.mxu0 0
        %3722 = vmatprep.subr.bf16.mxu0 0
        %3723 = vmatpush1.bf16.msra.mxu0 0
        %3724 = vmatprep.subr.bf16.mxu0 0
        %3725 = vmatpush1.bf16.msra.mxu0 0
        %3726 = vmatprep.subr.bf16.mxu0 0
        %3727 = vmatpush1.bf16.msra.mxu0 0
        %3728 = vmatprep.subr.bf16.mxu0 0
        %3729 = vmatpush1.bf16.msra.mxu0 0
        %3730 = vmatprep.subr.bf16.mxu0 0
        %3731 = vmatpush1.bf16.msra.mxu0 0
        %3732 = vmatprep.subr.bf16.mxu0 0
        %3733 = vmatpush1.bf16.msra.mxu0 0
        %3734 = vmatprep.subr.bf16.mxu0 0
        %3735 = vmatpush1.bf16.msra.mxu0 0
        %3736 = vmatprep.subr.bf16.mxu0 0
        %3737 = vmatpush1.bf16.msra.mxu0 0
        %3738 = vmatprep.subr.bf16.mxu0 0
        %3739 = vmatpush1.bf16.msra.mxu0 0
        %3740 = vmatprep.subr.bf16.mxu0 0
        %3741 = vmatpush1.bf16.msra.mxu0 0
        %3742 = vmatprep.mubr.bf16.mxu0 0
        %3743 = vmatmul.mubr.bf16.gmra.mrb[0].mxu0 %v3699
        %v3744 = vpop.f32.mrb[0].mxu0
        %v3745 = vadd.f32 0.0, %v3744
        %v3746 = vpop.f32.mrb[0].mxu0
        %v3747 = vpop.f32.mrb[0].mxu0
        %v3748 = vadd.f32 0.0, %v3747
        %v3749 = vpop.f32.mrb[0].mxu0
        %3750 = vmatprep.mubr.bf16.mxu0 0
        %3751 = vmatmul.mubr.bf16.gmra.mrb[0].mxu0 %v3702
        %v3752 = vpop.f32.mrb[0].mxu0
        %v3753 = vadd.f32 0.0, %v3752
        %v3754 = vpop.f32.mrb[0].mxu0
        %v3755 = vpop.f32.mrb[0].mxu0
        %v3756 = vadd.f32 0.0, %v3755
        %v3757 = vpop.f32.mrb[0].mxu0
        %3758 = vmatprep.mubr.bf16.mxu0 0
        %3759 = vmatmul.mubr.bf16.gmra.mrb[0].mxu0 %v3705
        %v3760 = vpop.f32.mrb[0].mxu0
        %v3761 = vadd.f32 0.0, %v3760
        %v3762 = vpop.f32.mrb[0].mxu0
        %v3763 = vpop.f32.mrb[0].mxu0
        %v3764 = vadd.f32 0.0, %v3763
        %v3765 = vpop.f32.mrb[0].mxu0
        %3766 = vmatprep.mubr.bf16.mxu0 0
        %3767 = vmatmul.mubr.bf16.gmra.mrb[0].mxu0 %v3708
        %v3768 = vpop.f32.mrb[0].mxu0
        %v3769 = vadd.f32 0.0, %v3768
        %v3770 = vpop.f32.mrb[0].mxu0
        %v3771 = vpop.f32.mrb[0].mxu0
        %v3772 = vadd.f32 0.0, %v3771
        %v3773 = vpop.f32.mrb[0].mxu0
        %3774 = vdwg.mxu0
        %v3775 = vpack.c.bf16 %v3748, %v3745
        %v3776 = vpack.c.bf16 %v3756, %v3753
        %v3777 = vpack.c.bf16 %v3764, %v3761
        %v3778 = vpack.c.bf16 %v3772, %v3769
        %v3780 = vsel %vm1575, %v3775, 0
        %v3783 = vsel %vm1575, %v3776, 0
        %v3786 = vsel %vm1575, %v3777, 0
        %v3789 = vsel %vm1575, %v3778, 0
        %v3792 = vsel %vm2946, %v1537, 0
        %3794 = vmatprep.subr.bf16.mxu0 0
        %3795 = vmatpush1.bf16.msra.mxu0 %v3792
        %3796 = vmatprep.subr.bf16.mxu0 0
        %3797 = vmatpush1.bf16.msra.mxu0 0
        %3798 = vmatprep.subr.bf16.mxu0 0
        %3799 = vmatpush1.bf16.msra.mxu0 0
        %3800 = vmatprep.subr.bf16.mxu0 0
        %3801 = vmatpush1.bf16.msra.mxu0 0
        %3802 = vmatprep.subr.bf16.mxu0 0
        %3803 = vmatpush1.bf16.msra.mxu0 0
        %3804 = vmatprep.subr.bf16.mxu0 0
        %3805 = vmatpush1.bf16.msra.mxu0 0
        %3806 = vmatprep.subr.bf16.mxu0 0
        %3807 = vmatpush1.bf16.msra.mxu0 0
        %3808 = vmatprep.subr.bf16.mxu0 0
        %3809 = vmatpush1.bf16.msra.mxu0 0
        %3810 = vmatprep.subr.bf16.mxu0 0
        %3811 = vmatpush1.bf16.msra.mxu0 0
        %3812 = vmatprep.subr.bf16.mxu0 0
        %3813 = vmatpush1.bf16.msra.mxu0 0
        %3814 = vmatprep.subr.bf16.mxu0 0
        %3815 = vmatpush1.bf16.msra.mxu0 0
        %3816 = vmatprep.subr.bf16.mxu0 0
        %3817 = vmatpush1.bf16.msra.mxu0 0
        %3818 = vmatprep.subr.bf16.mxu0 0
        %3819 = vmatpush1.bf16.msra.mxu0 0
        %3820 = vmatprep.subr.bf16.mxu0 0
        %3821 = vmatpush1.bf16.msra.mxu0 0
        %3822 = vmatprep.subr.bf16.mxu0 0
        %3823 = vmatpush1.bf16.msra.mxu0 0
        %3824 = vmatprep.subr.bf16.mxu0 0
        %3825 = vmatpush1.bf16.msra.mxu0 0
        %3826 = vmatprep.mubr.bf16.mxu0 0
        %3827 = vmatmul.mubr.bf16.gmra.mrb[0].mxu0 %v3780
        %v3828 = vpop.f32.mrb[0].mxu0
        %v3829 = vadd.f32 0.0, %v3828
        %v3830 = vpop.f32.mrb[0].mxu0
        %v3831 = vpop.f32.mrb[0].mxu0
        %v3832 = vadd.f32 0.0, %v3831
        %v3833 = vpop.f32.mrb[0].mxu0
        %3834 = vmatprep.mubr.bf16.mxu0 0
        %3835 = vmatmul.mubr.bf16.gmra.mrb[0].mxu0 %v3783
        %v3836 = vpop.f32.mrb[0].mxu0
        %v3837 = vadd.f32 0.0, %v3836
        %v3838 = vpop.f32.mrb[0].mxu0
        %v3839 = vpop.f32.mrb[0].mxu0
        %v3840 = vadd.f32 0.0, %v3839
        %v3841 = vpop.f32.mrb[0].mxu0
        %3842 = vmatprep.mubr.bf16.mxu0 0
        %3843 = vmatmul.mubr.bf16.gmra.mrb[0].mxu0 %v3786
        %v3844 = vpop.f32.mrb[0].mxu0
        %v3845 = vadd.f32 0.0, %v3844
        %v3846 = vpop.f32.mrb[0].mxu0
        %v3847 = vpop.f32.mrb[0].mxu0
        %v3848 = vadd.f32 0.0, %v3847
        %v3849 = vpop.f32.mrb[0].mxu0
        %3850 = vmatprep.mubr.bf16.mxu0 0
        %3851 = vmatmul.mubr.bf16.gmra.mrb[0].mxu0 %v3789
        %v3852 = vpop.f32.mrb[0].mxu0
        %v3853 = vadd.f32 0.0, %v3852
        %v3854 = vpop.f32.mrb[0].mxu0
        %v3855 = vpop.f32.mrb[0].mxu0
        %v3856 = vadd.f32 0.0, %v3855
        %v3857 = vpop.f32.mrb[0].mxu0
        %3858 = vdwg.mxu0
        %v3859 = vadd.f32 %v3065, %v3829
        %v3860 = vadd.f32 %v3068, %v3832
        %v3861 = vadd.f32 %v3073, %v3837
        %v3862 = vadd.f32 %v3076, %v3840
        %v3863 = vadd.f32 %v3081, %v3845
        %v3864 = vadd.f32 %v3084, %v3848
        %v3865 = vadd.f32 %v3089, %v3853
        %v3866 = vadd.f32 %v3092, %v3856
        %3867 = vrot.lane.b32.xlu0 %v1555, 104
        %v3868 = vpop.permute.xlu0 %3867
        %3869 = vrot.lane.b32.xlu0 %v1556, 104
        %v3870 = vpop.permute.xlu0 %3869
        %3871 = vrot.lane.b32.xlu0 %v1557, 104
        %v3872 = vpop.permute.xlu0 %3871
        %3873 = vrot.lane.b32.xlu0 %v1558, 104
        %v3874 = vpop.permute.xlu0 %3873
        %3875 = vrot.lane.b32.xlu0 %v1559, 72
        %v3876 = vpop.permute.xlu0 %3875
        %3877 = vrot.lane.b32.xlu0 %v1560, 72
        %v3878 = vpop.permute.xlu0 %3877
        %3879 = vrot.lane.b32.xlu0 %v1561, 72
        %v3880 = vpop.permute.xlu0 %3879
        %3881 = vrot.lane.b32.xlu0 %v1562, 72
        %v3882 = vpop.permute.xlu0 %3881
        %v3884 = vsel %vm1575, %v3868, 0
        %v3887 = vsel %vm1575, %v3870, 0
        %v3890 = vsel %vm1575, %v3872, 0
        %v3893 = vsel %vm1575, %v3874, 0
        %v3896 = vsel %vm1575, %v3876, 0
        %v3899 = vsel %vm1575, %v3878, 0
        %v3902 = vsel %vm1575, %v3880, 0
        %v3905 = vsel %vm1575, %v3882, 0
        %3907 = vmatprep.subr.bf16.mxu0 0
        %3908 = vmatpush1.bf16.xpose.msra.mxu0 %v3896
        %3909 = vmatprep.subr.bf16.mxu0 0
        %3910 = vmatpush1.bf16.xpose.msra.mxu0 %v3899
        %3911 = vmatprep.subr.bf16.mxu0 0
        %3912 = vmatpush1.bf16.xpose.msra.mxu0 %v3902
        %3913 = vmatprep.subr.bf16.mxu0 0
        %3914 = vmatpush1.bf16.xpose.msra.mxu0 %v3905
        %3915 = vmatprep.subr.bf16.mxu0 0
        %3916 = vmatpush1.bf16.xpose.msra.mxu0 0
        %3917 = vmatprep.subr.bf16.mxu0 0
        %3918 = vmatpush1.bf16.xpose.msra.mxu0 0
        %3919 = vmatprep.subr.bf16.mxu0 0
        %3920 = vmatpush1.bf16.xpose.msra.mxu0 0
        %3921 = vmatprep.subr.bf16.mxu0 0
        %3922 = vmatpush1.bf16.xpose.msra.mxu0 0
        %3923 = vmatprep.subr.bf16.mxu0 0
        %3924 = vmatpush1.bf16.xpose.msra.mxu0 0
        %3925 = vmatprep.subr.bf16.mxu0 0
        %3926 = vmatpush1.bf16.xpose.msra.mxu0 0
        %3927 = vmatprep.subr.bf16.mxu0 0
        %3928 = vmatpush1.bf16.xpose.msra.mxu0 0
        %3929 = vmatprep.subr.bf16.mxu0 0
        %3930 = vmatpush1.bf16.xpose.msra.mxu0 0
        %3931 = vmatprep.subr.bf16.mxu0 0
        %3932 = vmatpush1.bf16.xpose.msra.mxu0 0
        %3933 = vmatprep.subr.bf16.mxu0 0
        %3934 = vmatpush1.bf16.xpose.msra.mxu0 0
        %3935 = vmatprep.subr.bf16.mxu0 0
        %3936 = vmatpush1.bf16.xpose.msra.mxu0 0
        %3937 = vmatprep.subr.bf16.mxu0 0
        %3938 = vmatpush1.bf16.xpose.msra.mxu0 0
        %3939 = vmatprep.mubr.bf16.mxu0 0
        %3940 = vmatmul.mubr.bf16.gmra.mrb[0].mxu0 %v3884
        %v3941 = vpop.f32.mrb[0].mxu0
        %v3942 = vadd.f32 0.0, %v3941
        %v3943 = vpop.f32.mrb[0].mxu0
        %v3944 = vpop.f32.mrb[0].mxu0
        %v3945 = vadd.f32 0.0, %v3944
        %v3946 = vpop.f32.mrb[0].mxu0
        %3947 = vmatprep.mubr.bf16.mxu0 0
        %3948 = vmatmul.mubr.bf16.gmra.mrb[0].mxu0 %v3887
        %v3949 = vpop.f32.mrb[0].mxu0
        %v3950 = vadd.f32 0.0, %v3949
        %v3951 = vpop.f32.mrb[0].mxu0
        %v3952 = vpop.f32.mrb[0].mxu0
        %v3953 = vadd.f32 0.0, %v3952
        %v3954 = vpop.f32.mrb[0].mxu0
        %3955 = vmatprep.mubr.bf16.mxu0 0
        %3956 = vmatmul.mubr.bf16.gmra.mrb[0].mxu0 %v3890
        %v3957 = vpop.f32.mrb[0].mxu0
        %v3958 = vadd.f32 0.0, %v3957
        %v3959 = vpop.f32.mrb[0].mxu0
        %v3960 = vpop.f32.mrb[0].mxu0
        %v3961 = vadd.f32 0.0, %v3960
        %v3962 = vpop.f32.mrb[0].mxu0
        %3963 = vmatprep.mubr.bf16.mxu0 0
        %3964 = vmatmul.mubr.bf16.gmra.mrb[0].mxu0 %v3893
        %v3965 = vpop.f32.mrb[0].mxu0
        %v3966 = vadd.f32 0.0, %v3965
        %v3967 = vpop.f32.mrb[0].mxu0
        %v3968 = vpop.f32.mrb[0].mxu0
        %v3969 = vadd.f32 0.0, %v3968
        %v3970 = vpop.f32.mrb[0].mxu0
        %3971 = vdwg.mxu0
        %3972 = vrot.lane.b32.xlu0 %v1559, 40
        %v3973 = vpop.permute.xlu0 %3972
        %3974 = vrot.lane.b32.xlu0 %v1560, 40
        %v3975 = vpop.permute.xlu0 %3974
        %3976 = vrot.lane.b32.xlu0 %v1561, 40
        %v3977 = vpop.permute.xlu0 %3976
        %3978 = vrot.lane.b32.xlu0 %v1562, 40
        %v3979 = vpop.permute.xlu0 %3978
        %v3982 = vunpack.c.l.b16 %v1545
        %v3983 = vunpack.c.l.b16 %v1546
        %v3984 = vpack.c.b16 %v3983, %v3982
        %v3986 = vsel %vm1575, %v3973, 0
        %v3989 = vsel %vm1575, %v3975, 0
        %v3992 = vsel %vm1575, %v3977, 0
        %v3995 = vsel %vm1575, %v3979, 0
        %v3998 = vsel %vm1575, %v3984, 0
        %4000 = vmatprep.subr.bf16.mxu0 0
        %4001 = vmatpush1.bf16.xpose.msra.mxu0 %v3998
        %4002 = vmatprep.subr.bf16.mxu0 0
        %4003 = vmatpush1.bf16.xpose.msra.mxu0 0
        %4004 = vmatprep.subr.bf16.mxu0 0
        %4005 = vmatpush1.bf16.xpose.msra.mxu0 0
        %4006 = vmatprep.subr.bf16.mxu0 0
        %4007 = vmatpush1.bf16.xpose.msra.mxu0 0
        %4008 = vmatprep.subr.bf16.mxu0 0
        %4009 = vmatpush1.bf16.xpose.msra.mxu0 0
        %4010 = vmatprep.subr.bf16.mxu0 0
        %4011 = vmatpush1.bf16.xpose.msra.mxu0 0
        %4012 = vmatprep.subr.bf16.mxu0 0
        %4013 = vmatpush1.bf16.xpose.msra.mxu0 0
        %4014 = vmatprep.subr.bf16.mxu0 0
        %4015 = vmatpush1.bf16.xpose.msra.mxu0 0
        %4016 = vmatprep.subr.bf16.mxu0 0
        %4017 = vmatpush1.bf16.xpose.msra.mxu0 0
        %4018 = vmatprep.subr.bf16.mxu0 0
        %4019 = vmatpush1.bf16.xpose.msra.mxu0 0
        %4020 = vmatprep.subr.bf16.mxu0 0
        %4021 = vmatpush1.bf16.xpose.msra.mxu0 0
        %4022 = vmatprep.subr.bf16.mxu0 0
        %4023 = vmatpush1.bf16.xpose.msra.mxu0 0
        %4024 = vmatprep.subr.bf16.mxu0 0
        %4025 = vmatpush1.bf16.xpose.msra.mxu0 0
        %4026 = vmatprep.subr.bf16.mxu0 0
        %4027 = vmatpush1.bf16.xpose.msra.mxu0 0
        %4028 = vmatprep.subr.bf16.mxu0 0
        %4029 = vmatpush1.bf16.xpose.msra.mxu0 0
        %4030 = vmatprep.subr.bf16.mxu0 0
        %4031 = vmatpush1.bf16.xpose.msra.mxu0 0
        %4032 = vmatprep.mubr.bf16.mxu0 0
        %4033 = vmatmul.mubr.bf16.gmra.mrb[0].mxu0 %v3986
        %v4034 = vpop.f32.mrb[0].mxu0
        %v4035 = vadd.f32 0.0, %v4034
        %v4036 = vpop.f32.mrb[0].mxu0
        %v4037 = vpop.f32.mrb[0].mxu0
        %v4038 = vadd.f32 0.0, %v4037
        %v4039 = vpop.f32.mrb[0].mxu0
        %4040 = vmatprep.mubr.bf16.mxu0 0
        %4041 = vmatmul.mubr.bf16.gmra.mrb[0].mxu0 %v3989
        %v4042 = vpop.f32.mrb[0].mxu0
        %v4043 = vadd.f32 0.0, %v4042
        %v4044 = vpop.f32.mrb[0].mxu0
        %v4045 = vpop.f32.mrb[0].mxu0
        %v4046 = vadd.f32 0.0, %v4045
        %v4047 = vpop.f32.mrb[0].mxu0
        %4048 = vmatprep.mubr.bf16.mxu0 0
        %4049 = vmatmul.mubr.bf16.gmra.mrb[0].mxu0 %v3992
        %v4050 = vpop.f32.mrb[0].mxu0
        %v4051 = vadd.f32 0.0, %v4050
        %v4052 = vpop.f32.mrb[0].mxu0
        %v4053 = vpop.f32.mrb[0].mxu0
        %v4054 = vadd.f32 0.0, %v4053
        %v4055 = vpop.f32.mrb[0].mxu0
        %4056 = vmatprep.mubr.bf16.mxu0 0
        %4057 = vmatmul.mubr.bf16.gmra.mrb[0].mxu0 %v3995
        %v4058 = vpop.f32.mrb[0].mxu0
        %v4059 = vadd.f32 0.0, %v4058
        %v4060 = vpop.f32.mrb[0].mxu0
        %v4061 = vpop.f32.mrb[0].mxu0
        %v4062 = vadd.f32 0.0, %v4061
        %v4063 = vpop.f32.mrb[0].mxu0
        %4064 = vdwg.mxu0
        %v4065 = vmul.f32 %v4035, 0.5
        %v4066 = vmul.f32 %v4038, 0.5
        %v4067 = vmul.f32 %v4043, 0.5
        %v4068 = vmul.f32 %v4046, 0.5
        %v4069 = vmul.f32 %v4051, 0.5
        %v4070 = vmul.f32 %v4054, 0.5
        %v4071 = vmul.f32 %v4059, 0.5
        %v4072 = vmul.f32 %v4062, 0.5
        %v4073 = vmul.f32 %v4035, 0.044715
        %v4074 = vmul.f32 %v4038, 0.044715
        %v4075 = vmul.f32 %v4043, 0.044715
        %v4076 = vmul.f32 %v4046, 0.044715
        %v4077 = vmul.f32 %v4051, 0.044715
        %v4078 = vmul.f32 %v4054, 0.044715
        %v4079 = vmul.f32 %v4059, 0.044715
        %v4080 = vmul.f32 %v4062, 0.044715
        %v4081 = vmul.f32 %v4073, %v4035
        %v4082 = vmul.f32 %v4074, %v4038
        %v4083 = vmul.f32 %v4075, %v4043
        %v4084 = vmul.f32 %v4076, %v4046
        %v4085 = vmul.f32 %v4077, %v4051
        %v4086 = vmul.f32 %v4078, %v4054
        %v4087 = vmul.f32 %v4079, %v4059
        %v4088 = vmul.f32 %v4080, %v4062
        %v4089 = vmul.f32 %v4081, %v4035
        %v4090 = vmul.f32 %v4082, %v4038
        %v4091 = vmul.f32 %v4083, %v4043
        %v4092 = vmul.f32 %v4084, %v4046
        %v4093 = vmul.f32 %v4085, %v4051
        %v4094 = vmul.f32 %v4086, %v4054
        %v4095 = vmul.f32 %v4087, %v4059
        %v4096 = vmul.f32 %v4088, %v4062
        %v4097 = vadd.f32 %v4035, %v4089
        %v4098 = vadd.f32 %v4038, %v4090
        %v4099 = vadd.f32 %v4043, %v4091
        %v4100 = vadd.f32 %v4046, %v4092
        %v4101 = vadd.f32 %v4051, %v4093
        %v4102 = vadd.f32 %v4054, %v4094
        %v4103 = vadd.f32 %v4059, %v4095
        %v4104 = vadd.f32 %v4062, %v4096
        %v4105 = vmul.f32 %v4097, 0.7978846
        %v4106 = vmul.f32 %v4098, 0.7978846
        %v4107 = vmul.f32 %v4099, 0.7978846
        %v4108 = vmul.f32 %v4100, 0.7978846
        %v4109 = vmul.f32 %v4101, 0.7978846
        %v4110 = vmul.f32 %v4102, 0.7978846
        %v4111 = vmul.f32 %v4103, 0.7978846
        %v4112 = vmul.f32 %v4104, 0.7978846
        %v4113 = vtanh.pop %v4105
        %v4114 = vtanh.pop %v4106
        %v4115 = vtanh.pop %v4107
        %v4116 = vtanh.pop %v4108
        %v4117 = vtanh.pop %v4109
        %v4118 = vtanh.pop %v4110
        %v4119 = vtanh.pop %v4111
        %v4120 = vtanh.pop %v4112
        %v4121 = vadd.f32 %v4113, 1.0
        %v4122 = vadd.f32 %v4114, 1.0
        %v4123 = vadd.f32 %v4115, 1.0
        %v4124 = vadd.f32 %v4116, 1.0
        %v4125 = vadd.f32 %v4117, 1.0
        %v4126 = vadd.f32 %v4118, 1.0
        %v4127 = vadd.f32 %v4119, 1.0
        %v4128 = vadd.f32 %v4120, 1.0
        %v4129 = vmul.f32 %v4065, %v4121
        %v4130 = vmul.f32 %v4066, %v4122
        %v4131 = vmul.f32 %v4067, %v4123
        %v4132 = vmul.f32 %v4068, %v4124
        %v4133 = vmul.f32 %v4069, %v4125
        %v4134 = vmul.f32 %v4070, %v4126
        %v4135 = vmul.f32 %v4071, %v4127
        %v4136 = vmul.f32 %v4072, %v4128
        %v4137 = vsel %vm1830, %v4129, -inf
        %4138 = vmax.xlane.f32.xlu0 %v4137
        %v4139 = vpop.xlane.xlu0 %4138
        %v4140 = vsel %vm1830, %v4130, -inf
        %4141 = vmax.xlane.f32.xlu0 %v4140
        %v4142 = vpop.xlane.xlu0 %4141
        %v4143 = vsel %vm1830, %v4131, -inf
        %4144 = vmax.xlane.f32.xlu0 %v4143
        %v4145 = vpop.xlane.xlu0 %4144
        %v4146 = vsel %vm1830, %v4132, -inf
        %4147 = vmax.xlane.f32.xlu0 %v4146
        %v4148 = vpop.xlane.xlu0 %4147
        %v4149 = vsel %vm1830, %v4133, -inf
        %4150 = vmax.xlane.f32.xlu0 %v4149
        %v4151 = vpop.xlane.xlu0 %4150
        %v4152 = vsel %vm1830, %v4134, -inf
        %4153 = vmax.xlane.f32.xlu0 %v4152
        %v4154 = vpop.xlane.xlu0 %4153
        %v4155 = vsel %vm1830, %v4135, -inf
        %4156 = vmax.xlane.f32.xlu0 %v4155
        %v4157 = vpop.xlane.xlu0 %4156
        %v4158 = vsel %vm1830, %v4136, -inf
        %4159 = vmax.xlane.f32.xlu0 %v4158
        %v4160 = vpop.xlane.xlu0 %4159
        %v4161 = vsub.f32 %v4129, %v4139
        %v4162 = vsub.f32 %v4130, %v4142
        %v4163 = vsub.f32 %v4131, %v4145
        %v4164 = vsub.f32 %v4132, %v4148
        %v4165 = vsub.f32 %v4133, %v4151
        %v4166 = vsub.f32 %v4134, %v4154
        %v4167 = vsub.f32 %v4135, %v4157
        %v4168 = vsub.f32 %v4136, %v4160
        %v4169 = vmul.f32 %v4161, 1.442695
        %v4170 = vpow.pop %v4169
        %v4171 = vmul.f32 %v4162, 1.442695
        %v4172 = vpow.pop %v4171
        %v4173 = vmul.f32 %v4163, 1.442695
        %v4174 = vpow.pop %v4173
        %v4175 = vmul.f32 %v4164, 1.442695
        %v4176 = vpow.pop %v4175
        %v4177 = vmul.f32 %v4165, 1.442695
        %v4178 = vpow.pop %v4177
        %v4179 = vmul.f32 %v4166, 1.442695
        %v4180 = vpow.pop %v4179
        %v4181 = vmul.f32 %v4167, 1.442695
        %v4182 = vpow.pop %v4181
        %v4183 = vmul.f32 %v4168, 1.442695
        %v4184 = vpow.pop %v4183
        %v4185 = vsel %vm1830, %v4170, 0.0
        %4186 = vadd.xlane.f32.xlu0 %v4185
        %v4187 = vpop.xlane.xlu0 %4186
        %v4188 = vsel %vm1830, %v4172, 0.0
        %4189 = vadd.xlane.f32.xlu0 %v4188
        %v4190 = vpop.xlane.xlu0 %4189
        %v4191 = vsel %vm1830, %v4174, 0.0
        %4192 = vadd.xlane.f32.xlu0 %v4191
        %v4193 = vpop.xlane.xlu0 %4192
        %v4194 = vsel %vm1830, %v4176, 0.0
        %4195 = vadd.xlane.f32.xlu0 %v4194
        %v4196 = vpop.xlane.xlu0 %4195
        %v4197 = vsel %vm1830, %v4178, 0.0
        %4198 = vadd.xlane.f32.xlu0 %v4197
        %v4199 = vpop.xlane.xlu0 %4198
        %v4200 = vsel %vm1830, %v4180, 0.0
        %4201 = vadd.xlane.f32.xlu0 %v4200
        %v4202 = vpop.xlane.xlu0 %4201
        %v4203 = vsel %vm1830, %v4182, 0.0
        %4204 = vadd.xlane.f32.xlu0 %v4203
        %v4205 = vpop.xlane.xlu0 %4204
        %v4206 = vsel %vm1830, %v4184, 0.0
        %4207 = vadd.xlane.f32.xlu0 %v4206
        %v4208 = vpop.xlane.xlu0 %4207
        %v4209 = vrcp.pop %v4187
        %v4210 = vrcp.pop %v4190
        %v4211 = vrcp.pop %v4193
        %v4212 = vrcp.pop %v4196
        %v4213 = vrcp.pop %v4199
        %v4214 = vrcp.pop %v4202
        %v4215 = vrcp.pop %v4205
        %v4216 = vrcp.pop %v4208
        %v4217 = vmul.f32 %v4170, %v4209
        %v4218 = vmul.f32 %v4172, %v4210
        %v4219 = vmul.f32 %v4174, %v4211
        %v4220 = vmul.f32 %v4176, %v4212
        %v4221 = vmul.f32 %v4178, %v4213
        %v4222 = vmul.f32 %v4180, %v4214
        %v4223 = vmul.f32 %v4182, %v4215
        %v4224 = vmul.f32 %v4184, %v4216
        %v4225 = vpack.c.bf16 %v4218, %v4217
        %v4226 = vpack.c.bf16 %v4220, %v4219
        %v4227 = vpack.c.bf16 %v4222, %v4221
        %v4228 = vpack.c.bf16 %v4224, %v4223
        %v4230 = vsel %vm1830, %v4225, 0
        %v4233 = vsel %vm1830, %v4226, 0
        %v4236 = vsel %vm1830, %v4227, 0
        %v4239 = vsel %vm1830, %v4228, 0
        %4241 = vmatprep.subr.bf16.mxu0 0
        %4242 = vmatpush1.bf16.xpose.msra.mxu0 %v4230
        %4243 = vmatprep.subr.bf16.mxu0 0
        %4244 = vmatpush1.bf16.xpose.msra.mxu0 %v4233
        %4245 = vmatprep.subr.bf16.mxu0 0
        %4246 = vmatpush1.bf16.xpose.msra.mxu0 %v4236
        %4247 = vmatprep.subr.bf16.mxu0 0
        %4248 = vmatpush1.bf16.xpose.msra.mxu0 %v4239
        %4249 = vmatprep.subr.bf16.mxu0 0
        %4250 = vmatpush1.bf16.xpose.msra.mxu0 0
        %4251 = vmatprep.subr.bf16.mxu0 0
        %4252 = vmatpush1.bf16.xpose.msra.mxu0 0
        %4253 = vmatprep.subr.bf16.mxu0 0
        %4254 = vmatpush1.bf16.xpose.msra.mxu0 0
        %4255 = vmatprep.subr.bf16.mxu0 0
        %4256 = vmatpush1.bf16.xpose.msra.mxu0 0
        %4257 = vmatprep.subr.bf16.mxu0 0
        %4258 = vmatpush1.bf16.xpose.msra.mxu0 0
        %4259 = vmatprep.subr.bf16.mxu0 0
        %4260 = vmatpush1.bf16.xpose.msra.mxu0 0
        %4261 = vmatprep.subr.bf16.mxu0 0
        %4262 = vmatpush1.bf16.xpose.msra.mxu0 0
        %4263 = vmatprep.subr.bf16.mxu0 0
        %4264 = vmatpush1.bf16.xpose.msra.mxu0 0
        %4265 = vmatprep.subr.bf16.mxu0 0
        %4266 = vmatpush1.bf16.xpose.msra.mxu0 0
        %4267 = vmatprep.subr.bf16.mxu0 0
        %4268 = vmatpush1.bf16.xpose.msra.mxu0 0
        %4269 = vmatprep.subr.bf16.mxu0 0
        %4270 = vmatpush1.bf16.xpose.msra.mxu0 0
        %4271 = vmatprep.subr.bf16.mxu0 0
        %4272 = vmatpush1.bf16.xpose.msra.mxu0 0
        %4273 = vmatprep.mubr.bf16.mxu0 0
        %4274 = vmatmul.mubr.bf16.gmra.mrb[0].mxu0 %v4230
        %v4275 = vpop.f32.mrb[0].mxu0
        %v4276 = vadd.f32 0.0, %v4275
        %v4277 = vpop.f32.mrb[0].mxu0
        %v4278 = vpop.f32.mrb[0].mxu0
        %v4279 = vadd.f32 0.0, %v4278
        %v4280 = vpop.f32.mrb[0].mxu0
        %4281 = vmatprep.mubr.bf16.mxu0 0
        %4282 = vmatmul.mubr.bf16.gmra.mrb[0].mxu0 %v4233
        %v4283 = vpop.f32.mrb[0].mxu0
        %v4284 = vadd.f32 0.0, %v4283
        %v4285 = vpop.f32.mrb[0].mxu0
        %v4286 = vpop.f32.mrb[0].mxu0
        %v4287 = vadd.f32 0.0, %v4286
        %v4288 = vpop.f32.mrb[0].mxu0
        %4289 = vmatprep.mubr.bf16.mxu0 0
        %4290 = vmatmul.mubr.bf16.gmra.mrb[0].mxu0 %v4236
        %v4291 = vpop.f32.mrb[0].mxu0
        %v4292 = vadd.f32 0.0, %v4291
        %v4293 = vpop.f32.mrb[0].mxu0
        %v4294 = vpop.f32.mrb[0].mxu0
        %v4295 = vadd.f32 0.0, %v4294
        %v4296 = vpop.f32.mrb[0].mxu0
        %4297 = vmatprep.mubr.bf16.mxu0 0
        %4298 = vmatmul.mubr.bf16.gmra.mrb[0].mxu0 %v4239
        %v4299 = vpop.f32.mrb[0].mxu0
        %v4300 = vadd.f32 0.0, %v4299
        %v4301 = vpop.f32.mrb[0].mxu0
        %v4302 = vpop.f32.mrb[0].mxu0
        %v4303 = vadd.f32 0.0, %v4302
        %v4304 = vpop.f32.mrb[0].mxu0
        %4305 = vdwg.mxu0
        %v4306 = vmul.f32 %v3942, %v4276
        %v4307 = vmul.f32 %v3945, %v4279
        %v4308 = vmul.f32 %v3950, %v4284
        %v4309 = vmul.f32 %v3953, %v4287
        %v4310 = vmul.f32 %v3958, %v4292
        %v4311 = vmul.f32 %v3961, %v4295
        %v4312 = vmul.f32 %v3966, %v4300
        %v4313 = vmul.f32 %v3969, %v4303
        %v4314 = vsel %vm2008, %v4306, -inf
        %4315 = vmax.xlane.f32.xlu0 %v4314
        %v4316 = vpop.xlane.xlu0 %4315
        %v4317 = vsel %vm2008, %v4307, -inf
        %4318 = vmax.xlane.f32.xlu0 %v4317
        %v4319 = vpop.xlane.xlu0 %4318
        %v4320 = vsel %vm2008, %v4308, -inf
        %4321 = vmax.xlane.f32.xlu0 %v4320
        %v4322 = vpop.xlane.xlu0 %4321
        %v4323 = vsel %vm2008, %v4309, -inf
        %4324 = vmax.xlane.f32.xlu0 %v4323
        %v4325 = vpop.xlane.xlu0 %4324
        %v4326 = vsel %vm2008, %v4310, -inf
        %4327 = vmax.xlane.f32.xlu0 %v4326
        %v4328 = vpop.xlane.xlu0 %4327
        %v4329 = vsel %vm2008, %v4311, -inf
        %4330 = vmax.xlane.f32.xlu0 %v4329
        %v4331 = vpop.xlane.xlu0 %4330
        %v4332 = vsel %vm2008, %v4312, -inf
        %4333 = vmax.xlane.f32.xlu0 %v4332
        %v4334 = vpop.xlane.xlu0 %4333
        %v4335 = vsel %vm2008, %v4313, -inf
        %4336 = vmax.xlane.f32.xlu0 %v4335
        %v4337 = vpop.xlane.xlu0 %4336
        %v4338 = vsub.f32 %v4306, %v4316
        %v4339 = vsub.f32 %v4307, %v4319
        %v4340 = vsub.f32 %v4308, %v4322
        %v4341 = vsub.f32 %v4309, %v4325
        %v4342 = vsub.f32 %v4310, %v4328
        %v4343 = vsub.f32 %v4311, %v4331
        %v4344 = vsub.f32 %v4312, %v4334
        %v4345 = vsub.f32 %v4313, %v4337
        %v4346 = vmul.f32 %v4338, 1.442695
        %v4347 = vpow.pop %v4346
        %v4348 = vmul.f32 %v4339, 1.442695
        %v4349 = vpow.pop %v4348
        %v4350 = vmul.f32 %v4340, 1.442695
        %v4351 = vpow.pop %v4350
        %v4352 = vmul.f32 %v4341, 1.442695
        %v4353 = vpow.pop %v4352
        %v4354 = vmul.f32 %v4342, 1.442695
        %v4355 = vpow.pop %v4354
        %v4356 = vmul.f32 %v4343, 1.442695
        %v4357 = vpow.pop %v4356
        %v4358 = vmul.f32 %v4344, 1.442695
        %v4359 = vpow.pop %v4358
        %v4360 = vmul.f32 %v4345, 1.442695
        %v4361 = vpow.pop %v4360
        %v4362 = vsel %vm2008, %v4347, 0.0
        %4363 = vadd.xlane.f32.xlu0 %v4362
        %v4364 = vpop.xlane.xlu0 %4363
        %v4365 = vsel %vm2008, %v4349, 0.0
        %4366 = vadd.xlane.f32.xlu0 %v4365
        %v4367 = vpop.xlane.xlu0 %4366
        %v4368 = vsel %vm2008, %v4351, 0.0
        %4369 = vadd.xlane.f32.xlu0 %v4368
        %v4370 = vpop.xlane.xlu0 %4369
        %v4371 = vsel %vm2008, %v4353, 0.0
        %4372 = vadd.xlane.f32.xlu0 %v4371
        %v4373 = vpop.xlane.xlu0 %4372
        %v4374 = vsel %vm2008, %v4355, 0.0
        %4375 = vadd.xlane.f32.xlu0 %v4374
        %v4376 = vpop.xlane.xlu0 %4375
        %v4377 = vsel %vm2008, %v4357, 0.0
        %4378 = vadd.xlane.f32.xlu0 %v4377
        %v4379 = vpop.xlane.xlu0 %4378
        %v4380 = vsel %vm2008, %v4359, 0.0
        %4381 = vadd.xlane.f32.xlu0 %v4380
        %v4382 = vpop.xlane.xlu0 %4381
        %v4383 = vsel %vm2008, %v4361, 0.0
        %4384 = vadd.xlane.f32.xlu0 %v4383
        %v4385 = vpop.xlane.xlu0 %4384
        %v4386 = vrcp.pop %v4364
        %v4387 = vrcp.pop %v4367
        %v4388 = vrcp.pop %v4370
        %v4389 = vrcp.pop %v4373
        %v4390 = vrcp.pop %v4376
        %v4391 = vrcp.pop %v4379
        %v4392 = vrcp.pop %v4382
        %v4393 = vrcp.pop %v4385
        %v4394 = vmul.f32 %v4347, %v4386
        %v4395 = vmul.f32 %v4349, %v4387
        %v4396 = vmul.f32 %v4351, %v4388
        %v4397 = vmul.f32 %v4353, %v4389
        %v4398 = vmul.f32 %v4355, %v4390
        %v4399 = vmul.f32 %v4357, %v4391
        %v4400 = vmul.f32 %v4359, %v4392
        %v4401 = vmul.f32 %v4361, %v4393
        %s4402 = sadd.s32 %s2097, 3
        %s4403 = sld [smem:[#allocation8 + %s4402]]
        %s4404 = ssub.f32 1.0, %s4403
        %v4405 = vstv %s4404
        %v4406 = vmul.f32 %v4405, %v4394
        %v4407 = vmul.f32 %v4405, %v4395
        %v4408 = vmul.f32 %v4405, %v4396
        %v4409 = vmul.f32 %v4405, %v4397
        %v4410 = vmul.f32 %v4405, %v4398
        %v4411 = vmul.f32 %v4405, %v4399
        %v4412 = vmul.f32 %v4405, %v4400
        %v4413 = vmul.f32 %v4405, %v4401
        %v4414 = vstv %s4403
        %v4415 = vmul.f32 %v4414, %v4276
        %v4416 = vmul.f32 %v4414, %v4279
        %v4417 = vmul.f32 %v4414, %v4284
        %v4418 = vmul.f32 %v4414, %v4287
        %v4419 = vmul.f32 %v4414, %v4292
        %v4420 = vmul.f32 %v4414, %v4295
        %v4421 = vmul.f32 %v4414, %v4300
        %v4422 = vmul.f32 %v4414, %v4303
        %v4423 = vadd.f32 %v4406, %v4415
        %v4424 = vadd.f32 %v4407, %v4416
        %v4425 = vadd.f32 %v4408, %v4417
        %v4426 = vadd.f32 %v4409, %v4418
        %v4427 = vadd.f32 %v4410, %v4419
        %v4428 = vadd.f32 %v4411, %v4420
        %v4429 = vadd.f32 %v4412, %v4421
        %v4430 = vadd.f32 %v4413, %v4422
        %v4431 = vsel %vm2008, %v4423, 0.0
        %v4432 = vsel %vm2008, %v4424, 0.0
        %v4433 = vadd.f32 %v4431, %v4432
        %v4434 = vsel %vm2008, %v4425, 0.0
        %v4435 = vadd.f32 %v4433, %v4434
        %v4436 = vsel %vm2008, %v4426, 0.0
        %v4437 = vadd.f32 %v4435, %v4436
        %v4438 = vsel %vm2008, %v4427, 0.0
        %v4439 = vadd.f32 %v4437, %v4438
        %v4440 = vsel %vm2008, %v4428, 0.0
        %v4441 = vadd.f32 %v4439, %v4440
        %v4442 = vsel %vm2008, %v4429, 0.0
        %v4443 = vadd.f32 %v4441, %v4442
        %v4444 = vsel %vm2008, %v4430, 0.0
        %v4445 = vadd.f32 %v4443, %v4444
        %v4446 = vrot.slane %v4445, 4
        %v4447 = vadd.f32 %v4445, %v4446
        %v4448 = vrot.slane %v4447, 2
        %v4449 = vadd.f32 %v4447, %v4448
        %v4450 = vrot.slane %v4449, 1
        %v4451 = vadd.f32 %v4449, %v4450
        %v4452 = vadd.f32 %v4451, 1e-08
        %v4453 = vrcp.pop %v4452
        %v4454 = vmul.f32 %v4423, %v4453
        %v4455 = vmul.f32 %v4424, %v4453
        %v4456 = vmul.f32 %v4425, %v4453
        %v4457 = vmul.f32 %v4426, %v4453
        %v4458 = vmul.f32 %v4427, %v4453
        %v4459 = vmul.f32 %v4428, %v4453
        %v4460 = vmul.f32 %v4429, %v4453
        %v4461 = vmul.f32 %v4430, %v4453
        %v4462 = vpack.c.bf16 %v4455, %v4454
        %v4463 = vpack.c.bf16 %v4457, %v4456
        %v4464 = vpack.c.bf16 %v4459, %v4458
        %v4465 = vpack.c.bf16 %v4461, %v4460
        %v4471 = vsel %vm2008, %v4462, 0
        %v4474 = vsel %vm2008, %v4463, 0
        %v4477 = vsel %vm2008, %v4464, 0
        %v4480 = vsel %vm2008, %v4465, 0
        %4482 = vmatprep.subr.bf16.mxu0 0
        %4483 = vmatpush1.bf16.msra.mxu0 %v3973
        %4484 = vmatprep.subr.bf16.mxu0 0
        %4485 = vmatpush1.bf16.msra.mxu0 %v3975
        %4486 = vmatprep.subr.bf16.mxu0 0
        %4487 = vmatpush1.bf16.msra.mxu0 %v3977
        %4488 = vmatprep.subr.bf16.mxu0 0
        %4489 = vmatpush1.bf16.msra.mxu0 %v3979
        %4490 = vmatprep.subr.bf16.mxu0 0
        %4491 = vmatpush1.bf16.msra.mxu0 0
        %4492 = vmatprep.subr.bf16.mxu0 0
        %4493 = vmatpush1.bf16.msra.mxu0 0
        %4494 = vmatprep.subr.bf16.mxu0 0
        %4495 = vmatpush1.bf16.msra.mxu0 0
        %4496 = vmatprep.subr.bf16.mxu0 0
        %4497 = vmatpush1.bf16.msra.mxu0 0
        %4498 = vmatprep.subr.bf16.mxu0 0
        %4499 = vmatpush1.bf16.msra.mxu0 0
        %4500 = vmatprep.subr.bf16.mxu0 0
        %4501 = vmatpush1.bf16.msra.mxu0 0
        %4502 = vmatprep.subr.bf16.mxu0 0
        %4503 = vmatpush1.bf16.msra.mxu0 0
        %4504 = vmatprep.subr.bf16.mxu0 0
        %4505 = vmatpush1.bf16.msra.mxu0 0
        %4506 = vmatprep.subr.bf16.mxu0 0
        %4507 = vmatpush1.bf16.msra.mxu0 0
        %4508 = vmatprep.subr.bf16.mxu0 0
        %4509 = vmatpush1.bf16.msra.mxu0 0
        %4510 = vmatprep.subr.bf16.mxu0 0
        %4511 = vmatpush1.bf16.msra.mxu0 0
        %4512 = vmatprep.subr.bf16.mxu0 0
        %4513 = vmatpush1.bf16.msra.mxu0 0
        %4514 = vmatprep.mubr.bf16.mxu0 0
        %4515 = vmatmul.mubr.bf16.gmra.mrb[0].mxu0 %v4471
        %v4516 = vpop.f32.mrb[0].mxu0
        %v4517 = vadd.f32 0.0, %v4516
        %v4518 = vpop.f32.mrb[0].mxu0
        %v4519 = vpop.f32.mrb[0].mxu0
        %v4520 = vadd.f32 0.0, %v4519
        %v4521 = vpop.f32.mrb[0].mxu0
        %4522 = vmatprep.mubr.bf16.mxu0 0
        %4523 = vmatmul.mubr.bf16.gmra.mrb[0].mxu0 %v4474
        %v4524 = vpop.f32.mrb[0].mxu0
        %v4525 = vadd.f32 0.0, %v4524
        %v4526 = vpop.f32.mrb[0].mxu0
        %v4527 = vpop.f32.mrb[0].mxu0
        %v4528 = vadd.f32 0.0, %v4527
        %v4529 = vpop.f32.mrb[0].mxu0
        %4530 = vmatprep.mubr.bf16.mxu0 0
        %4531 = vmatmul.mubr.bf16.gmra.mrb[0].mxu0 %v4477
        %v4532 = vpop.f32.mrb[0].mxu0
        %v4533 = vadd.f32 0.0, %v4532
        %v4534 = vpop.f32.mrb[0].mxu0
        %v4535 = vpop.f32.mrb[0].mxu0
        %v4536 = vadd.f32 0.0, %v4535
        %v4537 = vpop.f32.mrb[0].mxu0
        %4538 = vmatprep.mubr.bf16.mxu0 0
        %4539 = vmatmul.mubr.bf16.gmra.mrb[0].mxu0 %v4480
        %v4540 = vpop.f32.mrb[0].mxu0
        %v4541 = vadd.f32 0.0, %v4540
        %v4542 = vpop.f32.mrb[0].mxu0
        %v4543 = vpop.f32.mrb[0].mxu0
        %v4544 = vadd.f32 0.0, %v4543
        %v4545 = vpop.f32.mrb[0].mxu0
        %4546 = vdwg.mxu0
        %v4547 = vpack.c.bf16 %v4520, %v4517
        %v4548 = vpack.c.bf16 %v4528, %v4525
        %v4549 = vpack.c.bf16 %v4536, %v4533
        %v4550 = vpack.c.bf16 %v4544, %v4541
        %v4552 = vsel %vm1575, %v4547, 0
        %v4555 = vsel %vm1575, %v4548, 0
        %v4558 = vsel %vm1575, %v4549, 0
        %v4561 = vsel %vm1575, %v4550, 0
        %v4564 = vsel %vm2946, %v1538, 0
        %4566 = vmatprep.subr.bf16.mxu0 0
        %4567 = vmatpush1.bf16.msra.mxu0 %v4564
        %4568 = vmatprep.subr.bf16.mxu0 0
        %4569 = vmatpush1.bf16.msra.mxu0 0
        %4570 = vmatprep.subr.bf16.mxu0 0
        %4571 = vmatpush1.bf16.msra.mxu0 0
        %4572 = vmatprep.subr.bf16.mxu0 0
        %4573 = vmatpush1.bf16.msra.mxu0 0
        %4574 = vmatprep.subr.bf16.mxu0 0
        %4575 = vmatpush1.bf16.msra.mxu0 0
        %4576 = vmatprep.subr.bf16.mxu0 0
        %4577 = vmatpush1.bf16.msra.mxu0 0
        %4578 = vmatprep.subr.bf16.mxu0 0
        %4579 = vmatpush1.bf16.msra.mxu0 0
        %4580 = vmatprep.subr.bf16.mxu0 0
        %4581 = vmatpush1.bf16.msra.mxu0 0
        %4582 = vmatprep.subr.bf16.mxu0 0
        %4583 = vmatpush1.bf16.msra.mxu0 0
        %4584 = vmatprep.subr.bf16.mxu0 0
        %4585 = vmatpush1.bf16.msra.mxu0 0
        %4586 = vmatprep.subr.bf16.mxu0 0
        %4587 = vmatpush1.bf16.msra.mxu0 0
        %4588 = vmatprep.subr.bf16.mxu0 0
        %4589 = vmatpush1.bf16.msra.mxu0 0
        %4590 = vmatprep.subr.bf16.mxu0 0
        %4591 = vmatpush1.bf16.msra.mxu0 0
        %4592 = vmatprep.subr.bf16.mxu0 0
        %4593 = vmatpush1.bf16.msra.mxu0 0
        %4594 = vmatprep.subr.bf16.mxu0 0
        %4595 = vmatpush1.bf16.msra.mxu0 0
        %4596 = vmatprep.subr.bf16.mxu0 0
        %4597 = vmatpush1.bf16.msra.mxu0 0
        %4598 = vmatprep.mubr.bf16.mxu0 0
        %4599 = vmatmul.mubr.bf16.gmra.mrb[0].mxu0 %v4552
        %v4600 = vpop.f32.mrb[0].mxu0
        %v4601 = vadd.f32 0.0, %v4600
        %v4602 = vpop.f32.mrb[0].mxu0
        %v4603 = vpop.f32.mrb[0].mxu0
        %v4604 = vadd.f32 0.0, %v4603
        %v4605 = vpop.f32.mrb[0].mxu0
        %4606 = vmatprep.mubr.bf16.mxu0 0
        %4607 = vmatmul.mubr.bf16.gmra.mrb[0].mxu0 %v4555
        %v4608 = vpop.f32.mrb[0].mxu0
        %v4609 = vadd.f32 0.0, %v4608
        %v4610 = vpop.f32.mrb[0].mxu0
        %v4611 = vpop.f32.mrb[0].mxu0
        %v4612 = vadd.f32 0.0, %v4611
        %v4613 = vpop.f32.mrb[0].mxu0
        %4614 = vmatprep.mubr.bf16.mxu0 0
        %4615 = vmatmul.mubr.bf16.gmra.mrb[0].mxu0 %v4558
        %v4616 = vpop.f32.mrb[0].mxu0
        %v4617 = vadd.f32 0.0, %v4616
        %v4618 = vpop.f32.mrb[0].mxu0
        %v4619 = vpop.f32.mrb[0].mxu0
        %v4620 = vadd.f32 0.0, %v4619
        %v4621 = vpop.f32.mrb[0].mxu0
        %4622 = vmatprep.mubr.bf16.mxu0 0
        %4623 = vmatmul.mubr.bf16.gmra.mrb[0].mxu0 %v4561
        %v4624 = vpop.f32.mrb[0].mxu0
        %v4625 = vadd.f32 0.0, %v4624
        %v4626 = vpop.f32.mrb[0].mxu0
        %v4627 = vpop.f32.mrb[0].mxu0
        %v4628 = vadd.f32 0.0, %v4627
        %v4629 = vpop.f32.mrb[0].mxu0
        %4630 = vdwg.mxu0
        %v4631 = vadd.f32 %v3859, %v4601
        %v4632 = vadd.f32 %v3860, %v4604
        %v4633 = vadd.f32 %v3861, %v4609
        %v4634 = vadd.f32 %v3862, %v4612
        %v4635 = vadd.f32 %v3863, %v4617
        %v4636 = vadd.f32 %v3864, %v4620
        %v4637 = vadd.f32 %v3865, %v4625
        %v4638 = vadd.f32 %v3866, %v4628
        %4639 = vst.msk [vmem:[#allocation3] sm:$0xff] %vm1129, %v4631
        %4640 = vst.msk [vmem:[#allocation3 + $0x8] sm:$0xff] %vm1129, %v4632
        %4641 = vst.msk [vmem:[#allocation3 + $0x10] sm:$0xff] %vm1129, %v4633
        %4642 = vst.msk [vmem:[#allocation3 + $0x18] sm:$0xff] %vm1129, %v4634
        %4643 = vst.msk [vmem:[#allocation3 + $0x20] sm:$0xff] %vm1129, %v4635
        %4644 = vst.msk [vmem:[#allocation3 + $0x28] sm:$0xff] %vm1129, %v4636
        %4645 = vst.msk [vmem:[#allocation3 + $0x30] sm:$0xff] %vm1129, %v4637
        %4646 = vst.msk [vmem:[#allocation3 + $0x38] sm:$0xff] %vm1129, %v4638
        %v4647 = vmul.f32 %v1505, 0.35355338
        %v4648 = vmul.f32 %v1508, 0.35355338
        %v4649 = vmul.f32 %v1513, 0.35355338
        %v4650 = vmul.f32 %v1516, 0.35355338
        %v4651 = vmul.f32 %v1521, 0.35355338
        %v4652 = vmul.f32 %v1524, 0.35355338
        %v4653 = vmul.f32 %v1529, 0.35355338
        %v4654 = vmul.f32 %v1532, 0.35355338
        %v4655 = vpack.c.bf16 %v4648, %v4647
        %v4656 = vpack.c.bf16 %v4650, %v4649
        %v4657 = vpack.c.bf16 %v4652, %v4651
        %v4658 = vpack.c.bf16 %v4654, %v4653
        %v4659 = vpack.c.bf16 %v1508, %v1505
        %v4660 = vpack.c.bf16 %v1516, %v1513
        %v4661 = vpack.c.bf16 %v1524, %v1521
        %v4662 = vpack.c.bf16 %v1532, %v1529
        %4667 = vrot.lane.b32.xlu0 %v4659, 96
        %v4668 = vpop.permute.xlu0 %4667
        %4669 = vrot.lane.b32.xlu0 %v4660, 96
        %v4670 = vpop.permute.xlu0 %4669
        %4671 = vrot.lane.b32.xlu0 %v4661, 96
        %v4672 = vpop.permute.xlu0 %4671
        %4673 = vrot.lane.b32.xlu0 %v4662, 96
        %v4674 = vpop.permute.xlu0 %4673
        %v4676 = vsel %vm1575, %v4655, 0
        %v4679 = vsel %vm1575, %v4656, 0
        %v4682 = vsel %vm1575, %v4657, 0
        %v4685 = vsel %vm1575, %v4658, 0
        %v4688 = vsel %vm1575, %v4668, 0
        %v4691 = vsel %vm1575, %v4670, 0
        %v4694 = vsel %vm1575, %v4672, 0
        %v4697 = vsel %vm1575, %v4674, 0
        %4699 = vmatprep.subr.bf16.mxu0 0
        %4700 = vmatpush1.bf16.xpose.msra.mxu0 %v4688
        %4701 = vmatprep.subr.bf16.mxu0 0
        %4702 = vmatpush1.bf16.xpose.msra.mxu0 %v4691
        %4703 = vmatprep.subr.bf16.mxu0 0
        %4704 = vmatpush1.bf16.xpose.msra.mxu0 %v4694
        %4705 = vmatprep.subr.bf16.mxu0 0
        %4706 = vmatpush1.bf16.xpose.msra.mxu0 %v4697
        %4707 = vmatprep.subr.bf16.mxu0 0
        %4708 = vmatpush1.bf16.xpose.msra.mxu0 0
        %4709 = vmatprep.subr.bf16.mxu0 0
        %4710 = vmatpush1.bf16.xpose.msra.mxu0 0
        %4711 = vmatprep.subr.bf16.mxu0 0
        %4712 = vmatpush1.bf16.xpose.msra.mxu0 0
        %4713 = vmatprep.subr.bf16.mxu0 0
        %4714 = vmatpush1.bf16.xpose.msra.mxu0 0
        %4715 = vmatprep.subr.bf16.mxu0 0
        %4716 = vmatpush1.bf16.xpose.msra.mxu0 0
        %4717 = vmatprep.subr.bf16.mxu0 0
        %4718 = vmatpush1.bf16.xpose.msra.mxu0 0
        %4719 = vmatprep.subr.bf16.mxu0 0
        %4720 = vmatpush1.bf16.xpose.msra.mxu0 0
        %4721 = vmatprep.subr.bf16.mxu0 0
        %4722 = vmatpush1.bf16.xpose.msra.mxu0 0
        %4723 = vmatprep.subr.bf16.mxu0 0
        %4724 = vmatpush1.bf16.xpose.msra.mxu0 0
        %4725 = vmatprep.subr.bf16.mxu0 0
        %4726 = vmatpush1.bf16.xpose.msra.mxu0 0
        %4727 = vmatprep.subr.bf16.mxu0 0
        %4728 = vmatpush1.bf16.xpose.msra.mxu0 0
        %4729 = vmatprep.subr.bf16.mxu0 0
        %4730 = vmatpush1.bf16.xpose.msra.mxu0 0
        %4731 = vmatprep.mubr.bf16.mxu0 0
        %4732 = vmatmul.mubr.bf16.gmra.mrb[0].mxu0 %v4676
        %v4733 = vpop.f32.mrb[0].mxu0
        %v4734 = vadd.f32 0.0, %v4733
        %v4735 = vpop.f32.mrb[0].mxu0
        %v4736 = vpop.f32.mrb[0].mxu0
        %v4737 = vadd.f32 0.0, %v4736
        %v4738 = vpop.f32.mrb[0].mxu0
        %4739 = vmatprep.mubr.bf16.mxu0 0
        %4740 = vmatmul.mubr.bf16.gmra.mrb[0].mxu0 %v4679
        %v4741 = vpop.f32.mrb[0].mxu0
        %v4742 = vadd.f32 0.0, %v4741
        %v4743 = vpop.f32.mrb[0].mxu0
        %v4744 = vpop.f32.mrb[0].mxu0
        %v4745 = vadd.f32 0.0, %v4744
        %v4746 = vpop.f32.mrb[0].mxu0
        %4747 = vmatprep.mubr.bf16.mxu0 0
        %4748 = vmatmul.mubr.bf16.gmra.mrb[0].mxu0 %v4682
        %v4749 = vpop.f32.mrb[0].mxu0
        %v4750 = vadd.f32 0.0, %v4749
        %v4751 = vpop.f32.mrb[0].mxu0
        %v4752 = vpop.f32.mrb[0].mxu0
        %v4753 = vadd.f32 0.0, %v4752
        %v4754 = vpop.f32.mrb[0].mxu0
        %4755 = vmatprep.mubr.bf16.mxu0 0
        %4756 = vmatmul.mubr.bf16.gmra.mrb[0].mxu0 %v4685
        %v4757 = vpop.f32.mrb[0].mxu0
        %v4758 = vadd.f32 0.0, %v4757
        %v4759 = vpop.f32.mrb[0].mxu0
        %v4760 = vpop.f32.mrb[0].mxu0
        %v4761 = vadd.f32 0.0, %v4760
        %v4762 = vpop.f32.mrb[0].mxu0
        %4763 = vdwg.mxu0
        %4764 = vrot.lane.b32.xlu0 %v4659, 64
        %v4765 = vpop.permute.xlu0 %4764
        %4766 = vrot.lane.b32.xlu0 %v4660, 64
        %v4767 = vpop.permute.xlu0 %4766
        %4768 = vrot.lane.b32.xlu0 %v4661, 64
        %v4769 = vpop.permute.xlu0 %4768
        %4770 = vrot.lane.b32.xlu0 %v4662, 64
        %v4771 = vpop.permute.xlu0 %4770
        %v4773 = vsel %vm1575, %v4765, 0
        %v4776 = vsel %vm1575, %v4767, 0
        %v4779 = vsel %vm1575, %v4769, 0
        %v4782 = vsel %vm1575, %v4771, 0
        %4784 = vmatprep.subr.bf16.mxu0 0
        %4785 = vmatpush1.bf16.xpose.msra.mxu0 %v1691
        %4786 = vmatprep.subr.bf16.mxu0 0
        %4787 = vmatpush1.bf16.xpose.msra.mxu0 0
        %4788 = vmatprep.subr.bf16.mxu0 0
        %4789 = vmatpush1.bf16.xpose.msra.mxu0 0
        %4790 = vmatprep.subr.bf16.mxu0 0
        %4791 = vmatpush1.bf16.xpose.msra.mxu0 0
        %4792 = vmatprep.subr.bf16.mxu0 0
        %4793 = vmatpush1.bf16.xpose.msra.mxu0 0
        %4794 = vmatprep.subr.bf16.mxu0 0
        %4795 = vmatpush1.bf16.xpose.msra.mxu0 0
        %4796 = vmatprep.subr.bf16.mxu0 0
        %4797 = vmatpush1.bf16.xpose.msra.mxu0 0
        %4798 = vmatprep.subr.bf16.mxu0 0
        %4799 = vmatpush1.bf16.xpose.msra.mxu0 0
        %4800 = vmatprep.subr.bf16.mxu0 0
        %4801 = vmatpush1.bf16.xpose.msra.mxu0 0
        %4802 = vmatprep.subr.bf16.mxu0 0
        %4803 = vmatpush1.bf16.xpose.msra.mxu0 0
        %4804 = vmatprep.subr.bf16.mxu0 0
        %4805 = vmatpush1.bf16.xpose.msra.mxu0 0
        %4806 = vmatprep.subr.bf16.mxu0 0
        %4807 = vmatpush1.bf16.xpose.msra.mxu0 0
        %4808 = vmatprep.subr.bf16.mxu0 0
        %4809 = vmatpush1.bf16.xpose.msra.mxu0 0
        %4810 = vmatprep.subr.bf16.mxu0 0
        %4811 = vmatpush1.bf16.xpose.msra.mxu0 0
        %4812 = vmatprep.subr.bf16.mxu0 0
        %4813 = vmatpush1.bf16.xpose.msra.mxu0 0
        %4814 = vmatprep.subr.bf16.mxu0 0
        %4815 = vmatpush1.bf16.xpose.msra.mxu0 0
        %4816 = vmatprep.mubr.bf16.mxu0 0
        %4817 = vmatmul.mubr.bf16.gmra.mrb[0].mxu0 %v4773
        %v4818 = vpop.f32.mrb[0].mxu0
        %v4819 = vadd.f32 0.0, %v4818
        %v4820 = vpop.f32.mrb[0].mxu0
        %v4821 = vpop.f32.mrb[0].mxu0
        %v4822 = vadd.f32 0.0, %v4821
        %v4823 = vpop.f32.mrb[0].mxu0
        %4824 = vmatprep.mubr.bf16.mxu0 0
        %4825 = vmatmul.mubr.bf16.gmra.mrb[0].mxu0 %v4776
        %v4826 = vpop.f32.mrb[0].mxu0
        %v4827 = vadd.f32 0.0, %v4826
        %v4828 = vpop.f32.mrb[0].mxu0
        %v4829 = vpop.f32.mrb[0].mxu0
        %v4830 = vadd.f32 0.0, %v4829
        %v4831 = vpop.f32.mrb[0].mxu0
        %4832 = vmatprep.mubr.bf16.mxu0 0
        %4833 = vmatmul.mubr.bf16.gmra.mrb[0].mxu0 %v4779
        %v4834 = vpop.f32.mrb[0].mxu0
        %v4835 = vadd.f32 0.0, %v4834
        %v4836 = vpop.f32.mrb[0].mxu0
        %v4837 = vpop.f32.mrb[0].mxu0
        %v4838 = vadd.f32 0.0, %v4837
        %v4839 = vpop.f32.mrb[0].mxu0
        %4840 = vmatprep.mubr.bf16.mxu0 0
        %4841 = vmatmul.mubr.bf16.gmra.mrb[0].mxu0 %v4782
        %v4842 = vpop.f32.mrb[0].mxu0
        %v4843 = vadd.f32 0.0, %v4842
        %v4844 = vpop.f32.mrb[0].mxu0
        %v4845 = vpop.f32.mrb[0].mxu0
        %v4846 = vadd.f32 0.0, %v4845
        %v4847 = vpop.f32.mrb[0].mxu0
        %4848 = vdwg.mxu0
        %v4849 = vmul.f32 %v4819, 0.5
        %v4850 = vmul.f32 %v4822, 0.5
        %v4851 = vmul.f32 %v4827, 0.5
        %v4852 = vmul.f32 %v4830, 0.5
        %v4853 = vmul.f32 %v4835, 0.5
        %v4854 = vmul.f32 %v4838, 0.5
        %v4855 = vmul.f32 %v4843, 0.5
        %v4856 = vmul.f32 %v4846, 0.5
        %v4857 = vmul.f32 %v4819, 0.044715
        %v4858 = vmul.f32 %v4822, 0.044715
        %v4859 = vmul.f32 %v4827, 0.044715
        %v4860 = vmul.f32 %v4830, 0.044715
        %v4861 = vmul.f32 %v4835, 0.044715
        %v4862 = vmul.f32 %v4838, 0.044715
        %v4863 = vmul.f32 %v4843, 0.044715
        %v4864 = vmul.f32 %v4846, 0.044715
        %v4865 = vmul.f32 %v4857, %v4819
        %v4866 = vmul.f32 %v4858, %v4822
        %v4867 = vmul.f32 %v4859, %v4827
        %v4868 = vmul.f32 %v4860, %v4830
        %v4869 = vmul.f32 %v4861, %v4835
        %v4870 = vmul.f32 %v4862, %v4838
        %v4871 = vmul.f32 %v4863, %v4843
        %v4872 = vmul.f32 %v4864, %v4846
        %v4873 = vmul.f32 %v4865, %v4819
        %v4874 = vmul.f32 %v4866, %v4822
        %v4875 = vmul.f32 %v4867, %v4827
        %v4876 = vmul.f32 %v4868, %v4830
        %v4877 = vmul.f32 %v4869, %v4835
        %v4878 = vmul.f32 %v4870, %v4838
        %v4879 = vmul.f32 %v4871, %v4843
        %v4880 = vmul.f32 %v4872, %v4846
        %v4881 = vadd.f32 %v4819, %v4873
        %v4882 = vadd.f32 %v4822, %v4874
        %v4883 = vadd.f32 %v4827, %v4875
        %v4884 = vadd.f32 %v4830, %v4876
        %v4885 = vadd.f32 %v4835, %v4877
        %v4886 = vadd.f32 %v4838, %v4878
        %v4887 = vadd.f32 %v4843, %v4879
        %v4888 = vadd.f32 %v4846, %v4880
        %v4889 = vmul.f32 %v4881, 0.7978846
        %v4890 = vmul.f32 %v4882, 0.7978846
        %v4891 = vmul.f32 %v4883, 0.7978846
        %v4892 = vmul.f32 %v4884, 0.7978846
        %v4893 = vmul.f32 %v4885, 0.7978846
        %v4894 = vmul.f32 %v4886, 0.7978846
        %v4895 = vmul.f32 %v4887, 0.7978846
        %v4896 = vmul.f32 %v4888, 0.7978846
        %v4897 = vtanh.pop %v4889
        %v4898 = vtanh.pop %v4890
        %v4899 = vtanh.pop %v4891
        %v4900 = vtanh.pop %v4892
        %v4901 = vtanh.pop %v4893
        %v4902 = vtanh.pop %v4894
        %v4903 = vtanh.pop %v4895
        %v4904 = vtanh.pop %v4896
        %v4905 = vadd.f32 %v4897, 1.0
        %v4906 = vadd.f32 %v4898, 1.0
        %v4907 = vadd.f32 %v4899, 1.0
        %v4908 = vadd.f32 %v4900, 1.0
        %v4909 = vadd.f32 %v4901, 1.0
        %v4910 = vadd.f32 %v4902, 1.0
        %v4911 = vadd.f32 %v4903, 1.0
        %v4912 = vadd.f32 %v4904, 1.0
        %v4913 = vmul.f32 %v4849, %v4905
        %v4914 = vmul.f32 %v4850, %v4906
        %v4915 = vmul.f32 %v4851, %v4907
        %v4916 = vmul.f32 %v4852, %v4908
        %v4917 = vmul.f32 %v4853, %v4909
        %v4918 = vmul.f32 %v4854, %v4910
        %v4919 = vmul.f32 %v4855, %v4911
        %v4920 = vmul.f32 %v4856, %v4912
        %v4921 = vsel %vm1830, %v4913, -inf
        %4922 = vmax.xlane.f32.xlu0 %v4921
        %v4923 = vpop.xlane.xlu0 %4922
        %v4924 = vsel %vm1830, %v4914, -inf
        %4925 = vmax.xlane.f32.xlu0 %v4924
        %v4926 = vpop.xlane.xlu0 %4925
        %v4927 = vsel %vm1830, %v4915, -inf
        %4928 = vmax.xlane.f32.xlu0 %v4927
        %v4929 = vpop.xlane.xlu0 %4928
        %v4930 = vsel %vm1830, %v4916, -inf
        %4931 = vmax.xlane.f32.xlu0 %v4930
        %v4932 = vpop.xlane.xlu0 %4931
        %v4933 = vsel %vm1830, %v4917, -inf
        %4934 = vmax.xlane.f32.xlu0 %v4933
        %v4935 = vpop.xlane.xlu0 %4934
        %v4936 = vsel %vm1830, %v4918, -inf
        %4937 = vmax.xlane.f32.xlu0 %v4936
        %v4938 = vpop.xlane.xlu0 %4937
        %v4939 = vsel %vm1830, %v4919, -inf
        %4940 = vmax.xlane.f32.xlu0 %v4939
        %v4941 = vpop.xlane.xlu0 %4940
        %v4942 = vsel %vm1830, %v4920, -inf
        %4943 = vmax.xlane.f32.xlu0 %v4942
        %v4944 = vpop.xlane.xlu0 %4943
        %v4945 = vsub.f32 %v4913, %v4923
        %v4946 = vsub.f32 %v4914, %v4926
        %v4947 = vsub.f32 %v4915, %v4929
        %v4948 = vsub.f32 %v4916, %v4932
        %v4949 = vsub.f32 %v4917, %v4935
        %v4950 = vsub.f32 %v4918, %v4938
        %v4951 = vsub.f32 %v4919, %v4941
        %v4952 = vsub.f32 %v4920, %v4944
        %v4953 = vmul.f32 %v4945, 1.442695
        %v4954 = vpow.pop %v4953
        %v4955 = vmul.f32 %v4946, 1.442695
        %v4956 = vpow.pop %v4955
        %v4957 = vmul.f32 %v4947, 1.442695
        %v4958 = vpow.pop %v4957
        %v4959 = vmul.f32 %v4948, 1.442695
        %v4960 = vpow.pop %v4959
        %v4961 = vmul.f32 %v4949, 1.442695
        %v4962 = vpow.pop %v4961
        %v4963 = vmul.f32 %v4950, 1.442695
        %v4964 = vpow.pop %v4963
        %v4965 = vmul.f32 %v4951, 1.442695
        %v4966 = vpow.pop %v4965
        %v4967 = vmul.f32 %v4952, 1.442695
        %v4968 = vpow.pop %v4967
        %v4969 = vsel %vm1830, %v4954, 0.0
        %4970 = vadd.xlane.f32.xlu0 %v4969
        %v4971 = vpop.xlane.xlu0 %4970
        %v4972 = vsel %vm1830, %v4956, 0.0
        %4973 = vadd.xlane.f32.xlu0 %v4972
        %v4974 = vpop.xlane.xlu0 %4973
        %v4975 = vsel %vm1830, %v4958, 0.0
        %4976 = vadd.xlane.f32.xlu0 %v4975
        %v4977 = vpop.xlane.xlu0 %4976
        %v4978 = vsel %vm1830, %v4960, 0.0
        %4979 = vadd.xlane.f32.xlu0 %v4978
        %v4980 = vpop.xlane.xlu0 %4979
        %v4981 = vsel %vm1830, %v4962, 0.0
        %4982 = vadd.xlane.f32.xlu0 %v4981
        %v4983 = vpop.xlane.xlu0 %4982
        %v4984 = vsel %vm1830, %v4964, 0.0
        %4985 = vadd.xlane.f32.xlu0 %v4984
        %v4986 = vpop.xlane.xlu0 %4985
        %v4987 = vsel %vm1830, %v4966, 0.0
        %4988 = vadd.xlane.f32.xlu0 %v4987
        %v4989 = vpop.xlane.xlu0 %4988
        %v4990 = vsel %vm1830, %v4968, 0.0
        %4991 = vadd.xlane.f32.xlu0 %v4990
        %v4992 = vpop.xlane.xlu0 %4991
        %v4993 = vrcp.pop %v4971
        %v4994 = vrcp.pop %v4974
        %v4995 = vrcp.pop %v4977
        %v4996 = vrcp.pop %v4980
        %v4997 = vrcp.pop %v4983
        %v4998 = vrcp.pop %v4986
        %v4999 = vrcp.pop %v4989
        %v5000 = vrcp.pop %v4992
        %v5001 = vmul.f32 %v4954, %v4993
        %v5002 = vmul.f32 %v4956, %v4994
        %v5003 = vmul.f32 %v4958, %v4995
        %v5004 = vmul.f32 %v4960, %v4996
        %v5005 = vmul.f32 %v4962, %v4997
        %v5006 = vmul.f32 %v4964, %v4998
        %v5007 = vmul.f32 %v4966, %v4999
        %v5008 = vmul.f32 %v4968, %v5000
        %v5009 = vpack.c.bf16 %v5002, %v5001
        %v5010 = vpack.c.bf16 %v5004, %v5003
        %v5011 = vpack.c.bf16 %v5006, %v5005
        %v5012 = vpack.c.bf16 %v5008, %v5007
        %v5014 = vsel %vm1830, %v5009, 0
        %v5017 = vsel %vm1830, %v5010, 0
        %v5020 = vsel %vm1830, %v5011, 0
        %v5023 = vsel %vm1830, %v5012, 0
        %5025 = vmatprep.subr.bf16.mxu0 0
        %5026 = vmatpush1.bf16.xpose.msra.mxu0 %v5014
        %5027 = vmatprep.subr.bf16.mxu0 0
        %5028 = vmatpush1.bf16.xpose.msra.mxu0 %v5017
        %5029 = vmatprep.subr.bf16.mxu0 0
        %5030 = vmatpush1.bf16.xpose.msra.mxu0 %v5020
        %5031 = vmatprep.subr.bf16.mxu0 0
        %5032 = vmatpush1.bf16.xpose.msra.mxu0 %v5023
        %5033 = vmatprep.subr.bf16.mxu0 0
        %5034 = vmatpush1.bf16.xpose.msra.mxu0 0
        %5035 = vmatprep.subr.bf16.mxu0 0
        %5036 = vmatpush1.bf16.xpose.msra.mxu0 0
        %5037 = vmatprep.subr.bf16.mxu0 0
        %5038 = vmatpush1.bf16.xpose.msra.mxu0 0
        %5039 = vmatprep.subr.bf16.mxu0 0
        %5040 = vmatpush1.bf16.xpose.msra.mxu0 0
        %5041 = vmatprep.subr.bf16.mxu0 0
        %5042 = vmatpush1.bf16.xpose.msra.mxu0 0
        %5043 = vmatprep.subr.bf16.mxu0 0
        %5044 = vmatpush1.bf16.xpose.msra.mxu0 0
        %5045 = vmatprep.subr.bf16.mxu0 0
        %5046 = vmatpush1.bf16.xpose.msra.mxu0 0
        %5047 = vmatprep.subr.bf16.mxu0 0
        %5048 = vmatpush1.bf16.xpose.msra.mxu0 0
        %5049 = vmatprep.subr.bf16.mxu0 0
        %5050 = vmatpush1.bf16.xpose.msra.mxu0 0
        %5051 = vmatprep.subr.bf16.mxu0 0
        %5052 = vmatpush1.bf16.xpose.msra.mxu0 0
        %5053 = vmatprep.subr.bf16.mxu0 0
        %5054 = vmatpush1.bf16.xpose.msra.mxu0 0
        %5055 = vmatprep.subr.bf16.mxu0 0
        %5056 = vmatpush1.bf16.xpose.msra.mxu0 0
        %5057 = vmatprep.mubr.bf16.mxu0 0
        %5058 = vmatmul.mubr.bf16.gmra.mrb[0].mxu0 %v5014
        %v5059 = vpop.f32.mrb[0].mxu0
        %v5060 = vadd.f32 0.0, %v5059
        %v5061 = vpop.f32.mrb[0].mxu0
        %v5062 = vpop.f32.mrb[0].mxu0
        %v5063 = vadd.f32 0.0, %v5062
        %v5064 = vpop.f32.mrb[0].mxu0
        %5065 = vmatprep.mubr.bf16.mxu0 0
        %5066 = vmatmul.mubr.bf16.gmra.mrb[0].mxu0 %v5017
        %v5067 = vpop.f32.mrb[0].mxu0
        %v5068 = vadd.f32 0.0, %v5067
        %v5069 = vpop.f32.mrb[0].mxu0
        %v5070 = vpop.f32.mrb[0].mxu0
        %v5071 = vadd.f32 0.0, %v5070
        %v5072 = vpop.f32.mrb[0].mxu0
        %5073 = vmatprep.mubr.bf16.mxu0 0
        %5074 = vmatmul.mubr.bf16.gmra.mrb[0].mxu0 %v5020
        %v5075 = vpop.f32.mrb[0].mxu0
        %v5076 = vadd.f32 0.0, %v5075
        %v5077 = vpop.f32.mrb[0].mxu0
        %v5078 = vpop.f32.mrb[0].mxu0
        %v5079 = vadd.f32 0.0, %v5078
        %v5080 = vpop.f32.mrb[0].mxu0
        %5081 = vmatprep.mubr.bf16.mxu0 0
        %5082 = vmatmul.mubr.bf16.gmra.mrb[0].mxu0 %v5023
        %v5083 = vpop.f32.mrb[0].mxu0
        %v5084 = vadd.f32 0.0, %v5083
        %v5085 = vpop.f32.mrb[0].mxu0
        %v5086 = vpop.f32.mrb[0].mxu0
        %v5087 = vadd.f32 0.0, %v5086
        %v5088 = vpop.f32.mrb[0].mxu0
        %5089 = vdwg.mxu0
        %v5090 = vmul.f32 %v4734, %v5060
        %v5091 = vmul.f32 %v4737, %v5063
        %v5092 = vmul.f32 %v4742, %v5068
        %v5093 = vmul.f32 %v4745, %v5071
        %v5094 = vmul.f32 %v4750, %v5076
        %v5095 = vmul.f32 %v4753, %v5079
        %v5096 = vmul.f32 %v4758, %v5084
        %v5097 = vmul.f32 %v4761, %v5087
        %v5098 = vsel %vm2008, %v5090, -inf
        %5099 = vmax.xlane.f32.xlu0 %v5098
        %v5100 = vpop.xlane.xlu0 %5099
        %v5101 = vsel %vm2008, %v5091, -inf
        %5102 = vmax.xlane.f32.xlu0 %v5101
        %v5103 = vpop.xlane.xlu0 %5102
        %v5104 = vsel %vm2008, %v5092, -inf
        %5105 = vmax.xlane.f32.xlu0 %v5104
        %v5106 = vpop.xlane.xlu0 %5105
        %v5107 = vsel %vm2008, %v5093, -inf
        %5108 = vmax.xlane.f32.xlu0 %v5107
        %v5109 = vpop.xlane.xlu0 %5108
        %v5110 = vsel %vm2008, %v5094, -inf
        %5111 = vmax.xlane.f32.xlu0 %v5110
        %v5112 = vpop.xlane.xlu0 %5111
        %v5113 = vsel %vm2008, %v5095, -inf
        %5114 = vmax.xlane.f32.xlu0 %v5113
        %v5115 = vpop.xlane.xlu0 %5114
        %v5116 = vsel %vm2008, %v5096, -inf
        %5117 = vmax.xlane.f32.xlu0 %v5116
        %v5118 = vpop.xlane.xlu0 %5117
        %v5119 = vsel %vm2008, %v5097, -inf
        %5120 = vmax.xlane.f32.xlu0 %v5119
        %v5121 = vpop.xlane.xlu0 %5120
        %v5122 = vsub.f32 %v5090, %v5100
        %v5123 = vsub.f32 %v5091, %v5103
        %v5124 = vsub.f32 %v5092, %v5106
        %v5125 = vsub.f32 %v5093, %v5109
        %v5126 = vsub.f32 %v5094, %v5112
        %v5127 = vsub.f32 %v5095, %v5115
        %v5128 = vsub.f32 %v5096, %v5118
        %v5129 = vsub.f32 %v5097, %v5121
        %v5130 = vmul.f32 %v5122, 1.442695
        %v5131 = vpow.pop %v5130
        %v5132 = vmul.f32 %v5123, 1.442695
        %v5133 = vpow.pop %v5132
        %v5134 = vmul.f32 %v5124, 1.442695
        %v5135 = vpow.pop %v5134
        %v5136 = vmul.f32 %v5125, 1.442695
        %v5137 = vpow.pop %v5136
        %v5138 = vmul.f32 %v5126, 1.442695
        %v5139 = vpow.pop %v5138
        %v5140 = vmul.f32 %v5127, 1.442695
        %v5141 = vpow.pop %v5140
        %v5142 = vmul.f32 %v5128, 1.442695
        %v5143 = vpow.pop %v5142
        %v5144 = vmul.f32 %v5129, 1.442695
        %v5145 = vpow.pop %v5144
        %v5146 = vsel %vm2008, %v5131, 0.0
        %5147 = vadd.xlane.f32.xlu0 %v5146
        %v5148 = vpop.xlane.xlu0 %5147
        %v5149 = vsel %vm2008, %v5133, 0.0
        %5150 = vadd.xlane.f32.xlu0 %v5149
        %v5151 = vpop.xlane.xlu0 %5150
        %v5152 = vsel %vm2008, %v5135, 0.0
        %5153 = vadd.xlane.f32.xlu0 %v5152
        %v5154 = vpop.xlane.xlu0 %5153
        %v5155 = vsel %vm2008, %v5137, 0.0
        %5156 = vadd.xlane.f32.xlu0 %v5155
        %v5157 = vpop.xlane.xlu0 %5156
        %v5158 = vsel %vm2008, %v5139, 0.0
        %5159 = vadd.xlane.f32.xlu0 %v5158
        %v5160 = vpop.xlane.xlu0 %5159
        %v5161 = vsel %vm2008, %v5141, 0.0
        %5162 = vadd.xlane.f32.xlu0 %v5161
        %v5163 = vpop.xlane.xlu0 %5162
        %v5164 = vsel %vm2008, %v5143, 0.0
        %5165 = vadd.xlane.f32.xlu0 %v5164
        %v5166 = vpop.xlane.xlu0 %5165
        %v5167 = vsel %vm2008, %v5145, 0.0
        %5168 = vadd.xlane.f32.xlu0 %v5167
        %v5169 = vpop.xlane.xlu0 %5168
        %v5170 = vrcp.pop %v5148
        %v5171 = vrcp.pop %v5151
        %v5172 = vrcp.pop %v5154
        %v5173 = vrcp.pop %v5157
        %v5174 = vrcp.pop %v5160
        %v5175 = vrcp.pop %v5163
        %v5176 = vrcp.pop %v5166
        %v5177 = vrcp.pop %v5169
        %v5178 = vmul.f32 %v5131, %v5170
        %v5179 = vmul.f32 %v5133, %v5171
        %v5180 = vmul.f32 %v5135, %v5172
        %v5181 = vmul.f32 %v5137, %v5173
        %v5182 = vmul.f32 %v5139, %v5174
        %v5183 = vmul.f32 %v5141, %v5175
        %v5184 = vmul.f32 %v5143, %v5176
        %v5185 = vmul.f32 %v5145, %v5177
        %s5186 = sld [smem:[#allocation8 + %s2097]]
        %s5187 = ssub.f32 1.0, %s5186
        %v5188 = vstv %s5187
        %v5189 = vmul.f32 %v5188, %v5178
        %v5190 = vmul.f32 %v5188, %v5179
        %v5191 = vmul.f32 %v5188, %v5180
        %v5192 = vmul.f32 %v5188, %v5181
        %v5193 = vmul.f32 %v5188, %v5182
        %v5194 = vmul.f32 %v5188, %v5183
        %v5195 = vmul.f32 %v5188, %v5184
        %v5196 = vmul.f32 %v5188, %v5185
        %v5197 = vstv %s5186
        %v5198 = vmul.f32 %v5197, %v5060
        %v5199 = vmul.f32 %v5197, %v5063
        %v5200 = vmul.f32 %v5197, %v5068
        %v5201 = vmul.f32 %v5197, %v5071
        %v5202 = vmul.f32 %v5197, %v5076
        %v5203 = vmul.f32 %v5197, %v5079
        %v5204 = vmul.f32 %v5197, %v5084
        %v5205 = vmul.f32 %v5197, %v5087
        %v5206 = vadd.f32 %v5189, %v5198
        %v5207 = vadd.f32 %v5190, %v5199
        %v5208 = vadd.f32 %v5191, %v5200
        %v5209 = vadd.f32 %v5192, %v5201
        %v5210 = vadd.f32 %v5193, %v5202
        %v5211 = vadd.f32 %v5194, %v5203
        %v5212 = vadd.f32 %v5195, %v5204
        %v5213 = vadd.f32 %v5196, %v5205
        %v5214 = vsel %vm2008, %v5206, 0.0
        %v5215 = vsel %vm2008, %v5207, 0.0
        %v5216 = vadd.f32 %v5214, %v5215
        %v5217 = vsel %vm2008, %v5208, 0.0
        %v5218 = vadd.f32 %v5216, %v5217
        %v5219 = vsel %vm2008, %v5209, 0.0
        %v5220 = vadd.f32 %v5218, %v5219
        %v5221 = vsel %vm2008, %v5210, 0.0
        %v5222 = vadd.f32 %v5220, %v5221
        %v5223 = vsel %vm2008, %v5211, 0.0
        %v5224 = vadd.f32 %v5222, %v5223
        %v5225 = vsel %vm2008, %v5212, 0.0
        %v5226 = vadd.f32 %v5224, %v5225
        %v5227 = vsel %vm2008, %v5213, 0.0
        %v5228 = vadd.f32 %v5226, %v5227
        %v5229 = vrot.slane %v5228, 4
        %v5230 = vadd.f32 %v5228, %v5229
        %v5231 = vrot.slane %v5230, 2
        %v5232 = vadd.f32 %v5230, %v5231
        %v5233 = vrot.slane %v5232, 1
        %v5234 = vadd.f32 %v5232, %v5233
        %v5235 = vadd.f32 %v5234, 1e-08
        %v5236 = vrcp.pop %v5235
        %v5237 = vmul.f32 %v5206, %v5236
        %v5238 = vmul.f32 %v5207, %v5236
        %v5239 = vmul.f32 %v5208, %v5236
        %v5240 = vmul.f32 %v5209, %v5236
        %v5241 = vmul.f32 %v5210, %v5236
        %v5242 = vmul.f32 %v5211, %v5236
        %v5243 = vmul.f32 %v5212, %v5236
        %v5244 = vmul.f32 %v5213, %v5236
        %v5245 = vpack.c.bf16 %v5238, %v5237
        %v5246 = vpack.c.bf16 %v5240, %v5239
        %v5247 = vpack.c.bf16 %v5242, %v5241
        %v5248 = vpack.c.bf16 %v5244, %v5243
        %v5254 = vsel %vm2008, %v5245, 0
        %v5257 = vsel %vm2008, %v5246, 0
        %v5260 = vsel %vm2008, %v5247, 0
        %v5263 = vsel %vm2008, %v5248, 0
        %5265 = vmatprep.subr.bf16.mxu0 0
        %5266 = vmatpush1.bf16.msra.mxu0 %v4765
        %5267 = vmatprep.subr.bf16.mxu0 0
        %5268 = vmatpush1.bf16.msra.mxu0 %v4767
        %5269 = vmatprep.subr.bf16.mxu0 0
        %5270 = vmatpush1.bf16.msra.mxu0 %v4769
        %5271 = vmatprep.subr.bf16.mxu0 0
        %5272 = vmatpush1.bf16.msra.mxu0 %v4771
        %5273 = vmatprep.subr.bf16.mxu0 0
        %5274 = vmatpush1.bf16.msra.mxu0 0
        %5275 = vmatprep.subr.bf16.mxu0 0
        %5276 = vmatpush1.bf16.msra.mxu0 0
        %5277 = vmatprep.subr.bf16.mxu0 0
        %5278 = vmatpush1.bf16.msra.mxu0 0
        %5279 = vmatprep.subr.bf16.mxu0 0
        %5280 = vmatpush1.bf16.msra.mxu0 0
        %5281 = vmatprep.subr.bf16.mxu0 0
        %5282 = vmatpush1.bf16.msra.mxu0 0
        %5283 = vmatprep.subr.bf16.mxu0 0
        %5284 = vmatpush1.bf16.msra.mxu0 0
        %5285 = vmatprep.subr.bf16.mxu0 0
        %5286 = vmatpush1.bf16.msra.mxu0 0
        %5287 = vmatprep.subr.bf16.mxu0 0
        %5288 = vmatpush1.bf16.msra.mxu0 0
        %5289 = vmatprep.subr.bf16.mxu0 0
        %5290 = vmatpush1.bf16.msra.mxu0 0
        %5291 = vmatprep.subr.bf16.mxu0 0
        %5292 = vmatpush1.bf16.msra.mxu0 0
        %5293 = vmatprep.subr.bf16.mxu0 0
        %5294 = vmatpush1.bf16.msra.mxu0 0
        %5295 = vmatprep.subr.bf16.mxu0 0
        %5296 = vmatpush1.bf16.msra.mxu0 0
        %5297 = vmatprep.mubr.bf16.mxu0 0
        %5298 = vmatmul.mubr.bf16.gmra.mrb[0].mxu0 %v5254
        %v5299 = vpop.f32.mrb[0].mxu0
        %v5300 = vadd.f32 0.0, %v5299
        %v5301 = vpop.f32.mrb[0].mxu0
        %v5302 = vpop.f32.mrb[0].mxu0
        %v5303 = vadd.f32 0.0, %v5302
        %v5304 = vpop.f32.mrb[0].mxu0
        %5305 = vmatprep.mubr.bf16.mxu0 0
        %5306 = vmatmul.mubr.bf16.gmra.mrb[0].mxu0 %v5257
        %v5307 = vpop.f32.mrb[0].mxu0
        %v5308 = vadd.f32 0.0, %v5307
        %v5309 = vpop.f32.mrb[0].mxu0
        %v5310 = vpop.f32.mrb[0].mxu0
        %v5311 = vadd.f32 0.0, %v5310
        %v5312 = vpop.f32.mrb[0].mxu0
        %5313 = vmatprep.mubr.bf16.mxu0 0
        %5314 = vmatmul.mubr.bf16.gmra.mrb[0].mxu0 %v5260
        %v5315 = vpop.f32.mrb[0].mxu0
        %v5316 = vadd.f32 0.0, %v5315
        %v5317 = vpop.f32.mrb[0].mxu0
        %v5318 = vpop.f32.mrb[0].mxu0
        %v5319 = vadd.f32 0.0, %v5318
        %v5320 = vpop.f32.mrb[0].mxu0
        %5321 = vmatprep.mubr.bf16.mxu0 0
        %5322 = vmatmul.mubr.bf16.gmra.mrb[0].mxu0 %v5263
        %v5323 = vpop.f32.mrb[0].mxu0
        %v5324 = vadd.f32 0.0, %v5323
        %v5325 = vpop.f32.mrb[0].mxu0
        %v5326 = vpop.f32.mrb[0].mxu0
        %v5327 = vadd.f32 0.0, %v5326
        %v5328 = vpop.f32.mrb[0].mxu0
        %5329 = vdwg.mxu0
        %v5330 = vpack.c.bf16 %v5303, %v5300
        %v5331 = vpack.c.bf16 %v5311, %v5308
        %v5332 = vpack.c.bf16 %v5319, %v5316
        %v5333 = vpack.c.bf16 %v5327, %v5324
        %5338 = vrot.lane.b32.xlu0 %v4655, 120
        %v5339 = vpop.permute.xlu0 %5338
        %5340 = vrot.lane.b32.xlu0 %v4656, 120
        %v5341 = vpop.permute.xlu0 %5340
        %5342 = vrot.lane.b32.xlu0 %v4657, 120
        %v5343 = vpop.permute.xlu0 %5342
        %5344 = vrot.lane.b32.xlu0 %v4658, 120
        %v5345 = vpop.permute.xlu0 %5344
        %5346 = vrot.lane.b32.xlu0 %v4659, 88
        %v5347 = vpop.permute.xlu0 %5346
        %5348 = vrot.lane.b32.xlu0 %v4660, 88
        %v5349 = vpop.permute.xlu0 %5348
        %5350 = vrot.lane.b32.xlu0 %v4661, 88
        %v5351 = vpop.permute.xlu0 %5350
        %5352 = vrot.lane.b32.xlu0 %v4662, 88
        %v5353 = vpop.permute.xlu0 %5352
        %v5355 = vsel %vm1575, %v5339, 0
        %v5358 = vsel %vm1575, %v5341, 0
        %v5361 = vsel %vm1575, %v5343, 0
        %v5364 = vsel %vm1575, %v5345, 0
        %v5367 = vsel %vm1575, %v5347, 0
        %v5370 = vsel %vm1575, %v5349, 0
        %v5373 = vsel %vm1575, %v5351, 0
        %v5376 = vsel %vm1575, %v5353, 0
        %5378 = vmatprep.subr.bf16.mxu0 0
        %5379 = vmatpush1.bf16.xpose.msra.mxu0 %v5367
        %5380 = vmatprep.subr.bf16.mxu0 0
        %5381 = vmatpush1.bf16.xpose.msra.mxu0 %v5370
        %5382 = vmatprep.subr.bf16.mxu0 0
        %5383 = vmatpush1.bf16.xpose.msra.mxu0 %v5373
        %5384 = vmatprep.subr.bf16.mxu0 0
        %5385 = vmatpush1.bf16.xpose.msra.mxu0 %v5376
        %5386 = vmatprep.subr.bf16.mxu0 0
        %5387 = vmatpush1.bf16.xpose.msra.mxu0 0
        %5388 = vmatprep.subr.bf16.mxu0 0
        %5389 = vmatpush1.bf16.xpose.msra.mxu0 0
        %5390 = vmatprep.subr.bf16.mxu0 0
        %5391 = vmatpush1.bf16.xpose.msra.mxu0 0
        %5392 = vmatprep.subr.bf16.mxu0 0
        %5393 = vmatpush1.bf16.xpose.msra.mxu0 0
        %5394 = vmatprep.subr.bf16.mxu0 0
        %5395 = vmatpush1.bf16.xpose.msra.mxu0 0
        %5396 = vmatprep.subr.bf16.mxu0 0
        %5397 = vmatpush1.bf16.xpose.msra.mxu0 0
        %5398 = vmatprep.subr.bf16.mxu0 0
        %5399 = vmatpush1.bf16.xpose.msra.mxu0 0
        %5400 = vmatprep.subr.bf16.mxu0 0
        %5401 = vmatpush1.bf16.xpose.msra.mxu0 0
        %5402 = vmatprep.subr.bf16.mxu0 0
        %5403 = vmatpush1.bf16.xpose.msra.mxu0 0
        %5404 = vmatprep.subr.bf16.mxu0 0
        %5405 = vmatpush1.bf16.xpose.msra.mxu0 0
        %5406 = vmatprep.subr.bf16.mxu0 0
        %5407 = vmatpush1.bf16.xpose.msra.mxu0 0
        %5408 = vmatprep.subr.bf16.mxu0 0
        %5409 = vmatpush1.bf16.xpose.msra.mxu0 0
        %5410 = vmatprep.mubr.bf16.mxu0 0
        %5411 = vmatmul.mubr.bf16.gmra.mrb[0].mxu0 %v5355
        %v5412 = vpop.f32.mrb[0].mxu0
        %v5413 = vadd.f32 0.0, %v5412
        %v5414 = vpop.f32.mrb[0].mxu0
        %v5415 = vpop.f32.mrb[0].mxu0
        %v5416 = vadd.f32 0.0, %v5415
        %v5417 = vpop.f32.mrb[0].mxu0
        %5418 = vmatprep.mubr.bf16.mxu0 0
        %5419 = vmatmul.mubr.bf16.gmra.mrb[0].mxu0 %v5358
        %v5420 = vpop.f32.mrb[0].mxu0
        %v5421 = vadd.f32 0.0, %v5420
        %v5422 = vpop.f32.mrb[0].mxu0
        %v5423 = vpop.f32.mrb[0].mxu0
        %v5424 = vadd.f32 0.0, %v5423
        %v5425 = vpop.f32.mrb[0].mxu0
        %5426 = vmatprep.mubr.bf16.mxu0 0
        %5427 = vmatmul.mubr.bf16.gmra.mrb[0].mxu0 %v5361
        %v5428 = vpop.f32.mrb[0].mxu0
        %v5429 = vadd.f32 0.0, %v5428
        %v5430 = vpop.f32.mrb[0].mxu0
        %v5431 = vpop.f32.mrb[0].mxu0
        %v5432 = vadd.f32 0.0, %v5431
        %v5433 = vpop.f32.mrb[0].mxu0
        %5434 = vmatprep.mubr.bf16.mxu0 0
        %5435 = vmatmul.mubr.bf16.gmra.mrb[0].mxu0 %v5364
        %v5436 = vpop.f32.mrb[0].mxu0
        %v5437 = vadd.f32 0.0, %v5436
        %v5438 = vpop.f32.mrb[0].mxu0
        %v5439 = vpop.f32.mrb[0].mxu0
        %v5440 = vadd.f32 0.0, %v5439
        %v5441 = vpop.f32.mrb[0].mxu0
        %5442 = vdwg.mxu0
        %5443 = vrot.lane.b32.xlu0 %v4659, 56
        %v5444 = vpop.permute.xlu0 %5443
        %5445 = vrot.lane.b32.xlu0 %v4660, 56
        %v5446 = vpop.permute.xlu0 %5445
        %5447 = vrot.lane.b32.xlu0 %v4661, 56
        %v5448 = vpop.permute.xlu0 %5447
        %5449 = vrot.lane.b32.xlu0 %v4662, 56
        %v5450 = vpop.permute.xlu0 %5449
        %v5452 = vsel %vm1575, %v5444, 0
        %v5455 = vsel %vm1575, %v5446, 0
        %v5458 = vsel %vm1575, %v5448, 0
        %v5461 = vsel %vm1575, %v5450, 0
        %5463 = vmatprep.subr.bf16.mxu0 0
        %5464 = vmatpush1.bf16.xpose.msra.mxu0 %v2381
        %5465 = vmatprep.subr.bf16.mxu0 0
        %5466 = vmatpush1.bf16.xpose.msra.mxu0 0
        %5467 = vmatprep.subr.bf16.mxu0 0
        %5468 = vmatpush1.bf16.xpose.msra.mxu0 0
        %5469 = vmatprep.subr.bf16.mxu0 0
        %5470 = vmatpush1.bf16.xpose.msra.mxu0 0
        %5471 = vmatprep.subr.bf16.mxu0 0
        %5472 = vmatpush1.bf16.xpose.msra.mxu0 0
        %5473 = vmatprep.subr.bf16.mxu0 0
        %5474 = vmatpush1.bf16.xpose.msra.mxu0 0
        %5475 = vmatprep.subr.bf16.mxu0 0
        %5476 = vmatpush1.bf16.xpose.msra.mxu0 0
        %5477 = vmatprep.subr.bf16.mxu0 0
        %5478 = vmatpush1.bf16.xpose.msra.mxu0 0
        %5479 = vmatprep.subr.bf16.mxu0 0
        %5480 = vmatpush1.bf16.xpose.msra.mxu0 0
        %5481 = vmatprep.subr.bf16.mxu0 0
        %5482 = vmatpush1.bf16.xpose.msra.mxu0 0
        %5483 = vmatprep.subr.bf16.mxu0 0
        %5484 = vmatpush1.bf16.xpose.msra.mxu0 0
        %5485 = vmatprep.subr.bf16.mxu0 0
        %5486 = vmatpush1.bf16.xpose.msra.mxu0 0
        %5487 = vmatprep.subr.bf16.mxu0 0
        %5488 = vmatpush1.bf16.xpose.msra.mxu0 0
        %5489 = vmatprep.subr.bf16.mxu0 0
        %5490 = vmatpush1.bf16.xpose.msra.mxu0 0
        %5491 = vmatprep.subr.bf16.mxu0 0
        %5492 = vmatpush1.bf16.xpose.msra.mxu0 0
        %5493 = vmatprep.subr.bf16.mxu0 0
        %5494 = vmatpush1.bf16.xpose.msra.mxu0 0
        %5495 = vmatprep.mubr.bf16.mxu0 0
        %5496 = vmatmul.mubr.bf16.gmra.mrb[0].mxu0 %v5452
        %v5497 = vpop.f32.mrb[0].mxu0
        %v5498 = vadd.f32 0.0, %v5497
        %v5499 = vpop.f32.mrb[0].mxu0
        %v5500 = vpop.f32.mrb[0].mxu0
        %v5501 = vadd.f32 0.0, %v5500
        %v5502 = vpop.f32.mrb[0].mxu0
        %5503 = vmatprep.mubr.bf16.mxu0 0
        %5504 = vmatmul.mubr.bf16.gmra.mrb[0].mxu0 %v5455
        %v5505 = vpop.f32.mrb[0].mxu0
        %v5506 = vadd.f32 0.0, %v5505
        %v5507 = vpop.f32.mrb[0].mxu0
        %v5508 = vpop.f32.mrb[0].mxu0
        %v5509 = vadd.f32 0.0, %v5508
        %v5510 = vpop.f32.mrb[0].mxu0
        %5511 = vmatprep.mubr.bf16.mxu0 0
        %5512 = vmatmul.mubr.bf16.gmra.mrb[0].mxu0 %v5458
        %v5513 = vpop.f32.mrb[0].mxu0
        %v5514 = vadd.f32 0.0, %v5513
        %v5515 = vpop.f32.mrb[0].mxu0
        %v5516 = vpop.f32.mrb[0].mxu0
        %v5517 = vadd.f32 0.0, %v5516
        %v5518 = vpop.f32.mrb[0].mxu0
        %5519 = vmatprep.mubr.bf16.mxu0 0
        %5520 = vmatmul.mubr.bf16.gmra.mrb[0].mxu0 %v5461
        %v5521 = vpop.f32.mrb[0].mxu0
        %v5522 = vadd.f32 0.0, %v5521
        %v5523 = vpop.f32.mrb[0].mxu0
        %v5524 = vpop.f32.mrb[0].mxu0
        %v5525 = vadd.f32 0.0, %v5524
        %v5526 = vpop.f32.mrb[0].mxu0
        %5527 = vdwg.mxu0
        %v5528 = vmul.f32 %v5498, 0.5
        %v5529 = vmul.f32 %v5501, 0.5
        %v5530 = vmul.f32 %v5506, 0.5
        %v5531 = vmul.f32 %v5509, 0.5
        %v5532 = vmul.f32 %v5514, 0.5
        %v5533 = vmul.f32 %v5517, 0.5
        %v5534 = vmul.f32 %v5522, 0.5
        %v5535 = vmul.f32 %v5525, 0.5
        %v5536 = vmul.f32 %v5498, 0.044715
        %v5537 = vmul.f32 %v5501, 0.044715
        %v5538 = vmul.f32 %v5506, 0.044715
        %v5539 = vmul.f32 %v5509, 0.044715
        %v5540 = vmul.f32 %v5514, 0.044715
        %v5541 = vmul.f32 %v5517, 0.044715
        %v5542 = vmul.f32 %v5522, 0.044715
        %v5543 = vmul.f32 %v5525, 0.044715
        %v5544 = vmul.f32 %v5536, %v5498
        %v5545 = vmul.f32 %v5537, %v5501
        %v5546 = vmul.f32 %v5538, %v5506
        %v5547 = vmul.f32 %v5539, %v5509
        %v5548 = vmul.f32 %v5540, %v5514
        %v5549 = vmul.f32 %v5541, %v5517
        %v5550 = vmul.f32 %v5542, %v5522
        %v5551 = vmul.f32 %v5543, %v5525
        %v5552 = vmul.f32 %v5544, %v5498
        %v5553 = vmul.f32 %v5545, %v5501
        %v5554 = vmul.f32 %v5546, %v5506
        %v5555 = vmul.f32 %v5547, %v5509
        %v5556 = vmul.f32 %v5548, %v5514
        %v5557 = vmul.f32 %v5549, %v5517
        %v5558 = vmul.f32 %v5550, %v5522
        %v5559 = vmul.f32 %v5551, %v5525
        %v5560 = vadd.f32 %v5498, %v5552
        %v5561 = vadd.f32 %v5501, %v5553
        %v5562 = vadd.f32 %v5506, %v5554
        %v5563 = vadd.f32 %v5509, %v5555
        %v5564 = vadd.f32 %v5514, %v5556
        %v5565 = vadd.f32 %v5517, %v5557
        %v5566 = vadd.f32 %v5522, %v5558
        %v5567 = vadd.f32 %v5525, %v5559
        %v5568 = vmul.f32 %v5560, 0.7978846
        %v5569 = vmul.f32 %v5561, 0.7978846
        %v5570 = vmul.f32 %v5562, 0.7978846
        %v5571 = vmul.f32 %v5563, 0.7978846
        %v5572 = vmul.f32 %v5564, 0.7978846
        %v5573 = vmul.f32 %v5565, 0.7978846
        %v5574 = vmul.f32 %v5566, 0.7978846
        %v5575 = vmul.f32 %v5567, 0.7978846
        %v5576 = vtanh.pop %v5568
        %v5577 = vtanh.pop %v5569
        %v5578 = vtanh.pop %v5570
        %v5579 = vtanh.pop %v5571
        %v5580 = vtanh.pop %v5572
        %v5581 = vtanh.pop %v5573
        %v5582 = vtanh.pop %v5574
        %v5583 = vtanh.pop %v5575
        %v5584 = vadd.f32 %v5576, 1.0
        %v5585 = vadd.f32 %v5577, 1.0
        %v5586 = vadd.f32 %v5578, 1.0
        %v5587 = vadd.f32 %v5579, 1.0
        %v5588 = vadd.f32 %v5580, 1.0
        %v5589 = vadd.f32 %v5581, 1.0
        %v5590 = vadd.f32 %v5582, 1.0
        %v5591 = vadd.f32 %v5583, 1.0
        %v5592 = vmul.f32 %v5528, %v5584
        %v5593 = vmul.f32 %v5529, %v5585
        %v5594 = vmul.f32 %v5530, %v5586
        %v5595 = vmul.f32 %v5531, %v5587
        %v5596 = vmul.f32 %v5532, %v5588
        %v5597 = vmul.f32 %v5533, %v5589
        %v5598 = vmul.f32 %v5534, %v5590
        %v5599 = vmul.f32 %v5535, %v5591
        %v5600 = vsel %vm1830, %v5592, -inf
        %5601 = vmax.xlane.f32.xlu0 %v5600
        %v5602 = vpop.xlane.xlu0 %5601
        %v5603 = vsel %vm1830, %v5593, -inf
        %5604 = vmax.xlane.f32.xlu0 %v5603
        %v5605 = vpop.xlane.xlu0 %5604
        %v5606 = vsel %vm1830, %v5594, -inf
        %5607 = vmax.xlane.f32.xlu0 %v5606
        %v5608 = vpop.xlane.xlu0 %5607
        %v5609 = vsel %vm1830, %v5595, -inf
        %5610 = vmax.xlane.f32.xlu0 %v5609
        %v5611 = vpop.xlane.xlu0 %5610
        %v5612 = vsel %vm1830, %v5596, -inf
        %5613 = vmax.xlane.f32.xlu0 %v5612
        %v5614 = vpop.xlane.xlu0 %5613
        %v5615 = vsel %vm1830, %v5597, -inf
        %5616 = vmax.xlane.f32.xlu0 %v5615
        %v5617 = vpop.xlane.xlu0 %5616
        %v5618 = vsel %vm1830, %v5598, -inf
        %5619 = vmax.xlane.f32.xlu0 %v5618
        %v5620 = vpop.xlane.xlu0 %5619
        %v5621 = vsel %vm1830, %v5599, -inf
        %5622 = vmax.xlane.f32.xlu0 %v5621
        %v5623 = vpop.xlane.xlu0 %5622
        %v5624 = vsub.f32 %v5592, %v5602
        %v5625 = vsub.f32 %v5593, %v5605
        %v5626 = vsub.f32 %v5594, %v5608
        %v5627 = vsub.f32 %v5595, %v5611
        %v5628 = vsub.f32 %v5596, %v5614
        %v5629 = vsub.f32 %v5597, %v5617
        %v5630 = vsub.f32 %v5598, %v5620
        %v5631 = vsub.f32 %v5599, %v5623
        %v5632 = vmul.f32 %v5624, 1.442695
        %v5633 = vpow.pop %v5632
        %v5634 = vmul.f32 %v5625, 1.442695
        %v5635 = vpow.pop %v5634
        %v5636 = vmul.f32 %v5626, 1.442695
        %v5637 = vpow.pop %v5636
        %v5638 = vmul.f32 %v5627, 1.442695
        %v5639 = vpow.pop %v5638
        %v5640 = vmul.f32 %v5628, 1.442695
        %v5641 = vpow.pop %v5640
        %v5642 = vmul.f32 %v5629, 1.442695
        %v5643 = vpow.pop %v5642
        %v5644 = vmul.f32 %v5630, 1.442695
        %v5645 = vpow.pop %v5644
        %v5646 = vmul.f32 %v5631, 1.442695
        %v5647 = vpow.pop %v5646
        %v5648 = vsel %vm1830, %v5633, 0.0
        %5649 = vadd.xlane.f32.xlu0 %v5648
        %v5650 = vpop.xlane.xlu0 %5649
        %v5651 = vsel %vm1830, %v5635, 0.0
        %5652 = vadd.xlane.f32.xlu0 %v5651
        %v5653 = vpop.xlane.xlu0 %5652
        %v5654 = vsel %vm1830, %v5637, 0.0
        %5655 = vadd.xlane.f32.xlu0 %v5654
        %v5656 = vpop.xlane.xlu0 %5655
        %v5657 = vsel %vm1830, %v5639, 0.0
        %5658 = vadd.xlane.f32.xlu0 %v5657
        %v5659 = vpop.xlane.xlu0 %5658
        %v5660 = vsel %vm1830, %v5641, 0.0
        %5661 = vadd.xlane.f32.xlu0 %v5660
        %v5662 = vpop.xlane.xlu0 %5661
        %v5663 = vsel %vm1830, %v5643, 0.0
        %5664 = vadd.xlane.f32.xlu0 %v5663
        %v5665 = vpop.xlane.xlu0 %5664
        %v5666 = vsel %vm1830, %v5645, 0.0
        %5667 = vadd.xlane.f32.xlu0 %v5666
        %v5668 = vpop.xlane.xlu0 %5667
        %v5669 = vsel %vm1830, %v5647, 0.0
        %5670 = vadd.xlane.f32.xlu0 %v5669
        %v5671 = vpop.xlane.xlu0 %5670
        %v5672 = vrcp.pop %v5650
        %v5673 = vrcp.pop %v5653
        %v5674 = vrcp.pop %v5656
        %v5675 = vrcp.pop %v5659
        %v5676 = vrcp.pop %v5662
        %v5677 = vrcp.pop %v5665
        %v5678 = vrcp.pop %v5668
        %v5679 = vrcp.pop %v5671
        %v5680 = vmul.f32 %v5633, %v5672
        %v5681 = vmul.f32 %v5635, %v5673
        %v5682 = vmul.f32 %v5637, %v5674
        %v5683 = vmul.f32 %v5639, %v5675
        %v5684 = vmul.f32 %v5641, %v5676
        %v5685 = vmul.f32 %v5643, %v5677
        %v5686 = vmul.f32 %v5645, %v5678
        %v5687 = vmul.f32 %v5647, %v5679
        %v5688 = vpack.c.bf16 %v5681, %v5680
        %v5689 = vpack.c.bf16 %v5683, %v5682
        %v5690 = vpack.c.bf16 %v5685, %v5684
        %v5691 = vpack.c.bf16 %v5687, %v5686
        %v5693 = vsel %vm1830, %v5688, 0
        %v5696 = vsel %vm1830, %v5689, 0
        %v5699 = vsel %vm1830, %v5690, 0
        %v5702 = vsel %vm1830, %v5691, 0
        %5704 = vmatprep.subr.bf16.mxu0 0
        %5705 = vmatpush1.bf16.xpose.msra.mxu0 %v5693
        %5706 = vmatprep.subr.bf16.mxu0 0
        %5707 = vmatpush1.bf16.xpose.msra.mxu0 %v5696
        %5708 = vmatprep.subr.bf16.mxu0 0
        %5709 = vmatpush1.bf16.xpose.msra.mxu0 %v5699
        %5710 = vmatprep.subr.bf16.mxu0 0
        %5711 = vmatpush1.bf16.xpose.msra.mxu0 %v5702
        %5712 = vmatprep.subr.bf16.mxu0 0
        %5713 = vmatpush1.bf16.xpose.msra.mxu0 0
        %5714 = vmatprep.subr.bf16.mxu0 0
        %5715 = vmatpush1.bf16.xpose.msra.mxu0 0
        %5716 = vmatprep.subr.bf16.mxu0 0
        %5717 = vmatpush1.bf16.xpose.msra.mxu0 0
        %5718 = vmatprep.subr.bf16.mxu0 0
        %5719 = vmatpush1.bf16.xpose.msra.mxu0 0
        %5720 = vmatprep.subr.bf16.mxu0 0
        %5721 = vmatpush1.bf16.xpose.msra.mxu0 0
        %5722 = vmatprep.subr.bf16.mxu0 0
        %5723 = vmatpush1.bf16.xpose.msra.mxu0 0
        %5724 = vmatprep.subr.bf16.mxu0 0
        %5725 = vmatpush1.bf16.xpose.msra.mxu0 0
        %5726 = vmatprep.subr.bf16.mxu0 0
        %5727 = vmatpush1.bf16.xpose.msra.mxu0 0
        %5728 = vmatprep.subr.bf16.mxu0 0
        %5729 = vmatpush1.bf16.xpose.msra.mxu0 0
        %5730 = vmatprep.subr.bf16.mxu0 0
        %5731 = vmatpush1.bf16.xpose.msra.mxu0 0
        %5732 = vmatprep.subr.bf16.mxu0 0
        %5733 = vmatpush1.bf16.xpose.msra.mxu0 0
        %5734 = vmatprep.subr.bf16.mxu0 0
        %5735 = vmatpush1.bf16.xpose.msra.mxu0 0
        %5736 = vmatprep.mubr.bf16.mxu0 0
        %5737 = vmatmul.mubr.bf16.gmra.mrb[0].mxu0 %v5693
        %v5738 = vpop.f32.mrb[0].mxu0
        %v5739 = vadd.f32 0.0, %v5738
        %v5740 = vpop.f32.mrb[0].mxu0
        %v5741 = vpop.f32.mrb[0].mxu0
        %v5742 = vadd.f32 0.0, %v5741
        %v5743 = vpop.f32.mrb[0].mxu0
        %5744 = vmatprep.mubr.bf16.mxu0 0
        %5745 = vmatmul.mubr.bf16.gmra.mrb[0].mxu0 %v5696
        %v5746 = vpop.f32.mrb[0].mxu0
        %v5747 = vadd.f32 0.0, %v5746
        %v5748 = vpop.f32.mrb[0].mxu0
        %v5749 = vpop.f32.mrb[0].mxu0
        %v5750 = vadd.f32 0.0, %v5749
        %v5751 = vpop.f32.mrb[0].mxu0
        %5752 = vmatprep.mubr.bf16.mxu0 0
        %5753 = vmatmul.mubr.bf16.gmra.mrb[0].mxu0 %v5699
        %v5754 = vpop.f32.mrb[0].mxu0
        %v5755 = vadd.f32 0.0, %v5754
        %v5756 = vpop.f32.mrb[0].mxu0
        %v5757 = vpop.f32.mrb[0].mxu0
        %v5758 = vadd.f32 0.0, %v5757
        %v5759 = vpop.f32.mrb[0].mxu0
        %5760 = vmatprep.mubr.bf16.mxu0 0
        %5761 = vmatmul.mubr.bf16.gmra.mrb[0].mxu0 %v5702
        %v5762 = vpop.f32.mrb[0].mxu0
        %v5763 = vadd.f32 0.0, %v5762
        %v5764 = vpop.f32.mrb[0].mxu0
        %v5765 = vpop.f32.mrb[0].mxu0
        %v5766 = vadd.f32 0.0, %v5765
        %v5767 = vpop.f32.mrb[0].mxu0
        %5768 = vdwg.mxu0
        %v5769 = vmul.f32 %v5413, %v5739
        %v5770 = vmul.f32 %v5416, %v5742
        %v5771 = vmul.f32 %v5421, %v5747
        %v5772 = vmul.f32 %v5424, %v5750
        %v5773 = vmul.f32 %v5429, %v5755
        %v5774 = vmul.f32 %v5432, %v5758
        %v5775 = vmul.f32 %v5437, %v5763
        %v5776 = vmul.f32 %v5440, %v5766
        %v5777 = vsel %vm2008, %v5769, -inf
        %5778 = vmax.xlane.f32.xlu0 %v5777
        %v5779 = vpop.xlane.xlu0 %5778
        %v5780 = vsel %vm2008, %v5770, -inf
        %5781 = vmax.xlane.f32.xlu0 %v5780
        %v5782 = vpop.xlane.xlu0 %5781
        %v5783 = vsel %vm2008, %v5771, -inf
        %5784 = vmax.xlane.f32.xlu0 %v5783
        %v5785 = vpop.xlane.xlu0 %5784
        %v5786 = vsel %vm2008, %v5772, -inf
        %5787 = vmax.xlane.f32.xlu0 %v5786
        %v5788 = vpop.xlane.xlu0 %5787
        %v5789 = vsel %vm2008, %v5773, -inf
        %5790 = vmax.xlane.f32.xlu0 %v5789
        %v5791 = vpop.xlane.xlu0 %5790
        %v5792 = vsel %vm2008, %v5774, -inf
        %5793 = vmax.xlane.f32.xlu0 %v5792
        %v5794 = vpop.xlane.xlu0 %5793
        %v5795 = vsel %vm2008, %v5775, -inf
        %5796 = vmax.xlane.f32.xlu0 %v5795
        %v5797 = vpop.xlane.xlu0 %5796
        %v5798 = vsel %vm2008, %v5776, -inf
        %5799 = vmax.xlane.f32.xlu0 %v5798
        %v5800 = vpop.xlane.xlu0 %5799
        %v5801 = vsub.f32 %v5769, %v5779
        %v5802 = vsub.f32 %v5770, %v5782
        %v5803 = vsub.f32 %v5771, %v5785
        %v5804 = vsub.f32 %v5772, %v5788
        %v5805 = vsub.f32 %v5773, %v5791
        %v5806 = vsub.f32 %v5774, %v5794
        %v5807 = vsub.f32 %v5775, %v5797
        %v5808 = vsub.f32 %v5776, %v5800
        %v5809 = vmul.f32 %v5801, 1.442695
        %v5810 = vpow.pop %v5809
        %v5811 = vmul.f32 %v5802, 1.442695
        %v5812 = vpow.pop %v5811
        %v5813 = vmul.f32 %v5803, 1.442695
        %v5814 = vpow.pop %v5813
        %v5815 = vmul.f32 %v5804, 1.442695
        %v5816 = vpow.pop %v5815
        %v5817 = vmul.f32 %v5805, 1.442695
        %v5818 = vpow.pop %v5817
        %v5819 = vmul.f32 %v5806, 1.442695
        %v5820 = vpow.pop %v5819
        %v5821 = vmul.f32 %v5807, 1.442695
        %v5822 = vpow.pop %v5821
        %v5823 = vmul.f32 %v5808, 1.442695
        %v5824 = vpow.pop %v5823
        %v5825 = vsel %vm2008, %v5810, 0.0
        %5826 = vadd.xlane.f32.xlu0 %v5825
        %v5827 = vpop.xlane.xlu0 %5826
        %v5828 = vsel %vm2008, %v5812, 0.0
        %5829 = vadd.xlane.f32.xlu0 %v5828
        %v5830 = vpop.xlane.xlu0 %5829
        %v5831 = vsel %vm2008, %v5814, 0.0
        %5832 = vadd.xlane.f32.xlu0 %v5831
        %v5833 = vpop.xlane.xlu0 %5832
        %v5834 = vsel %vm2008, %v5816, 0.0
        %5835 = vadd.xlane.f32.xlu0 %v5834
        %v5836 = vpop.xlane.xlu0 %5835
        %v5837 = vsel %vm2008, %v5818, 0.0
        %5838 = vadd.xlane.f32.xlu0 %v5837
        %v5839 = vpop.xlane.xlu0 %5838
        %v5840 = vsel %vm2008, %v5820, 0.0
        %5841 = vadd.xlane.f32.xlu0 %v5840
        %v5842 = vpop.xlane.xlu0 %5841
        %v5843 = vsel %vm2008, %v5822, 0.0
        %5844 = vadd.xlane.f32.xlu0 %v5843
        %v5845 = vpop.xlane.xlu0 %5844
        %v5846 = vsel %vm2008, %v5824, 0.0
        %5847 = vadd.xlane.f32.xlu0 %v5846
        %v5848 = vpop.xlane.xlu0 %5847
        %v5849 = vrcp.pop %v5827
        %v5850 = vrcp.pop %v5830
        %v5851 = vrcp.pop %v5833
        %v5852 = vrcp.pop %v5836
        %v5853 = vrcp.pop %v5839
        %v5854 = vrcp.pop %v5842
        %v5855 = vrcp.pop %v5845
        %v5856 = vrcp.pop %v5848
        %v5857 = vmul.f32 %v5810, %v5849
        %v5858 = vmul.f32 %v5812, %v5850
        %v5859 = vmul.f32 %v5814, %v5851
        %v5860 = vmul.f32 %v5816, %v5852
        %v5861 = vmul.f32 %v5818, %v5853
        %v5862 = vmul.f32 %v5820, %v5854
        %v5863 = vmul.f32 %v5822, %v5855
        %v5864 = vmul.f32 %v5824, %v5856
        %s5865 = sld [smem:[#allocation8 + %s2785]]
        %s5866 = ssub.f32 1.0, %s5865
        %v5867 = vstv %s5866
        %v5868 = vmul.f32 %v5867, %v5857
        %v5869 = vmul.f32 %v5867, %v5858
        %v5870 = vmul.f32 %v5867, %v5859
        %v5871 = vmul.f32 %v5867, %v5860
        %v5872 = vmul.f32 %v5867, %v5861
        %v5873 = vmul.f32 %v5867, %v5862
        %v5874 = vmul.f32 %v5867, %v5863
        %v5875 = vmul.f32 %v5867, %v5864
        %v5876 = vstv %s5865
        %v5877 = vmul.f32 %v5876, %v5739
        %v5878 = vmul.f32 %v5876, %v5742
        %v5879 = vmul.f32 %v5876, %v5747
        %v5880 = vmul.f32 %v5876, %v5750
        %v5881 = vmul.f32 %v5876, %v5755
        %v5882 = vmul.f32 %v5876, %v5758
        %v5883 = vmul.f32 %v5876, %v5763
        %v5884 = vmul.f32 %v5876, %v5766
        %v5885 = vadd.f32 %v5868, %v5877
        %v5886 = vadd.f32 %v5869, %v5878
        %v5887 = vadd.f32 %v5870, %v5879
        %v5888 = vadd.f32 %v5871, %v5880
        %v5889 = vadd.f32 %v5872, %v5881
        %v5890 = vadd.f32 %v5873, %v5882
        %v5891 = vadd.f32 %v5874, %v5883
        %v5892 = vadd.f32 %v5875, %v5884
        %v5893 = vsel %vm2008, %v5885, 0.0
        %v5894 = vsel %vm2008, %v5886, 0.0
        %v5895 = vadd.f32 %v5893, %v5894
        %v5896 = vsel %vm2008, %v5887, 0.0
        %v5897 = vadd.f32 %v5895, %v5896
        %v5898 = vsel %vm2008, %v5888, 0.0
        %v5899 = vadd.f32 %v5897, %v5898
        %v5900 = vsel %vm2008, %v5889, 0.0
        %v5901 = vadd.f32 %v5899, %v5900
        %v5902 = vsel %vm2008, %v5890, 0.0
        %v5903 = vadd.f32 %v5901, %v5902
        %v5904 = vsel %vm2008, %v5891, 0.0
        %v5905 = vadd.f32 %v5903, %v5904
        %v5906 = vsel %vm2008, %v5892, 0.0
        %v5907 = vadd.f32 %v5905, %v5906
        %v5908 = vrot.slane %v5907, 4
        %v5909 = vadd.f32 %v5907, %v5908
        %v5910 = vrot.slane %v5909, 2
        %v5911 = vadd.f32 %v5909, %v5910
        %v5912 = vrot.slane %v5911, 1
        %v5913 = vadd.f32 %v5911, %v5912
        %v5914 = vadd.f32 %v5913, 1e-08
        %v5915 = vrcp.pop %v5914
        %v5916 = vmul.f32 %v5885, %v5915
        %v5917 = vmul.f32 %v5886, %v5915
        %v5918 = vmul.f32 %v5887, %v5915
        %v5919 = vmul.f32 %v5888, %v5915
        %v5920 = vmul.f32 %v5889, %v5915
        %v5921 = vmul.f32 %v5890, %v5915
        %v5922 = vmul.f32 %v5891, %v5915
        %v5923 = vmul.f32 %v5892, %v5915
        %v5924 = vpack.c.bf16 %v5917, %v5916
        %v5925 = vpack.c.bf16 %v5919, %v5918
        %v5926 = vpack.c.bf16 %v5921, %v5920
        %v5927 = vpack.c.bf16 %v5923, %v5922
        %v5933 = vsel %vm2008, %v5924, 0
        %v5936 = vsel %vm2008, %v5925, 0
        %v5939 = vsel %vm2008, %v5926, 0
        %v5942 = vsel %vm2008, %v5927, 0
        %5944 = vmatprep.subr.bf16.mxu0 0
        %5945 = vmatpush1.bf16.msra.mxu0 %v5444
        %5946 = vmatprep.subr.bf16.mxu0 0
        %5947 = vmatpush1.bf16.msra.mxu0 %v5446
        %5948 = vmatprep.subr.bf16.mxu0 0
        %5949 = vmatpush1.bf16.msra.mxu0 %v5448
        %5950 = vmatprep.subr.bf16.mxu0 0
        %5951 = vmatpush1.bf16.msra.mxu0 %v5450
        %5952 = vmatprep.subr.bf16.mxu0 0
        %5953 = vmatpush1.bf16.msra.mxu0 0
        %5954 = vmatprep.subr.bf16.mxu0 0
        %5955 = vmatpush1.bf16.msra.mxu0 0
        %5956 = vmatprep.subr.bf16.mxu0 0
        %5957 = vmatpush1.bf16.msra.mxu0 0
        %5958 = vmatprep.subr.bf16.mxu0 0
        %5959 = vmatpush1.bf16.msra.mxu0 0
        %5960 = vmatprep.subr.bf16.mxu0 0
        %5961 = vmatpush1.bf16.msra.mxu0 0
        %5962 = vmatprep.subr.bf16.mxu0 0
        %5963 = vmatpush1.bf16.msra.mxu0 0
        %5964 = vmatprep.subr.bf16.mxu0 0
        %5965 = vmatpush1.bf16.msra.mxu0 0
        %5966 = vmatprep.subr.bf16.mxu0 0
        %5967 = vmatpush1.bf16.msra.mxu0 0
        %5968 = vmatprep.subr.bf16.mxu0 0
        %5969 = vmatpush1.bf16.msra.mxu0 0
        %5970 = vmatprep.subr.bf16.mxu0 0
        %5971 = vmatpush1.bf16.msra.mxu0 0
        %5972 = vmatprep.subr.bf16.mxu0 0
        %5973 = vmatpush1.bf16.msra.mxu0 0
        %5974 = vmatprep.subr.bf16.mxu0 0
        %5975 = vmatpush1.bf16.msra.mxu0 0
        %5976 = vmatprep.mubr.bf16.mxu0 0
        %5977 = vmatmul.mubr.bf16.gmra.mrb[0].mxu0 %v5933
        %v5978 = vpop.f32.mrb[0].mxu0
        %v5979 = vadd.f32 0.0, %v5978
        %v5980 = vpop.f32.mrb[0].mxu0
        %v5981 = vpop.f32.mrb[0].mxu0
        %v5982 = vadd.f32 0.0, %v5981
        %v5983 = vpop.f32.mrb[0].mxu0
        %5984 = vmatprep.mubr.bf16.mxu0 0
        %5985 = vmatmul.mubr.bf16.gmra.mrb[0].mxu0 %v5936
        %v5986 = vpop.f32.mrb[0].mxu0
        %v5987 = vadd.f32 0.0, %v5986
        %v5988 = vpop.f32.mrb[0].mxu0
        %v5989 = vpop.f32.mrb[0].mxu0
        %v5990 = vadd.f32 0.0, %v5989
        %v5991 = vpop.f32.mrb[0].mxu0
        %5992 = vmatprep.mubr.bf16.mxu0 0
        %5993 = vmatmul.mubr.bf16.gmra.mrb[0].mxu0 %v5939
        %v5994 = vpop.f32.mrb[0].mxu0
        %v5995 = vadd.f32 0.0, %v5994
        %v5996 = vpop.f32.mrb[0].mxu0
        %v5997 = vpop.f32.mrb[0].mxu0
        %v5998 = vadd.f32 0.0, %v5997
        %v5999 = vpop.f32.mrb[0].mxu0
        %6000 = vmatprep.mubr.bf16.mxu0 0
        %6001 = vmatmul.mubr.bf16.gmra.mrb[0].mxu0 %v5942
        %v6002 = vpop.f32.mrb[0].mxu0
        %v6003 = vadd.f32 0.0, %v6002
        %v6004 = vpop.f32.mrb[0].mxu0
        %v6005 = vpop.f32.mrb[0].mxu0
        %v6006 = vadd.f32 0.0, %v6005
        %v6007 = vpop.f32.mrb[0].mxu0
        %6008 = vdwg.mxu0
        %v6009 = vpack.c.bf16 %v5982, %v5979
        %v6010 = vpack.c.bf16 %v5990, %v5987
        %v6011 = vpack.c.bf16 %v5998, %v5995
        %v6012 = vpack.c.bf16 %v6006, %v6003
        %v6014 = vsel %vm1575, %v6009, 0
        %v6017 = vsel %vm1575, %v6010, 0
        %v6020 = vsel %vm1575, %v6011, 0
        %v6023 = vsel %vm1575, %v6012, 0
        %6025 = vmatprep.subr.bf16.mxu0 0
        %6026 = vmatpush1.bf16.msra.mxu0 %v2948
        %6027 = vmatprep.subr.bf16.mxu0 0
        %6028 = vmatpush1.bf16.msra.mxu0 0
        %6029 = vmatprep.subr.bf16.mxu0 0
        %6030 = vmatpush1.bf16.msra.mxu0 0
        %6031 = vmatprep.subr.bf16.mxu0 0
        %6032 = vmatpush1.bf16.msra.mxu0 0
        %6033 = vmatprep.subr.bf16.mxu0 0
        %6034 = vmatpush1.bf16.msra.mxu0 0
        %6035 = vmatprep.subr.bf16.mxu0 0
        %6036 = vmatpush1.bf16.msra.mxu0 0
        %6037 = vmatprep.subr.bf16.mxu0 0
        %6038 = vmatpush1.bf16.msra.mxu0 0
        %6039 = vmatprep.subr.bf16.mxu0 0
        %6040 = vmatpush1.bf16.msra.mxu0 0
        %6041 = vmatprep.subr.bf16.mxu0 0
        %6042 = vmatpush1.bf16.msra.mxu0 0
        %6043 = vmatprep.subr.bf16.mxu0 0
        %6044 = vmatpush1.bf16.msra.mxu0 0
        %6045 = vmatprep.subr.bf16.mxu0 0
        %6046 = vmatpush1.bf16.msra.mxu0 0
        %6047 = vmatprep.subr.bf16.mxu0 0
        %6048 = vmatpush1.bf16.msra.mxu0 0
        %6049 = vmatprep.subr.bf16.mxu0 0
        %6050 = vmatpush1.bf16.msra.mxu0 0
        %6051 = vmatprep.subr.bf16.mxu0 0
        %6052 = vmatpush1.bf16.msra.mxu0 0
        %6053 = vmatprep.subr.bf16.mxu0 0
        %6054 = vmatpush1.bf16.msra.mxu0 0
        %6055 = vmatprep.subr.bf16.mxu0 0
        %6056 = vmatpush1.bf16.msra.mxu0 0
        %6057 = vmatprep.mubr.bf16.mxu0 0
        %6058 = vmatmul.mubr.bf16.gmra.mrb[0].mxu0 %v6014
        %v6059 = vpop.f32.mrb[0].mxu0
        %v6060 = vadd.f32 0.0, %v6059
        %v6061 = vpop.f32.mrb[0].mxu0
        %v6062 = vpop.f32.mrb[0].mxu0
        %v6063 = vadd.f32 0.0, %v6062
        %v6064 = vpop.f32.mrb[0].mxu0
        %6065 = vmatprep.mubr.bf16.mxu0 0
        %6066 = vmatmul.mubr.bf16.gmra.mrb[0].mxu0 %v6017
        %v6067 = vpop.f32.mrb[0].mxu0
        %v6068 = vadd.f32 0.0, %v6067
        %v6069 = vpop.f32.mrb[0].mxu0
        %v6070 = vpop.f32.mrb[0].mxu0
        %v6071 = vadd.f32 0.0, %v6070
        %v6072 = vpop.f32.mrb[0].mxu0
        %6073 = vmatprep.mubr.bf16.mxu0 0
        %6074 = vmatmul.mubr.bf16.gmra.mrb[0].mxu0 %v6020
        %v6075 = vpop.f32.mrb[0].mxu0
        %v6076 = vadd.f32 0.0, %v6075
        %v6077 = vpop.f32.mrb[0].mxu0
        %v6078 = vpop.f32.mrb[0].mxu0
        %v6079 = vadd.f32 0.0, %v6078
        %v6080 = vpop.f32.mrb[0].mxu0
        %6081 = vmatprep.mubr.bf16.mxu0 0
        %6082 = vmatmul.mubr.bf16.gmra.mrb[0].mxu0 %v6023
        %v6083 = vpop.f32.mrb[0].mxu0
        %v6084 = vadd.f32 0.0, %v6083
        %v6085 = vpop.f32.mrb[0].mxu0
        %v6086 = vpop.f32.mrb[0].mxu0
        %v6087 = vadd.f32 0.0, %v6086
        %v6088 = vpop.f32.mrb[0].mxu0
        %6089 = vdwg.mxu0
        %v6091 = vsel %vm1575, %v5330, 0
        %v6094 = vsel %vm1575, %v5331, 0
        %v6097 = vsel %vm1575, %v5332, 0
        %v6100 = vsel %vm1575, %v5333, 0
        %6102 = vmatprep.subr.bf16.mxu0 0
        %6103 = vmatpush1.bf16.msra.mxu0 %v3028
        %6104 = vmatprep.subr.bf16.mxu0 0
        %6105 = vmatpush1.bf16.msra.mxu0 0
        %6106 = vmatprep.subr.bf16.mxu0 0
        %6107 = vmatpush1.bf16.msra.mxu0 0
        %6108 = vmatprep.subr.bf16.mxu0 0
        %6109 = vmatpush1.bf16.msra.mxu0 0
        %6110 = vmatprep.subr.bf16.mxu0 0
        %6111 = vmatpush1.bf16.msra.mxu0 0
        %6112 = vmatprep.subr.bf16.mxu0 0
        %6113 = vmatpush1.bf16.msra.mxu0 0
        %6114 = vmatprep.subr.bf16.mxu0 0
        %6115 = vmatpush1.bf16.msra.mxu0 0
        %6116 = vmatprep.subr.bf16.mxu0 0
        %6117 = vmatpush1.bf16.msra.mxu0 0
        %6118 = vmatprep.subr.bf16.mxu0 0
        %6119 = vmatpush1.bf16.msra.mxu0 0
        %6120 = vmatprep.subr.bf16.mxu0 0
        %6121 = vmatpush1.bf16.msra.mxu0 0
        %6122 = vmatprep.subr.bf16.mxu0 0
        %6123 = vmatpush1.bf16.msra.mxu0 0
        %6124 = vmatprep.subr.bf16.mxu0 0
        %6125 = vmatpush1.bf16.msra.mxu0 0
        %6126 = vmatprep.subr.bf16.mxu0 0
        %6127 = vmatpush1.bf16.msra.mxu0 0
        %6128 = vmatprep.subr.bf16.mxu0 0
        %6129 = vmatpush1.bf16.msra.mxu0 0
        %6130 = vmatprep.subr.bf16.mxu0 0
        %6131 = vmatpush1.bf16.msra.mxu0 0
        %6132 = vmatprep.subr.bf16.mxu0 0
        %6133 = vmatpush1.bf16.msra.mxu0 0
        %6134 = vmatprep.mubr.bf16.mxu0 0
        %6135 = vmatmul.mubr.bf16.gmra.mrb[0].mxu0 %v6091
        %v6136 = vpop.f32.mrb[0].mxu0
        %v6137 = vadd.f32 %v6060, %v6136
        %v6138 = vpop.f32.mrb[0].mxu0
        %v6139 = vpop.f32.mrb[0].mxu0
        %v6140 = vadd.f32 %v6063, %v6139
        %v6141 = vpop.f32.mrb[0].mxu0
        %6142 = vmatprep.mubr.bf16.mxu0 0
        %6143 = vmatmul.mubr.bf16.gmra.mrb[0].mxu0 %v6094
        %v6144 = vpop.f32.mrb[0].mxu0
        %v6145 = vadd.f32 %v6068, %v6144
        %v6146 = vpop.f32.mrb[0].mxu0
        %v6147 = vpop.f32.mrb[0].mxu0
        %v6148 = vadd.f32 %v6071, %v6147
        %v6149 = vpop.f32.mrb[0].mxu0
        %6150 = vmatprep.mubr.bf16.mxu0 0
        %6151 = vmatmul.mubr.bf16.gmra.mrb[0].mxu0 %v6097
        %v6152 = vpop.f32.mrb[0].mxu0
        %v6153 = vadd.f32 %v6076, %v6152
        %v6154 = vpop.f32.mrb[0].mxu0
        %v6155 = vpop.f32.mrb[0].mxu0
        %v6156 = vadd.f32 %v6079, %v6155
        %v6157 = vpop.f32.mrb[0].mxu0
        %6158 = vmatprep.mubr.bf16.mxu0 0
        %6159 = vmatmul.mubr.bf16.gmra.mrb[0].mxu0 %v6100
        %v6160 = vpop.f32.mrb[0].mxu0
        %v6161 = vadd.f32 %v6084, %v6160
        %v6162 = vpop.f32.mrb[0].mxu0
        %v6163 = vpop.f32.mrb[0].mxu0
        %v6164 = vadd.f32 %v6087, %v6163
        %v6165 = vpop.f32.mrb[0].mxu0
        %6166 = vdwg.mxu0
        %6167 = vrot.lane.b32.xlu0 %v4655, 112
        %v6168 = vpop.permute.xlu0 %6167
        %6169 = vrot.lane.b32.xlu0 %v4656, 112
        %v6170 = vpop.permute.xlu0 %6169
        %6171 = vrot.lane.b32.xlu0 %v4657, 112
        %v6172 = vpop.permute.xlu0 %6171
        %6173 = vrot.lane.b32.xlu0 %v4658, 112
        %v6174 = vpop.permute.xlu0 %6173
        %6175 = vrot.lane.b32.xlu0 %v4659, 80
        %v6176 = vpop.permute.xlu0 %6175
        %6177 = vrot.lane.b32.xlu0 %v4660, 80
        %v6178 = vpop.permute.xlu0 %6177
        %6179 = vrot.lane.b32.xlu0 %v4661, 80
        %v6180 = vpop.permute.xlu0 %6179
        %6181 = vrot.lane.b32.xlu0 %v4662, 80
        %v6182 = vpop.permute.xlu0 %6181
        %v6184 = vsel %vm1575, %v6168, 0
        %v6187 = vsel %vm1575, %v6170, 0
        %v6190 = vsel %vm1575, %v6172, 0
        %v6193 = vsel %vm1575, %v6174, 0
        %v6196 = vsel %vm1575, %v6176, 0
        %v6199 = vsel %vm1575, %v6178, 0
        %v6202 = vsel %vm1575, %v6180, 0
        %v6205 = vsel %vm1575, %v6182, 0
        %6207 = vmatprep.subr.bf16.mxu0 0
        %6208 = vmatpush1.bf16.xpose.msra.mxu0 %v6196
        %6209 = vmatprep.subr.bf16.mxu0 0
        %6210 = vmatpush1.bf16.xpose.msra.mxu0 %v6199
        %6211 = vmatprep.subr.bf16.mxu0 0
        %6212 = vmatpush1.bf16.xpose.msra.mxu0 %v6202
        %6213 = vmatprep.subr.bf16.mxu0 0
        %6214 = vmatpush1.bf16.xpose.msra.mxu0 %v6205
        %6215 = vmatprep.subr.bf16.mxu0 0
        %6216 = vmatpush1.bf16.xpose.msra.mxu0 0
        %6217 = vmatprep.subr.bf16.mxu0 0
        %6218 = vmatpush1.bf16.xpose.msra.mxu0 0
        %6219 = vmatprep.subr.bf16.mxu0 0
        %6220 = vmatpush1.bf16.xpose.msra.mxu0 0
        %6221 = vmatprep.subr.bf16.mxu0 0
        %6222 = vmatpush1.bf16.xpose.msra.mxu0 0
        %6223 = vmatprep.subr.bf16.mxu0 0
        %6224 = vmatpush1.bf16.xpose.msra.mxu0 0
        %6225 = vmatprep.subr.bf16.mxu0 0
        %6226 = vmatpush1.bf16.xpose.msra.mxu0 0
        %6227 = vmatprep.subr.bf16.mxu0 0
        %6228 = vmatpush1.bf16.xpose.msra.mxu0 0
        %6229 = vmatprep.subr.bf16.mxu0 0
        %6230 = vmatpush1.bf16.xpose.msra.mxu0 0
        %6231 = vmatprep.subr.bf16.mxu0 0
        %6232 = vmatpush1.bf16.xpose.msra.mxu0 0
        %6233 = vmatprep.subr.bf16.mxu0 0
        %6234 = vmatpush1.bf16.xpose.msra.mxu0 0
        %6235 = vmatprep.subr.bf16.mxu0 0
        %6236 = vmatpush1.bf16.xpose.msra.mxu0 0
        %6237 = vmatprep.subr.bf16.mxu0 0
        %6238 = vmatpush1.bf16.xpose.msra.mxu0 0
        %6239 = vmatprep.mubr.bf16.mxu0 0
        %6240 = vmatmul.mubr.bf16.gmra.mrb[0].mxu0 %v6184
        %v6241 = vpop.f32.mrb[0].mxu0
        %v6242 = vadd.f32 0.0, %v6241
        %v6243 = vpop.f32.mrb[0].mxu0
        %v6244 = vpop.f32.mrb[0].mxu0
        %v6245 = vadd.f32 0.0, %v6244
        %v6246 = vpop.f32.mrb[0].mxu0
        %6247 = vmatprep.mubr.bf16.mxu0 0
        %6248 = vmatmul.mubr.bf16.gmra.mrb[0].mxu0 %v6187
        %v6249 = vpop.f32.mrb[0].mxu0
        %v6250 = vadd.f32 0.0, %v6249
        %v6251 = vpop.f32.mrb[0].mxu0
        %v6252 = vpop.f32.mrb[0].mxu0
        %v6253 = vadd.f32 0.0, %v6252
        %v6254 = vpop.f32.mrb[0].mxu0
        %6255 = vmatprep.mubr.bf16.mxu0 0
        %6256 = vmatmul.mubr.bf16.gmra.mrb[0].mxu0 %v6190
        %v6257 = vpop.f32.mrb[0].mxu0
        %v6258 = vadd.f32 0.0, %v6257
        %v6259 = vpop.f32.mrb[0].mxu0
        %v6260 = vpop.f32.mrb[0].mxu0
        %v6261 = vadd.f32 0.0, %v6260
        %v6262 = vpop.f32.mrb[0].mxu0
        %6263 = vmatprep.mubr.bf16.mxu0 0
        %6264 = vmatmul.mubr.bf16.gmra.mrb[0].mxu0 %v6193
        %v6265 = vpop.f32.mrb[0].mxu0
        %v6266 = vadd.f32 0.0, %v6265
        %v6267 = vpop.f32.mrb[0].mxu0
        %v6268 = vpop.f32.mrb[0].mxu0
        %v6269 = vadd.f32 0.0, %v6268
        %v6270 = vpop.f32.mrb[0].mxu0
        %6271 = vdwg.mxu0
        %6272 = vrot.lane.b32.xlu0 %v4659, 48
        %v6273 = vpop.permute.xlu0 %6272
        %6274 = vrot.lane.b32.xlu0 %v4660, 48
        %v6275 = vpop.permute.xlu0 %6274
        %6276 = vrot.lane.b32.xlu0 %v4661, 48
        %v6277 = vpop.permute.xlu0 %6276
        %6278 = vrot.lane.b32.xlu0 %v4662, 48
        %v6279 = vpop.permute.xlu0 %6278
        %v6281 = vsel %vm1575, %v6273, 0
        %v6284 = vsel %vm1575, %v6275, 0
        %v6287 = vsel %vm1575, %v6277, 0
        %v6290 = vsel %vm1575, %v6279, 0
        %6292 = vmatprep.subr.bf16.mxu0 0
        %6293 = vmatpush1.bf16.xpose.msra.mxu0 %v3226
        %6294 = vmatprep.subr.bf16.mxu0 0
        %6295 = vmatpush1.bf16.xpose.msra.mxu0 0
        %6296 = vmatprep.subr.bf16.mxu0 0
        %6297 = vmatpush1.bf16.xpose.msra.mxu0 0
        %6298 = vmatprep.subr.bf16.mxu0 0
        %6299 = vmatpush1.bf16.xpose.msra.mxu0 0
        %6300 = vmatprep.subr.bf16.mxu0 0
        %6301 = vmatpush1.bf16.xpose.msra.mxu0 0
        %6302 = vmatprep.subr.bf16.mxu0 0
        %6303 = vmatpush1.bf16.xpose.msra.mxu0 0
        %6304 = vmatprep.subr.bf16.mxu0 0
        %6305 = vmatpush1.bf16.xpose.msra.mxu0 0
        %6306 = vmatprep.subr.bf16.mxu0 0
        %6307 = vmatpush1.bf16.xpose.msra.mxu0 0
        %6308 = vmatprep.subr.bf16.mxu0 0
        %6309 = vmatpush1.bf16.xpose.msra.mxu0 0
        %6310 = vmatprep.subr.bf16.mxu0 0
        %6311 = vmatpush1.bf16.xpose.msra.mxu0 0
        %6312 = vmatprep.subr.bf16.mxu0 0
        %6313 = vmatpush1.bf16.xpose.msra.mxu0 0
        %6314 = vmatprep.subr.bf16.mxu0 0
        %6315 = vmatpush1.bf16.xpose.msra.mxu0 0
        %6316 = vmatprep.subr.bf16.mxu0 0
        %6317 = vmatpush1.bf16.xpose.msra.mxu0 0
        %6318 = vmatprep.subr.bf16.mxu0 0
        %6319 = vmatpush1.bf16.xpose.msra.mxu0 0
        %6320 = vmatprep.subr.bf16.mxu0 0
        %6321 = vmatpush1.bf16.xpose.msra.mxu0 0
        %6322 = vmatprep.subr.bf16.mxu0 0
        %6323 = vmatpush1.bf16.xpose.msra.mxu0 0
        %6324 = vmatprep.mubr.bf16.mxu0 0
        %6325 = vmatmul.mubr.bf16.gmra.mrb[0].mxu0 %v6281
        %v6326 = vpop.f32.mrb[0].mxu0
        %v6327 = vadd.f32 0.0, %v6326
        %v6328 = vpop.f32.mrb[0].mxu0
        %v6329 = vpop.f32.mrb[0].mxu0
        %v6330 = vadd.f32 0.0, %v6329
        %v6331 = vpop.f32.mrb[0].mxu0
        %6332 = vmatprep.mubr.bf16.mxu0 0
        %6333 = vmatmul.mubr.bf16.gmra.mrb[0].mxu0 %v6284
        %v6334 = vpop.f32.mrb[0].mxu0
        %v6335 = vadd.f32 0.0, %v6334
        %v6336 = vpop.f32.mrb[0].mxu0
        %v6337 = vpop.f32.mrb[0].mxu0
        %v6338 = vadd.f32 0.0, %v6337
        %v6339 = vpop.f32.mrb[0].mxu0
        %6340 = vmatprep.mubr.bf16.mxu0 0
        %6341 = vmatmul.mubr.bf16.gmra.mrb[0].mxu0 %v6287
        %v6342 = vpop.f32.mrb[0].mxu0
        %v6343 = vadd.f32 0.0, %v6342
        %v6344 = vpop.f32.mrb[0].mxu0
        %v6345 = vpop.f32.mrb[0].mxu0
        %v6346 = vadd.f32 0.0, %v6345
        %v6347 = vpop.f32.mrb[0].mxu0
        %6348 = vmatprep.mubr.bf16.mxu0 0
        %6349 = vmatmul.mubr.bf16.gmra.mrb[0].mxu0 %v6290
        %v6350 = vpop.f32.mrb[0].mxu0
        %v6351 = vadd.f32 0.0, %v6350
        %v6352 = vpop.f32.mrb[0].mxu0
        %v6353 = vpop.f32.mrb[0].mxu0
        %v6354 = vadd.f32 0.0, %v6353
        %v6355 = vpop.f32.mrb[0].mxu0
        %6356 = vdwg.mxu0
        %v6357 = vmul.f32 %v6327, 0.5
        %v6358 = vmul.f32 %v6330, 0.5
        %v6359 = vmul.f32 %v6335, 0.5
        %v6360 = vmul.f32 %v6338, 0.5
        %v6361 = vmul.f32 %v6343, 0.5
        %v6362 = vmul.f32 %v6346, 0.5
        %v6363 = vmul.f32 %v6351, 0.5
        %v6364 = vmul.f32 %v6354, 0.5
        %v6365 = vmul.f32 %v6327, 0.044715
        %v6366 = vmul.f32 %v6330, 0.044715
        %v6367 = vmul.f32 %v6335, 0.044715
        %v6368 = vmul.f32 %v6338, 0.044715
        %v6369 = vmul.f32 %v6343, 0.044715
        %v6370 = vmul.f32 %v6346, 0.044715
        %v6371 = vmul.f32 %v6351, 0.044715
        %v6372 = vmul.f32 %v6354, 0.044715
        %v6373 = vmul.f32 %v6365, %v6327
        %v6374 = vmul.f32 %v6366, %v6330
        %v6375 = vmul.f32 %v6367, %v6335
        %v6376 = vmul.f32 %v6368, %v6338
        %v6377 = vmul.f32 %v6369, %v6343
        %v6378 = vmul.f32 %v6370, %v6346
        %v6379 = vmul.f32 %v6371, %v6351
        %v6380 = vmul.f32 %v6372, %v6354
        %v6381 = vmul.f32 %v6373, %v6327
        %v6382 = vmul.f32 %v6374, %v6330
        %v6383 = vmul.f32 %v6375, %v6335
        %v6384 = vmul.f32 %v6376, %v6338
        %v6385 = vmul.f32 %v6377, %v6343
        %v6386 = vmul.f32 %v6378, %v6346
        %v6387 = vmul.f32 %v6379, %v6351
        %v6388 = vmul.f32 %v6380, %v6354
        %v6389 = vadd.f32 %v6327, %v6381
        %v6390 = vadd.f32 %v6330, %v6382
        %v6391 = vadd.f32 %v6335, %v6383
        %v6392 = vadd.f32 %v6338, %v6384
        %v6393 = vadd.f32 %v6343, %v6385
        %v6394 = vadd.f32 %v6346, %v6386
        %v6395 = vadd.f32 %v6351, %v6387
        %v6396 = vadd.f32 %v6354, %v6388
        %v6397 = vmul.f32 %v6389, 0.7978846
        %v6398 = vmul.f32 %v6390, 0.7978846
        %v6399 = vmul.f32 %v6391, 0.7978846
        %v6400 = vmul.f32 %v6392, 0.7978846
        %v6401 = vmul.f32 %v6393, 0.7978846
        %v6402 = vmul.f32 %v6394, 0.7978846
        %v6403 = vmul.f32 %v6395, 0.7978846
        %v6404 = vmul.f32 %v6396, 0.7978846
        %v6405 = vtanh.pop %v6397
        %v6406 = vtanh.pop %v6398
        %v6407 = vtanh.pop %v6399
        %v6408 = vtanh.pop %v6400
        %v6409 = vtanh.pop %v6401
        %v6410 = vtanh.pop %v6402
        %v6411 = vtanh.pop %v6403
        %v6412 = vtanh.pop %v6404
        %v6413 = vadd.f32 %v6405, 1.0
        %v6414 = vadd.f32 %v6406, 1.0
        %v6415 = vadd.f32 %v6407, 1.0
        %v6416 = vadd.f32 %v6408, 1.0
        %v6417 = vadd.f32 %v6409, 1.0
        %v6418 = vadd.f32 %v6410, 1.0
        %v6419 = vadd.f32 %v6411, 1.0
        %v6420 = vadd.f32 %v6412, 1.0
        %v6421 = vmul.f32 %v6357, %v6413
        %v6422 = vmul.f32 %v6358, %v6414
        %v6423 = vmul.f32 %v6359, %v6415
        %v6424 = vmul.f32 %v6360, %v6416
        %v6425 = vmul.f32 %v6361, %v6417
        %v6426 = vmul.f32 %v6362, %v6418
        %v6427 = vmul.f32 %v6363, %v6419
        %v6428 = vmul.f32 %v6364, %v6420
        %v6429 = vsel %vm1830, %v6421, -inf
        %6430 = vmax.xlane.f32.xlu0 %v6429
        %v6431 = vpop.xlane.xlu0 %6430
        %v6432 = vsel %vm1830, %v6422, -inf
        %6433 = vmax.xlane.f32.xlu0 %v6432
        %v6434 = vpop.xlane.xlu0 %6433
        %v6435 = vsel %vm1830, %v6423, -inf
        %6436 = vmax.xlane.f32.xlu0 %v6435
        %v6437 = vpop.xlane.xlu0 %6436
        %v6438 = vsel %vm1830, %v6424, -inf
        %6439 = vmax.xlane.f32.xlu0 %v6438
        %v6440 = vpop.xlane.xlu0 %6439
        %v6441 = vsel %vm1830, %v6425, -inf
        %6442 = vmax.xlane.f32.xlu0 %v6441
        %v6443 = vpop.xlane.xlu0 %6442
        %v6444 = vsel %vm1830, %v6426, -inf
        %6445 = vmax.xlane.f32.xlu0 %v6444
        %v6446 = vpop.xlane.xlu0 %6445
        %v6447 = vsel %vm1830, %v6427, -inf
        %6448 = vmax.xlane.f32.xlu0 %v6447
        %v6449 = vpop.xlane.xlu0 %6448
        %v6450 = vsel %vm1830, %v6428, -inf
        %6451 = vmax.xlane.f32.xlu0 %v6450
        %v6452 = vpop.xlane.xlu0 %6451
        %v6453 = vsub.f32 %v6421, %v6431
        %v6454 = vsub.f32 %v6422, %v6434
        %v6455 = vsub.f32 %v6423, %v6437
        %v6456 = vsub.f32 %v6424, %v6440
        %v6457 = vsub.f32 %v6425, %v6443
        %v6458 = vsub.f32 %v6426, %v6446
        %v6459 = vsub.f32 %v6427, %v6449
        %v6460 = vsub.f32 %v6428, %v6452
        %v6461 = vmul.f32 %v6453, 1.442695
        %v6462 = vpow.pop %v6461
        %v6463 = vmul.f32 %v6454, 1.442695
        %v6464 = vpow.pop %v6463
        %v6465 = vmul.f32 %v6455, 1.442695
        %v6466 = vpow.pop %v6465
        %v6467 = vmul.f32 %v6456, 1.442695
        %v6468 = vpow.pop %v6467
        %v6469 = vmul.f32 %v6457, 1.442695
        %v6470 = vpow.pop %v6469
        %v6471 = vmul.f32 %v6458, 1.442695
        %v6472 = vpow.pop %v6471
        %v6473 = vmul.f32 %v6459, 1.442695
        %v6474 = vpow.pop %v6473
        %v6475 = vmul.f32 %v6460, 1.442695
        %v6476 = vpow.pop %v6475
        %v6477 = vsel %vm1830, %v6462, 0.0
        %6478 = vadd.xlane.f32.xlu0 %v6477
        %v6479 = vpop.xlane.xlu0 %6478
        %v6480 = vsel %vm1830, %v6464, 0.0
        %6481 = vadd.xlane.f32.xlu0 %v6480
        %v6482 = vpop.xlane.xlu0 %6481
        %v6483 = vsel %vm1830, %v6466, 0.0
        %6484 = vadd.xlane.f32.xlu0 %v6483
        %v6485 = vpop.xlane.xlu0 %6484
        %v6486 = vsel %vm1830, %v6468, 0.0
        %6487 = vadd.xlane.f32.xlu0 %v6486
        %v6488 = vpop.xlane.xlu0 %6487
        %v6489 = vsel %vm1830, %v6470, 0.0
        %6490 = vadd.xlane.f32.xlu0 %v6489
        %v6491 = vpop.xlane.xlu0 %6490
        %v6492 = vsel %vm1830, %v6472, 0.0
        %6493 = vadd.xlane.f32.xlu0 %v6492
        %v6494 = vpop.xlane.xlu0 %6493
        %v6495 = vsel %vm1830, %v6474, 0.0
        %6496 = vadd.xlane.f32.xlu0 %v6495
        %v6497 = vpop.xlane.xlu0 %6496
        %v6498 = vsel %vm1830, %v6476, 0.0
        %6499 = vadd.xlane.f32.xlu0 %v6498
        %v6500 = vpop.xlane.xlu0 %6499
        %v6501 = vrcp.pop %v6479
        %v6502 = vrcp.pop %v6482
        %v6503 = vrcp.pop %v6485
        %v6504 = vrcp.pop %v6488
        %v6505 = vrcp.pop %v6491
        %v6506 = vrcp.pop %v6494
        %v6507 = vrcp.pop %v6497
        %v6508 = vrcp.pop %v6500
        %v6509 = vmul.f32 %v6462, %v6501
        %v6510 = vmul.f32 %v6464, %v6502
        %v6511 = vmul.f32 %v6466, %v6503
        %v6512 = vmul.f32 %v6468, %v6504
        %v6513 = vmul.f32 %v6470, %v6505
        %v6514 = vmul.f32 %v6472, %v6506
        %v6515 = vmul.f32 %v6474, %v6507
        %v6516 = vmul.f32 %v6476, %v6508
        %v6517 = vpack.c.bf16 %v6510, %v6509
        %v6518 = vpack.c.bf16 %v6512, %v6511
        %v6519 = vpack.c.bf16 %v6514, %v6513
        %v6520 = vpack.c.bf16 %v6516, %v6515
        %v6522 = vsel %vm1830, %v6517, 0
        %v6525 = vsel %vm1830, %v6518, 0
        %v6528 = vsel %vm1830, %v6519, 0
        %v6531 = vsel %vm1830, %v6520, 0
        %6533 = vmatprep.subr.bf16.mxu0 0
        %6534 = vmatpush1.bf16.xpose.msra.mxu0 %v6522
        %6535 = vmatprep.subr.bf16.mxu0 0
        %6536 = vmatpush1.bf16.xpose.msra.mxu0 %v6525
        %6537 = vmatprep.subr.bf16.mxu0 0
        %6538 = vmatpush1.bf16.xpose.msra.mxu0 %v6528
        %6539 = vmatprep.subr.bf16.mxu0 0
        %6540 = vmatpush1.bf16.xpose.msra.mxu0 %v6531
        %6541 = vmatprep.subr.bf16.mxu0 0
        %6542 = vmatpush1.bf16.xpose.msra.mxu0 0
        %6543 = vmatprep.subr.bf16.mxu0 0
        %6544 = vmatpush1.bf16.xpose.msra.mxu0 0
        %6545 = vmatprep.subr.bf16.mxu0 0
        %6546 = vmatpush1.bf16.xpose.msra.mxu0 0
        %6547 = vmatprep.subr.bf16.mxu0 0
        %6548 = vmatpush1.bf16.xpose.msra.mxu0 0
        %6549 = vmatprep.subr.bf16.mxu0 0
        %6550 = vmatpush1.bf16.xpose.msra.mxu0 0
        %6551 = vmatprep.subr.bf16.mxu0 0
        %6552 = vmatpush1.bf16.xpose.msra.mxu0 0
        %6553 = vmatprep.subr.bf16.mxu0 0
        %6554 = vmatpush1.bf16.xpose.msra.mxu0 0
        %6555 = vmatprep.subr.bf16.mxu0 0
        %6556 = vmatpush1.bf16.xpose.msra.mxu0 0
        %6557 = vmatprep.subr.bf16.mxu0 0
        %6558 = vmatpush1.bf16.xpose.msra.mxu0 0
        %6559 = vmatprep.subr.bf16.mxu0 0
        %6560 = vmatpush1.bf16.xpose.msra.mxu0 0
        %6561 = vmatprep.subr.bf16.mxu0 0
        %6562 = vmatpush1.bf16.xpose.msra.mxu0 0
        %6563 = vmatprep.subr.bf16.mxu0 0
        %6564 = vmatpush1.bf16.xpose.msra.mxu0 0
        %6565 = vmatprep.mubr.bf16.mxu0 0
        %6566 = vmatmul.mubr.bf16.gmra.mrb[0].mxu0 %v6522
        %v6567 = vpop.f32.mrb[0].mxu0
        %v6568 = vadd.f32 0.0, %v6567
        %v6569 = vpop.f32.mrb[0].mxu0
        %v6570 = vpop.f32.mrb[0].mxu0
        %v6571 = vadd.f32 0.0, %v6570
        %v6572 = vpop.f32.mrb[0].mxu0
        %6573 = vmatprep.mubr.bf16.mxu0 0
        %6574 = vmatmul.mubr.bf16.gmra.mrb[0].mxu0 %v6525
        %v6575 = vpop.f32.mrb[0].mxu0
        %v6576 = vadd.f32 0.0, %v6575
        %v6577 = vpop.f32.mrb[0].mxu0
        %v6578 = vpop.f32.mrb[0].mxu0
        %v6579 = vadd.f32 0.0, %v6578
        %v6580 = vpop.f32.mrb[0].mxu0
        %6581 = vmatprep.mubr.bf16.mxu0 0
        %6582 = vmatmul.mubr.bf16.gmra.mrb[0].mxu0 %v6528
        %v6583 = vpop.f32.mrb[0].mxu0
        %v6584 = vadd.f32 0.0, %v6583
        %v6585 = vpop.f32.mrb[0].mxu0
        %v6586 = vpop.f32.mrb[0].mxu0
        %v6587 = vadd.f32 0.0, %v6586
        %v6588 = vpop.f32.mrb[0].mxu0
        %6589 = vmatprep.mubr.bf16.mxu0 0
        %6590 = vmatmul.mubr.bf16.gmra.mrb[0].mxu0 %v6531
        %v6591 = vpop.f32.mrb[0].mxu0
        %v6592 = vadd.f32 0.0, %v6591
        %v6593 = vpop.f32.mrb[0].mxu0
        %v6594 = vpop.f32.mrb[0].mxu0
        %v6595 = vadd.f32 0.0, %v6594
        %v6596 = vpop.f32.mrb[0].mxu0
        %6597 = vdwg.mxu0
        %v6598 = vmul.f32 %v6242, %v6568
        %v6599 = vmul.f32 %v6245, %v6571
        %v6600 = vmul.f32 %v6250, %v6576
        %v6601 = vmul.f32 %v6253, %v6579
        %v6602 = vmul.f32 %v6258, %v6584
        %v6603 = vmul.f32 %v6261, %v6587
        %v6604 = vmul.f32 %v6266, %v6592
        %v6605 = vmul.f32 %v6269, %v6595
        %v6606 = vsel %vm2008, %v6598, -inf
        %6607 = vmax.xlane.f32.xlu0 %v6606
        %v6608 = vpop.xlane.xlu0 %6607
        %v6609 = vsel %vm2008, %v6599, -inf
        %6610 = vmax.xlane.f32.xlu0 %v6609
        %v6611 = vpop.xlane.xlu0 %6610
        %v6612 = vsel %vm2008, %v6600, -inf
        %6613 = vmax.xlane.f32.xlu0 %v6612
        %v6614 = vpop.xlane.xlu0 %6613
        %v6615 = vsel %vm2008, %v6601, -inf
        %6616 = vmax.xlane.f32.xlu0 %v6615
        %v6617 = vpop.xlane.xlu0 %6616
        %v6618 = vsel %vm2008, %v6602, -inf
        %6619 = vmax.xlane.f32.xlu0 %v6618
        %v6620 = vpop.xlane.xlu0 %6619
        %v6621 = vsel %vm2008, %v6603, -inf
        %6622 = vmax.xlane.f32.xlu0 %v6621
        %v6623 = vpop.xlane.xlu0 %6622
        %v6624 = vsel %vm2008, %v6604, -inf
        %6625 = vmax.xlane.f32.xlu0 %v6624
        %v6626 = vpop.xlane.xlu0 %6625
        %v6627 = vsel %vm2008, %v6605, -inf
        %6628 = vmax.xlane.f32.xlu0 %v6627
        %v6629 = vpop.xlane.xlu0 %6628
        %v6630 = vsub.f32 %v6598, %v6608
        %v6631 = vsub.f32 %v6599, %v6611
        %v6632 = vsub.f32 %v6600, %v6614
        %v6633 = vsub.f32 %v6601, %v6617
        %v6634 = vsub.f32 %v6602, %v6620
        %v6635 = vsub.f32 %v6603, %v6623
        %v6636 = vsub.f32 %v6604, %v6626
        %v6637 = vsub.f32 %v6605, %v6629
        %v6638 = vmul.f32 %v6630, 1.442695
        %v6639 = vpow.pop %v6638
        %v6640 = vmul.f32 %v6631, 1.442695
        %v6641 = vpow.pop %v6640
        %v6642 = vmul.f32 %v6632, 1.442695
        %v6643 = vpow.pop %v6642
        %v6644 = vmul.f32 %v6633, 1.442695
        %v6645 = vpow.pop %v6644
        %v6646 = vmul.f32 %v6634, 1.442695
        %v6647 = vpow.pop %v6646
        %v6648 = vmul.f32 %v6635, 1.442695
        %v6649 = vpow.pop %v6648
        %v6650 = vmul.f32 %v6636, 1.442695
        %v6651 = vpow.pop %v6650
        %v6652 = vmul.f32 %v6637, 1.442695
        %v6653 = vpow.pop %v6652
        %v6654 = vsel %vm2008, %v6639, 0.0
        %6655 = vadd.xlane.f32.xlu0 %v6654
        %v6656 = vpop.xlane.xlu0 %6655
        %v6657 = vsel %vm2008, %v6641, 0.0
        %6658 = vadd.xlane.f32.xlu0 %v6657
        %v6659 = vpop.xlane.xlu0 %6658
        %v6660 = vsel %vm2008, %v6643, 0.0
        %6661 = vadd.xlane.f32.xlu0 %v6660
        %v6662 = vpop.xlane.xlu0 %6661
        %v6663 = vsel %vm2008, %v6645, 0.0
        %6664 = vadd.xlane.f32.xlu0 %v6663
        %v6665 = vpop.xlane.xlu0 %6664
        %v6666 = vsel %vm2008, %v6647, 0.0
        %6667 = vadd.xlane.f32.xlu0 %v6666
        %v6668 = vpop.xlane.xlu0 %6667
        %v6669 = vsel %vm2008, %v6649, 0.0
        %6670 = vadd.xlane.f32.xlu0 %v6669
        %v6671 = vpop.xlane.xlu0 %6670
        %v6672 = vsel %vm2008, %v6651, 0.0
        %6673 = vadd.xlane.f32.xlu0 %v6672
        %v6674 = vpop.xlane.xlu0 %6673
        %v6675 = vsel %vm2008, %v6653, 0.0
        %6676 = vadd.xlane.f32.xlu0 %v6675
        %v6677 = vpop.xlane.xlu0 %6676
        %v6678 = vrcp.pop %v6656
        %v6679 = vrcp.pop %v6659
        %v6680 = vrcp.pop %v6662
        %v6681 = vrcp.pop %v6665
        %v6682 = vrcp.pop %v6668
        %v6683 = vrcp.pop %v6671
        %v6684 = vrcp.pop %v6674
        %v6685 = vrcp.pop %v6677
        %v6686 = vmul.f32 %v6639, %v6678
        %v6687 = vmul.f32 %v6641, %v6679
        %v6688 = vmul.f32 %v6643, %v6680
        %v6689 = vmul.f32 %v6645, %v6681
        %v6690 = vmul.f32 %v6647, %v6682
        %v6691 = vmul.f32 %v6649, %v6683
        %v6692 = vmul.f32 %v6651, %v6684
        %v6693 = vmul.f32 %v6653, %v6685
        %s6694 = sld [smem:[#allocation8 + %s3630]]
        %s6695 = ssub.f32 1.0, %s6694
        %v6696 = vstv %s6695
        %v6697 = vmul.f32 %v6696, %v6686
        %v6698 = vmul.f32 %v6696, %v6687
        %v6699 = vmul.f32 %v6696, %v6688
        %v6700 = vmul.f32 %v6696, %v6689
        %v6701 = vmul.f32 %v6696, %v6690
        %v6702 = vmul.f32 %v6696, %v6691
        %v6703 = vmul.f32 %v6696, %v6692
        %v6704 = vmul.f32 %v6696, %v6693
        %v6705 = vstv %s6694
        %v6706 = vmul.f32 %v6705, %v6568
        %v6707 = vmul.f32 %v6705, %v6571
        %v6708 = vmul.f32 %v6705, %v6576
        %v6709 = vmul.f32 %v6705, %v6579
        %v6710 = vmul.f32 %v6705, %v6584
        %v6711 = vmul.f32 %v6705, %v6587
        %v6712 = vmul.f32 %v6705, %v6592
        %v6713 = vmul.f32 %v6705, %v6595
        %v6714 = vadd.f32 %v6697, %v6706
        %v6715 = vadd.f32 %v6698, %v6707
        %v6716 = vadd.f32 %v6699, %v6708
        %v6717 = vadd.f32 %v6700, %v6709
        %v6718 = vadd.f32 %v6701, %v6710
        %v6719 = vadd.f32 %v6702, %v6711
        %v6720 = vadd.f32 %v6703, %v6712
        %v6721 = vadd.f32 %v6704, %v6713
        %v6722 = vsel %vm2008, %v6714, 0.0
        %v6723 = vsel %vm2008, %v6715, 0.0
        %v6724 = vadd.f32 %v6722, %v6723
        %v6725 = vsel %vm2008, %v6716, 0.0
        %v6726 = vadd.f32 %v6724, %v6725
        %v6727 = vsel %vm2008, %v6717, 0.0
        %v6728 = vadd.f32 %v6726, %v6727
        %v6729 = vsel %vm2008, %v6718, 0.0
        %v6730 = vadd.f32 %v6728, %v6729
        %v6731 = vsel %vm2008, %v6719, 0.0
        %v6732 = vadd.f32 %v6730, %v6731
        %v6733 = vsel %vm2008, %v6720, 0.0
        %v6734 = vadd.f32 %v6732, %v6733
        %v6735 = vsel %vm2008, %v6721, 0.0
        %v6736 = vadd.f32 %v6734, %v6735
        %v6737 = vrot.slane %v6736, 4
        %v6738 = vadd.f32 %v6736, %v6737
        %v6739 = vrot.slane %v6738, 2
        %v6740 = vadd.f32 %v6738, %v6739
        %v6741 = vrot.slane %v6740, 1
        %v6742 = vadd.f32 %v6740, %v6741
        %v6743 = vadd.f32 %v6742, 1e-08
        %v6744 = vrcp.pop %v6743
        %v6745 = vmul.f32 %v6714, %v6744
        %v6746 = vmul.f32 %v6715, %v6744
        %v6747 = vmul.f32 %v6716, %v6744
        %v6748 = vmul.f32 %v6717, %v6744
        %v6749 = vmul.f32 %v6718, %v6744
        %v6750 = vmul.f32 %v6719, %v6744
        %v6751 = vmul.f32 %v6720, %v6744
        %v6752 = vmul.f32 %v6721, %v6744
        %v6753 = vpack.c.bf16 %v6746, %v6745
        %v6754 = vpack.c.bf16 %v6748, %v6747
        %v6755 = vpack.c.bf16 %v6750, %v6749
        %v6756 = vpack.c.bf16 %v6752, %v6751
        %v6762 = vsel %vm2008, %v6753, 0
        %v6765 = vsel %vm2008, %v6754, 0
        %v6768 = vsel %vm2008, %v6755, 0
        %v6771 = vsel %vm2008, %v6756, 0
        %6773 = vmatprep.subr.bf16.mxu0 0
        %6774 = vmatpush1.bf16.msra.mxu0 %v6273
        %6775 = vmatprep.subr.bf16.mxu0 0
        %6776 = vmatpush1.bf16.msra.mxu0 %v6275
        %6777 = vmatprep.subr.bf16.mxu0 0
        %6778 = vmatpush1.bf16.msra.mxu0 %v6277
        %6779 = vmatprep.subr.bf16.mxu0 0
        %6780 = vmatpush1.bf16.msra.mxu0 %v6279
        %6781 = vmatprep.subr.bf16.mxu0 0
        %6782 = vmatpush1.bf16.msra.mxu0 0
        %6783 = vmatprep.subr.bf16.mxu0 0
        %6784 = vmatpush1.bf16.msra.mxu0 0
        %6785 = vmatprep.subr.bf16.mxu0 0
        %6786 = vmatpush1.bf16.msra.mxu0 0
        %6787 = vmatprep.subr.bf16.mxu0 0
        %6788 = vmatpush1.bf16.msra.mxu0 0
        %6789 = vmatprep.subr.bf16.mxu0 0
        %6790 = vmatpush1.bf16.msra.mxu0 0
        %6791 = vmatprep.subr.bf16.mxu0 0
        %6792 = vmatpush1.bf16.msra.mxu0 0
        %6793 = vmatprep.subr.bf16.mxu0 0
        %6794 = vmatpush1.bf16.msra.mxu0 0
        %6795 = vmatprep.subr.bf16.mxu0 0
        %6796 = vmatpush1.bf16.msra.mxu0 0
        %6797 = vmatprep.subr.bf16.mxu0 0
        %6798 = vmatpush1.bf16.msra.mxu0 0
        %6799 = vmatprep.subr.bf16.mxu0 0
        %6800 = vmatpush1.bf16.msra.mxu0 0
        %6801 = vmatprep.subr.bf16.mxu0 0
        %6802 = vmatpush1.bf16.msra.mxu0 0
        %6803 = vmatprep.subr.bf16.mxu0 0
        %6804 = vmatpush1.bf16.msra.mxu0 0
        %6805 = vmatprep.mubr.bf16.mxu0 0
        %6806 = vmatmul.mubr.bf16.gmra.mrb[0].mxu0 %v6762
        %v6807 = vpop.f32.mrb[0].mxu0
        %v6808 = vadd.f32 0.0, %v6807
        %v6809 = vpop.f32.mrb[0].mxu0
        %v6810 = vpop.f32.mrb[0].mxu0
        %v6811 = vadd.f32 0.0, %v6810
        %v6812 = vpop.f32.mrb[0].mxu0
        %6813 = vmatprep.mubr.bf16.mxu0 0
        %6814 = vmatmul.mubr.bf16.gmra.mrb[0].mxu0 %v6765
        %v6815 = vpop.f32.mrb[0].mxu0
        %v6816 = vadd.f32 0.0, %v6815
        %v6817 = vpop.f32.mrb[0].mxu0
        %v6818 = vpop.f32.mrb[0].mxu0
        %v6819 = vadd.f32 0.0, %v6818
        %v6820 = vpop.f32.mrb[0].mxu0
        %6821 = vmatprep.mubr.bf16.mxu0 0
        %6822 = vmatmul.mubr.bf16.gmra.mrb[0].mxu0 %v6768
        %v6823 = vpop.f32.mrb[0].mxu0
        %v6824 = vadd.f32 0.0, %v6823
        %v6825 = vpop.f32.mrb[0].mxu0
        %v6826 = vpop.f32.mrb[0].mxu0
        %v6827 = vadd.f32 0.0, %v6826
        %v6828 = vpop.f32.mrb[0].mxu0
        %6829 = vmatprep.mubr.bf16.mxu0 0
        %6830 = vmatmul.mubr.bf16.gmra.mrb[0].mxu0 %v6771
        %v6831 = vpop.f32.mrb[0].mxu0
        %v6832 = vadd.f32 0.0, %v6831
        %v6833 = vpop.f32.mrb[0].mxu0
        %v6834 = vpop.f32.mrb[0].mxu0
        %v6835 = vadd.f32 0.0, %v6834
        %v6836 = vpop.f32.mrb[0].mxu0
        %6837 = vdwg.mxu0
        %v6838 = vpack.c.bf16 %v6811, %v6808
        %v6839 = vpack.c.bf16 %v6819, %v6816
        %v6840 = vpack.c.bf16 %v6827, %v6824
        %v6841 = vpack.c.bf16 %v6835, %v6832
        %v6843 = vsel %vm1575, %v6838, 0
        %v6846 = vsel %vm1575, %v6839, 0
        %v6849 = vsel %vm1575, %v6840, 0
        %v6852 = vsel %vm1575, %v6841, 0
        %6854 = vmatprep.subr.bf16.mxu0 0
        %6855 = vmatpush1.bf16.msra.mxu0 %v3792
        %6856 = vmatprep.subr.bf16.mxu0 0
        %6857 = vmatpush1.bf16.msra.mxu0 0
        %6858 = vmatprep.subr.bf16.mxu0 0
        %6859 = vmatpush1.bf16.msra.mxu0 0
        %6860 = vmatprep.subr.bf16.mxu0 0
        %6861 = vmatpush1.bf16.msra.mxu0 0
        %6862 = vmatprep.subr.bf16.mxu0 0
        %6863 = vmatpush1.bf16.msra.mxu0 0
        %6864 = vmatprep.subr.bf16.mxu0 0
        %6865 = vmatpush1.bf16.msra.mxu0 0
        %6866 = vmatprep.subr.bf16.mxu0 0
        %6867 = vmatpush1.bf16.msra.mxu0 0
        %6868 = vmatprep.subr.bf16.mxu0 0
        %6869 = vmatpush1.bf16.msra.mxu0 0
        %6870 = vmatprep.subr.bf16.mxu0 0
        %6871 = vmatpush1.bf16.msra.mxu0 0
        %6872 = vmatprep.subr.bf16.mxu0 0
        %6873 = vmatpush1.bf16.msra.mxu0 0
        %6874 = vmatprep.subr.bf16.mxu0 0
        %6875 = vmatpush1.bf16.msra.mxu0 0
        %6876 = vmatprep.subr.bf16.mxu0 0
        %6877 = vmatpush1.bf16.msra.mxu0 0
        %6878 = vmatprep.subr.bf16.mxu0 0
        %6879 = vmatpush1.bf16.msra.mxu0 0
        %6880 = vmatprep.subr.bf16.mxu0 0
        %6881 = vmatpush1.bf16.msra.mxu0 0
        %6882 = vmatprep.subr.bf16.mxu0 0
        %6883 = vmatpush1.bf16.msra.mxu0 0
        %6884 = vmatprep.subr.bf16.mxu0 0
        %6885 = vmatpush1.bf16.msra.mxu0 0
        %6886 = vmatprep.mubr.bf16.mxu0 0
        %6887 = vmatmul.mubr.bf16.gmra.mrb[0].mxu0 %v6843
        %v6888 = vpop.f32.mrb[0].mxu0
        %v6889 = vadd.f32 0.0, %v6888
        %v6890 = vpop.f32.mrb[0].mxu0
        %v6891 = vpop.f32.mrb[0].mxu0
        %v6892 = vadd.f32 0.0, %v6891
        %v6893 = vpop.f32.mrb[0].mxu0
        %6894 = vmatprep.mubr.bf16.mxu0 0
        %6895 = vmatmul.mubr.bf16.gmra.mrb[0].mxu0 %v6846
        %v6896 = vpop.f32.mrb[0].mxu0
        %v6897 = vadd.f32 0.0, %v6896
        %v6898 = vpop.f32.mrb[0].mxu0
        %v6899 = vpop.f32.mrb[0].mxu0
        %v6900 = vadd.f32 0.0, %v6899
        %v6901 = vpop.f32.mrb[0].mxu0
        %6902 = vmatprep.mubr.bf16.mxu0 0
        %6903 = vmatmul.mubr.bf16.gmra.mrb[0].mxu0 %v6849
        %v6904 = vpop.f32.mrb[0].mxu0
        %v6905 = vadd.f32 0.0, %v6904
        %v6906 = vpop.f32.mrb[0].mxu0
        %v6907 = vpop.f32.mrb[0].mxu0
        %v6908 = vadd.f32 0.0, %v6907
        %v6909 = vpop.f32.mrb[0].mxu0
        %6910 = vmatprep.mubr.bf16.mxu0 0
        %6911 = vmatmul.mubr.bf16.gmra.mrb[0].mxu0 %v6852
        %v6912 = vpop.f32.mrb[0].mxu0
        %v6913 = vadd.f32 0.0, %v6912
        %v6914 = vpop.f32.mrb[0].mxu0
        %v6915 = vpop.f32.mrb[0].mxu0
        %v6916 = vadd.f32 0.0, %v6915
        %v6917 = vpop.f32.mrb[0].mxu0
        %6918 = vdwg.mxu0
        %v6919 = vadd.f32 %v6137, %v6889
        %v6920 = vadd.f32 %v6140, %v6892
        %v6921 = vadd.f32 %v6145, %v6897
        %v6922 = vadd.f32 %v6148, %v6900
        %v6923 = vadd.f32 %v6153, %v6905
        %v6924 = vadd.f32 %v6156, %v6908
        %v6925 = vadd.f32 %v6161, %v6913
        %v6926 = vadd.f32 %v6164, %v6916
        %6927 = vrot.lane.b32.xlu0 %v4655, 104
        %v6928 = vpop.permute.xlu0 %6927
        %6929 = vrot.lane.b32.xlu0 %v4656, 104
        %v6930 = vpop.permute.xlu0 %6929
        %6931 = vrot.lane.b32.xlu0 %v4657, 104
        %v6932 = vpop.permute.xlu0 %6931
        %6933 = vrot.lane.b32.xlu0 %v4658, 104
        %v6934 = vpop.permute.xlu0 %6933
        %6935 = vrot.lane.b32.xlu0 %v4659, 72
        %v6936 = vpop.permute.xlu0 %6935
        %6937 = vrot.lane.b32.xlu0 %v4660, 72
        %v6938 = vpop.permute.xlu0 %6937
        %6939 = vrot.lane.b32.xlu0 %v4661, 72
        %v6940 = vpop.permute.xlu0 %6939
        %6941 = vrot.lane.b32.xlu0 %v4662, 72
        %v6942 = vpop.permute.xlu0 %6941
        %v6944 = vsel %vm1575, %v6928, 0
        %v6947 = vsel %vm1575, %v6930, 0
        %v6950 = vsel %vm1575, %v6932, 0
        %v6953 = vsel %vm1575, %v6934, 0
        %v6956 = vsel %vm1575, %v6936, 0
        %v6959 = vsel %vm1575, %v6938, 0
        %v6962 = vsel %vm1575, %v6940, 0
        %v6965 = vsel %vm1575, %v6942, 0
        %6967 = vmatprep.subr.bf16.mxu0 0
        %6968 = vmatpush1.bf16.xpose.msra.mxu0 %v6956
        %6969 = vmatprep.subr.bf16.mxu0 0
        %6970 = vmatpush1.bf16.xpose.msra.mxu0 %v6959
        %6971 = vmatprep.subr.bf16.mxu0 0
        %6972 = vmatpush1.bf16.xpose.msra.mxu0 %v6962
        %6973 = vmatprep.subr.bf16.mxu0 0
        %6974 = vmatpush1.bf16.xpose.msra.mxu0 %v6965
        %6975 = vmatprep.subr.bf16.mxu0 0
        %6976 = vmatpush1.bf16.xpose.msra.mxu0 0
        %6977 = vmatprep.subr.bf16.mxu0 0
        %6978 = vmatpush1.bf16.xpose.msra.mxu0 0
        %6979 = vmatprep.subr.bf16.mxu0 0
        %6980 = vmatpush1.bf16.xpose.msra.mxu0 0
        %6981 = vmatprep.subr.bf16.mxu0 0
        %6982 = vmatpush1.bf16.xpose.msra.mxu0 0
        %6983 = vmatprep.subr.bf16.mxu0 0
        %6984 = vmatpush1.bf16.xpose.msra.mxu0 0
        %6985 = vmatprep.subr.bf16.mxu0 0
        %6986 = vmatpush1.bf16.xpose.msra.mxu0 0
        %6987 = vmatprep.subr.bf16.mxu0 0
        %6988 = vmatpush1.bf16.xpose.msra.mxu0 0
        %6989 = vmatprep.subr.bf16.mxu0 0
        %6990 = vmatpush1.bf16.xpose.msra.mxu0 0
        %6991 = vmatprep.subr.bf16.mxu0 0
        %6992 = vmatpush1.bf16.xpose.msra.mxu0 0
        %6993 = vmatprep.subr.bf16.mxu0 0
        %6994 = vmatpush1.bf16.xpose.msra.mxu0 0
        %6995 = vmatprep.subr.bf16.mxu0 0
        %6996 = vmatpush1.bf16.xpose.msra.mxu0 0
        %6997 = vmatprep.subr.bf16.mxu0 0
        %6998 = vmatpush1.bf16.xpose.msra.mxu0 0
        %6999 = vmatprep.mubr.bf16.mxu0 0
        %7000 = vmatmul.mubr.bf16.gmra.mrb[0].mxu0 %v6944
        %v7001 = vpop.f32.mrb[0].mxu0
        %v7002 = vadd.f32 0.0, %v7001
        %v7003 = vpop.f32.mrb[0].mxu0
        %v7004 = vpop.f32.mrb[0].mxu0
        %v7005 = vadd.f32 0.0, %v7004
        %v7006 = vpop.f32.mrb[0].mxu0
        %7007 = vmatprep.mubr.bf16.mxu0 0
        %7008 = vmatmul.mubr.bf16.gmra.mrb[0].mxu0 %v6947
        %v7009 = vpop.f32.mrb[0].mxu0
        %v7010 = vadd.f32 0.0, %v7009
        %v7011 = vpop.f32.mrb[0].mxu0
        %v7012 = vpop.f32.mrb[0].mxu0
        %v7013 = vadd.f32 0.0, %v7012
        %v7014 = vpop.f32.mrb[0].mxu0
        %7015 = vmatprep.mubr.bf16.mxu0 0
        %7016 = vmatmul.mubr.bf16.gmra.mrb[0].mxu0 %v6950
        %v7017 = vpop.f32.mrb[0].mxu0
        %v7018 = vadd.f32 0.0, %v7017
        %v7019 = vpop.f32.mrb[0].mxu0
        %v7020 = vpop.f32.mrb[0].mxu0
        %v7021 = vadd.f32 0.0, %v7020
        %v7022 = vpop.f32.mrb[0].mxu0
        %7023 = vmatprep.mubr.bf16.mxu0 0
        %7024 = vmatmul.mubr.bf16.gmra.mrb[0].mxu0 %v6953
        %v7025 = vpop.f32.mrb[0].mxu0
        %v7026 = vadd.f32 0.0, %v7025
        %v7027 = vpop.f32.mrb[0].mxu0
        %v7028 = vpop.f32.mrb[0].mxu0
        %v7029 = vadd.f32 0.0, %v7028
        %v7030 = vpop.f32.mrb[0].mxu0
        %7031 = vdwg.mxu0
        %7032 = vrot.lane.b32.xlu0 %v4659, 40
        %v7033 = vpop.permute.xlu0 %7032
        %7034 = vrot.lane.b32.xlu0 %v4660, 40
        %v7035 = vpop.permute.xlu0 %7034
        %7036 = vrot.lane.b32.xlu0 %v4661, 40
        %v7037 = vpop.permute.xlu0 %7036
        %7038 = vrot.lane.b32.xlu0 %v4662, 40
        %v7039 = vpop.permute.xlu0 %7038
        %v7041 = vsel %vm1575, %v7033, 0
        %v7044 = vsel %vm1575, %v7035, 0
        %v7047 = vsel %vm1575, %v7037, 0
        %v7050 = vsel %vm1575, %v7039, 0
        %7052 = vmatprep.subr.bf16.mxu0 0
        %7053 = vmatpush1.bf16.xpose.msra.mxu0 %v3998
        %7054 = vmatprep.subr.bf16.mxu0 0
        %7055 = vmatpush1.bf16.xpose.msra.mxu0 0
        %7056 = vmatprep.subr.bf16.mxu0 0
        %7057 = vmatpush1.bf16.xpose.msra.mxu0 0
        %7058 = vmatprep.subr.bf16.mxu0 0
        %7059 = vmatpush1.bf16.xpose.msra.mxu0 0
        %7060 = vmatprep.subr.bf16.mxu0 0
        %7061 = vmatpush1.bf16.xpose.msra.mxu0 0
        %7062 = vmatprep.subr.bf16.mxu0 0
        %7063 = vmatpush1.bf16.xpose.msra.mxu0 0
        %7064 = vmatprep.subr.bf16.mxu0 0
        %7065 = vmatpush1.bf16.xpose.msra.mxu0 0
        %7066 = vmatprep.subr.bf16.mxu0 0
        %7067 = vmatpush1.bf16.xpose.msra.mxu0 0
        %7068 = vmatprep.subr.bf16.mxu0 0
        %7069 = vmatpush1.bf16.xpose.msra.mxu0 0
        %7070 = vmatprep.subr.bf16.mxu0 0
        %7071 = vmatpush1.bf16.xpose.msra.mxu0 0
        %7072 = vmatprep.subr.bf16.mxu0 0
        %7073 = vmatpush1.bf16.xpose.msra.mxu0 0
        %7074 = vmatprep.subr.bf16.mxu0 0
        %7075 = vmatpush1.bf16.xpose.msra.mxu0 0
        %7076 = vmatprep.subr.bf16.mxu0 0
        %7077 = vmatpush1.bf16.xpose.msra.mxu0 0
        %7078 = vmatprep.subr.bf16.mxu0 0
        %7079 = vmatpush1.bf16.xpose.msra.mxu0 0
        %7080 = vmatprep.subr.bf16.mxu0 0
        %7081 = vmatpush1.bf16.xpose.msra.mxu0 0
        %7082 = vmatprep.subr.bf16.mxu0 0
        %7083 = vmatpush1.bf16.xpose.msra.mxu0 0
        %7084 = vmatprep.mubr.bf16.mxu0 0
        %7085 = vmatmul.mubr.bf16.gmra.mrb[0].mxu0 %v7041
        %v7086 = vpop.f32.mrb[0].mxu0
        %v7087 = vadd.f32 0.0, %v7086
        %v7088 = vpop.f32.mrb[0].mxu0
        %v7089 = vpop.f32.mrb[0].mxu0
        %v7090 = vadd.f32 0.0, %v7089
        %v7091 = vpop.f32.mrb[0].mxu0
        %7092 = vmatprep.mubr.bf16.mxu0 0
        %7093 = vmatmul.mubr.bf16.gmra.mrb[0].mxu0 %v7044
        %v7094 = vpop.f32.mrb[0].mxu0
        %v7095 = vadd.f32 0.0, %v7094
        %v7096 = vpop.f32.mrb[0].mxu0
        %v7097 = vpop.f32.mrb[0].mxu0
        %v7098 = vadd.f32 0.0, %v7097
        %v7099 = vpop.f32.mrb[0].mxu0
        %7100 = vmatprep.mubr.bf16.mxu0 0
        %7101 = vmatmul.mubr.bf16.gmra.mrb[0].mxu0 %v7047
        %v7102 = vpop.f32.mrb[0].mxu0
        %v7103 = vadd.f32 0.0, %v7102
        %v7104 = vpop.f32.mrb[0].mxu0
        %v7105 = vpop.f32.mrb[0].mxu0
        %v7106 = vadd.f32 0.0, %v7105
        %v7107 = vpop.f32.mrb[0].mxu0
        %7108 = vmatprep.mubr.bf16.mxu0 0
        %7109 = vmatmul.mubr.bf16.gmra.mrb[0].mxu0 %v7050
        %v7110 = vpop.f32.mrb[0].mxu0
        %v7111 = vadd.f32 0.0, %v7110
        %v7112 = vpop.f32.mrb[0].mxu0
        %v7113 = vpop.f32.mrb[0].mxu0
        %v7114 = vadd.f32 0.0, %v7113
        %v7115 = vpop.f32.mrb[0].mxu0
        %7116 = vdwg.mxu0
        %v7117 = vmul.f32 %v7087, 0.5
        %v7118 = vmul.f32 %v7090, 0.5
        %v7119 = vmul.f32 %v7095, 0.5
        %v7120 = vmul.f32 %v7098, 0.5
        %v7121 = vmul.f32 %v7103, 0.5
        %v7122 = vmul.f32 %v7106, 0.5
        %v7123 = vmul.f32 %v7111, 0.5
        %v7124 = vmul.f32 %v7114, 0.5
        %v7125 = vmul.f32 %v7087, 0.044715
        %v7126 = vmul.f32 %v7090, 0.044715
        %v7127 = vmul.f32 %v7095, 0.044715
        %v7128 = vmul.f32 %v7098, 0.044715
        %v7129 = vmul.f32 %v7103, 0.044715
        %v7130 = vmul.f32 %v7106, 0.044715
        %v7131 = vmul.f32 %v7111, 0.044715
        %v7132 = vmul.f32 %v7114, 0.044715
        %v7133 = vmul.f32 %v7125, %v7087
        %v7134 = vmul.f32 %v7126, %v7090
        %v7135 = vmul.f32 %v7127, %v7095
        %v7136 = vmul.f32 %v7128, %v7098
        %v7137 = vmul.f32 %v7129, %v7103
        %v7138 = vmul.f32 %v7130, %v7106
        %v7139 = vmul.f32 %v7131, %v7111
        %v7140 = vmul.f32 %v7132, %v7114
        %v7141 = vmul.f32 %v7133, %v7087
        %v7142 = vmul.f32 %v7134, %v7090
        %v7143 = vmul.f32 %v7135, %v7095
        %v7144 = vmul.f32 %v7136, %v7098
        %v7145 = vmul.f32 %v7137, %v7103
        %v7146 = vmul.f32 %v7138, %v7106
        %v7147 = vmul.f32 %v7139, %v7111
        %v7148 = vmul.f32 %v7140, %v7114
        %v7149 = vadd.f32 %v7087, %v7141
        %v7150 = vadd.f32 %v7090, %v7142
        %v7151 = vadd.f32 %v7095, %v7143
        %v7152 = vadd.f32 %v7098, %v7144
        %v7153 = vadd.f32 %v7103, %v7145
        %v7154 = vadd.f32 %v7106, %v7146
        %v7155 = vadd.f32 %v7111, %v7147
        %v7156 = vadd.f32 %v7114, %v7148
        %v7157 = vmul.f32 %v7149, 0.7978846
        %v7158 = vmul.f32 %v7150, 0.7978846
        %v7159 = vmul.f32 %v7151, 0.7978846
        %v7160 = vmul.f32 %v7152, 0.7978846
        %v7161 = vmul.f32 %v7153, 0.7978846
        %v7162 = vmul.f32 %v7154, 0.7978846
        %v7163 = vmul.f32 %v7155, 0.7978846
        %v7164 = vmul.f32 %v7156, 0.7978846
        %v7165 = vtanh.pop %v7157
        %v7166 = vtanh.pop %v7158
        %v7167 = vtanh.pop %v7159
        %v7168 = vtanh.pop %v7160
        %v7169 = vtanh.pop %v7161
        %v7170 = vtanh.pop %v7162
        %v7171 = vtanh.pop %v7163
        %v7172 = vtanh.pop %v7164
        %v7173 = vadd.f32 %v7165, 1.0
        %v7174 = vadd.f32 %v7166, 1.0
        %v7175 = vadd.f32 %v7167, 1.0
        %v7176 = vadd.f32 %v7168, 1.0
        %v7177 = vadd.f32 %v7169, 1.0
        %v7178 = vadd.f32 %v7170, 1.0
        %v7179 = vadd.f32 %v7171, 1.0
        %v7180 = vadd.f32 %v7172, 1.0
        %v7181 = vmul.f32 %v7117, %v7173
        %v7182 = vmul.f32 %v7118, %v7174
        %v7183 = vmul.f32 %v7119, %v7175
        %v7184 = vmul.f32 %v7120, %v7176
        %v7185 = vmul.f32 %v7121, %v7177
        %v7186 = vmul.f32 %v7122, %v7178
        %v7187 = vmul.f32 %v7123, %v7179
        %v7188 = vmul.f32 %v7124, %v7180
        %v7189 = vsel %vm1830, %v7181, -inf
        %7190 = vmax.xlane.f32.xlu0 %v7189
        %v7191 = vpop.xlane.xlu0 %7190
        %v7192 = vsel %vm1830, %v7182, -inf
        %7193 = vmax.xlane.f32.xlu0 %v7192
        %v7194 = vpop.xlane.xlu0 %7193
        %v7195 = vsel %vm1830, %v7183, -inf
        %7196 = vmax.xlane.f32.xlu0 %v7195
        %v7197 = vpop.xlane.xlu0 %7196
        %v7198 = vsel %vm1830, %v7184, -inf
        %7199 = vmax.xlane.f32.xlu0 %v7198
        %v7200 = vpop.xlane.xlu0 %7199
        %v7201 = vsel %vm1830, %v7185, -inf
        %7202 = vmax.xlane.f32.xlu0 %v7201
        %v7203 = vpop.xlane.xlu0 %7202
        %v7204 = vsel %vm1830, %v7186, -inf
        %7205 = vmax.xlane.f32.xlu0 %v7204
        %v7206 = vpop.xlane.xlu0 %7205
        %v7207 = vsel %vm1830, %v7187, -inf
        %7208 = vmax.xlane.f32.xlu0 %v7207
        %v7209 = vpop.xlane.xlu0 %7208
        %v7210 = vsel %vm1830, %v7188, -inf
        %7211 = vmax.xlane.f32.xlu0 %v7210
        %v7212 = vpop.xlane.xlu0 %7211
        %v7213 = vsub.f32 %v7181, %v7191
        %v7214 = vsub.f32 %v7182, %v7194
        %v7215 = vsub.f32 %v7183, %v7197
        %v7216 = vsub.f32 %v7184, %v7200
        %v7217 = vsub.f32 %v7185, %v7203
        %v7218 = vsub.f32 %v7186, %v7206
        %v7219 = vsub.f32 %v7187, %v7209
        %v7220 = vsub.f32 %v7188, %v7212
        %v7221 = vmul.f32 %v7213, 1.442695
        %v7222 = vpow.pop %v7221
        %v7223 = vmul.f32 %v7214, 1.442695
        %v7224 = vpow.pop %v7223
        %v7225 = vmul.f32 %v7215, 1.442695
        %v7226 = vpow.pop %v7225
        %v7227 = vmul.f32 %v7216, 1.442695
        %v7228 = vpow.pop %v7227
        %v7229 = vmul.f32 %v7217, 1.442695
        %v7230 = vpow.pop %v7229
        %v7231 = vmul.f32 %v7218, 1.442695
        %v7232 = vpow.pop %v7231
        %v7233 = vmul.f32 %v7219, 1.442695
        %v7234 = vpow.pop %v7233
        %v7235 = vmul.f32 %v7220, 1.442695
        %v7236 = vpow.pop %v7235
        %v7237 = vsel %vm1830, %v7222, 0.0
        %7238 = vadd.xlane.f32.xlu0 %v7237
        %v7239 = vpop.xlane.xlu0 %7238
        %v7240 = vsel %vm1830, %v7224, 0.0
        %7241 = vadd.xlane.f32.xlu0 %v7240
        %v7242 = vpop.xlane.xlu0 %7241
        %v7243 = vsel %vm1830, %v7226, 0.0
        %7244 = vadd.xlane.f32.xlu0 %v7243
        %v7245 = vpop.xlane.xlu0 %7244
        %v7246 = vsel %vm1830, %v7228, 0.0
        %7247 = vadd.xlane.f32.xlu0 %v7246
        %v7248 = vpop.xlane.xlu0 %7247
        %v7249 = vsel %vm1830, %v7230, 0.0
        %7250 = vadd.xlane.f32.xlu0 %v7249
        %v7251 = vpop.xlane.xlu0 %7250
        %v7252 = vsel %vm1830, %v7232, 0.0
        %7253 = vadd.xlane.f32.xlu0 %v7252
        %v7254 = vpop.xlane.xlu0 %7253
        %v7255 = vsel %vm1830, %v7234, 0.0
        %7256 = vadd.xlane.f32.xlu0 %v7255
        %v7257 = vpop.xlane.xlu0 %7256
        %v7258 = vsel %vm1830, %v7236, 0.0
        %7259 = vadd.xlane.f32.xlu0 %v7258
        %v7260 = vpop.xlane.xlu0 %7259
        %v7261 = vrcp.pop %v7239
        %v7262 = vrcp.pop %v7242
        %v7263 = vrcp.pop %v7245
        %v7264 = vrcp.pop %v7248
        %v7265 = vrcp.pop %v7251
        %v7266 = vrcp.pop %v7254
        %v7267 = vrcp.pop %v7257
        %v7268 = vrcp.pop %v7260
        %v7269 = vmul.f32 %v7222, %v7261
        %v7270 = vmul.f32 %v7224, %v7262
        %v7271 = vmul.f32 %v7226, %v7263
        %v7272 = vmul.f32 %v7228, %v7264
        %v7273 = vmul.f32 %v7230, %v7265
        %v7274 = vmul.f32 %v7232, %v7266
        %v7275 = vmul.f32 %v7234, %v7267
        %v7276 = vmul.f32 %v7236, %v7268
        %v7277 = vpack.c.bf16 %v7270, %v7269
        %v7278 = vpack.c.bf16 %v7272, %v7271
        %v7279 = vpack.c.bf16 %v7274, %v7273
        %v7280 = vpack.c.bf16 %v7276, %v7275
        %v7282 = vsel %vm1830, %v7277, 0
        %v7285 = vsel %vm1830, %v7278, 0
        %v7288 = vsel %vm1830, %v7279, 0
        %v7291 = vsel %vm1830, %v7280, 0
        %7293 = vmatprep.subr.bf16.mxu0 0
        %7294 = vmatpush1.bf16.xpose.msra.mxu0 %v7282
        %7295 = vmatprep.subr.bf16.mxu0 0
        %7296 = vmatpush1.bf16.xpose.msra.mxu0 %v7285
        %7297 = vmatprep.subr.bf16.mxu0 0
        %7298 = vmatpush1.bf16.xpose.msra.mxu0 %v7288
        %7299 = vmatprep.subr.bf16.mxu0 0
        %7300 = vmatpush1.bf16.xpose.msra.mxu0 %v7291
        %7301 = vmatprep.subr.bf16.mxu0 0
        %7302 = vmatpush1.bf16.xpose.msra.mxu0 0
        %7303 = vmatprep.subr.bf16.mxu0 0
        %7304 = vmatpush1.bf16.xpose.msra.mxu0 0
        %7305 = vmatprep.subr.bf16.mxu0 0
        %7306 = vmatpush1.bf16.xpose.msra.mxu0 0
        %7307 = vmatprep.subr.bf16.mxu0 0
        %7308 = vmatpush1.bf16.xpose.msra.mxu0 0
        %7309 = vmatprep.subr.bf16.mxu0 0
        %7310 = vmatpush1.bf16.xpose.msra.mxu0 0
        %7311 = vmatprep.subr.bf16.mxu0 0
        %7312 = vmatpush1.bf16.xpose.msra.mxu0 0
        %7313 = vmatprep.subr.bf16.mxu0 0
        %7314 = vmatpush1.bf16.xpose.msra.mxu0 0
        %7315 = vmatprep.subr.bf16.mxu0 0
        %7316 = vmatpush1.bf16.xpose.msra.mxu0 0
        %7317 = vmatprep.subr.bf16.mxu0 0
        %7318 = vmatpush1.bf16.xpose.msra.mxu0 0
        %7319 = vmatprep.subr.bf16.mxu0 0
        %7320 = vmatpush1.bf16.xpose.msra.mxu0 0
        %7321 = vmatprep.subr.bf16.mxu0 0
        %7322 = vmatpush1.bf16.xpose.msra.mxu0 0
        %7323 = vmatprep.subr.bf16.mxu0 0
        %7324 = vmatpush1.bf16.xpose.msra.mxu0 0
        %7325 = vmatprep.mubr.bf16.mxu0 0
        %7326 = vmatmul.mubr.bf16.gmra.mrb[0].mxu0 %v7282
        %v7327 = vpop.f32.mrb[0].mxu0
        %v7328 = vadd.f32 0.0, %v7327
        %v7329 = vpop.f32.mrb[0].mxu0
        %v7330 = vpop.f32.mrb[0].mxu0
        %v7331 = vadd.f32 0.0, %v7330
        %v7332 = vpop.f32.mrb[0].mxu0
        %7333 = vmatprep.mubr.bf16.mxu0 0
        %7334 = vmatmul.mubr.bf16.gmra.mrb[0].mxu0 %v7285
        %v7335 = vpop.f32.mrb[0].mxu0
        %v7336 = vadd.f32 0.0, %v7335
        %v7337 = vpop.f32.mrb[0].mxu0
        %v7338 = vpop.f32.mrb[0].mxu0
        %v7339 = vadd.f32 0.0, %v7338
        %v7340 = vpop.f32.mrb[0].mxu0
        %7341 = vmatprep.mubr.bf16.mxu0 0
        %7342 = vmatmul.mubr.bf16.gmra.mrb[0].mxu0 %v7288
        %v7343 = vpop.f32.mrb[0].mxu0
        %v7344 = vadd.f32 0.0, %v7343
        %v7345 = vpop.f32.mrb[0].mxu0
        %v7346 = vpop.f32.mrb[0].mxu0
        %v7347 = vadd.f32 0.0, %v7346
        %v7348 = vpop.f32.mrb[0].mxu0
        %7349 = vmatprep.mubr.bf16.mxu0 0
        %7350 = vmatmul.mubr.bf16.gmra.mrb[0].mxu0 %v7291
        %v7351 = vpop.f32.mrb[0].mxu0
        %v7352 = vadd.f32 0.0, %v7351
        %v7353 = vpop.f32.mrb[0].mxu0
        %v7354 = vpop.f32.mrb[0].mxu0
        %v7355 = vadd.f32 0.0, %v7354
        %v7356 = vpop.f32.mrb[0].mxu0
        %7357 = vdwg.mxu0
        %v7358 = vmul.f32 %v7002, %v7328
        %v7359 = vmul.f32 %v7005, %v7331
        %v7360 = vmul.f32 %v7010, %v7336
        %v7361 = vmul.f32 %v7013, %v7339
        %v7362 = vmul.f32 %v7018, %v7344
        %v7363 = vmul.f32 %v7021, %v7347
        %v7364 = vmul.f32 %v7026, %v7352
        %v7365 = vmul.f32 %v7029, %v7355
        %v7366 = vsel %vm2008, %v7358, -inf
        %7367 = vmax.xlane.f32.xlu0 %v7366
        %v7368 = vpop.xlane.xlu0 %7367
        %v7369 = vsel %vm2008, %v7359, -inf
        %7370 = vmax.xlane.f32.xlu0 %v7369
        %v7371 = vpop.xlane.xlu0 %7370
        %v7372 = vsel %vm2008, %v7360, -inf
        %7373 = vmax.xlane.f32.xlu0 %v7372
        %v7374 = vpop.xlane.xlu0 %7373
        %v7375 = vsel %vm2008, %v7361, -inf
        %7376 = vmax.xlane.f32.xlu0 %v7375
        %v7377 = vpop.xlane.xlu0 %7376
        %v7378 = vsel %vm2008, %v7362, -inf
        %7379 = vmax.xlane.f32.xlu0 %v7378
        %v7380 = vpop.xlane.xlu0 %7379
        %v7381 = vsel %vm2008, %v7363, -inf
        %7382 = vmax.xlane.f32.xlu0 %v7381
        %v7383 = vpop.xlane.xlu0 %7382
        %v7384 = vsel %vm2008, %v7364, -inf
        %7385 = vmax.xlane.f32.xlu0 %v7384
        %v7386 = vpop.xlane.xlu0 %7385
        %v7387 = vsel %vm2008, %v7365, -inf
        %7388 = vmax.xlane.f32.xlu0 %v7387
        %v7389 = vpop.xlane.xlu0 %7388
        %v7390 = vsub.f32 %v7358, %v7368
        %v7391 = vsub.f32 %v7359, %v7371
        %v7392 = vsub.f32 %v7360, %v7374
        %v7393 = vsub.f32 %v7361, %v7377
        %v7394 = vsub.f32 %v7362, %v7380
        %v7395 = vsub.f32 %v7363, %v7383
        %v7396 = vsub.f32 %v7364, %v7386
        %v7397 = vsub.f32 %v7365, %v7389
        %v7398 = vmul.f32 %v7390, 1.442695
        %v7399 = vpow.pop %v7398
        %v7400 = vmul.f32 %v7391, 1.442695
        %v7401 = vpow.pop %v7400
        %v7402 = vmul.f32 %v7392, 1.442695
        %v7403 = vpow.pop %v7402
        %v7404 = vmul.f32 %v7393, 1.442695
        %v7405 = vpow.pop %v7404
        %v7406 = vmul.f32 %v7394, 1.442695
        %v7407 = vpow.pop %v7406
        %v7408 = vmul.f32 %v7395, 1.442695
        %v7409 = vpow.pop %v7408
        %v7410 = vmul.f32 %v7396, 1.442695
        %v7411 = vpow.pop %v7410
        %v7412 = vmul.f32 %v7397, 1.442695
        %v7413 = vpow.pop %v7412
        %v7414 = vsel %vm2008, %v7399, 0.0
        %7415 = vadd.xlane.f32.xlu0 %v7414
        %v7416 = vpop.xlane.xlu0 %7415
        %v7417 = vsel %vm2008, %v7401, 0.0
        %7418 = vadd.xlane.f32.xlu0 %v7417
        %v7419 = vpop.xlane.xlu0 %7418
        %v7420 = vsel %vm2008, %v7403, 0.0
        %7421 = vadd.xlane.f32.xlu0 %v7420
        %v7422 = vpop.xlane.xlu0 %7421
        %v7423 = vsel %vm2008, %v7405, 0.0
        %7424 = vadd.xlane.f32.xlu0 %v7423
        %v7425 = vpop.xlane.xlu0 %7424
        %v7426 = vsel %vm2008, %v7407, 0.0
        %7427 = vadd.xlane.f32.xlu0 %v7426
        %v7428 = vpop.xlane.xlu0 %7427
        %v7429 = vsel %vm2008, %v7409, 0.0
        %7430 = vadd.xlane.f32.xlu0 %v7429
        %v7431 = vpop.xlane.xlu0 %7430
        %v7432 = vsel %vm2008, %v7411, 0.0
        %7433 = vadd.xlane.f32.xlu0 %v7432
        %v7434 = vpop.xlane.xlu0 %7433
        %v7435 = vsel %vm2008, %v7413, 0.0
        %7436 = vadd.xlane.f32.xlu0 %v7435
        %v7437 = vpop.xlane.xlu0 %7436
        %v7438 = vrcp.pop %v7416
        %v7439 = vrcp.pop %v7419
        %v7440 = vrcp.pop %v7422
        %v7441 = vrcp.pop %v7425
        %v7442 = vrcp.pop %v7428
        %v7443 = vrcp.pop %v7431
        %v7444 = vrcp.pop %v7434
        %v7445 = vrcp.pop %v7437
        %v7446 = vmul.f32 %v7399, %v7438
        %v7447 = vmul.f32 %v7401, %v7439
        %v7448 = vmul.f32 %v7403, %v7440
        %v7449 = vmul.f32 %v7405, %v7441
        %v7450 = vmul.f32 %v7407, %v7442
        %v7451 = vmul.f32 %v7409, %v7443
        %v7452 = vmul.f32 %v7411, %v7444
        %v7453 = vmul.f32 %v7413, %v7445
        %s7454 = sld [smem:[#allocation8 + %s4402]]
        %s7455 = ssub.f32 1.0, %s7454
        %v7456 = vstv %s7455
        %v7457 = vmul.f32 %v7456, %v7446
        %v7458 = vmul.f32 %v7456, %v7447
        %v7459 = vmul.f32 %v7456, %v7448
        %v7460 = vmul.f32 %v7456, %v7449
        %v7461 = vmul.f32 %v7456, %v7450
        %v7462 = vmul.f32 %v7456, %v7451
        %v7463 = vmul.f32 %v7456, %v7452
        %v7464 = vmul.f32 %v7456, %v7453
        %v7465 = vstv %s7454
        %v7466 = vmul.f32 %v7465, %v7328
        %v7467 = vmul.f32 %v7465, %v7331
        %v7468 = vmul.f32 %v7465, %v7336
        %v7469 = vmul.f32 %v7465, %v7339
        %v7470 = vmul.f32 %v7465, %v7344
        %v7471 = vmul.f32 %v7465, %v7347
        %v7472 = vmul.f32 %v7465, %v7352
        %v7473 = vmul.f32 %v7465, %v7355
        %v7474 = vadd.f32 %v7457, %v7466
        %v7475 = vadd.f32 %v7458, %v7467
        %v7476 = vadd.f32 %v7459, %v7468
        %v7477 = vadd.f32 %v7460, %v7469
        %v7478 = vadd.f32 %v7461, %v7470
        %v7479 = vadd.f32 %v7462, %v7471
        %v7480 = vadd.f32 %v7463, %v7472
        %v7481 = vadd.f32 %v7464, %v7473
        %v7482 = vsel %vm2008, %v7474, 0.0
        %v7483 = vsel %vm2008, %v7475, 0.0
        %v7484 = vadd.f32 %v7482, %v7483
        %v7485 = vsel %vm2008, %v7476, 0.0
        %v7486 = vadd.f32 %v7484, %v7485
        %v7487 = vsel %vm2008, %v7477, 0.0
        %v7488 = vadd.f32 %v7486, %v7487
        %v7489 = vsel %vm2008, %v7478, 0.0
        %v7490 = vadd.f32 %v7488, %v7489
        %v7491 = vsel %vm2008, %v7479, 0.0
        %v7492 = vadd.f32 %v7490, %v7491
        %v7493 = vsel %vm2008, %v7480, 0.0
        %v7494 = vadd.f32 %v7492, %v7493
        %v7495 = vsel %vm2008, %v7481, 0.0
        %v7496 = vadd.f32 %v7494, %v7495
        %v7497 = vrot.slane %v7496, 4
        %v7498 = vadd.f32 %v7496, %v7497
        %v7499 = vrot.slane %v7498, 2
        %v7500 = vadd.f32 %v7498, %v7499
        %v7501 = vrot.slane %v7500, 1
        %v7502 = vadd.f32 %v7500, %v7501
        %v7503 = vadd.f32 %v7502, 1e-08
        %v7504 = vrcp.pop %v7503
        %v7505 = vmul.f32 %v7474, %v7504
        %v7506 = vmul.f32 %v7475, %v7504
        %v7507 = vmul.f32 %v7476, %v7504
        %v7508 = vmul.f32 %v7477, %v7504
        %v7509 = vmul.f32 %v7478, %v7504
        %v7510 = vmul.f32 %v7479, %v7504
        %v7511 = vmul.f32 %v7480, %v7504
        %v7512 = vmul.f32 %v7481, %v7504
        %v7513 = vpack.c.bf16 %v7506, %v7505
        %v7514 = vpack.c.bf16 %v7508, %v7507
        %v7515 = vpack.c.bf16 %v7510, %v7509
        %v7516 = vpack.c.bf16 %v7512, %v7511
        %v7522 = vsel %vm2008, %v7513, 0
        %v7525 = vsel %vm2008, %v7514, 0
        %v7528 = vsel %vm2008, %v7515, 0
        %v7531 = vsel %vm2008, %v7516, 0
        %7533 = vmatprep.subr.bf16.mxu0 0
        %7534 = vmatpush1.bf16.msra.mxu0 %v7033
        %7535 = vmatprep.subr.bf16.mxu0 0
        %7536 = vmatpush1.bf16.msra.mxu0 %v7035
        %7537 = vmatprep.subr.bf16.mxu0 0
        %7538 = vmatpush1.bf16.msra.mxu0 %v7037
        %7539 = vmatprep.subr.bf16.mxu0 0
        %7540 = vmatpush1.bf16.msra.mxu0 %v7039
        %7541 = vmatprep.subr.bf16.mxu0 0
        %7542 = vmatpush1.bf16.msra.mxu0 0
        %7543 = vmatprep.subr.bf16.mxu0 0
        %7544 = vmatpush1.bf16.msra.mxu0 0
        %7545 = vmatprep.subr.bf16.mxu0 0
        %7546 = vmatpush1.bf16.msra.mxu0 0
        %7547 = vmatprep.subr.bf16.mxu0 0
        %7548 = vmatpush1.bf16.msra.mxu0 0
        %7549 = vmatprep.subr.bf16.mxu0 0
        %7550 = vmatpush1.bf16.msra.mxu0 0
        %7551 = vmatprep.subr.bf16.mxu0 0
        %7552 = vmatpush1.bf16.msra.mxu0 0
        %7553 = vmatprep.subr.bf16.mxu0 0
        %7554 = vmatpush1.bf16.msra.mxu0 0
        %7555 = vmatprep.subr.bf16.mxu0 0
        %7556 = vmatpush1.bf16.msra.mxu0 0
        %7557 = vmatprep.subr.bf16.mxu0 0
        %7558 = vmatpush1.bf16.msra.mxu0 0
        %7559 = vmatprep.subr.bf16.mxu0 0
        %7560 = vmatpush1.bf16.msra.mxu0 0
        %7561 = vmatprep.subr.bf16.mxu0 0
        %7562 = vmatpush1.bf16.msra.mxu0 0
        %7563 = vmatprep.subr.bf16.mxu0 0
        %7564 = vmatpush1.bf16.msra.mxu0 0
        %7565 = vmatprep.mubr.bf16.mxu0 0
        %7566 = vmatmul.mubr.bf16.gmra.mrb[0].mxu0 %v7522
        %v7567 = vpop.f32.mrb[0].mxu0
        %v7568 = vadd.f32 0.0, %v7567
        %v7569 = vpop.f32.mrb[0].mxu0
        %v7570 = vpop.f32.mrb[0].mxu0
        %v7571 = vadd.f32 0.0, %v7570
        %v7572 = vpop.f32.mrb[0].mxu0
        %7573 = vmatprep.mubr.bf16.mxu0 0
        %7574 = vmatmul.mubr.bf16.gmra.mrb[0].mxu0 %v7525
        %v7575 = vpop.f32.mrb[0].mxu0
        %v7576 = vadd.f32 0.0, %v7575
        %v7577 = vpop.f32.mrb[0].mxu0
        %v7578 = vpop.f32.mrb[0].mxu0
        %v7579 = vadd.f32 0.0, %v7578
        %v7580 = vpop.f32.mrb[0].mxu0
        %7581 = vmatprep.mubr.bf16.mxu0 0
        %7582 = vmatmul.mubr.bf16.gmra.mrb[0].mxu0 %v7528
        %v7583 = vpop.f32.mrb[0].mxu0
        %v7584 = vadd.f32 0.0, %v7583
        %v7585 = vpop.f32.mrb[0].mxu0
        %v7586 = vpop.f32.mrb[0].mxu0
        %v7587 = vadd.f32 0.0, %v7586
        %v7588 = vpop.f32.mrb[0].mxu0
        %7589 = vmatprep.mubr.bf16.mxu0 0
        %7590 = vmatmul.mubr.bf16.gmra.mrb[0].mxu0 %v7531
        %v7591 = vpop.f32.mrb[0].mxu0
        %v7592 = vadd.f32 0.0, %v7591
        %v7593 = vpop.f32.mrb[0].mxu0
        %v7594 = vpop.f32.mrb[0].mxu0
        %v7595 = vadd.f32 0.0, %v7594
        %v7596 = vpop.f32.mrb[0].mxu0
        %7597 = vdwg.mxu0
        %v7598 = vpack.c.bf16 %v7571, %v7568
        %v7599 = vpack.c.bf16 %v7579, %v7576
        %v7600 = vpack.c.bf16 %v7587, %v7584
        %v7601 = vpack.c.bf16 %v7595, %v7592
        %v7603 = vsel %vm1575, %v7598, 0
        %v7606 = vsel %vm1575, %v7599, 0
        %v7609 = vsel %vm1575, %v7600, 0
        %v7612 = vsel %vm1575, %v7601, 0
        %7614 = vmatprep.subr.bf16.mxu0 0
        %7615 = vmatpush1.bf16.msra.mxu0 %v4564
        %7616 = vmatprep.subr.bf16.mxu0 0
        %7617 = vmatpush1.bf16.msra.mxu0 0
        %7618 = vmatprep.subr.bf16.mxu0 0
        %7619 = vmatpush1.bf16.msra.mxu0 0
        %7620 = vmatprep.subr.bf16.mxu0 0
        %7621 = vmatpush1.bf16.msra.mxu0 0
        %7622 = vmatprep.subr.bf16.mxu0 0
        %7623 = vmatpush1.bf16.msra.mxu0 0
        %7624 = vmatprep.subr.bf16.mxu0 0
        %7625 = vmatpush1.bf16.msra.mxu0 0
        %7626 = vmatprep.subr.bf16.mxu0 0
        %7627 = vmatpush1.bf16.msra.mxu0 0
        %7628 = vmatprep.subr.bf16.mxu0 0
        %7629 = vmatpush1.bf16.msra.mxu0 0
        %7630 = vmatprep.subr.bf16.mxu0 0
        %7631 = vmatpush1.bf16.msra.mxu0 0
        %7632 = vmatprep.subr.bf16.mxu0 0
        %7633 = vmatpush1.bf16.msra.mxu0 0
        %7634 = vmatprep.subr.bf16.mxu0 0
        %7635 = vmatpush1.bf16.msra.mxu0 0
        %7636 = vmatprep.subr.bf16.mxu0 0
        %7637 = vmatpush1.bf16.msra.mxu0 0
        %7638 = vmatprep.subr.bf16.mxu0 0
        %7639 = vmatpush1.bf16.msra.mxu0 0
        %7640 = vmatprep.subr.bf16.mxu0 0
        %7641 = vmatpush1.bf16.msra.mxu0 0
        %7642 = vmatprep.subr.bf16.mxu0 0
        %7643 = vmatpush1.bf16.msra.mxu0 0
        %7644 = vmatprep.subr.bf16.mxu0 0
        %7645 = vmatpush1.bf16.msra.mxu0 0
        %7646 = vmatprep.mubr.bf16.mxu0 0
        %7647 = vmatmul.mubr.bf16.gmra.mrb[0].mxu0 %v7603
        %v7648 = vpop.f32.mrb[0].mxu0
        %v7649 = vadd.f32 0.0, %v7648
        %v7650 = vpop.f32.mrb[0].mxu0
        %v7651 = vpop.f32.mrb[0].mxu0
        %v7652 = vadd.f32 0.0, %v7651
        %v7653 = vpop.f32.mrb[0].mxu0
        %7654 = vmatprep.mubr.bf16.mxu0 0
        %7655 = vmatmul.mubr.bf16.gmra.mrb[0].mxu0 %v7606
        %v7656 = vpop.f32.mrb[0].mxu0
        %v7657 = vadd.f32 0.0, %v7656
        %v7658 = vpop.f32.mrb[0].mxu0
        %v7659 = vpop.f32.mrb[0].mxu0
        %v7660 = vadd.f32 0.0, %v7659
        %v7661 = vpop.f32.mrb[0].mxu0
        %7662 = vmatprep.mubr.bf16.mxu0 0
        %7663 = vmatmul.mubr.bf16.gmra.mrb[0].mxu0 %v7609
        %v7664 = vpop.f32.mrb[0].mxu0
        %v7665 = vadd.f32 0.0, %v7664
        %v7666 = vpop.f32.mrb[0].mxu0
        %v7667 = vpop.f32.mrb[0].mxu0
        %v7668 = vadd.f32 0.0, %v7667
        %v7669 = vpop.f32.mrb[0].mxu0
        %7670 = vmatprep.mubr.bf16.mxu0 0
        %7671 = vmatmul.mubr.bf16.gmra.mrb[0].mxu0 %v7612
        %v7672 = vpop.f32.mrb[0].mxu0
        %v7673 = vadd.f32 0.0, %v7672
        %v7674 = vpop.f32.mrb[0].mxu0
        %v7675 = vpop.f32.mrb[0].mxu0
        %v7676 = vadd.f32 0.0, %v7675
        %v7677 = vpop.f32.mrb[0].mxu0
        %7678 = vdwg.mxu0
        %v7679 = vadd.f32 %v6919, %v7649
        %v7680 = vadd.f32 %v6920, %v7652
        %v7681 = vadd.f32 %v6921, %v7657
        %v7682 = vadd.f32 %v6922, %v7660
        %v7683 = vadd.f32 %v6923, %v7665
        %v7684 = vadd.f32 %v6924, %v7668
        %v7685 = vadd.f32 %v6925, %v7673
        %v7686 = vadd.f32 %v6926, %v7676
        %7687 = vst.msk [vmem:[#allocation3 + $0x40] sm:$0xff] %vm1129, %v7679
        %7688 = vst.msk [vmem:[#allocation3 + $0x48] sm:$0xff] %vm1129, %v7680
        %7689 = vst.msk [vmem:[#allocation3 + $0x50] sm:$0xff] %vm1129, %v7681
        %7690 = vst.msk [vmem:[#allocation3 + $0x58] sm:$0xff] %vm1129, %v7682
        %7691 = vst.msk [vmem:[#allocation3 + $0x60] sm:$0xff] %vm1129, %v7683
        %7692 = vst.msk [vmem:[#allocation3 + $0x68] sm:$0xff] %vm1129, %v7684
        %7693 = vst.msk [vmem:[#allocation3 + $0x70] sm:$0xff] %vm1129, %v7685
        %7694 = vst.msk [vmem:[#allocation3 + $0x78] sm:$0xff] %vm1129, %v7686
        %v7695 = vld [vmem:[#allocation3] sm:$0xff]
        %v7696 = vld [vmem:[#allocation3 + $0x8] sm:$0xff]
        %v7697 = vld [vmem:[#allocation3 + $0x10] sm:$0xff]
        %v7698 = vld [vmem:[#allocation3 + $0x18] sm:$0xff]
        %v7699 = vld [vmem:[#allocation3 + $0x20] sm:$0xff]
        %v7700 = vld [vmem:[#allocation3 + $0x28] sm:$0xff]
        %v7701 = vld [vmem:[#allocation3 + $0x30] sm:$0xff]
        %v7702 = vld [vmem:[#allocation3 + $0x38] sm:$0xff]
        %v7703 = vld [vmem:[#allocation3 + $0x40] sm:$0xff]
        %v7704 = vld [vmem:[#allocation3 + $0x48] sm:$0xff]
        %v7705 = vld [vmem:[#allocation3 + $0x50] sm:$0xff]
        %v7706 = vld [vmem:[#allocation3 + $0x58] sm:$0xff]
        %v7707 = vld [vmem:[#allocation3 + $0x60] sm:$0xff]
        %v7708 = vld [vmem:[#allocation3 + $0x68] sm:$0xff]
        %v7709 = vld [vmem:[#allocation3 + $0x70] sm:$0xff]
        %v7710 = vld [vmem:[#allocation3 + $0x78] sm:$0xff]
        %v7711 = vadd.f32 %v1111, %v7695
        %v7712 = vadd.f32 %v1112, %v7696
        %v7713 = vadd.f32 %v1113, %v7697
        %v7714 = vadd.f32 %v1114, %v7698
        %v7715 = vadd.f32 %v1115, %v7699
        %v7716 = vadd.f32 %v1116, %v7700
        %v7717 = vadd.f32 %v1117, %v7701
        %v7718 = vadd.f32 %v1118, %v7702
        %v7719 = vadd.f32 %v1119, %v7703
        %v7720 = vadd.f32 %v1120, %v7704
        %v7721 = vadd.f32 %v1121, %v7705
        %v7722 = vadd.f32 %v1122, %v7706
        %v7723 = vadd.f32 %v1123, %v7707
        %v7724 = vadd.f32 %v1124, %v7708
        %v7725 = vadd.f32 %v1125, %v7709
        %v7726 = vadd.f32 %v1126, %v7710
        %v7727 = vld [vmem:[%s904] sm:$0x1]
        %v7729 = vlaneseq
        %v7730 = vshrl.u32 %v7729, 7
        %v7731 = vsub.s32 0, %v7730
        %v7732 = vrot.slane %v7727, %v7731
        %v7734 = vadd.f32 %v7711, %v7732
        %v7735 = vadd.f32 %v7712, %v7732
        %v7736 = vadd.f32 %v7713, %v7732
        %v7737 = vadd.f32 %v7714, %v7732
        %v7738 = vadd.f32 %v7715, %v7732
        %v7739 = vadd.f32 %v7716, %v7732
        %v7740 = vadd.f32 %v7717, %v7732
        %v7741 = vadd.f32 %v7718, %v7732
        %v7742 = vadd.f32 %v7719, %v7732
        %v7743 = vadd.f32 %v7720, %v7732
        %v7744 = vadd.f32 %v7721, %v7732
        %v7745 = vadd.f32 %v7722, %v7732
        %v7746 = vadd.f32 %v7723, %v7732
        %v7747 = vadd.f32 %v7724, %v7732
        %v7748 = vadd.f32 %v7725, %v7732
        %v7749 = vadd.f32 %v7726, %v7732
        %v7750 = vld [vmem:[%s912] sm:$0x1]
        %v7751 = vld [vmem:[%s920] sm:$0x1]
        %v7752 = vsel %vm1129, %v7734, 0.0
        %7753 = vadd.xlane.f32.xlu0 %v7752
        %v7754 = vpop.xlane.xlu0 %7753
        %v7755 = vsel %vm1129, %v7735, 0.0
        %7756 = vadd.xlane.f32.xlu0 %v7755
        %v7757 = vpop.xlane.xlu0 %7756
        %v7758 = vsel %vm1129, %v7736, 0.0
        %7759 = vadd.xlane.f32.xlu0 %v7758
        %v7760 = vpop.xlane.xlu0 %7759
        %v7761 = vsel %vm1129, %v7737, 0.0
        %7762 = vadd.xlane.f32.xlu0 %v7761
        %v7763 = vpop.xlane.xlu0 %7762
        %v7764 = vsel %vm1129, %v7738, 0.0
        %7765 = vadd.xlane.f32.xlu0 %v7764
        %v7766 = vpop.xlane.xlu0 %7765
        %v7767 = vsel %vm1129, %v7739, 0.0
        %7768 = vadd.xlane.f32.xlu0 %v7767
        %v7769 = vpop.xlane.xlu0 %7768
        %v7770 = vsel %vm1129, %v7740, 0.0
        %7771 = vadd.xlane.f32.xlu0 %v7770
        %v7772 = vpop.xlane.xlu0 %7771
        %v7773 = vsel %vm1129, %v7741, 0.0
        %7774 = vadd.xlane.f32.xlu0 %v7773
        %v7775 = vpop.xlane.xlu0 %7774
        %v7776 = vsel %vm1129, %v7742, 0.0
        %7777 = vadd.xlane.f32.xlu0 %v7776
        %v7778 = vpop.xlane.xlu0 %7777
        %v7779 = vsel %vm1129, %v7743, 0.0
        %7780 = vadd.xlane.f32.xlu0 %v7779
        %v7781 = vpop.xlane.xlu0 %7780
        %v7782 = vsel %vm1129, %v7744, 0.0
        %7783 = vadd.xlane.f32.xlu0 %v7782
        %v7784 = vpop.xlane.xlu0 %7783
        %v7785 = vsel %vm1129, %v7745, 0.0
        %7786 = vadd.xlane.f32.xlu0 %v7785
        %v7787 = vpop.xlane.xlu0 %7786
        %v7788 = vsel %vm1129, %v7746, 0.0
        %7789 = vadd.xlane.f32.xlu0 %v7788
        %v7790 = vpop.xlane.xlu0 %7789
        %v7791 = vsel %vm1129, %v7747, 0.0
        %7792 = vadd.xlane.f32.xlu0 %v7791
        %v7793 = vpop.xlane.xlu0 %7792
        %v7794 = vsel %vm1129, %v7748, 0.0
        %7795 = vadd.xlane.f32.xlu0 %v7794
        %v7796 = vpop.xlane.xlu0 %7795
        %v7797 = vsel %vm1129, %v7749, 0.0
        %7798 = vadd.xlane.f32.xlu0 %v7797
        %v7799 = vpop.xlane.xlu0 %7798
        %v7800 = vmul.f32 %v7754, %v1178
        %v7801 = vmul.f32 %v7757, %v1178
        %v7802 = vmul.f32 %v7760, %v1178
        %v7803 = vmul.f32 %v7763, %v1178
        %v7804 = vmul.f32 %v7766, %v1178
        %v7805 = vmul.f32 %v7769, %v1178
        %v7806 = vmul.f32 %v7772, %v1178
        %v7807 = vmul.f32 %v7775, %v1178
        %v7808 = vmul.f32 %v7778, %v1178
        %v7809 = vmul.f32 %v7781, %v1178
        %v7810 = vmul.f32 %v7784, %v1178
        %v7811 = vmul.f32 %v7787, %v1178
        %v7812 = vmul.f32 %v7790, %v1178
        %v7813 = vmul.f32 %v7793, %v1178
        %v7814 = vmul.f32 %v7796, %v1178
        %v7815 = vmul.f32 %v7799, %v1178
        %v7816 = vsub.f32 %v7734, %v7800
        %v7817 = vsub.f32 %v7735, %v7801
        %v7818 = vsub.f32 %v7736, %v7802
        %v7819 = vsub.f32 %v7737, %v7803
        %v7820 = vsub.f32 %v7738, %v7804
        %v7821 = vsub.f32 %v7739, %v7805
        %v7822 = vsub.f32 %v7740, %v7806
        %v7823 = vsub.f32 %v7741, %v7807
        %v7824 = vsub.f32 %v7742, %v7808
        %v7825 = vsub.f32 %v7743, %v7809
        %v7826 = vsub.f32 %v7744, %v7810
        %v7827 = vsub.f32 %v7745, %v7811
        %v7828 = vsub.f32 %v7746, %v7812
        %v7829 = vsub.f32 %v7747, %v7813
        %v7830 = vsub.f32 %v7748, %v7814
        %v7831 = vsub.f32 %v7749, %v7815
        %v7832 = vmul.f32 %v7816, %v7816
        %v7833 = vmul.f32 %v7817, %v7817
        %v7834 = vmul.f32 %v7818, %v7818
        %v7835 = vmul.f32 %v7819, %v7819
        %v7836 = vmul.f32 %v7820, %v7820
        %v7837 = vmul.f32 %v7821, %v7821
        %v7838 = vmul.f32 %v7822, %v7822
        %v7839 = vmul.f32 %v7823, %v7823
        %v7840 = vmul.f32 %v7824, %v7824
        %v7841 = vmul.f32 %v7825, %v7825
        %v7842 = vmul.f32 %v7826, %v7826
        %v7843 = vmul.f32 %v7827, %v7827
        %v7844 = vmul.f32 %v7828, %v7828
        %v7845 = vmul.f32 %v7829, %v7829
        %v7846 = vmul.f32 %v7830, %v7830
        %v7847 = vmul.f32 %v7831, %v7831
        %v7848 = vsel %vm1129, %v7832, 0.0
        %7849 = vadd.xlane.f32.xlu0 %v7848
        %v7850 = vpop.xlane.xlu0 %7849
        %v7851 = vsel %vm1129, %v7833, 0.0
        %7852 = vadd.xlane.f32.xlu0 %v7851
        %v7853 = vpop.xlane.xlu0 %7852
        %v7854 = vsel %vm1129, %v7834, 0.0
        %7855 = vadd.xlane.f32.xlu0 %v7854
        %v7856 = vpop.xlane.xlu0 %7855
        %v7857 = vsel %vm1129, %v7835, 0.0
        %7858 = vadd.xlane.f32.xlu0 %v7857
        %v7859 = vpop.xlane.xlu0 %7858
        %v7860 = vsel %vm1129, %v7836, 0.0
        %7861 = vadd.xlane.f32.xlu0 %v7860
        %v7862 = vpop.xlane.xlu0 %7861
        %v7863 = vsel %vm1129, %v7837, 0.0
        %7864 = vadd.xlane.f32.xlu0 %v7863
        %v7865 = vpop.xlane.xlu0 %7864
        %v7866 = vsel %vm1129, %v7838, 0.0
        %7867 = vadd.xlane.f32.xlu0 %v7866
        %v7868 = vpop.xlane.xlu0 %7867
        %v7869 = vsel %vm1129, %v7839, 0.0
        %7870 = vadd.xlane.f32.xlu0 %v7869
        %v7871 = vpop.xlane.xlu0 %7870
        %v7872 = vsel %vm1129, %v7840, 0.0
        %7873 = vadd.xlane.f32.xlu0 %v7872
        %v7874 = vpop.xlane.xlu0 %7873
        %v7875 = vsel %vm1129, %v7841, 0.0
        %7876 = vadd.xlane.f32.xlu0 %v7875
        %v7877 = vpop.xlane.xlu0 %7876
        %v7878 = vsel %vm1129, %v7842, 0.0
        %7879 = vadd.xlane.f32.xlu0 %v7878
        %v7880 = vpop.xlane.xlu0 %7879
        %v7881 = vsel %vm1129, %v7843, 0.0
        %7882 = vadd.xlane.f32.xlu0 %v7881
        %v7883 = vpop.xlane.xlu0 %7882
        %v7884 = vsel %vm1129, %v7844, 0.0
        %7885 = vadd.xlane.f32.xlu0 %v7884
        %v7886 = vpop.xlane.xlu0 %7885
        %v7887 = vsel %vm1129, %v7845, 0.0
        %7888 = vadd.xlane.f32.xlu0 %v7887
        %v7889 = vpop.xlane.xlu0 %7888
        %v7890 = vsel %vm1129, %v7846, 0.0
        %7891 = vadd.xlane.f32.xlu0 %v7890
        %v7892 = vpop.xlane.xlu0 %7891
        %v7893 = vsel %vm1129, %v7847, 0.0
        %7894 = vadd.xlane.f32.xlu0 %v7893
        %v7895 = vpop.xlane.xlu0 %7894
        %v7896 = vmul.f32 %v7850, %v1178
        %v7897 = vmul.f32 %v7853, %v1178
        %v7898 = vmul.f32 %v7856, %v1178
        %v7899 = vmul.f32 %v7859, %v1178
        %v7900 = vmul.f32 %v7862, %v1178
        %v7901 = vmul.f32 %v7865, %v1178
        %v7902 = vmul.f32 %v7868, %v1178
        %v7903 = vmul.f32 %v7871, %v1178
        %v7904 = vmul.f32 %v7874, %v1178
        %v7905 = vmul.f32 %v7877, %v1178
        %v7906 = vmul.f32 %v7880, %v1178
        %v7907 = vmul.f32 %v7883, %v1178
        %v7908 = vmul.f32 %v7886, %v1178
        %v7909 = vmul.f32 %v7889, %v1178
        %v7910 = vmul.f32 %v7892, %v1178
        %v7911 = vmul.f32 %v7895, %v1178
        %v7912 = vadd.f32 %v7896, 1e-05
        %v7913 = vadd.f32 %v7897, 1e-05
        %v7914 = vadd.f32 %v7898, 1e-05
        %v7915 = vadd.f32 %v7899, 1e-05
        %v7916 = vadd.f32 %v7900, 1e-05
        %v7917 = vadd.f32 %v7901, 1e-05
        %v7918 = vadd.f32 %v7902, 1e-05
        %v7919 = vadd.f32 %v7903, 1e-05
        %v7920 = vadd.f32 %v7904, 1e-05
        %v7921 = vadd.f32 %v7905, 1e-05
        %v7922 = vadd.f32 %v7906, 1e-05
        %v7923 = vadd.f32 %v7907, 1e-05
        %v7924 = vadd.f32 %v7908, 1e-05
        %v7925 = vadd.f32 %v7909, 1e-05
        %v7926 = vadd.f32 %v7910, 1e-05
        %v7927 = vadd.f32 %v7911, 1e-05
        %v7928 = vrsqrt.pop %v7912
        %v7929 = vrsqrt.pop %v7913
        %v7930 = vrsqrt.pop %v7914
        %v7931 = vrsqrt.pop %v7915
        %v7932 = vrsqrt.pop %v7916
        %v7933 = vrsqrt.pop %v7917
        %v7934 = vrsqrt.pop %v7918
        %v7935 = vrsqrt.pop %v7919
        %v7936 = vrsqrt.pop %v7920
        %v7937 = vrsqrt.pop %v7921
        %v7938 = vrsqrt.pop %v7922
        %v7939 = vrsqrt.pop %v7923
        %v7940 = vrsqrt.pop %v7924
        %v7941 = vrsqrt.pop %v7925
        %v7942 = vrsqrt.pop %v7926
        %v7943 = vrsqrt.pop %v7927
        %v7944 = vmul.f32 %v7816, %v7928
        %v7945 = vmul.f32 %v7817, %v7929
        %v7946 = vmul.f32 %v7818, %v7930
        %v7947 = vmul.f32 %v7819, %v7931
        %v7948 = vmul.f32 %v7820, %v7932
        %v7949 = vmul.f32 %v7821, %v7933
        %v7950 = vmul.f32 %v7822, %v7934
        %v7951 = vmul.f32 %v7823, %v7935
        %v7952 = vmul.f32 %v7824, %v7936
        %v7953 = vmul.f32 %v7825, %v7937
        %v7954 = vmul.f32 %v7826, %v7938
        %v7955 = vmul.f32 %v7827, %v7939
        %v7956 = vmul.f32 %v7828, %v7940
        %v7957 = vmul.f32 %v7829, %v7941
        %v7958 = vmul.f32 %v7830, %v7942
        %v7959 = vmul.f32 %v7831, %v7943
        %v7961 = vlaneseq
        %v7962 = vshrl.u32 %v7961, 7
        %v7963 = vsub.s32 0, %v7962
        %v7964 = vrot.slane %v7750, %v7963
        %v7966 = vmul.f32 %v7944, %v7964
        %v7967 = vmul.f32 %v7945, %v7964
        %v7968 = vmul.f32 %v7946, %v7964
        %v7969 = vmul.f32 %v7947, %v7964
        %v7970 = vmul.f32 %v7948, %v7964
        %v7971 = vmul.f32 %v7949, %v7964
        %v7972 = vmul.f32 %v7950, %v7964
        %v7973 = vmul.f32 %v7951, %v7964
        %v7974 = vmul.f32 %v7952, %v7964
        %v7975 = vmul.f32 %v7953, %v7964
        %v7976 = vmul.f32 %v7954, %v7964
        %v7977 = vmul.f32 %v7955, %v7964
        %v7978 = vmul.f32 %v7956, %v7964
        %v7979 = vmul.f32 %v7957, %v7964
        %v7980 = vmul.f32 %v7958, %v7964
        %v7981 = vmul.f32 %v7959, %v7964
        %v7983 = vlaneseq
        %v7984 = vshrl.u32 %v7983, 7
        %v7985 = vsub.s32 0, %v7984
        %v7986 = vrot.slane %v7751, %v7985
        %v7988 = vadd.f32 %v7966, %v7986
        %v7989 = vadd.f32 %v7967, %v7986
        %v7990 = vadd.f32 %v7968, %v7986
        %v7991 = vadd.f32 %v7969, %v7986
        %v7992 = vadd.f32 %v7970, %v7986
        %v7993 = vadd.f32 %v7971, %v7986
        %v7994 = vadd.f32 %v7972, %v7986
        %v7995 = vadd.f32 %v7973, %v7986
        %v7996 = vadd.f32 %v7974, %v7986
        %v7997 = vadd.f32 %v7975, %v7986
        %v7998 = vadd.f32 %v7976, %v7986
        %v7999 = vadd.f32 %v7977, %v7986
        %v8000 = vadd.f32 %v7978, %v7986
        %v8001 = vadd.f32 %v7979, %v7986
        %v8002 = vadd.f32 %v7980, %v7986
        %v8003 = vadd.f32 %v7981, %v7986
        %v8004 = vld [vmem:[%s929] sm:$0xf]
        %v8005 = vld [vmem:[%s929 + $0x4] sm:$0xf]
        %v8006 = vld [vmem:[%s929 + $0x8] sm:$0xf]
        %v8007 = vld [vmem:[%s929 + $0xc] sm:$0xf]
        %v8008 = vpack.c.bf16 %v7989, %v7988
        %v8009 = vpack.c.bf16 %v7991, %v7990
        %v8010 = vpack.c.bf16 %v7993, %v7992
        %v8011 = vpack.c.bf16 %v7995, %v7994
        %v8012 = vpack.c.bf16 %v7997, %v7996
        %v8013 = vpack.c.bf16 %v7999, %v7998
        %v8014 = vpack.c.bf16 %v8001, %v8000
        %v8015 = vpack.c.bf16 %v8003, %v8002
        %v8016 = vld [vmem:[%s937] sm:$0x1]
        %v8018 = vlaneseq
        %v8019 = vshrl.u32 %v8018, 7
        %v8020 = vsub.s32 0, %v8019
        %v8021 = vrot.slane %v8016, %v8020
        %v8027 = vunpack.c.l.b16 %v8004
        %v8028 = vunpack.c.l.b16 %v8005
        %v8029 = vunpack.c.l.b16 %v8006
        %v8030 = vunpack.c.l.b16 %v8007
        %v8031 = vpack.c.b16 %v8028, %v8027
        %v8032 = vpack.c.b16 %v8030, %v8029
        %v8036 = vsel %vm1129, %v8008, 0
        %v8039 = vsel %vm1129, %v8009, 0
        %v8042 = vsel %vm1129, %v8010, 0
        %v8045 = vsel %vm1129, %v8011, 0
        %v8048 = vsel %vm1129, %v8012, 0
        %v8051 = vsel %vm1129, %v8013, 0
        %v8054 = vsel %vm1129, %v8014, 0
        %v8057 = vsel %vm1129, %v8015, 0
        %8059 = vmatprep.subr.bf16.mxu0 0
        %8060 = vmatpush1.bf16.msra.mxu0 %v8031
        %8061 = vmatprep.subr.bf16.mxu0 0
        %8062 = vmatpush1.bf16.msra.mxu0 %v8032
        %8063 = vmatprep.subr.bf16.mxu0 0
        %8064 = vmatpush1.bf16.msra.mxu0 0
        %8065 = vmatprep.subr.bf16.mxu0 0
        %8066 = vmatpush1.bf16.msra.mxu0 0
        %8067 = vmatprep.subr.bf16.mxu0 0
        %8068 = vmatpush1.bf16.msra.mxu0 0
        %8069 = vmatprep.subr.bf16.mxu0 0
        %8070 = vmatpush1.bf16.msra.mxu0 0
        %8071 = vmatprep.subr.bf16.mxu0 0
        %8072 = vmatpush1.bf16.msra.mxu0 0
        %8073 = vmatprep.subr.bf16.mxu0 0
        %8074 = vmatpush1.bf16.msra.mxu0 0
        %8075 = vmatprep.subr.bf16.mxu0 0
        %8076 = vmatpush1.bf16.msra.mxu0 0
        %8077 = vmatprep.subr.bf16.mxu0 0
        %8078 = vmatpush1.bf16.msra.mxu0 0
        %8079 = vmatprep.subr.bf16.mxu0 0
        %8080 = vmatpush1.bf16.msra.mxu0 0
        %8081 = vmatprep.subr.bf16.mxu0 0
        %8082 = vmatpush1.bf16.msra.mxu0 0
        %8083 = vmatprep.subr.bf16.mxu0 0
        %8084 = vmatpush1.bf16.msra.mxu0 0
        %8085 = vmatprep.subr.bf16.mxu0 0
        %8086 = vmatpush1.bf16.msra.mxu0 0
        %8087 = vmatprep.subr.bf16.mxu0 0
        %8088 = vmatpush1.bf16.msra.mxu0 0
        %8089 = vmatprep.subr.bf16.mxu0 0
        %8090 = vmatpush1.bf16.msra.mxu0 0
        %8091 = vmatprep.mubr.bf16.mxu0 0
        %8092 = vmatmul.mubr.bf16.gmra.mrb[0].mxu0 %v8036
        %v8093 = vpop.f32.mrb[0].mxu0
        %v8094 = vadd.f32 %v8021, %v8093
        %v8095 = vpop.f32.mrb[0].mxu0
        %v8096 = vpop.f32.mrb[0].mxu0
        %v8097 = vadd.f32 %v8021, %v8096
        %v8098 = vpop.f32.mrb[0].mxu0
        %8099 = vmatprep.mubr.bf16.mxu0 0
        %8100 = vmatmul.mubr.bf16.gmra.mrb[0].mxu0 %v8039
        %v8101 = vpop.f32.mrb[0].mxu0
        %v8102 = vadd.f32 %v8021, %v8101
        %v8103 = vpop.f32.mrb[0].mxu0
        %v8104 = vpop.f32.mrb[0].mxu0
        %v8105 = vadd.f32 %v8021, %v8104
        %v8106 = vpop.f32.mrb[0].mxu0
        %8107 = vmatprep.mubr.bf16.mxu0 0
        %8108 = vmatmul.mubr.bf16.gmra.mrb[0].mxu0 %v8042
        %v8109 = vpop.f32.mrb[0].mxu0
        %v8110 = vadd.f32 %v8021, %v8109
        %v8111 = vpop.f32.mrb[0].mxu0
        %v8112 = vpop.f32.mrb[0].mxu0
        %v8113 = vadd.f32 %v8021, %v8112
        %v8114 = vpop.f32.mrb[0].mxu0
        %8115 = vmatprep.mubr.bf16.mxu0 0
        %8116 = vmatmul.mubr.bf16.gmra.mrb[0].mxu0 %v8045
        %v8117 = vpop.f32.mrb[0].mxu0
        %v8118 = vadd.f32 %v8021, %v8117
        %v8119 = vpop.f32.mrb[0].mxu0
        %v8120 = vpop.f32.mrb[0].mxu0
        %v8121 = vadd.f32 %v8021, %v8120
        %v8122 = vpop.f32.mrb[0].mxu0
        %8123 = vmatprep.mubr.bf16.mxu0 0
        %8124 = vmatmul.mubr.bf16.gmra.mrb[0].mxu0 %v8048
        %v8125 = vpop.f32.mrb[0].mxu0
        %v8126 = vadd.f32 %v8021, %v8125
        %v8127 = vpop.f32.mrb[0].mxu0
        %v8128 = vpop.f32.mrb[0].mxu0
        %v8129 = vadd.f32 %v8021, %v8128
        %v8130 = vpop.f32.mrb[0].mxu0
        %8131 = vmatprep.mubr.bf16.mxu0 0
        %8132 = vmatmul.mubr.bf16.gmra.mrb[0].mxu0 %v8051
        %v8133 = vpop.f32.mrb[0].mxu0
        %v8134 = vadd.f32 %v8021, %v8133
        %v8135 = vpop.f32.mrb[0].mxu0
        %v8136 = vpop.f32.mrb[0].mxu0
        %v8137 = vadd.f32 %v8021, %v8136
        %v8138 = vpop.f32.mrb[0].mxu0
        %8139 = vmatprep.mubr.bf16.mxu0 0
        %8140 = vmatmul.mubr.bf16.gmra.mrb[0].mxu0 %v8054
        %v8141 = vpop.f32.mrb[0].mxu0
        %v8142 = vadd.f32 %v8021, %v8141
        %v8143 = vpop.f32.mrb[0].mxu0
        %v8144 = vpop.f32.mrb[0].mxu0
        %v8145 = vadd.f32 %v8021, %v8144
        %v8146 = vpop.f32.mrb[0].mxu0
        %8147 = vmatprep.mubr.bf16.mxu0 0
        %8148 = vmatmul.mubr.bf16.gmra.mrb[0].mxu0 %v8057
        %v8149 = vpop.f32.mrb[0].mxu0
        %v8150 = vadd.f32 %v8021, %v8149
        %v8151 = vpop.f32.mrb[0].mxu0
        %v8152 = vpop.f32.mrb[0].mxu0
        %v8153 = vadd.f32 %v8021, %v8152
        %v8154 = vpop.f32.mrb[0].mxu0
        %8155 = vdwg.mxu0
        %v8156 = vmul.f32 %v8094, 0.5
        %v8157 = vmul.f32 %v8097, 0.5
        %v8158 = vmul.f32 %v8102, 0.5
        %v8159 = vmul.f32 %v8105, 0.5
        %v8160 = vmul.f32 %v8110, 0.5
        %v8161 = vmul.f32 %v8113, 0.5
        %v8162 = vmul.f32 %v8118, 0.5
        %v8163 = vmul.f32 %v8121, 0.5
        %v8164 = vmul.f32 %v8126, 0.5
        %v8165 = vmul.f32 %v8129, 0.5
        %v8166 = vmul.f32 %v8134, 0.5
        %v8167 = vmul.f32 %v8137, 0.5
        %v8168 = vmul.f32 %v8142, 0.5
        %v8169 = vmul.f32 %v8145, 0.5
        %v8170 = vmul.f32 %v8150, 0.5
        %v8171 = vmul.f32 %v8153, 0.5
        %v8172 = vmul.f32 %v8094, 0.044715
        %v8173 = vmul.f32 %v8097, 0.044715
        %v8174 = vmul.f32 %v8102, 0.044715
        %v8175 = vmul.f32 %v8105, 0.044715
        %v8176 = vmul.f32 %v8110, 0.044715
        %v8177 = vmul.f32 %v8113, 0.044715
        %v8178 = vmul.f32 %v8118, 0.044715
        %v8179 = vmul.f32 %v8121, 0.044715
        %v8180 = vmul.f32 %v8126, 0.044715
        %v8181 = vmul.f32 %v8129, 0.044715
        %v8182 = vmul.f32 %v8134, 0.044715
        %v8183 = vmul.f32 %v8137, 0.044715
        %v8184 = vmul.f32 %v8142, 0.044715
        %v8185 = vmul.f32 %v8145, 0.044715
        %v8186 = vmul.f32 %v8150, 0.044715
        %v8187 = vmul.f32 %v8153, 0.044715
        %v8188 = vmul.f32 %v8172, %v8094
        %v8189 = vmul.f32 %v8173, %v8097
        %v8190 = vmul.f32 %v8174, %v8102
        %v8191 = vmul.f32 %v8175, %v8105
        %v8192 = vmul.f32 %v8176, %v8110
        %v8193 = vmul.f32 %v8177, %v8113
        %v8194 = vmul.f32 %v8178, %v8118
        %v8195 = vmul.f32 %v8179, %v8121
        %v8196 = vmul.f32 %v8180, %v8126
        %v8197 = vmul.f32 %v8181, %v8129
        %v8198 = vmul.f32 %v8182, %v8134
        %v8199 = vmul.f32 %v8183, %v8137
        %v8200 = vmul.f32 %v8184, %v8142
        %v8201 = vmul.f32 %v8185, %v8145
        %v8202 = vmul.f32 %v8186, %v8150
        %v8203 = vmul.f32 %v8187, %v8153
        %v8204 = vmul.f32 %v8188, %v8094
        %v8205 = vmul.f32 %v8189, %v8097
        %v8206 = vmul.f32 %v8190, %v8102
        %v8207 = vmul.f32 %v8191, %v8105
        %v8208 = vmul.f32 %v8192, %v8110
        %v8209 = vmul.f32 %v8193, %v8113
        %v8210 = vmul.f32 %v8194, %v8118
        %v8211 = vmul.f32 %v8195, %v8121
        %v8212 = vmul.f32 %v8196, %v8126
        %v8213 = vmul.f32 %v8197, %v8129
        %v8214 = vmul.f32 %v8198, %v8134
        %v8215 = vmul.f32 %v8199, %v8137
        %v8216 = vmul.f32 %v8200, %v8142
        %v8217 = vmul.f32 %v8201, %v8145
        %v8218 = vmul.f32 %v8202, %v8150
        %v8219 = vmul.f32 %v8203, %v8153
        %v8220 = vadd.f32 %v8094, %v8204
        %v8221 = vadd.f32 %v8097, %v8205
        %v8222 = vadd.f32 %v8102, %v8206
        %v8223 = vadd.f32 %v8105, %v8207
        %v8224 = vadd.f32 %v8110, %v8208
        %v8225 = vadd.f32 %v8113, %v8209
        %v8226 = vadd.f32 %v8118, %v8210
        %v8227 = vadd.f32 %v8121, %v8211
        %v8228 = vadd.f32 %v8126, %v8212
        %v8229 = vadd.f32 %v8129, %v8213
        %v8230 = vadd.f32 %v8134, %v8214
        %v8231 = vadd.f32 %v8137, %v8215
        %v8232 = vadd.f32 %v8142, %v8216
        %v8233 = vadd.f32 %v8145, %v8217
        %v8234 = vadd.f32 %v8150, %v8218
        %v8235 = vadd.f32 %v8153, %v8219
        %v8236 = vmul.f32 %v8220, 0.7978846
        %v8237 = vmul.f32 %v8221, 0.7978846
        %v8238 = vmul.f32 %v8222, 0.7978846
        %v8239 = vmul.f32 %v8223, 0.7978846
        %v8240 = vmul.f32 %v8224, 0.7978846
        %v8241 = vmul.f32 %v8225, 0.7978846
        %v8242 = vmul.f32 %v8226, 0.7978846
        %v8243 = vmul.f32 %v8227, 0.7978846
        %v8244 = vmul.f32 %v8228, 0.7978846
        %v8245 = vmul.f32 %v8229, 0.7978846
        %v8246 = vmul.f32 %v8230, 0.7978846
        %v8247 = vmul.f32 %v8231, 0.7978846
        %v8248 = vmul.f32 %v8232, 0.7978846
        %v8249 = vmul.f32 %v8233, 0.7978846
        %v8250 = vmul.f32 %v8234, 0.7978846
        %v8251 = vmul.f32 %v8235, 0.7978846
        %v8252 = vtanh.pop %v8236
        %v8253 = vtanh.pop %v8237
        %v8254 = vtanh.pop %v8238
        %v8255 = vtanh.pop %v8239
        %v8256 = vtanh.pop %v8240
        %v8257 = vtanh.pop %v8241
        %v8258 = vtanh.pop %v8242
        %v8259 = vtanh.pop %v8243
        %v8260 = vtanh.pop %v8244
        %v8261 = vtanh.pop %v8245
        %v8262 = vtanh.pop %v8246
        %v8263 = vtanh.pop %v8247
        %v8264 = vtanh.pop %v8248
        %v8265 = vtanh.pop %v8249
        %v8266 = vtanh.pop %v8250
        %v8267 = vtanh.pop %v8251
        %v8268 = vadd.f32 %v8252, 1.0
        %v8269 = vadd.f32 %v8253, 1.0
        %v8270 = vadd.f32 %v8254, 1.0
        %v8271 = vadd.f32 %v8255, 1.0
        %v8272 = vadd.f32 %v8256, 1.0
        %v8273 = vadd.f32 %v8257, 1.0
        %v8274 = vadd.f32 %v8258, 1.0
        %v8275 = vadd.f32 %v8259, 1.0
        %v8276 = vadd.f32 %v8260, 1.0
        %v8277 = vadd.f32 %v8261, 1.0
        %v8278 = vadd.f32 %v8262, 1.0
        %v8279 = vadd.f32 %v8263, 1.0
        %v8280 = vadd.f32 %v8264, 1.0
        %v8281 = vadd.f32 %v8265, 1.0
        %v8282 = vadd.f32 %v8266, 1.0
        %v8283 = vadd.f32 %v8267, 1.0
        %v8284 = vmul.f32 %v8156, %v8268
        %v8285 = vmul.f32 %v8157, %v8269
        %v8286 = vmul.f32 %v8158, %v8270
        %v8287 = vmul.f32 %v8159, %v8271
        %v8288 = vmul.f32 %v8160, %v8272
        %v8289 = vmul.f32 %v8161, %v8273
        %v8290 = vmul.f32 %v8162, %v8274
        %v8291 = vmul.f32 %v8163, %v8275
        %v8292 = vmul.f32 %v8164, %v8276
        %v8293 = vmul.f32 %v8165, %v8277
        %v8294 = vmul.f32 %v8166, %v8278
        %v8295 = vmul.f32 %v8167, %v8279
        %v8296 = vmul.f32 %v8168, %v8280
        %v8297 = vmul.f32 %v8169, %v8281
        %v8298 = vmul.f32 %v8170, %v8282
        %v8299 = vmul.f32 %v8171, %v8283
        %v8300 = vld [vmem:[%s946] sm:$0xf]
        %v8301 = vld [vmem:[%s946 + $0x4] sm:$0xf]
        %v8302 = vld [vmem:[%s946 + $0x8] sm:$0xf]
        %v8303 = vld [vmem:[%s946 + $0xc] sm:$0xf]
        %v8304 = vld [vmem:[%s946 + $0x10] sm:$0xf]
        %v8305 = vld [vmem:[%s946 + $0x14] sm:$0xf]
        %v8306 = vld [vmem:[%s946 + $0x18] sm:$0xf]
        %v8307 = vld [vmem:[%s946 + $0x1c] sm:$0xf]
        %v8308 = vpack.c.bf16 %v8285, %v8284
        %v8309 = vpack.c.bf16 %v8287, %v8286
        %v8310 = vpack.c.bf16 %v8289, %v8288
        %v8311 = vpack.c.bf16 %v8291, %v8290
        %v8312 = vpack.c.bf16 %v8293, %v8292
        %v8313 = vpack.c.bf16 %v8295, %v8294
        %v8314 = vpack.c.bf16 %v8297, %v8296
        %v8315 = vpack.c.bf16 %v8299, %v8298
        %v8316 = vld [vmem:[%s954] sm:$0x1]
        %v8318 = vlaneseq
        %v8319 = vshrl.u32 %v8318, 7
        %v8320 = vsub.s32 0, %v8319
        %v8321 = vrot.slane %v8316, %v8320
        %v8331 = vunpack.c.l.b16 %v8300
        %v8332 = vunpack.c.l.b16 %v8301
        %v8333 = vunpack.c.l.b16 %v8302
        %v8334 = vunpack.c.l.b16 %v8303
        %v8335 = vunpack.c.l.b16 %v8304
        %v8336 = vunpack.c.l.b16 %v8305
        %v8337 = vunpack.c.l.b16 %v8306
        %v8338 = vunpack.c.l.b16 %v8307
        %v8339 = vpack.c.b16 %v8332, %v8331
        %v8340 = vpack.c.b16 %v8334, %v8333
        %v8341 = vpack.c.b16 %v8336, %v8335
        %v8342 = vpack.c.b16 %v8338, %v8337
        %v8348 = vsel %vm2008, %v8308, 0
        %v8351 = vsel %vm2008, %v8309, 0
        %v8354 = vsel %vm2008, %v8310, 0
        %v8357 = vsel %vm2008, %v8311, 0
        %v8360 = vsel %vm2008, %v8312, 0
        %v8363 = vsel %vm2008, %v8313, 0
        %v8366 = vsel %vm2008, %v8314, 0
        %v8369 = vsel %vm2008, %v8315, 0
        %8371 = vmatprep.subr.bf16.mxu0 0
        %8372 = vmatpush1.bf16.msra.mxu0 %v8339
        %8373 = vmatprep.subr.bf16.mxu0 0
        %8374 = vmatpush1.bf16.msra.mxu0 %v8340
        %8375 = vmatprep.subr.bf16.mxu0 0
        %8376 = vmatpush1.bf16.msra.mxu0 %v8341
        %8377 = vmatprep.subr.bf16.mxu0 0
        %8378 = vmatpush1.bf16.msra.mxu0 %v8342
        %8379 = vmatprep.subr.bf16.mxu0 0
        %8380 = vmatpush1.bf16.msra.mxu0 0
        %8381 = vmatprep.subr.bf16.mxu0 0
        %8382 = vmatpush1.bf16.msra.mxu0 0
        %8383 = vmatprep.subr.bf16.mxu0 0
        %8384 = vmatpush1.bf16.msra.mxu0 0
        %8385 = vmatprep.subr.bf16.mxu0 0
        %8386 = vmatpush1.bf16.msra.mxu0 0
        %8387 = vmatprep.subr.bf16.mxu0 0
        %8388 = vmatpush1.bf16.msra.mxu0 0
        %8389 = vmatprep.subr.bf16.mxu0 0
        %8390 = vmatpush1.bf16.msra.mxu0 0
        %8391 = vmatprep.subr.bf16.mxu0 0
        %8392 = vmatpush1.bf16.msra.mxu0 0
        %8393 = vmatprep.subr.bf16.mxu0 0
        %8394 = vmatpush1.bf16.msra.mxu0 0
        %8395 = vmatprep.subr.bf16.mxu0 0
        %8396 = vmatpush1.bf16.msra.mxu0 0
        %8397 = vmatprep.subr.bf16.mxu0 0
        %8398 = vmatpush1.bf16.msra.mxu0 0
        %8399 = vmatprep.subr.bf16.mxu0 0
        %8400 = vmatpush1.bf16.msra.mxu0 0
        %8401 = vmatprep.subr.bf16.mxu0 0
        %8402 = vmatpush1.bf16.msra.mxu0 0
        %8403 = vmatprep.mubr.bf16.mxu0 0
        %8404 = vmatmul.mubr.bf16.gmra.mrb[0].mxu0 %v8348
        %v8405 = vpop.f32.mrb[0].mxu0
        %v8406 = vadd.f32 %v8321, %v8405
        %v8407 = vpop.f32.mrb[0].mxu0
        %v8408 = vpop.f32.mrb[0].mxu0
        %v8409 = vadd.f32 %v8321, %v8408
        %v8410 = vpop.f32.mrb[0].mxu0
        %8411 = vmatprep.mubr.bf16.mxu0 0
        %8412 = vmatmul.mubr.bf16.gmra.mrb[0].mxu0 %v8351
        %v8413 = vpop.f32.mrb[0].mxu0
        %v8414 = vadd.f32 %v8321, %v8413
        %v8415 = vpop.f32.mrb[0].mxu0
        %v8416 = vpop.f32.mrb[0].mxu0
        %v8417 = vadd.f32 %v8321, %v8416
        %v8418 = vpop.f32.mrb[0].mxu0
        %8419 = vmatprep.mubr.bf16.mxu0 0
        %8420 = vmatmul.mubr.bf16.gmra.mrb[0].mxu0 %v8354
        %v8421 = vpop.f32.mrb[0].mxu0
        %v8422 = vadd.f32 %v8321, %v8421
        %v8423 = vpop.f32.mrb[0].mxu0
        %v8424 = vpop.f32.mrb[0].mxu0
        %v8425 = vadd.f32 %v8321, %v8424
        %v8426 = vpop.f32.mrb[0].mxu0
        %8427 = vmatprep.mubr.bf16.mxu0 0
        %8428 = vmatmul.mubr.bf16.gmra.mrb[0].mxu0 %v8357
        %v8429 = vpop.f32.mrb[0].mxu0
        %v8430 = vadd.f32 %v8321, %v8429
        %v8431 = vpop.f32.mrb[0].mxu0
        %v8432 = vpop.f32.mrb[0].mxu0
        %v8433 = vadd.f32 %v8321, %v8432
        %v8434 = vpop.f32.mrb[0].mxu0
        %8435 = vmatprep.mubr.bf16.mxu0 0
        %8436 = vmatmul.mubr.bf16.gmra.mrb[0].mxu0 %v8360
        %v8437 = vpop.f32.mrb[0].mxu0
        %v8438 = vadd.f32 %v8321, %v8437
        %v8439 = vpop.f32.mrb[0].mxu0
        %v8440 = vpop.f32.mrb[0].mxu0
        %v8441 = vadd.f32 %v8321, %v8440
        %v8442 = vpop.f32.mrb[0].mxu0
        %8443 = vmatprep.mubr.bf16.mxu0 0
        %8444 = vmatmul.mubr.bf16.gmra.mrb[0].mxu0 %v8363
        %v8445 = vpop.f32.mrb[0].mxu0
        %v8446 = vadd.f32 %v8321, %v8445
        %v8447 = vpop.f32.mrb[0].mxu0
        %v8448 = vpop.f32.mrb[0].mxu0
        %v8449 = vadd.f32 %v8321, %v8448
        %v8450 = vpop.f32.mrb[0].mxu0
        %8451 = vmatprep.mubr.bf16.mxu0 0
        %8452 = vmatmul.mubr.bf16.gmra.mrb[0].mxu0 %v8366
        %v8453 = vpop.f32.mrb[0].mxu0
        %v8454 = vadd.f32 %v8321, %v8453
        %v8455 = vpop.f32.mrb[0].mxu0
        %v8456 = vpop.f32.mrb[0].mxu0
        %v8457 = vadd.f32 %v8321, %v8456
        %v8458 = vpop.f32.mrb[0].mxu0
        %8459 = vmatprep.mubr.bf16.mxu0 0
        %8460 = vmatmul.mubr.bf16.gmra.mrb[0].mxu0 %v8369
        %v8461 = vpop.f32.mrb[0].mxu0
        %v8462 = vadd.f32 %v8321, %v8461
        %v8463 = vpop.f32.mrb[0].mxu0
        %v8464 = vpop.f32.mrb[0].mxu0
        %v8465 = vadd.f32 %v8321, %v8464
        %v8466 = vpop.f32.mrb[0].mxu0
        %8467 = vdwg.mxu0
        %v8468 = vadd.f32 %v7734, %v8406
        %v8469 = vadd.f32 %v7735, %v8409
        %v8470 = vadd.f32 %v7736, %v8414
        %v8471 = vadd.f32 %v7737, %v8417
        %v8472 = vadd.f32 %v7738, %v8422
        %v8473 = vadd.f32 %v7739, %v8425
        %v8474 = vadd.f32 %v7740, %v8430
        %v8475 = vadd.f32 %v7741, %v8433
        %v8476 = vadd.f32 %v7742, %v8438
        %v8477 = vadd.f32 %v7743, %v8441
        %v8478 = vadd.f32 %v7744, %v8446
        %v8479 = vadd.f32 %v7745, %v8449
        %v8480 = vadd.f32 %v7746, %v8454
        %v8481 = vadd.f32 %v7747, %v8457
        %v8482 = vadd.f32 %v7748, %v8462
        %v8483 = vadd.f32 %v7749, %v8465
        %8484 = vst.msk [vmem:[#allocation2] sm:$0xff] %vm1129, %v8468
        %8485 = vst.msk [vmem:[#allocation2 + $0x8] sm:$0xff] %vm1129, %v8469
        %8486 = vst.msk [vmem:[#allocation2 + $0x10] sm:$0xff] %vm1129, %v8470
        %8487 = vst.msk [vmem:[#allocation2 + $0x18] sm:$0xff] %vm1129, %v8471
        %8488 = vst.msk [vmem:[#allocation2 + $0x20] sm:$0xff] %vm1129, %v8472
        %8489 = vst.msk [vmem:[#allocation2 + $0x28] sm:$0xff] %vm1129, %v8473
        %8490 = vst.msk [vmem:[#allocation2 + $0x30] sm:$0xff] %vm1129, %v8474
        %8491 = vst.msk [vmem:[#allocation2 + $0x38] sm:$0xff] %vm1129, %v8475
        %8492 = vst.msk [vmem:[#allocation2 + $0x40] sm:$0xff] %vm1129, %v8476
        %8493 = vst.msk [vmem:[#allocation2 + $0x48] sm:$0xff] %vm1129, %v8477
        %8494 = vst.msk [vmem:[#allocation2 + $0x50] sm:$0xff] %vm1129, %v8478
        %8495 = vst.msk [vmem:[#allocation2 + $0x58] sm:$0xff] %vm1129, %v8479
        %8496 = vst.msk [vmem:[#allocation2 + $0x60] sm:$0xff] %vm1129, %v8480
        %8497 = vst.msk [vmem:[#allocation2 + $0x68] sm:$0xff] %vm1129, %v8481
        %8498 = vst.msk [vmem:[#allocation2 + $0x70] sm:$0xff] %vm1129, %v8482
        %8499 = vst.msk [vmem:[#allocation2 + $0x78] sm:$0xff] %vm1129, %v8483
        %p8500 = scmp.eq.s32.totalorder %s62, 1
        // Predicated region
        $region161: #{transformer_forward.1} parent=87 // pred_check
          %p8501 = pneg %p8500
        $region162: #{transformer_forward.1} parent=87 // pred_check_branch
          %8503 = sbr.rel (%p8501) target = $region164
        $region163: #{transformer_forward.1} parent=87 // pred_region
          %v8504 = vld [vmem:[#allocation29] sm:$0x1]
          %v8505 = vld [vmem:[#allocation30] sm:$0x1]
          %v8506 = vsel %vm1129, %v8468, 0.0
          %8507 = vadd.xlane.f32.xlu0 %v8506
          %v8508 = vpop.xlane.xlu0 %8507
          %v8509 = vsel %vm1129, %v8469, 0.0
          %8510 = vadd.xlane.f32.xlu0 %v8509
          %v8511 = vpop.xlane.xlu0 %8510
          %v8512 = vsel %vm1129, %v8470, 0.0
          %8513 = vadd.xlane.f32.xlu0 %v8512
          %v8514 = vpop.xlane.xlu0 %8513
          %v8515 = vsel %vm1129, %v8471, 0.0
          %8516 = vadd.xlane.f32.xlu0 %v8515
          %v8517 = vpop.xlane.xlu0 %8516
          %v8518 = vsel %vm1129, %v8472, 0.0
          %8519 = vadd.xlane.f32.xlu0 %v8518
          %v8520 = vpop.xlane.xlu0 %8519
          %v8521 = vsel %vm1129, %v8473, 0.0
          %8522 = vadd.xlane.f32.xlu0 %v8521
          %v8523 = vpop.xlane.xlu0 %8522
          %v8524 = vsel %vm1129, %v8474, 0.0
          %8525 = vadd.xlane.f32.xlu0 %v8524
          %v8526 = vpop.xlane.xlu0 %8525
          %v8527 = vsel %vm1129, %v8475, 0.0
          %8528 = vadd.xlane.f32.xlu0 %v8527
          %v8529 = vpop.xlane.xlu0 %8528
          %v8530 = vsel %vm1129, %v8476, 0.0
          %8531 = vadd.xlane.f32.xlu0 %v8530
          %v8532 = vpop.xlane.xlu0 %8531
          %v8533 = vsel %vm1129, %v8477, 0.0
          %8534 = vadd.xlane.f32.xlu0 %v8533
          %v8535 = vpop.xlane.xlu0 %8534
          %v8536 = vsel %vm1129, %v8478, 0.0
          %8537 = vadd.xlane.f32.xlu0 %v8536
          %v8538 = vpop.xlane.xlu0 %8537
          %v8539 = vsel %vm1129, %v8479, 0.0
          %8540 = vadd.xlane.f32.xlu0 %v8539
          %v8541 = vpop.xlane.xlu0 %8540
          %v8542 = vsel %vm1129, %v8480, 0.0
          %8543 = vadd.xlane.f32.xlu0 %v8542
          %v8544 = vpop.xlane.xlu0 %8543
          %v8545 = vsel %vm1129, %v8481, 0.0
          %8546 = vadd.xlane.f32.xlu0 %v8545
          %v8547 = vpop.xlane.xlu0 %8546
          %v8548 = vsel %vm1129, %v8482, 0.0
          %8549 = vadd.xlane.f32.xlu0 %v8548
          %v8550 = vpop.xlane.xlu0 %8549
          %v8551 = vsel %vm1129, %v8483, 0.0
          %8552 = vadd.xlane.f32.xlu0 %v8551
          %v8553 = vpop.xlane.xlu0 %8552
          %v8554 = vmul.f32 %v8508, %v1178
          %v8555 = vmul.f32 %v8511, %v1178
          %v8556 = vmul.f32 %v8514, %v1178
          %v8557 = vmul.f32 %v8517, %v1178
          %v8558 = vmul.f32 %v8520, %v1178
          %v8559 = vmul.f32 %v8523, %v1178
          %v8560 = vmul.f32 %v8526, %v1178
          %v8561 = vmul.f32 %v8529, %v1178
          %v8562 = vmul.f32 %v8532, %v1178
          %v8563 = vmul.f32 %v8535, %v1178
          %v8564 = vmul.f32 %v8538, %v1178
          %v8565 = vmul.f32 %v8541, %v1178
          %v8566 = vmul.f32 %v8544, %v1178
          %v8567 = vmul.f32 %v8547, %v1178
          %v8568 = vmul.f32 %v8550, %v1178
          %v8569 = vmul.f32 %v8553, %v1178
          %v8570 = vsub.f32 %v8468, %v8554
          %v8571 = vsub.f32 %v8469, %v8555
          %v8572 = vsub.f32 %v8470, %v8556
          %v8573 = vsub.f32 %v8471, %v8557
          %v8574 = vsub.f32 %v8472, %v8558
          %v8575 = vsub.f32 %v8473, %v8559
          %v8576 = vsub.f32 %v8474, %v8560
          %v8577 = vsub.f32 %v8475, %v8561
          %v8578 = vsub.f32 %v8476, %v8562
          %v8579 = vsub.f32 %v8477, %v8563
          %v8580 = vsub.f32 %v8478, %v8564
          %v8581 = vsub.f32 %v8479, %v8565
          %v8582 = vsub.f32 %v8480, %v8566
          %v8583 = vsub.f32 %v8481, %v8567
          %v8584 = vsub.f32 %v8482, %v8568
          %v8585 = vsub.f32 %v8483, %v8569
          %v8586 = vmul.f32 %v8570, %v8570
          %v8587 = vmul.f32 %v8571, %v8571
          %v8588 = vmul.f32 %v8572, %v8572
          %v8589 = vmul.f32 %v8573, %v8573
          %v8590 = vmul.f32 %v8574, %v8574
          %v8591 = vmul.f32 %v8575, %v8575
          %v8592 = vmul.f32 %v8576, %v8576
          %v8593 = vmul.f32 %v8577, %v8577
          %v8594 = vmul.f32 %v8578, %v8578
          %v8595 = vmul.f32 %v8579, %v8579
          %v8596 = vmul.f32 %v8580, %v8580
          %v8597 = vmul.f32 %v8581, %v8581
          %v8598 = vmul.f32 %v8582, %v8582
          %v8599 = vmul.f32 %v8583, %v8583
          %v8600 = vmul.f32 %v8584, %v8584
          %v8601 = vmul.f32 %v8585, %v8585
          %v8602 = vsel %vm1129, %v8586, 0.0
          %8603 = vadd.xlane.f32.xlu0 %v8602
          %v8604 = vpop.xlane.xlu0 %8603
          %v8605 = vsel %vm1129, %v8587, 0.0
          %8606 = vadd.xlane.f32.xlu0 %v8605
          %v8607 = vpop.xlane.xlu0 %8606
          %v8608 = vsel %vm1129, %v8588, 0.0
          %8609 = vadd.xlane.f32.xlu0 %v8608
          %v8610 = vpop.xlane.xlu0 %8609
          %v8611 = vsel %vm1129, %v8589, 0.0
          %8612 = vadd.xlane.f32.xlu0 %v8611
          %v8613 = vpop.xlane.xlu0 %8612
          %v8614 = vsel %vm1129, %v8590, 0.0
          %8615 = vadd.xlane.f32.xlu0 %v8614
          %v8616 = vpop.xlane.xlu0 %8615
          %v8617 = vsel %vm1129, %v8591, 0.0
          %8618 = vadd.xlane.f32.xlu0 %v8617
          %v8619 = vpop.xlane.xlu0 %8618
          %v8620 = vsel %vm1129, %v8592, 0.0
          %8621 = vadd.xlane.f32.xlu0 %v8620
          %v8622 = vpop.xlane.xlu0 %8621
          %v8623 = vsel %vm1129, %v8593, 0.0
          %8624 = vadd.xlane.f32.xlu0 %v8623
          %v8625 = vpop.xlane.xlu0 %8624
          %v8626 = vsel %vm1129, %v8594, 0.0
          %8627 = vadd.xlane.f32.xlu0 %v8626
          %v8628 = vpop.xlane.xlu0 %8627
          %v8629 = vsel %vm1129, %v8595, 0.0
          %8630 = vadd.xlane.f32.xlu0 %v8629
          %v8631 = vpop.xlane.xlu0 %8630
          %v8632 = vsel %vm1129, %v8596, 0.0
          %8633 = vadd.xlane.f32.xlu0 %v8632
          %v8634 = vpop.xlane.xlu0 %8633
          %v8635 = vsel %vm1129, %v8597, 0.0
          %8636 = vadd.xlane.f32.xlu0 %v8635
          %v8637 = vpop.xlane.xlu0 %8636
          %v8638 = vsel %vm1129, %v8598, 0.0
          %8639 = vadd.xlane.f32.xlu0 %v8638
          %v8640 = vpop.xlane.xlu0 %8639
          %v8641 = vsel %vm1129, %v8599, 0.0
          %8642 = vadd.xlane.f32.xlu0 %v8641
          %v8643 = vpop.xlane.xlu0 %8642
          %v8644 = vsel %vm1129, %v8600, 0.0
          %8645 = vadd.xlane.f32.xlu0 %v8644
          %v8646 = vpop.xlane.xlu0 %8645
          %v8647 = vsel %vm1129, %v8601, 0.0
          %8648 = vadd.xlane.f32.xlu0 %v8647
          %v8649 = vpop.xlane.xlu0 %8648
          %v8650 = vmul.f32 %v8604, %v1178
          %v8651 = vmul.f32 %v8607, %v1178
          %v8652 = vmul.f32 %v8610, %v1178
          %v8653 = vmul.f32 %v8613, %v1178
          %v8654 = vmul.f32 %v8616, %v1178
          %v8655 = vmul.f32 %v8619, %v1178
          %v8656 = vmul.f32 %v8622, %v1178
          %v8657 = vmul.f32 %v8625, %v1178
          %v8658 = vmul.f32 %v8628, %v1178
          %v8659 = vmul.f32 %v8631, %v1178
          %v8660 = vmul.f32 %v8634, %v1178
          %v8661 = vmul.f32 %v8637, %v1178
          %v8662 = vmul.f32 %v8640, %v1178
          %v8663 = vmul.f32 %v8643, %v1178
          %v8664 = vmul.f32 %v8646, %v1178
          %v8665 = vmul.f32 %v8649, %v1178
          %v8666 = vadd.f32 %v8650, 1e-05
          %v8667 = vadd.f32 %v8651, 1e-05
          %v8668 = vadd.f32 %v8652, 1e-05
          %v8669 = vadd.f32 %v8653, 1e-05
          %v8670 = vadd.f32 %v8654, 1e-05
          %v8671 = vadd.f32 %v8655, 1e-05
          %v8672 = vadd.f32 %v8656, 1e-05
          %v8673 = vadd.f32 %v8657, 1e-05
          %v8674 = vadd.f32 %v8658, 1e-05
          %v8675 = vadd.f32 %v8659, 1e-05
          %v8676 = vadd.f32 %v8660, 1e-05
          %v8677 = vadd.f32 %v8661, 1e-05
          %v8678 = vadd.f32 %v8662, 1e-05
          %v8679 = vadd.f32 %v8663, 1e-05
          %v8680 = vadd.f32 %v8664, 1e-05
          %v8681 = vadd.f32 %v8665, 1e-05
          %v8682 = vrsqrt.pop %v8666
          %v8683 = vrsqrt.pop %v8667
          %v8684 = vrsqrt.pop %v8668
          %v8685 = vrsqrt.pop %v8669
          %v8686 = vrsqrt.pop %v8670
          %v8687 = vrsqrt.pop %v8671
          %v8688 = vrsqrt.pop %v8672
          %v8689 = vrsqrt.pop %v8673
          %v8690 = vrsqrt.pop %v8674
          %v8691 = vrsqrt.pop %v8675
          %v8692 = vrsqrt.pop %v8676
          %v8693 = vrsqrt.pop %v8677
          %v8694 = vrsqrt.pop %v8678
          %v8695 = vrsqrt.pop %v8679
          %v8696 = vrsqrt.pop %v8680
          %v8697 = vrsqrt.pop %v8681
          %v8698 = vmul.f32 %v8570, %v8682
          %v8699 = vmul.f32 %v8571, %v8683
          %v8700 = vmul.f32 %v8572, %v8684
          %v8701 = vmul.f32 %v8573, %v8685
          %v8702 = vmul.f32 %v8574, %v8686
          %v8703 = vmul.f32 %v8575, %v8687
          %v8704 = vmul.f32 %v8576, %v8688
          %v8705 = vmul.f32 %v8577, %v8689
          %v8706 = vmul.f32 %v8578, %v8690
          %v8707 = vmul.f32 %v8579, %v8691
          %v8708 = vmul.f32 %v8580, %v8692
          %v8709 = vmul.f32 %v8581, %v8693
          %v8710 = vmul.f32 %v8582, %v8694
          %v8711 = vmul.f32 %v8583, %v8695
          %v8712 = vmul.f32 %v8584, %v8696
          %v8713 = vmul.f32 %v8585, %v8697
          %v8715 = vlaneseq
          %v8716 = vshrl.u32 %v8715, 7
          %v8717 = vsub.s32 0, %v8716
          %v8718 = vrot.slane %v8504, %v8717
          %v8720 = vmul.f32 %v8698, %v8718
          %v8721 = vmul.f32 %v8699, %v8718
          %v8722 = vmul.f32 %v8700, %v8718
          %v8723 = vmul.f32 %v8701, %v8718
          %v8724 = vmul.f32 %v8702, %v8718
          %v8725 = vmul.f32 %v8703, %v8718
          %v8726 = vmul.f32 %v8704, %v8718
          %v8727 = vmul.f32 %v8705, %v8718
          %v8728 = vmul.f32 %v8706, %v8718
          %v8729 = vmul.f32 %v8707, %v8718
          %v8730 = vmul.f32 %v8708, %v8718
          %v8731 = vmul.f32 %v8709, %v8718
          %v8732 = vmul.f32 %v8710, %v8718
          %v8733 = vmul.f32 %v8711, %v8718
          %v8734 = vmul.f32 %v8712, %v8718
          %v8735 = vmul.f32 %v8713, %v8718
          %v8737 = vlaneseq
          %v8738 = vshrl.u32 %v8737, 7
          %v8739 = vsub.s32 0, %v8738
          %v8740 = vrot.slane %v8505, %v8739
          %v8742 = vadd.f32 %v8720, %v8740
          %v8743 = vadd.f32 %v8721, %v8740
          %v8744 = vadd.f32 %v8722, %v8740
          %v8745 = vadd.f32 %v8723, %v8740
          %v8746 = vadd.f32 %v8724, %v8740
          %v8747 = vadd.f32 %v8725, %v8740
          %v8748 = vadd.f32 %v8726, %v8740
          %v8749 = vadd.f32 %v8727, %v8740
          %v8750 = vadd.f32 %v8728, %v8740
          %v8751 = vadd.f32 %v8729, %v8740
          %v8752 = vadd.f32 %v8730, %v8740
          %v8753 = vadd.f32 %v8731, %v8740
          %v8754 = vadd.f32 %v8732, %v8740
          %v8755 = vadd.f32 %v8733, %v8740
          %v8756 = vadd.f32 %v8734, %v8740
          %v8757 = vadd.f32 %v8735, %v8740
          %8758 = vst.msk [vmem:[%s1070] sm:$0xff] %vm1129, %v8742
          %8759 = vst.msk [vmem:[%s1070 + $0x8] sm:$0xff] %vm1129, %v8743
          %8760 = vst.msk [vmem:[%s1070 + $0x10] sm:$0xff] %vm1129, %v8744
          %8761 = vst.msk [vmem:[%s1070 + $0x18] sm:$0xff] %vm1129, %v8745
          %8762 = vst.msk [vmem:[%s1070 + $0x20] sm:$0xff] %vm1129, %v8746
          %8763 = vst.msk [vmem:[%s1070 + $0x28] sm:$0xff] %vm1129, %v8747
          %8764 = vst.msk [vmem:[%s1070 + $0x30] sm:$0xff] %vm1129, %v8748
          %8765 = vst.msk [vmem:[%s1070 + $0x38] sm:$0xff] %vm1129, %v8749
          %8766 = vst.msk [vmem:[%s1070 + $0x40] sm:$0xff] %vm1129, %v8750
          %8767 = vst.msk [vmem:[%s1070 + $0x48] sm:$0xff] %vm1129, %v8751
          %8768 = vst.msk [vmem:[%s1070 + $0x50] sm:$0xff] %vm1129, %v8752
          %8769 = vst.msk [vmem:[%s1070 + $0x58] sm:$0xff] %vm1129, %v8753
          %8770 = vst.msk [vmem:[%s1070 + $0x60] sm:$0xff] %vm1129, %v8754
          %8771 = vst.msk [vmem:[%s1070 + $0x68] sm:$0xff] %vm1129, %v8755
          %8772 = vst.msk [vmem:[%s1070 + $0x70] sm:$0xff] %vm1129, %v8756
          %8773 = vst.msk [vmem:[%s1070 + $0x78] sm:$0xff] %vm1129, %v8757
        $region164: #{transformer_forward.1} parent=87 // pred_fallthru
          _
        %s8774 = sand.u32 %s504, 1
        %s8775 = scalar_lea.sflag [#allocation6], %s8774
        %s8776 = sand.u32 %s504, 1
        %s8777 = smul.addr %s8776, 128
        %s8778 = scalar_lea.vmem [#allocation32], %s8777
        // Predicated region
        $region165: #{transformer_forward.1} parent=87 // pred_check
          %p8779 = pneg %p514
        $region166: #{transformer_forward.1} parent=87 // pred_check_branch
          %8781 = sbr.rel (%p8779) target = $region168
        $region167: #{transformer_forward.1} parent=87 // pred_region
          %s8782 = smul.u32 2, %s61
          %s8784 = ssub.s32 2048, 2048
          %8785 = vsyncadd %s8775, %s8784
          %s8786 = smul.addr %s8782, 8
          %s8787 = smul.addr %s8786, 128
          %s8788 = scalar_lea.hbm %s17, %s8787
          %s8789 = sshll.u32 %s8778, 4
          %s8790 = int_to_ptr.vmem [resolvable:$true] %s8789
          %8795 = dma.vmem_to_hbm [thread:$0]  %s8790, 2048, %s8788, %s8775, 128, 128, 8
        $region168: #{transformer_forward.1} parent=87 // pred_fallthru
          _
      $region88: #{transformer_forward.1} parent=5 // pred_fallthru
        _
      %p8796 = scmp.le.s32.totalorder 2, %s52
      // Predicated region
      $region169: #{transformer_forward.1} parent=5 // pred_check
        %p8797 = pneg %p8796
      $region170: #{transformer_forward.1} parent=5 // pred_check_branch
        %8799 = sbr.rel (%p8797) target = $region172
      $region171: #{transformer_forward.1} parent=5 // pred_region
        %s8800 = ssub.s32 %s52, 2
        // Predicated region
        $region173: #{transformer_forward.1} parent=171 // pred_check
          %p8801 = pneg %p520
        $region174: #{transformer_forward.1} parent=171 // pred_check_branch
          %8803 = sbr.rel (%p8801) target = $region176
        $region175: #{transformer_forward.1} parent=171 // pred_region
          %s8804 = sand.u32 %s505, 1
          %s8805 = scalar_lea.sflag [#allocation6], %s8804
          %s8806 = sand.u32 %s505, 1
          %s8807 = smul.addr %s8806, 128
          %s8808 = scalar_lea.vmem [#allocation32], %s8807
          %8809 = dma.done %s8805, 2048
        $region176: #{transformer_forward.1} parent=171 // pred_fallthru
          _
      $region172: #{transformer_forward.1} parent=5 // pred_fallthru
        _
    $region6: #{transformer_forward.1} parent=1 // loop_footer
      %s56 = sadd.s32 1, %s52
    $region7: #{transformer_forward.1} parent=1 // loop_footer_branch
      %51 = sbr.rel target = $region3
    $region8: #{transformer_forward.1} parent=1 // loop_exit
      _
    %8810 = vsyncpa [#allocation5], 1
    %s8811 = scalar_lea.sflag [#allocation5], 1
    %8812 = vsyncpa %s8811, 1
    %8813 = vsyncpa [#allocation10], 1
    %s8814 = scalar_lea.sflag [#allocation10], 1
    %8815 = vsyncpa %s8814, 1
    %8816 = vsyncpa [#allocation13], 1
    %s8817 = scalar_lea.sflag [#allocation13], 1
    %8818 = vsyncpa %s8817, 1
    %8819 = vsyncpa [#allocation16], 1
    %s8820 = scalar_lea.sflag [#allocation16], 1
    %8821 = vsyncpa %s8820, 1
    %8822 = vsyncpa [#allocation19], 1
    %s8823 = scalar_lea.sflag [#allocation19], 1
    %8824 = vsyncpa %s8823, 1
    %8825 = vsyncpa [#allocation22], 1
    %s8826 = scalar_lea.sflag [#allocation22], 1
    %8827 = vsyncpa %s8826, 1
    %8828 = vsyncpa [#allocation25], 1
    %s8829 = scalar_lea.sflag [#allocation25], 1
    %8830 = vsyncpa %s8829, 1
    %8831 = vsyncpa [#allocation28], 1
    %s8832 = scalar_lea.sflag [#allocation28], 1
    %8833 = vsyncpa %s8832, 1
    %8834 = vsyncpa [#allocation31], 1
    %8835 = vsyncpa [#allocation6], 1
    %s8836 = scalar_lea.sflag [#allocation6], 1
    %8837 = vsyncpa %s8836, 1
    %8838 = vsyncpa [#allocation7], 1
    %s8839 = scalar_lea.sflag [#allocation7], 1
    %8840 = vsyncpa %s8839, 1

</llo_original>
